<compile_context>
chip_gen: v5e
topology: v5e:2x2
jax: 0.10.0
libtpu: 0.0.40
codegen_flags: <defaults>
</compile_context>

<pallas_src>
import functools

import jax
import jax.numpy as jnp
from jax.experimental import pallas as pl
from jax.experimental.pallas import tpu as pltpu

# ----------------------------- configuration -------------------------------
# torchvision vgg16_bn cfg is [64,64,'M',128,128,'M',256,256,256,'M',512,...];
# widths scaled by 1/16 to keep the synthetic kernel small.
VGG16_CFG = [4, 4, "M", 8, 8, "M", 16, 16, 16, "M", 32, 32, 32, "M", 32, 32, 32, "M"]
HIDDEN = 256          # scaled stand-in for 4096
CLASS_COUNT = 8
BN_EPS = 1e-5


# --------------------------- Pallas kernels --------------------------------
def _conv_stage_kernel(w_ref, b_ref, *refs, nq):
    """One VGG stage: Conv3x3 (+folded BN) [+ fused 2x2 maxpool] + bias + ReLU.

    The conv is an MXU matmul over pre-gathered im2col columns; the optional
    maxpool is fused as an elementwise max over the `nq` pool-quadrant column
    matrices (exact: the per-channel bias and ReLU commute with the max).
    Output layout is (Cout, M): the big spatial axis is lane-dense, the tiny
    channel axis sits on sublanes.
    """
    col_refs = refs[:nq]
    o_ref = refs[nq]
    w = w_ref[...]                                                  # (Cout, 9*Cin) bf16
    acc = jnp.dot(w, col_refs[0][...], preferred_element_type=jnp.float32)
    for c_ref in col_refs[1:]:
        acc = jnp.maximum(
            acc, jnp.dot(w, c_ref[...], preferred_element_type=jnp.float32))
    y = acc + b_ref[...]                                            # folded BN bias, f32
    y = jnp.maximum(y, 0.0)                                         # ReLU
    o_ref[...] = y.astype(o_ref.dtype)


def conv_stage(w_mat, bias, cols):
    """y = relu(max_q(w_mat @ cols[q]) + bias) as one pallas_call, shape (Cout, M)."""
    cout, k = w_mat.shape
    nq = len(cols)
    m = cols[0].shape[1]
    # 2-way lane split for the big early layer(s): feeds both TensorCores on a
    # 2-TC chip (v7x); on single-TC chips it only adds ~0.35us of grid overhead.
    grid_m = 2 if (m >= 1024 and m % 256 == 0) else 1
    bm = m // grid_m
    kernel = functools.partial(_conv_stage_kernel, nq=nq)
    in_specs = [
        pl.BlockSpec((cout, k), lambda i: (0, 0)),
        pl.BlockSpec((cout, 1), lambda i: (0, 0)),
    ] + [pl.BlockSpec((k, bm), lambda i: (0, i)) for _ in range(nq)]
    return pl.pallas_call(
        kernel,
        out_shape=jax.ShapeDtypeStruct((cout, m), jnp.bfloat16),
        grid=(grid_m,),
        in_specs=in_specs,
        out_specs=pl.BlockSpec((cout, bm), lambda i: (0, i)),
        compiler_params=pltpu.CompilerParams(dimension_semantics=("parallel",)),
    )(w_mat, bias, *cols)


def _classifier_kernel(f_ref, w1_ref, b1_ref, w2_ref, b2_ref, w3_ref, b3_ref, o_ref):
    """Fused Linear-ReLU-[Dropout]-Linear-ReLU-[Dropout]-Linear-Sigmoid (eval)."""
    h = jnp.dot(f_ref[...], w1_ref[...], preferred_element_type=jnp.float32) + b1_ref[...]
    h = jnp.maximum(h, 0.0).astype(jnp.bfloat16)
    h = jnp.dot(h, w2_ref[...], preferred_element_type=jnp.float32) + b2_ref[...]
    h = jnp.maximum(h, 0.0).astype(jnp.bfloat16)
    y = jnp.dot(h, w3_ref[...], preferred_element_type=jnp.float32) + b3_ref[...]
    y = pl.reciprocal(1.0 + jnp.exp(-y), approx=True)   # sigmoid; recip goes to the EUP
    o_ref[...] = jnp.clip(y, 0.0, 1.0)                  # guard approx-recip rounding


def classifier(feat, w1, b1, w2, b2, w3, b3):
    n = feat.shape[0]
    ncls = w3.shape[1]
    vmem = pl.BlockSpec(memory_space=pltpu.MemorySpace.VMEM)
    return pl.pallas_call(
        _classifier_kernel,
        out_shape=jax.ShapeDtypeStruct((n, ncls), jnp.float32),
        in_specs=[vmem] * 7,
        out_specs=vmem,
    )(feat, w1, b1, w2, b2, w3, b3)


# ------------------------------ glue helpers --------------------------------
def make_cols(x, pooled):
    """Channels-first activation (C,N,H,W) -> im2col column matrices (9C, M).

    Layout plumbing only (pad / shift / stack / reshape) that XLA fuses; no
    Pallas work happens here.  When `pooled`, the four 2x2-pool quadrants are
    returned as separate column matrices so the pool is fused into the conv
    kernel as an elementwise max.
    """
    C, N, H, W = x.shape
    xp = jnp.pad(x, ((0, 0), (0, 0), (1, 1), (1, 1)))
    taps = [xp[:, :, ky:ky + H, kx:kx + W] for ky in range(3) for kx in range(3)]
    t = jnp.stack(taps, axis=0)                           # (9, C, N, H, W)
    if not pooled:
        return [t.reshape(9 * C, N * H * W)]
    cols = []
    for dy in (0, 1):
        for dx in (0, 1):
            q = t[:, :, :, dy::2, dx::2]                  # (9, C, N, H/2, W/2)
            cols.append(q.reshape(9 * C, -1))
    return cols


# ------------------------------ parameters ----------------------------------
def init_params(key, in_ch=3):
    params = {"convs": [], "fcs": []}
    c = in_ch
    for v in VGG16_CFG:
        if v == "M":
            continue
        key, k1, k2, k3, k4, k5, k6 = jax.random.split(key, 7)
        w = 0.1 * jax.random.normal(k1, (v, c, 3, 3), jnp.float32)    # PyTorch OIHW
        b = 0.05 * jax.random.normal(k2, (v,), jnp.float32)
        gamma = 1.0 + 0.1 * jax.random.normal(k3, (v,), jnp.float32)
        beta = 0.05 * jax.random.normal(k4, (v,), jnp.float32)
        mean = 0.05 * jax.random.normal(k5, (v,), jnp.float32)
        var = 0.5 + 0.1 * jax.random.uniform(k6, (v,), jnp.float32)
        params["convs"].append((w, b, gamma, beta, mean, var))
        c = v
    fc_dims = [(c * 7 * 7, HIDDEN), (HIDDEN, HIDDEN), (HIDDEN, CLASS_COUNT)]
    for fin, fout in fc_dims:
        key, k1, k2 = jax.random.split(key, 3)
        w = jax.random.normal(k1, (fout, fin), jnp.float32) / jnp.sqrt(float(fin))
        b = 0.05 * jax.random.normal(k2, (fout,), jnp.float32)
        params["fcs"].append((w, b))                                  # PyTorch (out, in)
    return params


# ------------------------------- forward ------------------------------------
def forward(params, x_nchw):
    # NCHW -> channels-first (C, N, H, W); bf16 MXU operands.
    x = jnp.transpose(x_nchw, (1, 0, 2, 3)).astype(jnp.bfloat16)
    conv_i = 0
    i = 0
    while i < len(VGG16_CFG):
        v = VGG16_CFG[i]
        pooled = (i + 1 < len(VGG16_CFG)) and VGG16_CFG[i + 1] == "M"
        w, b, gamma, beta, mean, var = params["convs"][conv_i]
        conv_i += 1
        C, N, H, W = x.shape
        # eval-mode BN folded into the weight matrix / bias on the host side.
        scale = gamma / jnp.sqrt(var + BN_EPS)
        bias = (beta + (b - mean) * scale).reshape(v, 1).astype(jnp.float32)
        w_mat = (jnp.transpose(w, (0, 2, 3, 1)).reshape(v, 9 * C)
                 * scale[:, None]).astype(jnp.bfloat16)               # (Cout, 9*Cin)
        y = conv_stage(w_mat, bias, make_cols(x, pooled))             # (Cout, M)
        Ho, Wo = (H // 2, W // 2) if pooled else (H, W)
        x = y.reshape(v, N, Ho, Wo)
        i += 2 if pooled else 1

    # AdaptiveAvgPool2d((7,7)): with a 32x32 input the trunk output is 1x1, so
    # the adaptive pool reduces to broadcasting that value onto the 7x7 grid,
    # then flattening in PyTorch NCHW order.
    C, N, H, W = x.shape
    assert (H, W) == (1, 1)
    feat = jnp.transpose(x.reshape(C, N))                             # (N, C)
    feat = jnp.broadcast_to(feat[:, :, None], (N, C, 49)).reshape(N, C * 49)

    (w1, b1), (w2, b2), (w3, b3) = params["fcs"]
    return classifier(
        feat.astype(jnp.bfloat16),
        w1.T.astype(jnp.bfloat16), b1.reshape(1, -1),
        w2.T.astype(jnp.bfloat16), b2.reshape(1, -1),
        w3.T.astype(jnp.bfloat16), b3.reshape(1, -1),
    )


# --------------------------------- main --------------------------------------
if __name__ == "__main__":
    key = jax.random.PRNGKey(0)
    pkey, xkey = jax.random.split(key)
    params = init_params(pkey)
    x = jax.random.normal(xkey, (2, 3, 32, 32), jnp.float32)   # NCHW, PyTorch convention

    out = jax.jit(forward)(params, x)
    out = jax.block_until_ready(out)

    assert out.shape == (2, CLASS_COUNT), out.shape
    assert bool(jnp.all((out >= 0.0) & (out <= 1.0)))          # Sigmoid range
    print("KERNEL_OK")
</pallas_src>

<mosaic_0001>
module attributes {stable_mosaic.version = 11 : i64} {
  func.func @_conv_stage_kernel(%arg0: i32, %arg1: memref<4x27xbf16, #tpu.memory_space<vmem>>, %arg2: memref<4x1xf32, #tpu.memory_space<vmem>>, %arg3: memref<27x1024xbf16, #tpu.memory_space<vmem>>, %arg4: memref<4x1024xbf16, #tpu.memory_space<vmem>>) attributes {dimension_semantics = [#tpu.dimension_semantics<parallel>], iteration_bounds = array<i64: 2>, scalar_prefetch = 0 : i64, scratch_operands = 0 : i64, tpu.core_type = #tpu.core_type<tc>, window_params = [{pipeline_mode = #tpu.pipeline_mode<synchronous>, transform_indices = @transform_0, window_bounds = array<i64: 4, 27>}, {pipeline_mode = #tpu.pipeline_mode<synchronous>, transform_indices = @transform_1, window_bounds = array<i64: 4, 1>}, {transform_indices = @transform_2, window_bounds = array<i64: 27, 1024>}, {transform_indices = @transform_3, window_bounds = array<i64: 4, 1024>}]} {
    %c0 = arith.constant 0 : index
    %c0_0 = arith.constant 0 : index
    %0 = vector.load %arg1[%c0, %c0_0] : memref<4x27xbf16, #tpu.memory_space<vmem>>, vector<4x27xbf16>
    %c0_1 = arith.constant 0 : index
    %c0_2 = arith.constant 0 : index
    %1 = vector.load %arg3[%c0_1, %c0_2] : memref<27x1024xbf16, #tpu.memory_space<vmem>>, vector<27x1024xbf16>
    %cst = arith.constant dense<0.000000e+00> : vector<4x1024xf32>
    %2 = tpu.matmul %0, %1, %cst {dimension_numbers = #tpu.dot_dimension_numbers<[1], [0], [0], [1], [0, 0, 1, 1], [], []>} : vector<4x27xbf16>, vector<27x1024xbf16>, vector<4x1024xf32> -> vector<4x1024xf32>
    %c0_3 = arith.constant 0 : index
    %c0_4 = arith.constant 0 : index
    %3 = vector.load %arg2[%c0_3, %c0_4] : memref<4x1xf32, #tpu.memory_space<vmem>>, vector<4x1xf32>
    %4 = vector.broadcast %3 : vector<4x1xf32> to vector<4x1024xf32>
    %5 = arith.addf %2, %4 : vector<4x1024xf32>
    %cst_5 = arith.constant 0.000000e+00 : f32
    %6 = vector.broadcast %cst_5 : f32 to vector<4x1024xf32>
    %7 = arith.maximumf %5, %6 : vector<4x1024xf32>
    %8 = arith.truncf %7 : vector<4x1024xf32> to vector<4x1024xbf16>
    %c0_6 = arith.constant 0 : index
    %c0_7 = arith.constant 0 : index
    %9 = vector.load %arg4[%c0_6, %c0_7] : memref<4x1024xbf16, #tpu.memory_space<vmem>>, vector<4x1024xbf16>
    tpu.vector_store %arg4[%c0_6, %c0_7], %8 {strides = array<i32>} : memref<4x1024xbf16, #tpu.memory_space<vmem>>, vector<4x1024xbf16>,
    return
  }
  func.func @transform_0(%arg0: i32) -> (i32, i32) {
    %c0_i32 = arith.constant 0 : i32
    %c0_i32_0 = arith.constant 0 : i32
    %c0_i32_1 = arith.constant 0 : i32
    return %c0_i32, %c0_i32_0 : i32, i32
  }
  func.func @transform_1(%arg0: i32) -> (i32, i32) {
    %c0_i32 = arith.constant 0 : i32
    %c0_i32_0 = arith.constant 0 : i32
    %c0_i32_1 = arith.constant 0 : i32
    return %c0_i32, %c0_i32_0 : i32, i32
  }
  func.func @transform_2(%arg0: i32) -> (i32, i32) {
    %c0_i32 = arith.constant 0 : i32
    %c0_i32_0 = arith.constant 0 : i32
    return %c0_i32, %arg0 : i32, i32
  }
  func.func @transform_3(%arg0: i32) -> (i32, i32) {
    %c0_i32 = arith.constant 0 : i32
    %c0_i32_0 = arith.constant 0 : i32
    return %c0_i32, %arg0 : i32, i32
  }
}

module attributes {stable_mosaic.version = 11 : i64} {
  func.func @_conv_stage_kernel(%arg0: i32, %arg1: memref<4x36xbf16, #tpu.memory_space<vmem>>, %arg2: memref<4x1xf32, #tpu.memory_space<vmem>>, %arg3: memref<36x512xbf16, #tpu.memory_space<vmem>>, %arg4: memref<36x512xbf16, #tpu.memory_space<vmem>>, %arg5: memref<36x512xbf16, #tpu.memory_space<vmem>>, %arg6: memref<36x512xbf16, #tpu.memory_space<vmem>>, %arg7: memref<4x512xbf16, #tpu.memory_space<vmem>>) attributes {dimension_semantics = [#tpu.dimension_semantics<parallel>], iteration_bounds = array<i64: 1>, scalar_prefetch = 0 : i64, scratch_operands = 0 : i64, tpu.core_type = #tpu.core_type<tc>, window_params = [{pipeline_mode = #tpu.pipeline_mode<synchronous>, transform_indices = @transform_0, window_bounds = array<i64: 4, 36>}, {pipeline_mode = #tpu.pipeline_mode<synchronous>, transform_indices = @transform_1, window_bounds = array<i64: 4, 1>}, {transform_indices = @transform_2, window_bounds = array<i64: 36, 512>}, {transform_indices = @transform_3, window_bounds = array<i64: 36, 512>}, {transform_indices = @transform_4, window_bounds = array<i64: 36, 512>}, {transform_indices = @transform_5, window_bounds = array<i64: 36, 512>}, {transform_indices = @transform_6, window_bounds = array<i64: 4, 512>}]} {
    %c0 = arith.constant 0 : index
    %c0_0 = arith.constant 0 : index
    %0 = vector.load %arg1[%c0, %c0_0] : memref<4x36xbf16, #tpu.memory_space<vmem>>, vector<4x36xbf16>
    %c0_1 = arith.constant 0 : index
    %c0_2 = arith.constant 0 : index
    %1 = vector.load %arg3[%c0_1, %c0_2] : memref<36x512xbf16, #tpu.memory_space<vmem>>, vector<36x512xbf16>
    %cst = arith.constant dense<0.000000e+00> : vector<4x512xf32>
    %2 = tpu.matmul %0, %1, %cst {dimension_numbers = #tpu.dot_dimension_numbers<[1], [0], [0], [1], [0, 0, 1, 1], [], []>} : vector<4x36xbf16>, vector<36x512xbf16>, vector<4x512xf32> -> vector<4x512xf32>
    %c0_3 = arith.constant 0 : index
    %c0_4 = arith.constant 0 : index
    %3 = vector.load %arg4[%c0_3, %c0_4] : memref<36x512xbf16, #tpu.memory_space<vmem>>, vector<36x512xbf16>
    %cst_5 = arith.constant dense<0.000000e+00> : vector<4x512xf32>
    %4 = tpu.matmul %0, %3, %cst_5 {dimension_numbers = #tpu.dot_dimension_numbers<[1], [0], [0], [1], [0, 0, 1, 1], [], []>} : vector<4x36xbf16>, vector<36x512xbf16>, vector<4x512xf32> -> vector<4x512xf32>
    %5 = arith.maximumf %2, %4 : vector<4x512xf32>
    %c0_6 = arith.constant 0 : index
    %c0_7 = arith.constant 0 : index
    %6 = vector.load %arg5[%c0_6, %c0_7] : memref<36x512xbf16, #tpu.memory_space<vmem>>, vector<36x512xbf16>
    %cst_8 = arith.constant dense<0.000000e+00> : vector<4x512xf32>
    %7 = tpu.matmul %0, %6, %cst_8 {dimension_numbers = #tpu.dot_dimension_numbers<[1], [0], [0], [1], [0, 0, 1, 1], [], []>} : vector<4x36xbf16>, vector<36x512xbf16>, vector<4x512xf32> -> vector<4x512xf32>
    %8 = arith.maximumf %5, %7 : vector<4x512xf32>
    %c0_9 = arith.constant 0 : index
    %c0_10 = arith.constant 0 : index
    %9 = vector.load %arg6[%c0_9, %c0_10] : memref<36x512xbf16, #tpu.memory_space<vmem>>, vector<36x512xbf16>
    %cst_11 = arith.constant dense<0.000000e+00> : vector<4x512xf32>
    %10 = tpu.matmul %0, %9, %cst_11 {dimension_numbers = #tpu.dot_dimension_numbers<[1], [0], [0], [1], [0, 0, 1, 1], [], []>} : vector<4x36xbf16>, vector<36x512xbf16>, vector<4x512xf32> -> vector<4x512xf32>
    %11 = arith.maximumf %8, %10 : vector<4x512xf32>
    %c0_12 = arith.constant 0 : index
    %c0_13 = arith.constant 0 : index
    %12 = vector.load %arg2[%c0_12, %c0_13] : memref<4x1xf32, #tpu.memory_space<vmem>>, vector<4x1xf32>
    %13 = vector.broadcast %12 : vector<4x1xf32> to vector<4x512xf32>
    %14 = arith.addf %11, %13 : vector<4x512xf32>
    %cst_14 = arith.constant 0.000000e+00 : f32
    %15 = vector.broadcast %cst_14 : f32 to vector<4x512xf32>
    %16 = arith.maximumf %14, %15 : vector<4x512xf32>
    %17 = arith.truncf %16 : vector<4x512xf32> to vector<4x512xbf16>
    %c0_15 = arith.constant 0 : index
    %c0_16 = arith.constant 0 : index
    %18 = vector.load %arg7[%c0_15, %c0_16] : memref<4x512xbf16, #tpu.memory_space<vmem>>, vector<4x512xbf16>
    tpu.vector_store %arg7[%c0_15, %c0_16], %17 {strides = array<i32>} : memref<4x512xbf16, #tpu.memory_space<vmem>>, vector<4x512xbf16>,
    return
  }
  func.func @transform_0(%arg0: i32) -> (i32, i32) {
    %c0_i32 = arith.constant 0 : i32
    %c0_i32_0 = arith.constant 0 : i32
    %c0_i32_1 = arith.constant 0 : i32
    return %c0_i32, %c0_i32_0 : i32, i32
  }
  func.func @transform_1(%arg0: i32) -> (i32, i32) {
    %c0_i32 = arith.constant 0 : i32
    %c0_i32_0 = arith.constant 0 : i32
    %c0_i32_1 = arith.constant 0 : i32
    return %c0_i32, %c0_i32_0 : i32, i32
  }
  func.func @transform_2(%arg0: i32) -> (i32, i32) {
    %c0_i32 = arith.constant 0 : i32
    %c0_i32_0 = arith.constant 0 : i32
    return %c0_i32, %arg0 : i32, i32
  }
  func.func @transform_3(%arg0: i32) -> (i32, i32) {
    %c0_i32 = arith.constant 0 : i32
    %c0_i32_0 = arith.constant 0 : i32
    return %c0_i32, %arg0 : i32, i32
  }
  func.func @transform_4(%arg0: i32) -> (i32, i32) {
    %c0_i32 = arith.constant 0 : i32
    %c0_i32_0 = arith.constant 0 : i32
    return %c0_i32, %arg0 : i32, i32
  }
  func.func @transform_5(%arg0: i32) -> (i32, i32) {
    %c0_i32 = arith.constant 0 : i32
    %c0_i32_0 = arith.constant 0 : i32
    return %c0_i32, %arg0 : i32, i32
  }
  func.func @transform_6(%arg0: i32) -> (i32, i32) {
    %c0_i32 = arith.constant 0 : i32
    %c0_i32_0 = arith.constant 0 : i32
    return %c0_i32, %arg0 : i32, i32
  }
}

module attributes {stable_mosaic.version = 11 : i64} {
  func.func @_conv_stage_kernel(%arg0: i32, %arg1: memref<8x36xbf16, #tpu.memory_space<vmem>>, %arg2: memref<8x1xf32, #tpu.memory_space<vmem>>, %arg3: memref<36x512xbf16, #tpu.memory_space<vmem>>, %arg4: memref<8x512xbf16, #tpu.memory_space<vmem>>) attributes {dimension_semantics = [#tpu.dimension_semantics<parallel>], iteration_bounds = array<i64: 1>, scalar_prefetch = 0 : i64, scratch_operands = 0 : i64, tpu.core_type = #tpu.core_type<tc>, window_params = [{pipeline_mode = #tpu.pipeline_mode<synchronous>, transform_indices = @transform_0, window_bounds = array<i64: 8, 36>}, {pipeline_mode = #tpu.pipeline_mode<synchronous>, transform_indices = @transform_1, window_bounds = array<i64: 8, 1>}, {transform_indices = @transform_2, window_bounds = array<i64: 36, 512>}, {transform_indices = @transform_3, window_bounds = array<i64: 8, 512>}]} {
    %c0 = arith.constant 0 : index
    %c0_0 = arith.constant 0 : index
    %0 = vector.load %arg1[%c0, %c0_0] : memref<8x36xbf16, #tpu.memory_space<vmem>>, vector<8x36xbf16>
    %c0_1 = arith.constant 0 : index
    %c0_2 = arith.constant 0 : index
    %1 = vector.load %arg3[%c0_1, %c0_2] : memref<36x512xbf16, #tpu.memory_space<vmem>>, vector<36x512xbf16>
    %cst = arith.constant dense<0.000000e+00> : vector<8x512xf32>
    %2 = tpu.matmul %0, %1, %cst {dimension_numbers = #tpu.dot_dimension_numbers<[1], [0], [0], [1], [0, 0, 1, 1], [], []>} : vector<8x36xbf16>, vector<36x512xbf16>, vector<8x512xf32> -> vector<8x512xf32>
    %c0_3 = arith.constant 0 : index
    %c0_4 = arith.constant 0 : index
    %3 = vector.load %arg2[%c0_3, %c0_4] : memref<8x1xf32, #tpu.memory_space<vmem>>, vector<8x1xf32>
    %4 = vector.broadcast %3 : vector<8x1xf32> to vector<8x512xf32>
    %5 = arith.addf %2, %4 : vector<8x512xf32>
    %cst_5 = arith.constant 0.000000e+00 : f32
    %6 = vector.broadcast %cst_5 : f32 to vector<8x512xf32>
    %7 = arith.maximumf %5, %6 : vector<8x512xf32>
    %8 = arith.truncf %7 : vector<8x512xf32> to vector<8x512xbf16>
    %c0_6 = arith.constant 0 : index
    %c0_7 = arith.constant 0 : index
    %9 = vector.load %arg4[%c0_6, %c0_7] : memref<8x512xbf16, #tpu.memory_space<vmem>>, vector<8x512xbf16>
    tpu.vector_store %arg4[%c0_6, %c0_7], %8 {strides = array<i32>} : memref<8x512xbf16, #tpu.memory_space<vmem>>, vector<8x512xbf16>,
    return
  }
  func.func @transform_0(%arg0: i32) -> (i32, i32) {
    %c0_i32 = arith.constant 0 : i32
    %c0_i32_0 = arith.constant 0 : i32
    %c0_i32_1 = arith.constant 0 : i32
    return %c0_i32, %c0_i32_0 : i32, i32
  }
  func.func @transform_1(%arg0: i32) -> (i32, i32) {
    %c0_i32 = arith.constant 0 : i32
    %c0_i32_0 = arith.constant 0 : i32
    %c0_i32_1 = arith.constant 0 : i32
    return %c0_i32, %c0_i32_0 : i32, i32
  }
  func.func @transform_2(%arg0: i32) -> (i32, i32) {
    %c0_i32 = arith.constant 0 : i32
    %c0_i32_0 = arith.constant 0 : i32
    return %c0_i32, %arg0 : i32, i32
  }
  func.func @transform_3(%arg0: i32) -> (i32, i32) {
    %c0_i32 = arith.constant 0 : i32
    %c0_i32_0 = arith.constant 0 : i32
    return %c0_i32, %arg0 : i32, i32
  }
}

module attributes {stable_mosaic.version = 11 : i64} {
  func.func @_conv_stage_kernel(%arg0: i32, %arg1: memref<8x72xbf16, #tpu.memory_space<vmem>>, %arg2: memref<8x1xf32, #tpu.memory_space<vmem>>, %arg3: memref<72x128xbf16, #tpu.memory_space<vmem>>, %arg4: memref<72x128xbf16, #tpu.memory_space<vmem>>, %arg5: memref<72x128xbf16, #tpu.memory_space<vmem>>, %arg6: memref<72x128xbf16, #tpu.memory_space<vmem>>, %arg7: memref<8x128xbf16, #tpu.memory_space<vmem>>) attributes {dimension_semantics = [#tpu.dimension_semantics<parallel>], iteration_bounds = array<i64: 1>, scalar_prefetch = 0 : i64, scratch_operands = 0 : i64, tpu.core_type = #tpu.core_type<tc>, window_params = [{pipeline_mode = #tpu.pipeline_mode<synchronous>, transform_indices = @transform_0, window_bounds = array<i64: 8, 72>}, {pipeline_mode = #tpu.pipeline_mode<synchronous>, transform_indices = @transform_1, window_bounds = array<i64: 8, 1>}, {transform_indices = @transform_2, window_bounds = array<i64: 72, 128>}, {transform_indices = @transform_3, window_bounds = array<i64: 72, 128>}, {transform_indices = @transform_4, window_bounds = array<i64: 72, 128>}, {transform_indices = @transform_5, window_bounds = array<i64: 72, 128>}, {transform_indices = @transform_6, window_bounds = array<i64: 8, 128>}]} {
    %c0 = arith.constant 0 : index
    %c0_0 = arith.constant 0 : index
    %0 = vector.load %arg1[%c0, %c0_0] : memref<8x72xbf16, #tpu.memory_space<vmem>>, vector<8x72xbf16>
    %c0_1 = arith.constant 0 : index
    %c0_2 = arith.constant 0 : index
    %1 = vector.load %arg3[%c0_1, %c0_2] : memref<72x128xbf16, #tpu.memory_space<vmem>>, vector<72x128xbf16>
    %cst = arith.constant dense<0.000000e+00> : vector<8x128xf32>
    %2 = tpu.matmul %0, %1, %cst {dimension_numbers = #tpu.dot_dimension_numbers<[1], [0], [0], [1], [0, 0, 1, 1], [], []>} : vector<8x72xbf16>, vector<72x128xbf16>, vector<8x128xf32> -> vector<8x128xf32>
    %c0_3 = arith.constant 0 : index
    %c0_4 = arith.constant 0 : index
    %3 = vector.load %arg4[%c0_3, %c0_4] : memref<72x128xbf16, #tpu.memory_space<vmem>>, vector<72x128xbf16>
    %cst_5 = arith.constant dense<0.000000e+00> : vector<8x128xf32>
    %4 = tpu.matmul %0, %3, %cst_5 {dimension_numbers = #tpu.dot_dimension_numbers<[1], [0], [0], [1], [0, 0, 1, 1], [], []>} : vector<8x72xbf16>, vector<72x128xbf16>, vector<8x128xf32> -> vector<8x128xf32>
    %5 = arith.maximumf %2, %4 : vector<8x128xf32>
    %c0_6 = arith.constant 0 : index
    %c0_7 = arith.constant 0 : index
    %6 = vector.load %arg5[%c0_6, %c0_7] : memref<72x128xbf16, #tpu.memory_space<vmem>>, vector<72x128xbf16>
    %cst_8 = arith.constant dense<0.000000e+00> : vector<8x128xf32>
    %7 = tpu.matmul %0, %6, %cst_8 {dimension_numbers = #tpu.dot_dimension_numbers<[1], [0], [0], [1], [0, 0, 1, 1], [], []>} : vector<8x72xbf16>, vector<72x128xbf16>, vector<8x128xf32> -> vector<8x128xf32>
    %8 = arith.maximumf %5, %7 : vector<8x128xf32>
    %c0_9 = arith.constant 0 : index
    %c0_10 = arith.constant 0 : index
    %9 = vector.load %arg6[%c0_9, %c0_10] : memref<72x128xbf16, #tpu.memory_space<vmem>>, vector<72x128xbf16>
    %cst_11 = arith.constant dense<0.000000e+00> : vector<8x128xf32>
    %10 = tpu.matmul %0, %9, %cst_11 {dimension_numbers = #tpu.dot_dimension_numbers<[1], [0], [0], [1], [0, 0, 1, 1], [], []>} : vector<8x72xbf16>, vector<72x128xbf16>, vector<8x128xf32> -> vector<8x128xf32>
    %11 = arith.maximumf %8, %10 : vector<8x128xf32>
    %c0_12 = arith.constant 0 : index
    %c0_13 = arith.constant 0 : index
    %12 = vector.load %arg2[%c0_12, %c0_13] : memref<8x1xf32, #tpu.memory_space<vmem>>, vector<8x1xf32>
    %13 = vector.broadcast %12 : vector<8x1xf32> to vector<8x128xf32>
    %14 = arith.addf %11, %13 : vector<8x128xf32>
    %cst_14 = arith.constant 0.000000e+00 : f32
    %15 = vector.broadcast %cst_14 : f32 to vector<8x128xf32>
    %16 = arith.maximumf %14, %15 : vector<8x128xf32>
    %17 = arith.truncf %16 : vector<8x128xf32> to vector<8x128xbf16>
    %c0_15 = arith.constant 0 : index
    %c0_16 = arith.constant 0 : index
    %18 = vector.load %arg7[%c0_15, %c0_16] : memref<8x128xbf16, #tpu.memory_space<vmem>>, vector<8x128xbf16>
    tpu.vector_store %arg7[%c0_15, %c0_16], %17 {strides = array<i32>} : memref<8x128xbf16, #tpu.memory_space<vmem>>, vector<8x128xbf16>,
    return
  }
  func.func @transform_0(%arg0: i32) -> (i32, i32) {
    %c0_i32 = arith.constant 0 : i32
    %c0_i32_0 = arith.constant 0 : i32
    %c0_i32_1 = arith.constant 0 : i32
    return %c0_i32, %c0_i32_0 : i32, i32
  }
  func.func @transform_1(%arg0: i32) -> (i32, i32) {
    %c0_i32 = arith.constant 0 : i32
    %c0_i32_0 = arith.constant 0 : i32
    %c0_i32_1 = arith.constant 0 : i32
    return %c0_i32, %c0_i32_0 : i32, i32
  }
  func.func @transform_2(%arg0: i32) -> (i32, i32) {
    %c0_i32 = arith.constant 0 : i32
    %c0_i32_0 = arith.constant 0 : i32
    return %c0_i32, %arg0 : i32, i32
  }
  func.func @transform_3(%arg0: i32) -> (i32, i32) {
    %c0_i32 = arith.constant 0 : i32
    %c0_i32_0 = arith.constant 0 : i32
    return %c0_i32, %arg0 : i32, i32
  }
  func.func @transform_4(%arg0: i32) -> (i32, i32) {
    %c0_i32 = arith.constant 0 : i32
    %c0_i32_0 = arith.constant 0 : i32
    return %c0_i32, %arg0 : i32, i32
  }
  func.func @transform_5(%arg0: i32) -> (i32, i32) {
    %c0_i32 = arith.constant 0 : i32
    %c0_i32_0 = arith.constant 0 : i32
    return %c0_i32, %arg0 : i32, i32
  }
  func.func @transform_6(%arg0: i32) -> (i32, i32) {
    %c0_i32 = arith.constant 0 : i32
    %c0_i32_0 = arith.constant 0 : i32
    return %c0_i32, %arg0 : i32, i32
  }
}

module attributes {stable_mosaic.version = 11 : i64} {
  func.func @_conv_stage_kernel(%arg0: i32, %arg1: memref<16x72xbf16, #tpu.memory_space<vmem>>, %arg2: memref<16x1xf32, #tpu.memory_space<vmem>>, %arg3: memref<72x128xbf16, #tpu.memory_space<vmem>>, %arg4: memref<16x128xbf16, #tpu.memory_space<vmem>>) attributes {dimension_semantics = [#tpu.dimension_semantics<parallel>], iteration_bounds = array<i64: 1>, scalar_prefetch = 0 : i64, scratch_operands = 0 : i64, tpu.core_type = #tpu.core_type<tc>, window_params = [{pipeline_mode = #tpu.pipeline_mode<synchronous>, transform_indices = @transform_0, window_bounds = array<i64: 16, 72>}, {pipeline_mode = #tpu.pipeline_mode<synchronous>, transform_indices = @transform_1, window_bounds = array<i64: 16, 1>}, {transform_indices = @transform_2, window_bounds = array<i64: 72, 128>}, {transform_indices = @transform_3, window_bounds = array<i64: 16, 128>}]} {
    %c0 = arith.constant 0 : index
    %c0_0 = arith.constant 0 : index
    %0 = vector.load %arg1[%c0, %c0_0] : memref<16x72xbf16, #tpu.memory_space<vmem>>, vector<16x72xbf16>
    %c0_1 = arith.constant 0 : index
    %c0_2 = arith.constant 0 : index
    %1 = vector.load %arg3[%c0_1, %c0_2] : memref<72x128xbf16, #tpu.memory_space<vmem>>, vector<72x128xbf16>
    %cst = arith.constant dense<0.000000e+00> : vector<16x128xf32>
    %2 = tpu.matmul %0, %1, %cst {dimension_numbers = #tpu.dot_dimension_numbers<[1], [0], [0], [1], [0, 0, 1, 1], [], []>} : vector<16x72xbf16>, vector<72x128xbf16>, vector<16x128xf32> -> vector<16x128xf32>
    %c0_3 = arith.constant 0 : index
    %c0_4 = arith.constant 0 : index
    %3 = vector.load %arg2[%c0_3, %c0_4] : memref<16x1xf32, #tpu.memory_space<vmem>>, vector<16x1xf32>
    %4 = vector.broadcast %3 : vector<16x1xf32> to vector<16x128xf32>
    %5 = arith.addf %2, %4 : vector<16x128xf32>
    %cst_5 = arith.constant 0.000000e+00 : f32
    %6 = vector.broadcast %cst_5 : f32 to vector<16x128xf32>
    %7 = arith.maximumf %5, %6 : vector<16x128xf32>
    %8 = arith.truncf %7 : vector<16x128xf32> to vector<16x128xbf16>
    %c0_6 = arith.constant 0 : index
    %c0_7 = arith.constant 0 : index
    %9 = vector.load %arg4[%c0_6, %c0_7] : memref<16x128xbf16, #tpu.memory_space<vmem>>, vector<16x128xbf16>
    tpu.vector_store %arg4[%c0_6, %c0_7], %8 {strides = array<i32>} : memref<16x128xbf16, #tpu.memory_space<vmem>>, vector<16x128xbf16>,
    return
  }
  func.func @transform_0(%arg0: i32) -> (i32, i32) {
    %c0_i32 = arith.constant 0 : i32
    %c0_i32_0 = arith.constant 0 : i32
    %c0_i32_1 = arith.constant 0 : i32
    return %c0_i32, %c0_i32_0 : i32, i32
  }
  func.func @transform_1(%arg0: i32) -> (i32, i32) {
    %c0_i32 = arith.constant 0 : i32
    %c0_i32_0 = arith.constant 0 : i32
    %c0_i32_1 = arith.constant 0 : i32
    return %c0_i32, %c0_i32_0 : i32, i32
  }
  func.func @transform_2(%arg0: i32) -> (i32, i32) {
    %c0_i32 = arith.constant 0 : i32
    %c0_i32_0 = arith.constant 0 : i32
    return %c0_i32, %arg0 : i32, i32
  }
  func.func @transform_3(%arg0: i32) -> (i32, i32) {
    %c0_i32 = arith.constant 0 : i32
    %c0_i32_0 = arith.constant 0 : i32
    return %c0_i32, %arg0 : i32, i32
  }
}

module attributes {stable_mosaic.version = 11 : i64} {
  func.func @_conv_stage_kernel(%arg0: i32, %arg1: memref<16x144xbf16, #tpu.memory_space<vmem>>, %arg2: memref<16x1xf32, #tpu.memory_space<vmem>>, %arg3: memref<144x128xbf16, #tpu.memory_space<vmem>>, %arg4: memref<16x128xbf16, #tpu.memory_space<vmem>>) attributes {dimension_semantics = [#tpu.dimension_semantics<parallel>], iteration_bounds = array<i64: 1>, scalar_prefetch = 0 : i64, scratch_operands = 0 : i64, tpu.core_type = #tpu.core_type<tc>, window_params = [{pipeline_mode = #tpu.pipeline_mode<synchronous>, transform_indices = @transform_0, window_bounds = array<i64: 16, 144>}, {pipeline_mode = #tpu.pipeline_mode<synchronous>, transform_indices = @transform_1, window_bounds = array<i64: 16, 1>}, {transform_indices = @transform_2, window_bounds = array<i64: 144, 128>}, {transform_indices = @transform_3, window_bounds = array<i64: 16, 128>}]} {
    %c0 = arith.constant 0 : index
    %c0_0 = arith.constant 0 : index
    %0 = vector.load %arg1[%c0, %c0_0] : memref<16x144xbf16, #tpu.memory_space<vmem>>, vector<16x144xbf16>
    %c0_1 = arith.constant 0 : index
    %c0_2 = arith.constant 0 : index
    %1 = vector.load %arg3[%c0_1, %c0_2] : memref<144x128xbf16, #tpu.memory_space<vmem>>, vector<144x128xbf16>
    %cst = arith.constant dense<0.000000e+00> : vector<16x128xf32>
    %2 = tpu.matmul %0, %1, %cst {dimension_numbers = #tpu.dot_dimension_numbers<[1], [0], [0], [1], [0, 0, 1, 1], [], []>} : vector<16x144xbf16>, vector<144x128xbf16>, vector<16x128xf32> -> vector<16x128xf32>
    %c0_3 = arith.constant 0 : index
    %c0_4 = arith.constant 0 : index
    %3 = vector.load %arg2[%c0_3, %c0_4] : memref<16x1xf32, #tpu.memory_space<vmem>>, vector<16x1xf32>
    %4 = vector.broadcast %3 : vector<16x1xf32> to vector<16x128xf32>
    %5 = arith.addf %2, %4 : vector<16x128xf32>
    %cst_5 = arith.constant 0.000000e+00 : f32
    %6 = vector.broadcast %cst_5 : f32 to vector<16x128xf32>
    %7 = arith.maximumf %5, %6 : vector<16x128xf32>
    %8 = arith.truncf %7 : vector<16x128xf32> to vector<16x128xbf16>
    %c0_6 = arith.constant 0 : index
    %c0_7 = arith.constant 0 : index
    %9 = vector.load %arg4[%c0_6, %c0_7] : memref<16x128xbf16, #tpu.memory_space<vmem>>, vector<16x128xbf16>
    tpu.vector_store %arg4[%c0_6, %c0_7], %8 {strides = array<i32>} : memref<16x128xbf16, #tpu.memory_space<vmem>>, vector<16x128xbf16>,
    return
  }
  func.func @transform_0(%arg0: i32) -> (i32, i32) {
    %c0_i32 = arith.constant 0 : i32
    %c0_i32_0 = arith.constant 0 : i32
    %c0_i32_1 = arith.constant 0 : i32
    return %c0_i32, %c0_i32_0 : i32, i32
  }
  func.func @transform_1(%arg0: i32) -> (i32, i32) {
    %c0_i32 = arith.constant 0 : i32
    %c0_i32_0 = arith.constant 0 : i32
    %c0_i32_1 = arith.constant 0 : i32
    return %c0_i32, %c0_i32_0 : i32, i32
  }
  func.func @transform_2(%arg0: i32) -> (i32, i32) {
    %c0_i32 = arith.constant 0 : i32
    %c0_i32_0 = arith.constant 0 : i32
    return %c0_i32, %arg0 : i32, i32
  }
  func.func @transform_3(%arg0: i32) -> (i32, i32) {
    %c0_i32 = arith.constant 0 : i32
    %c0_i32_0 = arith.constant 0 : i32
    return %c0_i32, %arg0 : i32, i32
  }
}

module attributes {stable_mosaic.version = 11 : i64} {
  func.func @_conv_stage_kernel(%arg0: i32, %arg1: memref<16x144xbf16, #tpu.memory_space<vmem>>, %arg2: memref<16x1xf32, #tpu.memory_space<vmem>>, %arg3: memref<144x32xbf16, #tpu.memory_space<vmem>>, %arg4: memref<144x32xbf16, #tpu.memory_space<vmem>>, %arg5: memref<144x32xbf16, #tpu.memory_space<vmem>>, %arg6: memref<144x32xbf16, #tpu.memory_space<vmem>>, %arg7: memref<16x32xbf16, #tpu.memory_space<vmem>>) attributes {dimension_semantics = [#tpu.dimension_semantics<parallel>], iteration_bounds = array<i64: 1>, scalar_prefetch = 0 : i64, scratch_operands = 0 : i64, tpu.core_type = #tpu.core_type<tc>, window_params = [{pipeline_mode = #tpu.pipeline_mode<synchronous>, transform_indices = @transform_0, window_bounds = array<i64: 16, 144>}, {pipeline_mode = #tpu.pipeline_mode<synchronous>, transform_indices = @transform_1, window_bounds = array<i64: 16, 1>}, {transform_indices = @transform_2, window_bounds = array<i64: 144, 32>}, {transform_indices = @transform_3, window_bounds = array<i64: 144, 32>}, {transform_indices = @transform_4, window_bounds = array<i64: 144, 32>}, {transform_indices = @transform_5, window_bounds = array<i64: 144, 32>}, {transform_indices = @transform_6, window_bounds = array<i64: 16, 32>}]} {
    %c0 = arith.constant 0 : index
    %c0_0 = arith.constant 0 : index
    %0 = vector.load %arg1[%c0, %c0_0] : memref<16x144xbf16, #tpu.memory_space<vmem>>, vector<16x144xbf16>
    %c0_1 = arith.constant 0 : index
    %c0_2 = arith.constant 0 : index
    %1 = vector.load %arg3[%c0_1, %c0_2] : memref<144x32xbf16, #tpu.memory_space<vmem>>, vector<144x32xbf16>
    %cst = arith.constant dense<0.000000e+00> : vector<16x32xf32>
    %2 = tpu.matmul %0, %1, %cst {dimension_numbers = #tpu.dot_dimension_numbers<[1], [0], [0], [1], [0, 0, 1, 1], [], []>} : vector<16x144xbf16>, vector<144x32xbf16>, vector<16x32xf32> -> vector<16x32xf32>
    %c0_3 = arith.constant 0 : index
    %c0_4 = arith.constant 0 : index
    %3 = vector.load %arg4[%c0_3, %c0_4] : memref<144x32xbf16, #tpu.memory_space<vmem>>, vector<144x32xbf16>
    %cst_5 = arith.constant dense<0.000000e+00> : vector<16x32xf32>
    %4 = tpu.matmul %0, %3, %cst_5 {dimension_numbers = #tpu.dot_dimension_numbers<[1], [0], [0], [1], [0, 0, 1, 1], [], []>} : vector<16x144xbf16>, vector<144x32xbf16>, vector<16x32xf32> -> vector<16x32xf32>
    %5 = arith.maximumf %2, %4 : vector<16x32xf32>
    %c0_6 = arith.constant 0 : index
    %c0_7 = arith.constant 0 : index
    %6 = vector.load %arg5[%c0_6, %c0_7] : memref<144x32xbf16, #tpu.memory_space<vmem>>, vector<144x32xbf16>
    %cst_8 = arith.constant dense<0.000000e+00> : vector<16x32xf32>
    %7 = tpu.matmul %0, %6, %cst_8 {dimension_numbers = #tpu.dot_dimension_numbers<[1], [0], [0], [1], [0, 0, 1, 1], [], []>} : vector<16x144xbf16>, vector<144x32xbf16>, vector<16x32xf32> -> vector<16x32xf32>
    %8 = arith.maximumf %5, %7 : vector<16x32xf32>
    %c0_9 = arith.constant 0 : index
    %c0_10 = arith.constant 0 : index
    %9 = vector.load %arg6[%c0_9, %c0_10] : memref<144x32xbf16, #tpu.memory_space<vmem>>, vector<144x32xbf16>
    %cst_11 = arith.constant dense<0.000000e+00> : vector<16x32xf32>
    %10 = tpu.matmul %0, %9, %cst_11 {dimension_numbers = #tpu.dot_dimension_numbers<[1], [0], [0], [1], [0, 0, 1, 1], [], []>} : vector<16x144xbf16>, vector<144x32xbf16>, vector<16x32xf32> -> vector<16x32xf32>
    %11 = arith.maximumf %8, %10 : vector<16x32xf32>
    %c0_12 = arith.constant 0 : index
    %c0_13 = arith.constant 0 : index
    %12 = vector.load %arg2[%c0_12, %c0_13] : memref<16x1xf32, #tpu.memory_space<vmem>>, vector<16x1xf32>
    %13 = vector.broadcast %12 : vector<16x1xf32> to vector<16x32xf32>
    %14 = arith.addf %11, %13 : vector<16x32xf32>
    %cst_14 = arith.constant 0.000000e+00 : f32
    %15 = vector.broadcast %cst_14 : f32 to vector<16x32xf32>
    %16 = arith.maximumf %14, %15 : vector<16x32xf32>
    %17 = arith.truncf %16 : vector<16x32xf32> to vector<16x32xbf16>
    %c0_15 = arith.constant 0 : index
    %c0_16 = arith.constant 0 : index
    %18 = vector.load %arg7[%c0_15, %c0_16] : memref<16x32xbf16, #tpu.memory_space<vmem>>, vector<16x32xbf16>
    tpu.vector_store %arg7[%c0_15, %c0_16], %17 {strides = array<i32>} : memref<16x32xbf16, #tpu.memory_space<vmem>>, vector<16x32xbf16>,
    return
  }
  func.func @transform_0(%arg0: i32) -> (i32, i32) {
    %c0_i32 = arith.constant 0 : i32
    %c0_i32_0 = arith.constant 0 : i32
    %c0_i32_1 = arith.constant 0 : i32
    return %c0_i32, %c0_i32_0 : i32, i32
  }
  func.func @transform_1(%arg0: i32) -> (i32, i32) {
    %c0_i32 = arith.constant 0 : i32
    %c0_i32_0 = arith.constant 0 : i32
    %c0_i32_1 = arith.constant 0 : i32
    return %c0_i32, %c0_i32_0 : i32, i32
  }
  func.func @transform_2(%arg0: i32) -> (i32, i32) {
    %c0_i32 = arith.constant 0 : i32
    %c0_i32_0 = arith.constant 0 : i32
    return %c0_i32, %arg0 : i32, i32
  }
  func.func @transform_3(%arg0: i32) -> (i32, i32) {
    %c0_i32 = arith.constant 0 : i32
    %c0_i32_0 = arith.constant 0 : i32
    return %c0_i32, %arg0 : i32, i32
  }
  func.func @transform_4(%arg0: i32) -> (i32, i32) {
    %c0_i32 = arith.constant 0 : i32
    %c0_i32_0 = arith.constant 0 : i32
    return %c0_i32, %arg0 : i32, i32
  }
  func.func @transform_5(%arg0: i32) -> (i32, i32) {
    %c0_i32 = arith.constant 0 : i32
    %c0_i32_0 = arith.constant 0 : i32
    return %c0_i32, %arg0 : i32, i32
  }
  func.func @transform_6(%arg0: i32) -> (i32, i32) {
    %c0_i32 = arith.constant 0 : i32
    %c0_i32_0 = arith.constant 0 : i32
    return %c0_i32, %arg0 : i32, i32
  }
}

module attributes {stable_mosaic.version = 11 : i64} {
  func.func @_conv_stage_kernel(%arg0: i32, %arg1: memref<32x144xbf16, #tpu.memory_space<vmem>>, %arg2: memref<32x1xf32, #tpu.memory_space<vmem>>, %arg3: memref<144x32xbf16, #tpu.memory_space<vmem>>, %arg4: memref<32x32xbf16, #tpu.memory_space<vmem>>) attributes {dimension_semantics = [#tpu.dimension_semantics<parallel>], iteration_bounds = array<i64: 1>, scalar_prefetch = 0 : i64, scratch_operands = 0 : i64, tpu.core_type = #tpu.core_type<tc>, window_params = [{pipeline_mode = #tpu.pipeline_mode<synchronous>, transform_indices = @transform_0, window_bounds = array<i64: 32, 144>}, {pipeline_mode = #tpu.pipeline_mode<synchronous>, transform_indices = @transform_1, window_bounds = array<i64: 32, 1>}, {transform_indices = @transform_2, window_bounds = array<i64: 144, 32>}, {transform_indices = @transform_3, window_bounds = array<i64: 32, 32>}]} {
    %c0 = arith.constant 0 : index
    %c0_0 = arith.constant 0 : index
    %0 = vector.load %arg1[%c0, %c0_0] : memref<32x144xbf16, #tpu.memory_space<vmem>>, vector<32x144xbf16>
    %c0_1 = arith.constant 0 : index
    %c0_2 = arith.constant 0 : index
    %1 = vector.load %arg3[%c0_1, %c0_2] : memref<144x32xbf16, #tpu.memory_space<vmem>>, vector<144x32xbf16>
    %cst = arith.constant dense<0.000000e+00> : vector<32x32xf32>
    %2 = tpu.matmul %0, %1, %cst {dimension_numbers = #tpu.dot_dimension_numbers<[1], [0], [0], [1], [0, 0, 1, 1], [], []>} : vector<32x144xbf16>, vector<144x32xbf16>, vector<32x32xf32> -> vector<32x32xf32>
    %c0_3 = arith.constant 0 : index
    %c0_4 = arith.constant 0 : index
    %3 = vector.load %arg2[%c0_3, %c0_4] : memref<32x1xf32, #tpu.memory_space<vmem>>, vector<32x1xf32>
    %4 = vector.broadcast %3 : vector<32x1xf32> to vector<32x32xf32>
    %5 = arith.addf %2, %4 : vector<32x32xf32>
    %cst_5 = arith.constant 0.000000e+00 : f32
    %6 = vector.broadcast %cst_5 : f32 to vector<32x32xf32>
    %7 = arith.maximumf %5, %6 : vector<32x32xf32>
    %8 = arith.truncf %7 : vector<32x32xf32> to vector<32x32xbf16>
    %c0_6 = arith.constant 0 : index
    %c0_7 = arith.constant 0 : index
    %9 = vector.load %arg4[%c0_6, %c0_7] : memref<32x32xbf16, #tpu.memory_space<vmem>>, vector<32x32xbf16>
    tpu.vector_store %arg4[%c0_6, %c0_7], %8 {strides = array<i32>} : memref<32x32xbf16, #tpu.memory_space<vmem>>, vector<32x32xbf16>,
    return
  }
  func.func @transform_0(%arg0: i32) -> (i32, i32) {
    %c0_i32 = arith.constant 0 : i32
    %c0_i32_0 = arith.constant 0 : i32
    %c0_i32_1 = arith.constant 0 : i32
    return %c0_i32, %c0_i32_0 : i32, i32
  }
  func.func @transform_1(%arg0: i32) -> (i32, i32) {
    %c0_i32 = arith.constant 0 : i32
    %c0_i32_0 = arith.constant 0 : i32
    %c0_i32_1 = arith.constant 0 : i32
    return %c0_i32, %c0_i32_0 : i32, i32
  }
  func.func @transform_2(%arg0: i32) -> (i32, i32) {
    %c0_i32 = arith.constant 0 : i32
    %c0_i32_0 = arith.constant 0 : i32
    return %c0_i32, %arg0 : i32, i32
  }
  func.func @transform_3(%arg0: i32) -> (i32, i32) {
    %c0_i32 = arith.constant 0 : i32
    %c0_i32_0 = arith.constant 0 : i32
    return %c0_i32, %arg0 : i32, i32
  }
}

module attributes {stable_mosaic.version = 11 : i64} {
  func.func @_conv_stage_kernel(%arg0: i32, %arg1: memref<32x288xbf16, #tpu.memory_space<vmem>>, %arg2: memref<32x1xf32, #tpu.memory_space<vmem>>, %arg3: memref<288x32xbf16, #tpu.memory_space<vmem>>, %arg4: memref<32x32xbf16, #tpu.memory_space<vmem>>) attributes {dimension_semantics = [#tpu.dimension_semantics<parallel>], iteration_bounds = array<i64: 1>, scalar_prefetch = 0 : i64, scratch_operands = 0 : i64, tpu.core_type = #tpu.core_type<tc>, window_params = [{pipeline_mode = #tpu.pipeline_mode<synchronous>, transform_indices = @transform_0, window_bounds = array<i64: 32, 288>}, {pipeline_mode = #tpu.pipeline_mode<synchronous>, transform_indices = @transform_1, window_bounds = array<i64: 32, 1>}, {transform_indices = @transform_2, window_bounds = array<i64: 288, 32>}, {transform_indices = @transform_3, window_bounds = array<i64: 32, 32>}]} {
    %c0 = arith.constant 0 : index
    %c0_0 = arith.constant 0 : index
    %0 = vector.load %arg1[%c0, %c0_0] : memref<32x288xbf16, #tpu.memory_space<vmem>>, vector<32x288xbf16>
    %c0_1 = arith.constant 0 : index
    %c0_2 = arith.constant 0 : index
    %1 = vector.load %arg3[%c0_1, %c0_2] : memref<288x32xbf16, #tpu.memory_space<vmem>>, vector<288x32xbf16>
    %cst = arith.constant dense<0.000000e+00> : vector<32x32xf32>
    %2 = tpu.matmul %0, %1, %cst {dimension_numbers = #tpu.dot_dimension_numbers<[1], [0], [0], [1], [0, 0, 1, 1], [], []>} : vector<32x288xbf16>, vector<288x32xbf16>, vector<32x32xf32> -> vector<32x32xf32>
    %c0_3 = arith.constant 0 : index
    %c0_4 = arith.constant 0 : index
    %3 = vector.load %arg2[%c0_3, %c0_4] : memref<32x1xf32, #tpu.memory_space<vmem>>, vector<32x1xf32>
    %4 = vector.broadcast %3 : vector<32x1xf32> to vector<32x32xf32>
    %5 = arith.addf %2, %4 : vector<32x32xf32>
    %cst_5 = arith.constant 0.000000e+00 : f32
    %6 = vector.broadcast %cst_5 : f32 to vector<32x32xf32>
    %7 = arith.maximumf %5, %6 : vector<32x32xf32>
    %8 = arith.truncf %7 : vector<32x32xf32> to vector<32x32xbf16>
    %c0_6 = arith.constant 0 : index
    %c0_7 = arith.constant 0 : index
    %9 = vector.load %arg4[%c0_6, %c0_7] : memref<32x32xbf16, #tpu.memory_space<vmem>>, vector<32x32xbf16>
    tpu.vector_store %arg4[%c0_6, %c0_7], %8 {strides = array<i32>} : memref<32x32xbf16, #tpu.memory_space<vmem>>, vector<32x32xbf16>,
    return
  }
  func.func @transform_0(%arg0: i32) -> (i32, i32) {
    %c0_i32 = arith.constant 0 : i32
    %c0_i32_0 = arith.constant 0 : i32
    %c0_i32_1 = arith.constant 0 : i32
    return %c0_i32, %c0_i32_0 : i32, i32
  }
  func.func @transform_1(%arg0: i32) -> (i32, i32) {
    %c0_i32 = arith.constant 0 : i32
    %c0_i32_0 = arith.constant 0 : i32
    %c0_i32_1 = arith.constant 0 : i32
    return %c0_i32, %c0_i32_0 : i32, i32
  }
  func.func @transform_2(%arg0: i32) -> (i32, i32) {
    %c0_i32 = arith.constant 0 : i32
    %c0_i32_0 = arith.constant 0 : i32
    return %c0_i32, %arg0 : i32, i32
  }
  func.func @transform_3(%arg0: i32) -> (i32, i32) {
    %c0_i32 = arith.constant 0 : i32
    %c0_i32_0 = arith.constant 0 : i32
    return %c0_i32, %arg0 : i32, i32
  }
}

module attributes {stable_mosaic.version = 11 : i64} {
  func.func @_conv_stage_kernel(%arg0: i32, %arg1: memref<32x288xbf16, #tpu.memory_space<vmem>>, %arg2: memref<32x1xf32, #tpu.memory_space<vmem>>, %arg3: memref<288x8xbf16, #tpu.memory_space<vmem>>, %arg4: memref<288x8xbf16, #tpu.memory_space<vmem>>, %arg5: memref<288x8xbf16, #tpu.memory_space<vmem>>, %arg6: memref<288x8xbf16, #tpu.memory_space<vmem>>, %arg7: memref<32x8xbf16, #tpu.memory_space<vmem>>) attributes {dimension_semantics = [#tpu.dimension_semantics<parallel>], iteration_bounds = array<i64: 1>, scalar_prefetch = 0 : i64, scratch_operands = 0 : i64, tpu.core_type = #tpu.core_type<tc>, window_params = [{pipeline_mode = #tpu.pipeline_mode<synchronous>, transform_indices = @transform_0, window_bounds = array<i64: 32, 288>}, {pipeline_mode = #tpu.pipeline_mode<synchronous>, transform_indices = @transform_1, window_bounds = array<i64: 32, 1>}, {transform_indices = @transform_2, window_bounds = array<i64: 288, 8>}, {transform_indices = @transform_3, window_bounds = array<i64: 288, 8>}, {transform_indices = @transform_4, window_bounds = array<i64: 288, 8>}, {transform_indices = @transform_5, window_bounds = array<i64: 288, 8>}, {transform_indices = @transform_6, window_bounds = array<i64: 32, 8>}]} {
    %c0 = arith.constant 0 : index
    %c0_0 = arith.constant 0 : index
    %0 = vector.load %arg1[%c0, %c0_0] : memref<32x288xbf16, #tpu.memory_space<vmem>>, vector<32x288xbf16>
    %c0_1 = arith.constant 0 : index
    %c0_2 = arith.constant 0 : index
    %1 = vector.load %arg3[%c0_1, %c0_2] : memref<288x8xbf16, #tpu.memory_space<vmem>>, vector<288x8xbf16>
    %cst = arith.constant dense<0.000000e+00> : vector<32x8xf32>
    %2 = tpu.matmul %0, %1, %cst {dimension_numbers = #tpu.dot_dimension_numbers<[1], [0], [0], [1], [0, 0, 1, 1], [], []>} : vector<32x288xbf16>, vector<288x8xbf16>, vector<32x8xf32> -> vector<32x8xf32>
    %c0_3 = arith.constant 0 : index
    %c0_4 = arith.constant 0 : index
    %3 = vector.load %arg4[%c0_3, %c0_4] : memref<288x8xbf16, #tpu.memory_space<vmem>>, vector<288x8xbf16>
    %cst_5 = arith.constant dense<0.000000e+00> : vector<32x8xf32>
    %4 = tpu.matmul %0, %3, %cst_5 {dimension_numbers = #tpu.dot_dimension_numbers<[1], [0], [0], [1], [0, 0, 1, 1], [], []>} : vector<32x288xbf16>, vector<288x8xbf16>, vector<32x8xf32> -> vector<32x8xf32>
    %5 = arith.maximumf %2, %4 : vector<32x8xf32>
    %c0_6 = arith.constant 0 : index
    %c0_7 = arith.constant 0 : index
    %6 = vector.load %arg5[%c0_6, %c0_7] : memref<288x8xbf16, #tpu.memory_space<vmem>>, vector<288x8xbf16>
    %cst_8 = arith.constant dense<0.000000e+00> : vector<32x8xf32>
    %7 = tpu.matmul %0, %6, %cst_8 {dimension_numbers = #tpu.dot_dimension_numbers<[1], [0], [0], [1], [0, 0, 1, 1], [], []>} : vector<32x288xbf16>, vector<288x8xbf16>, vector<32x8xf32> -> vector<32x8xf32>
    %8 = arith.maximumf %5, %7 : vector<32x8xf32>
    %c0_9 = arith.constant 0 : index
    %c0_10 = arith.constant 0 : index
    %9 = vector.load %arg6[%c0_9, %c0_10] : memref<288x8xbf16, #tpu.memory_space<vmem>>, vector<288x8xbf16>
    %cst_11 = arith.constant dense<0.000000e+00> : vector<32x8xf32>
    %10 = tpu.matmul %0, %9, %cst_11 {dimension_numbers = #tpu.dot_dimension_numbers<[1], [0], [0], [1], [0, 0, 1, 1], [], []>} : vector<32x288xbf16>, vector<288x8xbf16>, vector<32x8xf32> -> vector<32x8xf32>
    %11 = arith.maximumf %8, %10 : vector<32x8xf32>
    %c0_12 = arith.constant 0 : index
    %c0_13 = arith.constant 0 : index
    %12 = vector.load %arg2[%c0_12, %c0_13] : memref<32x1xf32, #tpu.memory_space<vmem>>, vector<32x1xf32>
    %13 = vector.broadcast %12 : vector<32x1xf32> to vector<32x8xf32>
    %14 = arith.addf %11, %13 : vector<32x8xf32>
    %cst_14 = arith.constant 0.000000e+00 : f32
    %15 = vector.broadcast %cst_14 : f32 to vector<32x8xf32>
    %16 = arith.maximumf %14, %15 : vector<32x8xf32>
    %17 = arith.truncf %16 : vector<32x8xf32> to vector<32x8xbf16>
    %c0_15 = arith.constant 0 : index
    %c0_16 = arith.constant 0 : index
    %18 = vector.load %arg7[%c0_15, %c0_16] : memref<32x8xbf16, #tpu.memory_space<vmem>>, vector<32x8xbf16>
    tpu.vector_store %arg7[%c0_15, %c0_16], %17 {strides = array<i32>} : memref<32x8xbf16, #tpu.memory_space<vmem>>, vector<32x8xbf16>,
    return
  }
  func.func @transform_0(%arg0: i32) -> (i32, i32) {
    %c0_i32 = arith.constant 0 : i32
    %c0_i32_0 = arith.constant 0 : i32
    %c0_i32_1 = arith.constant 0 : i32
    return %c0_i32, %c0_i32_0 : i32, i32
  }
  func.func @transform_1(%arg0: i32) -> (i32, i32) {
    %c0_i32 = arith.constant 0 : i32
    %c0_i32_0 = arith.constant 0 : i32
    %c0_i32_1 = arith.constant 0 : i32
    return %c0_i32, %c0_i32_0 : i32, i32
  }
  func.func @transform_2(%arg0: i32) -> (i32, i32) {
    %c0_i32 = arith.constant 0 : i32
    %c0_i32_0 = arith.constant 0 : i32
    return %c0_i32, %arg0 : i32, i32
  }
  func.func @transform_3(%arg0: i32) -> (i32, i32) {
    %c0_i32 = arith.constant 0 : i32
    %c0_i32_0 = arith.constant 0 : i32
    return %c0_i32, %arg0 : i32, i32
  }
  func.func @transform_4(%arg0: i32) -> (i32, i32) {
    %c0_i32 = arith.constant 0 : i32
    %c0_i32_0 = arith.constant 0 : i32
    return %c0_i32, %arg0 : i32, i32
  }
  func.func @transform_5(%arg0: i32) -> (i32, i32) {
    %c0_i32 = arith.constant 0 : i32
    %c0_i32_0 = arith.constant 0 : i32
    return %c0_i32, %arg0 : i32, i32
  }
  func.func @transform_6(%arg0: i32) -> (i32, i32) {
    %c0_i32 = arith.constant 0 : i32
    %c0_i32_0 = arith.constant 0 : i32
    return %c0_i32, %arg0 : i32, i32
  }
}

module attributes {stable_mosaic.version = 11 : i64} {
  func.func @_conv_stage_kernel(%arg0: i32, %arg1: memref<32x288xbf16, #tpu.memory_space<vmem>>, %arg2: memref<32x1xf32, #tpu.memory_space<vmem>>, %arg3: memref<288x8xbf16, #tpu.memory_space<vmem>>, %arg4: memref<32x8xbf16, #tpu.memory_space<vmem>>) attributes {dimension_semantics = [#tpu.dimension_semantics<parallel>], iteration_bounds = array<i64: 1>, scalar_prefetch = 0 : i64, scratch_operands = 0 : i64, tpu.core_type = #tpu.core_type<tc>, window_params = [{pipeline_mode = #tpu.pipeline_mode<synchronous>, transform_indices = @transform_0, window_bounds = array<i64: 32, 288>}, {pipeline_mode = #tpu.pipeline_mode<synchronous>, transform_indices = @transform_1, window_bounds = array<i64: 32, 1>}, {transform_indices = @transform_2, window_bounds = array<i64: 288, 8>}, {transform_indices = @transform_3, window_bounds = array<i64: 32, 8>}]} {
    %c0 = arith.constant 0 : index
    %c0_0 = arith.constant 0 : index
    %0 = vector.load %arg1[%c0, %c0_0] : memref<32x288xbf16, #tpu.memory_space<vmem>>, vector<32x288xbf16>
    %c0_1 = arith.constant 0 : index
    %c0_2 = arith.constant 0 : index
    %1 = vector.load %arg3[%c0_1, %c0_2] : memref<288x8xbf16, #tpu.memory_space<vmem>>, vector<288x8xbf16>
    %cst = arith.constant dense<0.000000e+00> : vector<32x8xf32>
    %2 = tpu.matmul %0, %1, %cst {dimension_numbers = #tpu.dot_dimension_numbers<[1], [0], [0], [1], [0, 0, 1, 1], [], []>} : vector<32x288xbf16>, vector<288x8xbf16>, vector<32x8xf32> -> vector<32x8xf32>
    %c0_3 = arith.constant 0 : index
    %c0_4 = arith.constant 0 : index
    %3 = vector.load %arg2[%c0_3, %c0_4] : memref<32x1xf32, #tpu.memory_space<vmem>>, vector<32x1xf32>
    %4 = vector.broadcast %3 : vector<32x1xf32> to vector<32x8xf32>
    %5 = arith.addf %2, %4 : vector<32x8xf32>
    %cst_5 = arith.constant 0.000000e+00 : f32
    %6 = vector.broadcast %cst_5 : f32 to vector<32x8xf32>
    %7 = arith.maximumf %5, %6 : vector<32x8xf32>
    %8 = arith.truncf %7 : vector<32x8xf32> to vector<32x8xbf16>
    %c0_6 = arith.constant 0 : index
    %c0_7 = arith.constant 0 : index
    %9 = vector.load %arg4[%c0_6, %c0_7] : memref<32x8xbf16, #tpu.memory_space<vmem>>, vector<32x8xbf16>
    tpu.vector_store %arg4[%c0_6, %c0_7], %8 {strides = array<i32>} : memref<32x8xbf16, #tpu.memory_space<vmem>>, vector<32x8xbf16>,
    return
  }
  func.func @transform_0(%arg0: i32) -> (i32, i32) {
    %c0_i32 = arith.constant 0 : i32
    %c0_i32_0 = arith.constant 0 : i32
    %c0_i32_1 = arith.constant 0 : i32
    return %c0_i32, %c0_i32_0 : i32, i32
  }
  func.func @transform_1(%arg0: i32) -> (i32, i32) {
    %c0_i32 = arith.constant 0 : i32
    %c0_i32_0 = arith.constant 0 : i32
    %c0_i32_1 = arith.constant 0 : i32
    return %c0_i32, %c0_i32_0 : i32, i32
  }
  func.func @transform_2(%arg0: i32) -> (i32, i32) {
    %c0_i32 = arith.constant 0 : i32
    %c0_i32_0 = arith.constant 0 : i32
    return %c0_i32, %arg0 : i32, i32
  }
  func.func @transform_3(%arg0: i32) -> (i32, i32) {
    %c0_i32 = arith.constant 0 : i32
    %c0_i32_0 = arith.constant 0 : i32
    return %c0_i32, %arg0 : i32, i32
  }
}

module attributes {stable_mosaic.version = 11 : i64} {
  func.func @_conv_stage_kernel(%arg0: i32, %arg1: memref<32x288xbf16, #tpu.memory_space<vmem>>, %arg2: memref<32x1xf32, #tpu.memory_space<vmem>>, %arg3: memref<288x2xbf16, #tpu.memory_space<vmem>>, %arg4: memref<288x2xbf16, #tpu.memory_space<vmem>>, %arg5: memref<288x2xbf16, #tpu.memory_space<vmem>>, %arg6: memref<288x2xbf16, #tpu.memory_space<vmem>>, %arg7: memref<32x2xbf16, #tpu.memory_space<vmem>>) attributes {dimension_semantics = [#tpu.dimension_semantics<parallel>], iteration_bounds = array<i64: 1>, scalar_prefetch = 0 : i64, scratch_operands = 0 : i64, tpu.core_type = #tpu.core_type<tc>, window_params = [{pipeline_mode = #tpu.pipeline_mode<synchronous>, transform_indices = @transform_0, window_bounds = array<i64: 32, 288>}, {pipeline_mode = #tpu.pipeline_mode<synchronous>, transform_indices = @transform_1, window_bounds = array<i64: 32, 1>}, {transform_indices = @transform_2, window_bounds = array<i64: 288, 2>}, {transform_indices = @transform_3, window_bounds = array<i64: 288, 2>}, {transform_indices = @transform_4, window_bounds = array<i64: 288, 2>}, {transform_indices = @transform_5, window_bounds = array<i64: 288, 2>}, {transform_indices = @transform_6, window_bounds = array<i64: 32, 2>}]} {
    %c0 = arith.constant 0 : index
    %c0_0 = arith.constant 0 : index
    %0 = vector.load %arg1[%c0, %c0_0] : memref<32x288xbf16, #tpu.memory_space<vmem>>, vector<32x288xbf16>
    %c0_1 = arith.constant 0 : index
    %c0_2 = arith.constant 0 : index
    %1 = vector.load %arg3[%c0_1, %c0_2] : memref<288x2xbf16, #tpu.memory_space<vmem>>, vector<288x2xbf16>
    %cst = arith.constant dense<0.000000e+00> : vector<32x2xf32>
    %2 = tpu.matmul %0, %1, %cst {dimension_numbers = #tpu.dot_dimension_numbers<[1], [0], [0], [1], [0, 0, 1, 1], [], []>} : vector<32x288xbf16>, vector<288x2xbf16>, vector<32x2xf32> -> vector<32x2xf32>
    %c0_3 = arith.constant 0 : index
    %c0_4 = arith.constant 0 : index
    %3 = vector.load %arg4[%c0_3, %c0_4] : memref<288x2xbf16, #tpu.memory_space<vmem>>, vector<288x2xbf16>
    %cst_5 = arith.constant dense<0.000000e+00> : vector<32x2xf32>
    %4 = tpu.matmul %0, %3, %cst_5 {dimension_numbers = #tpu.dot_dimension_numbers<[1], [0], [0], [1], [0, 0, 1, 1], [], []>} : vector<32x288xbf16>, vector<288x2xbf16>, vector<32x2xf32> -> vector<32x2xf32>
    %5 = arith.maximumf %2, %4 : vector<32x2xf32>
    %c0_6 = arith.constant 0 : index
    %c0_7 = arith.constant 0 : index
    %6 = vector.load %arg5[%c0_6, %c0_7] : memref<288x2xbf16, #tpu.memory_space<vmem>>, vector<288x2xbf16>
    %cst_8 = arith.constant dense<0.000000e+00> : vector<32x2xf32>
    %7 = tpu.matmul %0, %6, %cst_8 {dimension_numbers = #tpu.dot_dimension_numbers<[1], [0], [0], [1], [0, 0, 1, 1], [], []>} : vector<32x288xbf16>, vector<288x2xbf16>, vector<32x2xf32> -> vector<32x2xf32>
    %8 = arith.maximumf %5, %7 : vector<32x2xf32>
    %c0_9 = arith.constant 0 : index
    %c0_10 = arith.constant 0 : index
    %9 = vector.load %arg6[%c0_9, %c0_10] : memref<288x2xbf16, #tpu.memory_space<vmem>>, vector<288x2xbf16>
    %cst_11 = arith.constant dense<0.000000e+00> : vector<32x2xf32>
    %10 = tpu.matmul %0, %9, %cst_11 {dimension_numbers = #tpu.dot_dimension_numbers<[1], [0], [0], [1], [0, 0, 1, 1], [], []>} : vector<32x288xbf16>, vector<288x2xbf16>, vector<32x2xf32> -> vector<32x2xf32>
    %11 = arith.maximumf %8, %10 : vector<32x2xf32>
    %c0_12 = arith.constant 0 : index
    %c0_13 = arith.constant 0 : index
    %12 = vector.load %arg2[%c0_12, %c0_13] : memref<32x1xf32, #tpu.memory_space<vmem>>, vector<32x1xf32>
    %13 = vector.broadcast %12 : vector<32x1xf32> to vector<32x2xf32>
    %14 = arith.addf %11, %13 : vector<32x2xf32>
    %cst_14 = arith.constant 0.000000e+00 : f32
    %15 = vector.broadcast %cst_14 : f32 to vector<32x2xf32>
    %16 = arith.maximumf %14, %15 : vector<32x2xf32>
    %17 = arith.truncf %16 : vector<32x2xf32> to vector<32x2xbf16>
    %c0_15 = arith.constant 0 : index
    %c0_16 = arith.constant 0 : index
    %18 = vector.load %arg7[%c0_15, %c0_16] : memref<32x2xbf16, #tpu.memory_space<vmem>>, vector<32x2xbf16>
    tpu.vector_store %arg7[%c0_15, %c0_16], %17 {strides = array<i32>} : memref<32x2xbf16, #tpu.memory_space<vmem>>, vector<32x2xbf16>,
    return
  }
  func.func @transform_0(%arg0: i32) -> (i32, i32) {
    %c0_i32 = arith.constant 0 : i32
    %c0_i32_0 = arith.constant 0 : i32
    %c0_i32_1 = arith.constant 0 : i32
    return %c0_i32, %c0_i32_0 : i32, i32
  }
  func.func @transform_1(%arg0: i32) -> (i32, i32) {
    %c0_i32 = arith.constant 0 : i32
    %c0_i32_0 = arith.constant 0 : i32
    %c0_i32_1 = arith.constant 0 : i32
    return %c0_i32, %c0_i32_0 : i32, i32
  }
  func.func @transform_2(%arg0: i32) -> (i32, i32) {
    %c0_i32 = arith.constant 0 : i32
    %c0_i32_0 = arith.constant 0 : i32
    return %c0_i32, %arg0 : i32, i32
  }
  func.func @transform_3(%arg0: i32) -> (i32, i32) {
    %c0_i32 = arith.constant 0 : i32
    %c0_i32_0 = arith.constant 0 : i32
    return %c0_i32, %arg0 : i32, i32
  }
  func.func @transform_4(%arg0: i32) -> (i32, i32) {
    %c0_i32 = arith.constant 0 : i32
    %c0_i32_0 = arith.constant 0 : i32
    return %c0_i32, %arg0 : i32, i32
  }
  func.func @transform_5(%arg0: i32) -> (i32, i32) {
    %c0_i32 = arith.constant 0 : i32
    %c0_i32_0 = arith.constant 0 : i32
    return %c0_i32, %arg0 : i32, i32
  }
  func.func @transform_6(%arg0: i32) -> (i32, i32) {
    %c0_i32 = arith.constant 0 : i32
    %c0_i32_0 = arith.constant 0 : i32
    return %c0_i32, %arg0 : i32, i32
  }
}

module attributes {stable_mosaic.version = 11 : i64} {
  func.func @_classifier_kernel(%arg0: memref<2x1568xbf16, #tpu.memory_space<vmem>>, %arg1: memref<1568x256xbf16, #tpu.memory_space<vmem>>, %arg2: memref<1x256xf32, #tpu.memory_space<vmem>>, %arg3: memref<256x256xbf16, #tpu.memory_space<vmem>>, %arg4: memref<1x256xf32, #tpu.memory_space<vmem>>, %arg5: memref<256x8xbf16, #tpu.memory_space<vmem>>, %arg6: memref<1x8xf32, #tpu.memory_space<vmem>>, %arg7: memref<2x8xf32, #tpu.memory_space<vmem>>) attributes {dimension_semantics = [], scalar_prefetch = 0 : i64, scratch_operands = 0 : i64, tpu.core_type = #tpu.core_type<tc>} {
    %c0 = arith.constant 0 : index
    %c0_0 = arith.constant 0 : index
    %0 = vector.load %arg0[%c0, %c0_0] : memref<2x1568xbf16, #tpu.memory_space<vmem>>, vector<2x1568xbf16>
    %c0_1 = arith.constant 0 : index
    %c0_2 = arith.constant 0 : index
    %1 = vector.load %arg1[%c0_1, %c0_2] : memref<1568x256xbf16, #tpu.memory_space<vmem>>, vector<1568x256xbf16>
    %cst = arith.constant dense<0.000000e+00> : vector<2x256xf32>
    %2 = tpu.matmul %0, %1, %cst {dimension_numbers = #tpu.dot_dimension_numbers<[1], [0], [0], [1], [0, 0, 1, 1], [], []>} : vector<2x1568xbf16>, vector<1568x256xbf16>, vector<2x256xf32> -> vector<2x256xf32>
    %c0_3 = arith.constant 0 : index
    %c0_4 = arith.constant 0 : index
    %3 = vector.load %arg2[%c0_3, %c0_4] : memref<1x256xf32, #tpu.memory_space<vmem>>, vector<1x256xf32>
    %4 = vector.broadcast %3 : vector<1x256xf32> to vector<2x256xf32>
    %5 = arith.addf %2, %4 : vector<2x256xf32>
    %cst_5 = arith.constant 0.000000e+00 : f32
    %6 = vector.broadcast %cst_5 : f32 to vector<2x256xf32>
    %7 = arith.maximumf %5, %6 : vector<2x256xf32>
    %8 = arith.truncf %7 : vector<2x256xf32> to vector<2x256xbf16>
    %c0_6 = arith.constant 0 : index
    %c0_7 = arith.constant 0 : index
    %9 = vector.load %arg3[%c0_6, %c0_7] : memref<256x256xbf16, #tpu.memory_space<vmem>>, vector<256x256xbf16>
    %cst_8 = arith.constant dense<0.000000e+00> : vector<2x256xf32>
    %10 = tpu.matmul %8, %9, %cst_8 {dimension_numbers = #tpu.dot_dimension_numbers<[1], [0], [0], [1], [0, 0, 1, 1], [], []>} : vector<2x256xbf16>, vector<256x256xbf16>, vector<2x256xf32> -> vector<2x256xf32>
    %c0_9 = arith.constant 0 : index
    %c0_10 = arith.constant 0 : index
    %11 = vector.load %arg4[%c0_9, %c0_10] : memref<1x256xf32, #tpu.memory_space<vmem>>, vector<1x256xf32>
    %12 = vector.broadcast %11 : vector<1x256xf32> to vector<2x256xf32>
    %13 = arith.addf %10, %12 : vector<2x256xf32>
    %cst_11 = arith.constant 0.000000e+00 : f32
    %14 = vector.broadcast %cst_11 : f32 to vector<2x256xf32>
    %15 = arith.maximumf %13, %14 : vector<2x256xf32>
    %16 = arith.truncf %15 : vector<2x256xf32> to vector<2x256xbf16>
    %c0_12 = arith.constant 0 : index
    %c0_13 = arith.constant 0 : index
    %17 = vector.load %arg5[%c0_12, %c0_13] : memref<256x8xbf16, #tpu.memory_space<vmem>>, vector<256x8xbf16>
    %cst_14 = arith.constant dense<0.000000e+00> : vector<2x8xf32>
    %18 = tpu.matmul %16, %17, %cst_14 {dimension_numbers = #tpu.dot_dimension_numbers<[1], [0], [0], [1], [0, 0, 1, 1], [], []>} : vector<2x256xbf16>, vector<256x8xbf16>, vector<2x8xf32> -> vector<2x8xf32>
    %c0_15 = arith.constant 0 : index
    %c0_16 = arith.constant 0 : index
    %19 = vector.load %arg6[%c0_15, %c0_16] : memref<1x8xf32, #tpu.memory_space<vmem>>, vector<1x8xf32>
    %20 = vector.broadcast %19 : vector<1x8xf32> to vector<2x8xf32>
    %21 = arith.addf %18, %20 : vector<2x8xf32>
    %cst_17 = arith.constant 0.000000e+00 : f32
    %22 = vector.broadcast %cst_17 : f32 to vector<2x8xf32>
    %23 = arith.subf %22, %21 : vector<2x8xf32>
    %24 = math.exp %23 : vector<2x8xf32>
    %cst_18 = arith.constant 1.000000e+00 : f32
    %25 = vector.broadcast %cst_18 : f32 to vector<2x8xf32>
    %26 = arith.addf %25, %24 : vector<2x8xf32>
    %27 = tpu.reciprocal %26 {approx = true} : vector<2x8xf32> -> vector<2x8xf32>
    %cst_19 = arith.constant 0.000000e+00 : f32
    %cst_20 = arith.constant 1.000000e+00 : f32
    %28 = vector.broadcast %cst_19 : f32 to vector<2x8xf32>
    %29 = arith.maximumf %28, %27 : vector<2x8xf32>
    %30 = vector.broadcast %cst_20 : f32 to vector<2x8xf32>
    %31 = arith.minimumf %30, %29 : vector<2x8xf32>
    %c0_21 = arith.constant 0 : index
    %c0_22 = arith.constant 0 : index
    %32 = vector.load %arg7[%c0_21, %c0_22] : memref<2x8xf32, #tpu.memory_space<vmem>>, vector<2x8xf32>
    tpu.vector_store %arg7[%c0_21, %c0_22], %31 {strides = array<i32>} : memref<2x8xf32, #tpu.memory_space<vmem>>, vector<2x8xf32>,
    return
  }
}

</mosaic_0001>

<llo_original>
// kernel: forward.14
$region0: #{forward.14}
  #allocation0 [shape = 'u32[]', space=smem, size = 0x4, offset = 0x4, fixed_abs, tag = 'smem constant byte address 0x4 - core index']
  #allocation1 [shape = 'u32[72,128]{1,0:T(1,128)}', space=vmem, size = 0x9000, scoped, tag = 'internal scratch']
  %s0 = inlined_call_operand.vmem [shape: bf16[4,27], index: 0, kind: input, shape index: {}]
  %s1 = inlined_call_operand.vmem [shape: f32[4,1], index: 1, kind: input, shape index: {}]
  %s2 = inlined_call_operand.vmem [shape: bf16[27,2048], index: 2, kind: input, shape index: {}]
  %s3 = inlined_call_operand.vmem [shape: bf16[4,2048], index: 3, kind: output, shape index: {}]
  %s4 = sld [smem:[#allocation0]]
  $region68: #{forward.14} parent=0
    _
  %s6 = ssub.s32 1, %s4
  %s7 = scalar_select 0, %s6, %s4
  $region1: #{forward.14} parent=0
    #allocation2 [shape = 'u8[131072]{0}', space=vmem, size = 0x20000, scoped, tag = 'input window, operand 2']
    loop: start=0, step=1, limit=4
    $region2: #{forward.14} parent=1 // loop_pre_header
      _
    $region3: #{forward.14} parent=1 // loop_header
      %s9 = sphi 0, %s13
      %p10 = scmp.ge.s32.totalorder %s9, 4
      %s17 = sphi 0, %s17
      %s19 = sphi 0, %s17
      %s20 = sphi 0, %s19
      %s34 = sphi 0, %s20
      %s38 = sphi 0, %s38
      %s40 = sphi 0, %s38
      %s41 = sphi 0, %s40
      %s55 = sphi 0, %s41
      %s61 = sphi 0, %s63
      %s64 = sphi 0, %s61
      %s65 = sphi 0, %s64
      %s81 = sphi 0, %s65
      %s87 = sphi 0, %s89
      %s90 = sphi 0, %s87
      %s91 = sphi 0, %s90
      %s107 = sphi 0, %s91
    $region4: #{forward.14} parent=1 // loop_header_branch
      %12 = sbr.rel (%p10) target = $region8
    $region5: #{forward.14} parent=1 // loop_body
      %s14 = ssub.s32 %s9, 1
      %s15 = ssub.s32 %s9, 2
      %s16 = sadd.s32 %s9, 1
      %s18 = sadd.s32 %s17, 1
      %p21 = scmp.eq.s32.totalorder %s9, 1
      %p22 = scmp.ne.s32.totalorder %s17, %s19
      %p23 = scmp.eq.s32.totalorder %s9, 0
      %p24 = por %p22, %p23
      %p25 = scmp.ne.s32.totalorder %s17, %s19
      %p26 = scmp.eq.s32.totalorder %s14, 1
      %p27 = por %p25, %p26
      %p28 = scmp.ne.s32.totalorder %s19, %s20
      %p29 = scmp.eq.s32.totalorder %s14, 0
      %p30 = por %p28, %p29
      %p31 = scmp.ne.s32.totalorder %s19, %s20
      %p32 = scmp.eq.s32.totalorder %s15, 1
      %p33 = por %p31, %p32
      %p35 = scmp.ne.s32.totalorder %s20, %s34
      %p36 = scmp.eq.s32.totalorder %s15, 0
      %p37 = por %p35, %p36
      %s39 = sadd.s32 %s38, 1
      %p42 = scmp.eq.s32.totalorder %s9, 1
      %p43 = scmp.ne.s32.totalorder %s38, %s40
      %p44 = scmp.eq.s32.totalorder %s9, 0
      %p45 = por %p43, %p44
      %p46 = scmp.ne.s32.totalorder %s38, %s40
      %p47 = scmp.eq.s32.totalorder %s14, 1
      %p48 = por %p46, %p47
      %p49 = scmp.ne.s32.totalorder %s40, %s41
      %p50 = scmp.eq.s32.totalorder %s14, 0
      %p51 = por %p49, %p50
      %p52 = scmp.ne.s32.totalorder %s40, %s41
      %p53 = scmp.eq.s32.totalorder %s15, 1
      %p54 = por %p52, %p53
      %p56 = scmp.ne.s32.totalorder %s41, %s55
      %p57 = scmp.eq.s32.totalorder %s15, 0
      %p58 = por %p56, %p57
      %s59 = ssub.s32 %s9, %s16
      %p60 = scmp.eq.s32.totalorder %s59, 0
      %s62 = sadd.s32 %s61, 1
      %s63 = scalar_select %p60, %s61, %s62
      %p66 = pneg %p60
      %p67 = scmp.eq.s32.totalorder %s9, 1
      %p68 = por %p66, %p67
      %p69 = scmp.ne.s32.totalorder %s61, %s64
      %p70 = scmp.eq.s32.totalorder %s9, 0
      %p71 = por %p69, %p70
      %p72 = scmp.ne.s32.totalorder %s61, %s64
      %p73 = scmp.eq.s32.totalorder %s14, 1
      %p74 = por %p72, %p73
      %p75 = scmp.ne.s32.totalorder %s64, %s65
      %p76 = scmp.eq.s32.totalorder %s14, 0
      %p77 = por %p75, %p76
      %p78 = scmp.ne.s32.totalorder %s64, %s65
      %p79 = scmp.eq.s32.totalorder %s15, 1
      %p80 = por %p78, %p79
      %p82 = scmp.ne.s32.totalorder %s65, %s81
      %p83 = scmp.eq.s32.totalorder %s15, 0
      %p84 = por %p82, %p83
      %s85 = ssub.s32 %s9, %s16
      %p86 = scmp.eq.s32.totalorder %s85, 0
      %s88 = sadd.s32 %s87, 1
      %s89 = scalar_select %p86, %s87, %s88
      %p92 = pneg %p86
      %p93 = scmp.eq.s32.totalorder %s9, 1
      %p94 = por %p92, %p93
      %p95 = scmp.ne.s32.totalorder %s87, %s90
      %p96 = scmp.eq.s32.totalorder %s9, 0
      %p97 = por %p95, %p96
      %p98 = scmp.ne.s32.totalorder %s87, %s90
      %p99 = scmp.eq.s32.totalorder %s14, 1
      %p100 = por %p98, %p99
      %p101 = scmp.ne.s32.totalorder %s90, %s91
      %p102 = scmp.eq.s32.totalorder %s14, 0
      %p103 = por %p101, %p102
      %p104 = scmp.ne.s32.totalorder %s90, %s91
      %p105 = scmp.eq.s32.totalorder %s15, 1
      %p106 = por %p104, %p105
      %p108 = scmp.ne.s32.totalorder %s91, %s107
      %p109 = scmp.eq.s32.totalorder %s15, 0
      %p110 = por %p108, %p109
      %p111 = scmp.le.s32.totalorder 1, %s9
      %p112 = scmp.lt.s32.totalorder %s9, 3
      %p113 = pnand %p111, %p112
      %p114 = pneg %p113
      // Predicated region
      $region9: #{forward.14} parent=5 // pred_check
        _
      $region10: #{forward.14} parent=5 // pred_check_branch
        %116 = sbr.rel (%p113) target = $region12
      $region11: #{forward.14} parent=5 // pred_region
        %s117 = ssub.s32 %s9, 1
        // Predicated region
        $region13: #{forward.14} parent=11 // pred_check
          %p118 = pneg %p30
        $region14: #{forward.14} parent=11 // pred_check_branch
          %120 = sbr.rel (%p118) target = $region16
        $region15: #{forward.14} parent=11 // pred_region
          _
        $region16: #{forward.14} parent=11 // pred_fallthru
          _
        // Predicated region
        $region17: #{forward.14} parent=11 // pred_check
          %p121 = pneg %p51
        $region18: #{forward.14} parent=11 // pred_check_branch
          %123 = sbr.rel (%p121) target = $region20
        $region19: #{forward.14} parent=11 // pred_region
          _
        $region20: #{forward.14} parent=11 // pred_fallthru
          _
      $region12: #{forward.14} parent=5 // pred_fallthru
        _
      %p124 = scmp.lt.s32.totalorder %s9, 2
      // Predicated region
      $region21: #{forward.14} parent=5 // pred_check
        %p125 = pneg %p124
      $region22: #{forward.14} parent=5 // pred_check_branch
        %127 = sbr.rel (%p125) target = $region24
      $region23: #{forward.14} parent=5 // pred_region
        // Predicated region
        $region25: #{forward.14} parent=23 // pred_check
          %p128 = pneg %p71
        $region26: #{forward.14} parent=23 // pred_check_branch
          %130 = sbr.rel (%p128) target = $region28
        $region27: #{forward.14} parent=23 // pred_region
          %s131 = sand.u32 %s61, 1
          %s132 = sand.u32 %s61, 1
          %s133 = smul.addr %s132, 128
          %s134 = scalar_lea.vmem [#allocation2], %s133
          %s135 = smul.u32 8, %s9
          %s136 = smul.addr %s135, 4
          %s137 = scalar_lea.vmem %s2, %s136
          // Predicated region
          $region29: #{forward.14} parent=27 // pred_check
            _
          $region30: #{forward.14} parent=27 // pred_check_branch
            %139 = sbr.rel (0) target = $region32
          $region31: #{forward.14} parent=27 // pred_region
            // Predicated region
            $region33: #{forward.14} parent=31 // pred_check
              _
            $region34: #{forward.14} parent=31 // pred_check_branch
              %141 = sbr.rel (0) target = $region36
            $region35: #{forward.14} parent=31 // pred_region
              loop: start=0, step=1, limit=1
              $region37: #{forward.14} parent=35 // loop_pre_header
                _
              $region38: #{forward.14} parent=35 // loop_header
                %s143 = sphi 0, %s147
                %p144 = scmp.ge.s32.totalorder %s143, 1
                %s148 = sphi %s137, %s137
                %s149 = sphi %s134, %s134
              $region39: #{forward.14} parent=35 // loop_header_branch
                %146 = sbr.rel (%p144) target = $region43
              $region40: #{forward.14} parent=35 // loop_body
                %v150 = vld [vmem:[%s148] sm:$0xff]
                %151 = vst [vmem:[%s149] sm:$0xff] %v150
                %v152 = vld [vmem:[%s148 + $0x8] sm:$0xff]
                %153 = vst [vmem:[%s149 + $0x8] sm:$0xff] %v152
                %v154 = vld [vmem:[%s148 + $0x10] sm:$0xff]
                %155 = vst [vmem:[%s149 + $0x10] sm:$0xff] %v154
                %v156 = vld [vmem:[%s148 + $0x18] sm:$0xff]
                %157 = vst [vmem:[%s149 + $0x18] sm:$0xff] %v156
                %v158 = vld [vmem:[%s148 + $0x40] sm:$0xff]
                %159 = vst [vmem:[%s149 + $0x20] sm:$0xff] %v158
                %v160 = vld [vmem:[%s148 + $0x48] sm:$0xff]
                %161 = vst [vmem:[%s149 + $0x28] sm:$0xff] %v160
                %v162 = vld [vmem:[%s148 + $0x50] sm:$0xff]
                %163 = vst [vmem:[%s149 + $0x30] sm:$0xff] %v162
                %v164 = vld [vmem:[%s148 + $0x58] sm:$0xff]
                %165 = vst [vmem:[%s149 + $0x38] sm:$0xff] %v164
                %v166 = vld [vmem:[%s148 + $0x80] sm:$0xff]
                %167 = vst [vmem:[%s149 + $0x40] sm:$0xff] %v166
                %v168 = vld [vmem:[%s148 + $0x88] sm:$0xff]
                %169 = vst [vmem:[%s149 + $0x48] sm:$0xff] %v168
                %v170 = vld [vmem:[%s148 + $0x90] sm:$0xff]
                %171 = vst [vmem:[%s149 + $0x50] sm:$0xff] %v170
                %v172 = vld [vmem:[%s148 + $0x98] sm:$0xff]
                %173 = vst [vmem:[%s149 + $0x58] sm:$0xff] %v172
                %v174 = vld [vmem:[%s148 + $0xc0] sm:$0xff]
                %175 = vst [vmem:[%s149 + $0x60] sm:$0xff] %v174
                %v176 = vld [vmem:[%s148 + $0xc8] sm:$0xff]
                %177 = vst [vmem:[%s149 + $0x68] sm:$0xff] %v176
                %v178 = vld [vmem:[%s148 + $0xd0] sm:$0xff]
                %179 = vst [vmem:[%s149 + $0x70] sm:$0xff] %v178
                %v180 = vld [vmem:[%s148 + $0xd8] sm:$0xff]
                %181 = vst [vmem:[%s149 + $0x78] sm:$0xff] %v180
              $region41: #{forward.14} parent=35 // loop_footer
                %s147 = sadd.s32 1, %s143
              $region42: #{forward.14} parent=35 // loop_footer_branch
                %142 = sbr.rel target = $region38
              $region43: #{forward.14} parent=35 // loop_exit
                _
            $region36: #{forward.14} parent=31 // pred_fallthru
              _
            // Predicated region
            $region44: #{forward.14} parent=31 // pred_check
              _
            $region45: #{forward.14} parent=31 // pred_check_branch
              %183 = sbr.rel target = $region47
            $region46: #{forward.14} parent=31 // pred_region
              _
            $region47: #{forward.14} parent=31 // pred_fallthru
              _
          $region32: #{forward.14} parent=27 // pred_fallthru
            _
          %184 = vnop
        $region28: #{forward.14} parent=23 // pred_fallthru
          _
      $region24: #{forward.14} parent=5 // pred_fallthru
        _
      %p185 = scmp.le.s32.totalorder 1, %s9
      %p186 = scmp.lt.s32.totalorder %s9, 3
      %p187 = pnand %p185, %p186
      %p188 = pneg %p187
      // Predicated region
      $region48: #{forward.14} parent=5 // pred_check
        _
      $region49: #{forward.14} parent=5 // pred_check_branch
        %190 = sbr.rel (%p187) target = $region51
      $region50: #{forward.14} parent=5 // pred_region
        %s191 = ssub.s32 %s9, 1
        %s192 = sand.u32 %s64, 1
        %s193 = sand.u32 %s64, 1
        %s194 = smul.addr %s193, 128
        %s195 = scalar_lea.vmem [#allocation2], %s194
        // Predicated region
        $region52: #{forward.14} parent=50 // pred_check
          %p196 = pneg %p77
        $region53: #{forward.14} parent=50 // pred_check_branch
          %198 = sbr.rel (%p196) target = $region55
        $region54: #{forward.14} parent=50 // pred_region
          _
        $region55: #{forward.14} parent=50 // pred_fallthru
          _
        %p199 = pneg %p30
        %p200 = pneg %p27
        %p201 = pneg %p51
        %p202 = pneg %p48
        %s203 = sand.u32 %s64, 1
        %s204 = sand.u32 %s64, 1
        %s205 = smul.addr %s204, 128
        %s206 = scalar_lea.vmem [#allocation2], %s205
        %p207 = pneg %p77
        %p208 = pneg %p74
        %p209 = pneg %p103
        %p210 = pneg %p100
        %s211 = smul.u32 8, %s14
        %p212 = scmp.lt.s32.totalorder %s211, 15
        %s213 = scalar_select %p212, %s211, 15
        %s214 = smul.addr %s213, 2
        %s215 = scalar_lea.vmem %s3, %s214
        %s216 = smul.u32 8, %s14
        %s217 = smul.u32 8, %s14
        %p218 = scmp.lt.s32.totalorder %s217, 15
        %s219 = scalar_select %p218, %s217, 15
        %s220 = smul.addr %s219, 2
        %s221 = scalar_lea.vmem %s3, %s220
        %s222 = smul.u32 8, %s14
        %v224 = vld [vmem:[%s0] sm:$0x3]
        %v225 = vld [vmem:[%s195] sm:$0xff]
        %v226 = vld [vmem:[%s195 + $0x8] sm:$0xff]
        %v227 = vld [vmem:[%s195 + $0x10] sm:$0xff]
        %v228 = vld [vmem:[%s195 + $0x18] sm:$0xff]
        %v229 = vld [vmem:[%s195 + $0x20] sm:$0xff]
        %v230 = vld [vmem:[%s195 + $0x28] sm:$0xff]
        %v231 = vld [vmem:[%s195 + $0x30] sm:$0xff]
        %v232 = vld [vmem:[%s195 + $0x38] sm:$0xff]
        %v233 = vld [vmem:[%s195 + $0x40] sm:$0xff]
        %v234 = vld [vmem:[%s195 + $0x48] sm:$0xff]
        %v235 = vld [vmem:[%s195 + $0x50] sm:$0xff]
        %v236 = vld [vmem:[%s195 + $0x58] sm:$0xff]
        %v237 = vld [vmem:[%s195 + $0x60] sm:$0x33]
        %v238 = vld [vmem:[%s195 + $0x68] sm:$0x33]
        %v239 = vld [vmem:[%s195 + $0x70] sm:$0x33]
        %v240 = vld [vmem:[%s195 + $0x78] sm:$0x33]
        %v241 = vld [vmem:[%s1] sm:$0xf]
        %243 = vset.pattern.permute.xlu0 0
        %244 = vperm.xlu0 %243, %v241
        %v245 = vpop.permute.xlu0 %244
        %v263 = vunpack.c.l.b16 %v225
        %v264 = vunpack.c.h.b16 %v225
        %v265 = vunpack.c.l.b16 %v226
        %v266 = vunpack.c.h.b16 %v226
        %v267 = vunpack.c.l.b16 %v227
        %v268 = vunpack.c.h.b16 %v227
        %v269 = vunpack.c.l.b16 %v228
        %v270 = vunpack.c.h.b16 %v228
        %v271 = vunpack.c.l.b16 %v229
        %v272 = vunpack.c.h.b16 %v229
        %v273 = vunpack.c.l.b16 %v230
        %v274 = vunpack.c.h.b16 %v230
        %v275 = vunpack.c.l.b16 %v231
        %v276 = vunpack.c.h.b16 %v231
        %v277 = vunpack.c.l.b16 %v232
        %v278 = vunpack.c.h.b16 %v232
        %v279 = vunpack.c.l.b16 %v233
        %v280 = vunpack.c.h.b16 %v233
        %v281 = vunpack.c.l.b16 %v234
        %v282 = vunpack.c.h.b16 %v234
        %v283 = vunpack.c.l.b16 %v235
        %v284 = vunpack.c.h.b16 %v235
        %v285 = vunpack.c.l.b16 %v236
        %v286 = vunpack.c.h.b16 %v236
        %v287 = vunpack.c.l.b16 %v237
        %v288 = vunpack.c.h.b16 %v237
        %v289 = vunpack.c.l.b16 %v238
        %v290 = vunpack.c.h.b16 %v238
        %v291 = vunpack.c.l.b16 %v239
        %v292 = vunpack.c.h.b16 %v239
        %v293 = vunpack.c.l.b16 %v240
        %v294 = vunpack.c.h.b16 %v240
        %v295 = vpack.c.b16 %v271, %v263
        %v296 = vpack.c.b16 %v272, %v264
        %v297 = vpack.c.b16 %v273, %v265
        %v298 = vpack.c.b16 %v274, %v266
        %v299 = vpack.c.b16 %v275, %v267
        %v300 = vpack.c.b16 %v276, %v268
        %v301 = vpack.c.b16 %v277, %v269
        %v302 = vpack.c.b16 %v278, %v270
        %v303 = vpack.c.b16 %v287, %v279
        %v304 = vpack.c.b16 %v288, %v280
        %v305 = vpack.c.b16 %v289, %v281
        %v306 = vpack.c.b16 %v290, %v282
        %v307 = vpack.c.b16 %v291, %v283
        %v308 = vpack.c.b16 %v292, %v284
        %v309 = vpack.c.b16 %v293, %v285
        %v310 = vpack.c.b16 %v294, %v286
        %vm319 = vcmask 220160
        %v321 = vsel %vm319, %v224, 0
        %vm323 = vcmask 1044480
        %vm324 = vcmask 1045504
        %v325 = vsel %vm323, 4294967295, 65535
        %v326 = vsel %vm324, %v325, 0
        %v328 = vand.u32 %v303, %v326
        %v331 = vand.u32 %v304, %v326
        %v334 = vand.u32 %v305, %v326
        %v337 = vand.u32 %v306, %v326
        %v340 = vand.u32 %v307, %v326
        %v343 = vand.u32 %v308, %v326
        %v346 = vand.u32 %v309, %v326
        %v349 = vand.u32 %v310, %v326
        %351 = vmatpush.bf16.msra.mxu0 0
        %352 = vmatpush.bf16.msra.mxu0 0
        %353 = vmatpush.bf16.msra.mxu0 0
        %354 = vmatpush.bf16.msra.mxu0 0
        %355 = vmatpush.bf16.msra.mxu0 0
        %356 = vmatpush.bf16.msra.mxu0 0
        %357 = vmatpush.bf16.msra.mxu0 %v328
        %358 = vmatpush.bf16.msra.mxu0 %v295
        %359 = vmatmul.bf16.gmra.mxu0 %v321
        %v360 = vpop.f32.mrf.mxu0
        %v361 = vadd.f32 %v245, %v360
        %v362 = vpop.f32.mrf.mxu0
        %363 = vdwg.mxu0
        %364 = vmatpush.bf16.msra.mxu0 0
        %365 = vmatpush.bf16.msra.mxu0 0
        %366 = vmatpush.bf16.msra.mxu0 0
        %367 = vmatpush.bf16.msra.mxu0 0
        %368 = vmatpush.bf16.msra.mxu0 0
        %369 = vmatpush.bf16.msra.mxu0 0
        %370 = vmatpush.bf16.msra.mxu0 %v331
        %371 = vmatpush.bf16.msra.mxu0 %v296
        %372 = vmatmul.bf16.gmra.mxu0 %v321
        %v373 = vpop.f32.mrf.mxu0
        %v374 = vadd.f32 %v245, %v373
        %v375 = vpop.f32.mrf.mxu0
        %376 = vdwg.mxu0
        %377 = vmatpush.bf16.msra.mxu0 0
        %378 = vmatpush.bf16.msra.mxu0 0
        %379 = vmatpush.bf16.msra.mxu0 0
        %380 = vmatpush.bf16.msra.mxu0 0
        %381 = vmatpush.bf16.msra.mxu0 0
        %382 = vmatpush.bf16.msra.mxu0 0
        %383 = vmatpush.bf16.msra.mxu0 %v334
        %384 = vmatpush.bf16.msra.mxu0 %v297
        %385 = vmatmul.bf16.gmra.mxu0 %v321
        %v386 = vpop.f32.mrf.mxu0
        %v387 = vadd.f32 %v245, %v386
        %v388 = vpop.f32.mrf.mxu0
        %389 = vdwg.mxu0
        %390 = vmatpush.bf16.msra.mxu0 0
        %391 = vmatpush.bf16.msra.mxu0 0
        %392 = vmatpush.bf16.msra.mxu0 0
        %393 = vmatpush.bf16.msra.mxu0 0
        %394 = vmatpush.bf16.msra.mxu0 0
        %395 = vmatpush.bf16.msra.mxu0 0
        %396 = vmatpush.bf16.msra.mxu0 %v337
        %397 = vmatpush.bf16.msra.mxu0 %v298
        %398 = vmatmul.bf16.gmra.mxu0 %v321
        %v399 = vpop.f32.mrf.mxu0
        %v400 = vadd.f32 %v245, %v399
        %v401 = vpop.f32.mrf.mxu0
        %402 = vdwg.mxu0
        %403 = vmatpush.bf16.msra.mxu0 0
        %404 = vmatpush.bf16.msra.mxu0 0
        %405 = vmatpush.bf16.msra.mxu0 0
        %406 = vmatpush.bf16.msra.mxu0 0
        %407 = vmatpush.bf16.msra.mxu0 0
        %408 = vmatpush.bf16.msra.mxu0 0
        %409 = vmatpush.bf16.msra.mxu0 %v340
        %410 = vmatpush.bf16.msra.mxu0 %v299
        %411 = vmatmul.bf16.gmra.mxu0 %v321
        %v412 = vpop.f32.mrf.mxu0
        %v413 = vadd.f32 %v245, %v412
        %v414 = vpop.f32.mrf.mxu0
        %415 = vdwg.mxu0
        %416 = vmatpush.bf16.msra.mxu0 0
        %417 = vmatpush.bf16.msra.mxu0 0
        %418 = vmatpush.bf16.msra.mxu0 0
        %419 = vmatpush.bf16.msra.mxu0 0
        %420 = vmatpush.bf16.msra.mxu0 0
        %421 = vmatpush.bf16.msra.mxu0 0
        %422 = vmatpush.bf16.msra.mxu0 %v343
        %423 = vmatpush.bf16.msra.mxu0 %v300
        %424 = vmatmul.bf16.gmra.mxu0 %v321
        %v425 = vpop.f32.mrf.mxu0
        %v426 = vadd.f32 %v245, %v425
        %v427 = vpop.f32.mrf.mxu0
        %428 = vdwg.mxu0
        %429 = vmatpush.bf16.msra.mxu0 0
        %430 = vmatpush.bf16.msra.mxu0 0
        %431 = vmatpush.bf16.msra.mxu0 0
        %432 = vmatpush.bf16.msra.mxu0 0
        %433 = vmatpush.bf16.msra.mxu0 0
        %434 = vmatpush.bf16.msra.mxu0 0
        %435 = vmatpush.bf16.msra.mxu0 %v346
        %436 = vmatpush.bf16.msra.mxu0 %v301
        %437 = vmatmul.bf16.gmra.mxu0 %v321
        %v438 = vpop.f32.mrf.mxu0
        %v439 = vadd.f32 %v245, %v438
        %v440 = vpop.f32.mrf.mxu0
        %441 = vdwg.mxu0
        %442 = vmatpush.bf16.msra.mxu0 0
        %443 = vmatpush.bf16.msra.mxu0 0
        %444 = vmatpush.bf16.msra.mxu0 0
        %445 = vmatpush.bf16.msra.mxu0 0
        %446 = vmatpush.bf16.msra.mxu0 0
        %447 = vmatpush.bf16.msra.mxu0 0
        %448 = vmatpush.bf16.msra.mxu0 %v349
        %449 = vmatpush.bf16.msra.mxu0 %v302
        %450 = vmatmul.bf16.gmra.mxu0 %v321
        %v451 = vpop.f32.mrf.mxu0
        %v452 = vadd.f32 %v245, %v451
        %v453 = vpop.f32.mrf.mxu0
        %454 = vdwg.mxu0
        %v455 = vmax.f32 %v361, 0.0
        %v456 = vmax.f32 %v374, 0.0
        %v457 = vmax.f32 %v387, 0.0
        %v458 = vmax.f32 %v400, 0.0
        %v459 = vmax.f32 %v413, 0.0
        %v460 = vmax.f32 %v426, 0.0
        %v461 = vmax.f32 %v439, 0.0
        %v462 = vmax.f32 %v452, 0.0
        %v463 = vpack.c.bf16 %v456, %v455
        %v464 = vpack.c.bf16 %v458, %v457
        %v465 = vpack.c.bf16 %v460, %v459
        %v466 = vpack.c.bf16 %v462, %v461
        %v471 = vrot.slane %v463, 2
        %v472 = vrot.slane %v464, 4
        %v473 = vrot.slane %v464, 6
        %v474 = vrot.slane %v465, 2
        %v475 = vrot.slane %v466, 4
        %v476 = vrot.slane %v466, 6
        %vm477 = vcmask 1041408
        %v480 = vsel %vm477, %v463, %v471
        %vm481 = vcmask 1045508
        %v484 = vsel %vm481, %v472, %v473
        %vm485 = vcmask 1043456
        %v486 = vsel %vm485, %v480, %v484
        %v489 = vsel %vm477, %v465, %v474
        %v492 = vsel %vm481, %v475, %v476
        %v493 = vsel %vm485, %v489, %v492
        %496 = vst [vmem:[%s221] sm:$0xff] %v486
        %497 = vst [vmem:[%s221 + $0x8] sm:$0xff] %v493
        %s498 = smul.u32 8, %s14
        %p499 = scmp.lt.s32.totalorder %s498, 15
        %s500 = scalar_select %p499, %s498, 15
        %s501 = smul.addr %s500, 2
        %s502 = scalar_lea.vmem %s3, %s501
        // Predicated region
        $region56: #{forward.14} parent=50 // pred_check
          %p503 = pneg %p100
        $region57: #{forward.14} parent=50 // pred_check_branch
          %505 = sbr.rel (%p503) target = $region59
        $region58: #{forward.14} parent=50 // pred_region
          %s506 = smul.u32 8, %s14
        $region59: #{forward.14} parent=50 // pred_fallthru
          _
      $region51: #{forward.14} parent=5 // pred_fallthru
        _
      %p507 = scmp.le.s32.totalorder 2, %s9
      // Predicated region
      $region60: #{forward.14} parent=5 // pred_check
        %p508 = pneg %p507
      $region61: #{forward.14} parent=5 // pred_check_branch
        %510 = sbr.rel (%p508) target = $region63
      $region62: #{forward.14} parent=5 // pred_region
        %s511 = ssub.s32 %s9, 2
        // Predicated region
        $region64: #{forward.14} parent=62 // pred_check
          %p512 = pneg %p106
        $region65: #{forward.14} parent=62 // pred_check_branch
          %514 = sbr.rel (%p512) target = $region67
        $region66: #{forward.14} parent=62 // pred_region
          %s515 = smul.u32 8, %s15
          %p516 = scmp.lt.s32.totalorder %s515, 15
          %s517 = scalar_select %p516, %s515, 15
          %s518 = smul.addr %s517, 2
          %s519 = scalar_lea.vmem %s3, %s518
        $region67: #{forward.14} parent=62 // pred_fallthru
          _
      $region63: #{forward.14} parent=5 // pred_fallthru
        _
    $region6: #{forward.14} parent=1 // loop_footer
      %s13 = sadd.s32 1, %s9
    $region7: #{forward.14} parent=1 // loop_footer_branch
      %8 = sbr.rel target = $region3
    $region8: #{forward.14} parent=1 // loop_exit
      _

// kernel: forward.15
$region0: #{forward.15}
  #allocation0 [shape = 'u32[]', space=smem, size = 0x4, offset = 0x4, fixed_abs, tag = 'smem constant byte address 0x4 - core index']
  #allocation1 [shape = 'u32[72,128]{1,0:T(1,128)}', space=vmem, size = 0x9000, scoped, tag = 'internal scratch']
  %s0 = inlined_call_operand.vmem [shape: bf16[4,36], index: 0, kind: input, shape index: {}]
  %s1 = inlined_call_operand.vmem [shape: f32[4,1], index: 1, kind: input, shape index: {}]
  %s2 = inlined_call_operand.vmem [shape: bf16[36,512], index: 2, kind: input, shape index: {}]
  %s3 = inlined_call_operand.vmem [shape: bf16[36,512], index: 3, kind: input, shape index: {}]
  %s4 = inlined_call_operand.vmem [shape: bf16[36,512], index: 4, kind: input, shape index: {}]
  %s5 = inlined_call_operand.vmem [shape: bf16[36,512], index: 5, kind: input, shape index: {}]
  %s6 = inlined_call_operand.vmem [shape: bf16[4,512], index: 6, kind: output, shape index: {}]
  %s7 = sld [smem:[#allocation0]]
  $region34: #{forward.15} parent=0
    _
  %s9 = ssub.s32 1, %s7
  %s10 = scalar_select 0, %s9, %s7
  // Predicated region
  $region2: #{forward.15} parent=0 // pred_check
    _
  $region3: #{forward.15} parent=0 // pred_check_branch
    %12 = sbr.rel (0) target = $region5
  $region4: #{forward.15} parent=0 // pred_region
    _
  $region5: #{forward.15} parent=0 // pred_fallthru
    _
  // Predicated region
  $region6: #{forward.15} parent=0 // pred_check
    _
  $region7: #{forward.15} parent=0 // pred_check_branch
    %14 = sbr.rel (0) target = $region9
  $region8: #{forward.15} parent=0 // pred_region
    _
  $region9: #{forward.15} parent=0 // pred_fallthru
    _
  // Predicated region
  $region10: #{forward.15} parent=0 // pred_check
    _
  $region11: #{forward.15} parent=0 // pred_check_branch
    %16 = sbr.rel (0) target = $region13
  $region12: #{forward.15} parent=0 // pred_region
    _
  $region13: #{forward.15} parent=0 // pred_fallthru
    _
  // Predicated region
  $region14: #{forward.15} parent=0 // pred_check
    _
  $region15: #{forward.15} parent=0 // pred_check_branch
    %18 = sbr.rel (0) target = $region17
  $region16: #{forward.15} parent=0 // pred_region
    _
  $region17: #{forward.15} parent=0 // pred_fallthru
    _
  // Predicated region
  $region18: #{forward.15} parent=0 // pred_check
    _
  $region19: #{forward.15} parent=0 // pred_check_branch
    %20 = sbr.rel (0) target = $region21
  $region20: #{forward.15} parent=0 // pred_region
    _
  $region21: #{forward.15} parent=0 // pred_fallthru
    _
  // Predicated region
  $region22: #{forward.15} parent=0 // pred_check
    _
  $region23: #{forward.15} parent=0 // pred_check_branch
    %22 = sbr.rel (0) target = $region25
  $region24: #{forward.15} parent=0 // pred_region
    _
  $region25: #{forward.15} parent=0 // pred_fallthru
    _
  %v24 = vld [vmem:[%s0] sm:$0x3]
  %v25 = vld [vmem:[%s2] sm:$0xff]
  %v26 = vld [vmem:[%s2 + $0x8] sm:$0xff]
  %v27 = vld [vmem:[%s2 + $0x10] sm:$0xff]
  %v28 = vld [vmem:[%s2 + $0x18] sm:$0xff]
  %v29 = vld [vmem:[%s2 + $0x20] sm:$0xff]
  %v30 = vld [vmem:[%s2 + $0x28] sm:$0xff]
  %v31 = vld [vmem:[%s2 + $0x30] sm:$0xff]
  %v32 = vld [vmem:[%s2 + $0x38] sm:$0xff]
  %v33 = vld [vmem:[%s2 + $0x40] sm:$0x33]
  %v34 = vld [vmem:[%s2 + $0x48] sm:$0x33]
  %v45 = vunpack.c.l.b16 %v25
  %v46 = vunpack.c.h.b16 %v25
  %v47 = vunpack.c.l.b16 %v26
  %v48 = vunpack.c.h.b16 %v26
  %v49 = vunpack.c.l.b16 %v27
  %v50 = vunpack.c.h.b16 %v27
  %v51 = vunpack.c.l.b16 %v28
  %v52 = vunpack.c.h.b16 %v28
  %v53 = vunpack.c.l.b16 %v29
  %v54 = vunpack.c.h.b16 %v29
  %v55 = vunpack.c.l.b16 %v30
  %v56 = vunpack.c.h.b16 %v30
  %v57 = vunpack.c.l.b16 %v31
  %v58 = vunpack.c.h.b16 %v31
  %v59 = vunpack.c.l.b16 %v32
  %v60 = vunpack.c.h.b16 %v32
  %v61 = vunpack.c.l.b16 %v33
  %v62 = vunpack.c.h.b16 %v33
  %v63 = vunpack.c.l.b16 %v34
  %v64 = vunpack.c.h.b16 %v34
  %v65 = vpack.c.b16 %v49, %v45
  %v66 = vpack.c.b16 %v50, %v46
  %v67 = vpack.c.b16 %v51, %v47
  %v68 = vpack.c.b16 %v52, %v48
  %v69 = vpack.c.b16 %v57, %v53
  %v70 = vpack.c.b16 %v58, %v54
  %v71 = vpack.c.b16 %v59, %v55
  %v72 = vpack.c.b16 %v60, %v56
  %v73 = vpack.c.b16 %v61, %v61
  %v74 = vpack.c.b16 %v62, %v62
  %v75 = vpack.c.b16 %v63, %v63
  %v76 = vpack.c.b16 %v64, %v64
  %vm85 = vcmask 293888
  %v87 = vsel %vm85, %v24, 0
  %vm89 = vcmask 1041408
  %v91 = vsel %vm89, %v73, 0
  %v94 = vsel %vm89, %v74, 0
  %v97 = vsel %vm89, %v75, 0
  %v100 = vsel %vm89, %v76, 0
  %102 = vmatpush.bf16.msra.mxu0 0
  %103 = vmatpush.bf16.msra.mxu0 0
  %104 = vmatpush.bf16.msra.mxu0 0
  %105 = vmatpush.bf16.msra.mxu0 0
  %106 = vmatpush.bf16.msra.mxu0 0
  %107 = vmatpush.bf16.msra.mxu0 %v91
  %108 = vmatpush.bf16.msra.mxu0 %v69
  %109 = vmatpush.bf16.msra.mxu0 %v65
  %110 = vmatmul.bf16.gmra.mxu0 %v87
  %v111 = vpop.f32.mrf.mxu0
  %v112 = vadd.f32 0.0, %v111
  %v113 = vpop.f32.mrf.mxu0
  %114 = vdwg.mxu0
  %115 = vmatpush.bf16.msra.mxu0 0
  %116 = vmatpush.bf16.msra.mxu0 0
  %117 = vmatpush.bf16.msra.mxu0 0
  %118 = vmatpush.bf16.msra.mxu0 0
  %119 = vmatpush.bf16.msra.mxu0 0
  %120 = vmatpush.bf16.msra.mxu0 %v94
  %121 = vmatpush.bf16.msra.mxu0 %v70
  %122 = vmatpush.bf16.msra.mxu0 %v66
  %123 = vmatmul.bf16.gmra.mxu0 %v87
  %v124 = vpop.f32.mrf.mxu0
  %v125 = vadd.f32 0.0, %v124
  %v126 = vpop.f32.mrf.mxu0
  %127 = vdwg.mxu0
  %128 = vmatpush.bf16.msra.mxu0 0
  %129 = vmatpush.bf16.msra.mxu0 0
  %130 = vmatpush.bf16.msra.mxu0 0
  %131 = vmatpush.bf16.msra.mxu0 0
  %132 = vmatpush.bf16.msra.mxu0 0
  %133 = vmatpush.bf16.msra.mxu0 %v97
  %134 = vmatpush.bf16.msra.mxu0 %v71
  %135 = vmatpush.bf16.msra.mxu0 %v67
  %136 = vmatmul.bf16.gmra.mxu0 %v87
  %v137 = vpop.f32.mrf.mxu0
  %v138 = vadd.f32 0.0, %v137
  %v139 = vpop.f32.mrf.mxu0
  %140 = vdwg.mxu0
  %141 = vmatpush.bf16.msra.mxu0 0
  %142 = vmatpush.bf16.msra.mxu0 0
  %143 = vmatpush.bf16.msra.mxu0 0
  %144 = vmatpush.bf16.msra.mxu0 0
  %145 = vmatpush.bf16.msra.mxu0 0
  %146 = vmatpush.bf16.msra.mxu0 %v100
  %147 = vmatpush.bf16.msra.mxu0 %v72
  %148 = vmatpush.bf16.msra.mxu0 %v68
  %149 = vmatmul.bf16.gmra.mxu0 %v87
  %v150 = vpop.f32.mrf.mxu0
  %v151 = vadd.f32 0.0, %v150
  %v152 = vpop.f32.mrf.mxu0
  %153 = vdwg.mxu0
  %v154 = vld [vmem:[%s3] sm:$0xff]
  %v155 = vld [vmem:[%s3 + $0x8] sm:$0xff]
  %v156 = vld [vmem:[%s3 + $0x10] sm:$0xff]
  %v157 = vld [vmem:[%s3 + $0x18] sm:$0xff]
  %v158 = vld [vmem:[%s3 + $0x20] sm:$0xff]
  %v159 = vld [vmem:[%s3 + $0x28] sm:$0xff]
  %v160 = vld [vmem:[%s3 + $0x30] sm:$0xff]
  %v161 = vld [vmem:[%s3 + $0x38] sm:$0xff]
  %v162 = vld [vmem:[%s3 + $0x40] sm:$0x33]
  %v163 = vld [vmem:[%s3 + $0x48] sm:$0x33]
  %v174 = vunpack.c.l.b16 %v154
  %v175 = vunpack.c.h.b16 %v154
  %v176 = vunpack.c.l.b16 %v155
  %v177 = vunpack.c.h.b16 %v155
  %v178 = vunpack.c.l.b16 %v156
  %v179 = vunpack.c.h.b16 %v156
  %v180 = vunpack.c.l.b16 %v157
  %v181 = vunpack.c.h.b16 %v157
  %v182 = vunpack.c.l.b16 %v158
  %v183 = vunpack.c.h.b16 %v158
  %v184 = vunpack.c.l.b16 %v159
  %v185 = vunpack.c.h.b16 %v159
  %v186 = vunpack.c.l.b16 %v160
  %v187 = vunpack.c.h.b16 %v160
  %v188 = vunpack.c.l.b16 %v161
  %v189 = vunpack.c.h.b16 %v161
  %v190 = vunpack.c.l.b16 %v162
  %v191 = vunpack.c.h.b16 %v162
  %v192 = vunpack.c.l.b16 %v163
  %v193 = vunpack.c.h.b16 %v163
  %v194 = vpack.c.b16 %v178, %v174
  %v195 = vpack.c.b16 %v179, %v175
  %v196 = vpack.c.b16 %v180, %v176
  %v197 = vpack.c.b16 %v181, %v177
  %v198 = vpack.c.b16 %v186, %v182
  %v199 = vpack.c.b16 %v187, %v183
  %v200 = vpack.c.b16 %v188, %v184
  %v201 = vpack.c.b16 %v189, %v185
  %v202 = vpack.c.b16 %v190, %v190
  %v203 = vpack.c.b16 %v191, %v191
  %v204 = vpack.c.b16 %v192, %v192
  %v205 = vpack.c.b16 %v193, %v193
  %v215 = vsel %vm89, %v202, 0
  %v218 = vsel %vm89, %v203, 0
  %v221 = vsel %vm89, %v204, 0
  %v224 = vsel %vm89, %v205, 0
  %226 = vmatpush.bf16.msra.mxu0 0
  %227 = vmatpush.bf16.msra.mxu0 0
  %228 = vmatpush.bf16.msra.mxu0 0
  %229 = vmatpush.bf16.msra.mxu0 0
  %230 = vmatpush.bf16.msra.mxu0 0
  %231 = vmatpush.bf16.msra.mxu0 %v215
  %232 = vmatpush.bf16.msra.mxu0 %v198
  %233 = vmatpush.bf16.msra.mxu0 %v194
  %234 = vmatmul.bf16.gmra.mxu0 %v87
  %v235 = vpop.f32.mrf.mxu0
  %v236 = vadd.f32 0.0, %v235
  %v237 = vpop.f32.mrf.mxu0
  %238 = vdwg.mxu0
  %239 = vmatpush.bf16.msra.mxu0 0
  %240 = vmatpush.bf16.msra.mxu0 0
  %241 = vmatpush.bf16.msra.mxu0 0
  %242 = vmatpush.bf16.msra.mxu0 0
  %243 = vmatpush.bf16.msra.mxu0 0
  %244 = vmatpush.bf16.msra.mxu0 %v218
  %245 = vmatpush.bf16.msra.mxu0 %v199
  %246 = vmatpush.bf16.msra.mxu0 %v195
  %247 = vmatmul.bf16.gmra.mxu0 %v87
  %v248 = vpop.f32.mrf.mxu0
  %v249 = vadd.f32 0.0, %v248
  %v250 = vpop.f32.mrf.mxu0
  %251 = vdwg.mxu0
  %252 = vmatpush.bf16.msra.mxu0 0
  %253 = vmatpush.bf16.msra.mxu0 0
  %254 = vmatpush.bf16.msra.mxu0 0
  %255 = vmatpush.bf16.msra.mxu0 0
  %256 = vmatpush.bf16.msra.mxu0 0
  %257 = vmatpush.bf16.msra.mxu0 %v221
  %258 = vmatpush.bf16.msra.mxu0 %v200
  %259 = vmatpush.bf16.msra.mxu0 %v196
  %260 = vmatmul.bf16.gmra.mxu0 %v87
  %v261 = vpop.f32.mrf.mxu0
  %v262 = vadd.f32 0.0, %v261
  %v263 = vpop.f32.mrf.mxu0
  %264 = vdwg.mxu0
  %265 = vmatpush.bf16.msra.mxu0 0
  %266 = vmatpush.bf16.msra.mxu0 0
  %267 = vmatpush.bf16.msra.mxu0 0
  %268 = vmatpush.bf16.msra.mxu0 0
  %269 = vmatpush.bf16.msra.mxu0 0
  %270 = vmatpush.bf16.msra.mxu0 %v224
  %271 = vmatpush.bf16.msra.mxu0 %v201
  %272 = vmatpush.bf16.msra.mxu0 %v197
  %273 = vmatmul.bf16.gmra.mxu0 %v87
  %v274 = vpop.f32.mrf.mxu0
  %v275 = vadd.f32 0.0, %v274
  %v276 = vpop.f32.mrf.mxu0
  %277 = vdwg.mxu0
  %v278 = vmax.f32 %v112, %v236
  %v279 = vmax.f32 %v125, %v249
  %v280 = vmax.f32 %v138, %v262
  %v281 = vmax.f32 %v151, %v275
  %v282 = vld [vmem:[%s4] sm:$0xff]
  %v283 = vld [vmem:[%s4 + $0x8] sm:$0xff]
  %v284 = vld [vmem:[%s4 + $0x10] sm:$0xff]
  %v285 = vld [vmem:[%s4 + $0x18] sm:$0xff]
  %v286 = vld [vmem:[%s4 + $0x20] sm:$0xff]
  %v287 = vld [vmem:[%s4 + $0x28] sm:$0xff]
  %v288 = vld [vmem:[%s4 + $0x30] sm:$0xff]
  %v289 = vld [vmem:[%s4 + $0x38] sm:$0xff]
  %v290 = vld [vmem:[%s4 + $0x40] sm:$0x33]
  %v291 = vld [vmem:[%s4 + $0x48] sm:$0x33]
  %v302 = vunpack.c.l.b16 %v282
  %v303 = vunpack.c.h.b16 %v282
  %v304 = vunpack.c.l.b16 %v283
  %v305 = vunpack.c.h.b16 %v283
  %v306 = vunpack.c.l.b16 %v284
  %v307 = vunpack.c.h.b16 %v284
  %v308 = vunpack.c.l.b16 %v285
  %v309 = vunpack.c.h.b16 %v285
  %v310 = vunpack.c.l.b16 %v286
  %v311 = vunpack.c.h.b16 %v286
  %v312 = vunpack.c.l.b16 %v287
  %v313 = vunpack.c.h.b16 %v287
  %v314 = vunpack.c.l.b16 %v288
  %v315 = vunpack.c.h.b16 %v288
  %v316 = vunpack.c.l.b16 %v289
  %v317 = vunpack.c.h.b16 %v289
  %v318 = vunpack.c.l.b16 %v290
  %v319 = vunpack.c.h.b16 %v290
  %v320 = vunpack.c.l.b16 %v291
  %v321 = vunpack.c.h.b16 %v291
  %v322 = vpack.c.b16 %v306, %v302
  %v323 = vpack.c.b16 %v307, %v303
  %v324 = vpack.c.b16 %v308, %v304
  %v325 = vpack.c.b16 %v309, %v305
  %v326 = vpack.c.b16 %v314, %v310
  %v327 = vpack.c.b16 %v315, %v311
  %v328 = vpack.c.b16 %v316, %v312
  %v329 = vpack.c.b16 %v317, %v313
  %v330 = vpack.c.b16 %v318, %v318
  %v331 = vpack.c.b16 %v319, %v319
  %v332 = vpack.c.b16 %v320, %v320
  %v333 = vpack.c.b16 %v321, %v321
  %v343 = vsel %vm89, %v330, 0
  %v346 = vsel %vm89, %v331, 0
  %v349 = vsel %vm89, %v332, 0
  %v352 = vsel %vm89, %v333, 0
  %354 = vmatpush.bf16.msra.mxu0 0
  %355 = vmatpush.bf16.msra.mxu0 0
  %356 = vmatpush.bf16.msra.mxu0 0
  %357 = vmatpush.bf16.msra.mxu0 0
  %358 = vmatpush.bf16.msra.mxu0 0
  %359 = vmatpush.bf16.msra.mxu0 %v343
  %360 = vmatpush.bf16.msra.mxu0 %v326
  %361 = vmatpush.bf16.msra.mxu0 %v322
  %362 = vmatmul.bf16.gmra.mxu0 %v87
  %v363 = vpop.f32.mrf.mxu0
  %v364 = vadd.f32 0.0, %v363
  %v365 = vpop.f32.mrf.mxu0
  %366 = vdwg.mxu0
  %367 = vmatpush.bf16.msra.mxu0 0
  %368 = vmatpush.bf16.msra.mxu0 0
  %369 = vmatpush.bf16.msra.mxu0 0
  %370 = vmatpush.bf16.msra.mxu0 0
  %371 = vmatpush.bf16.msra.mxu0 0
  %372 = vmatpush.bf16.msra.mxu0 %v346
  %373 = vmatpush.bf16.msra.mxu0 %v327
  %374 = vmatpush.bf16.msra.mxu0 %v323
  %375 = vmatmul.bf16.gmra.mxu0 %v87
  %v376 = vpop.f32.mrf.mxu0
  %v377 = vadd.f32 0.0, %v376
  %v378 = vpop.f32.mrf.mxu0
  %379 = vdwg.mxu0
  %380 = vmatpush.bf16.msra.mxu0 0
  %381 = vmatpush.bf16.msra.mxu0 0
  %382 = vmatpush.bf16.msra.mxu0 0
  %383 = vmatpush.bf16.msra.mxu0 0
  %384 = vmatpush.bf16.msra.mxu0 0
  %385 = vmatpush.bf16.msra.mxu0 %v349
  %386 = vmatpush.bf16.msra.mxu0 %v328
  %387 = vmatpush.bf16.msra.mxu0 %v324
  %388 = vmatmul.bf16.gmra.mxu0 %v87
  %v389 = vpop.f32.mrf.mxu0
  %v390 = vadd.f32 0.0, %v389
  %v391 = vpop.f32.mrf.mxu0
  %392 = vdwg.mxu0
  %393 = vmatpush.bf16.msra.mxu0 0
  %394 = vmatpush.bf16.msra.mxu0 0
  %395 = vmatpush.bf16.msra.mxu0 0
  %396 = vmatpush.bf16.msra.mxu0 0
  %397 = vmatpush.bf16.msra.mxu0 0
  %398 = vmatpush.bf16.msra.mxu0 %v352
  %399 = vmatpush.bf16.msra.mxu0 %v329
  %400 = vmatpush.bf16.msra.mxu0 %v325
  %401 = vmatmul.bf16.gmra.mxu0 %v87
  %v402 = vpop.f32.mrf.mxu0
  %v403 = vadd.f32 0.0, %v402
  %v404 = vpop.f32.mrf.mxu0
  %405 = vdwg.mxu0
  %v406 = vmax.f32 %v278, %v364
  %v407 = vmax.f32 %v279, %v377
  %v408 = vmax.f32 %v280, %v390
  %v409 = vmax.f32 %v281, %v403
  %v410 = vld [vmem:[%s5] sm:$0xff]
  %v411 = vld [vmem:[%s5 + $0x8] sm:$0xff]
  %v412 = vld [vmem:[%s5 + $0x10] sm:$0xff]
  %v413 = vld [vmem:[%s5 + $0x18] sm:$0xff]
  %v414 = vld [vmem:[%s5 + $0x20] sm:$0xff]
  %v415 = vld [vmem:[%s5 + $0x28] sm:$0xff]
  %v416 = vld [vmem:[%s5 + $0x30] sm:$0xff]
  %v417 = vld [vmem:[%s5 + $0x38] sm:$0xff]
  %v418 = vld [vmem:[%s5 + $0x40] sm:$0x33]
  %v419 = vld [vmem:[%s5 + $0x48] sm:$0x33]
  %v430 = vunpack.c.l.b16 %v410
  %v431 = vunpack.c.h.b16 %v410
  %v432 = vunpack.c.l.b16 %v411
  %v433 = vunpack.c.h.b16 %v411
  %v434 = vunpack.c.l.b16 %v412
  %v435 = vunpack.c.h.b16 %v412
  %v436 = vunpack.c.l.b16 %v413
  %v437 = vunpack.c.h.b16 %v413
  %v438 = vunpack.c.l.b16 %v414
  %v439 = vunpack.c.h.b16 %v414
  %v440 = vunpack.c.l.b16 %v415
  %v441 = vunpack.c.h.b16 %v415
  %v442 = vunpack.c.l.b16 %v416
  %v443 = vunpack.c.h.b16 %v416
  %v444 = vunpack.c.l.b16 %v417
  %v445 = vunpack.c.h.b16 %v417
  %v446 = vunpack.c.l.b16 %v418
  %v447 = vunpack.c.h.b16 %v418
  %v448 = vunpack.c.l.b16 %v419
  %v449 = vunpack.c.h.b16 %v419
  %v450 = vpack.c.b16 %v434, %v430
  %v451 = vpack.c.b16 %v435, %v431
  %v452 = vpack.c.b16 %v436, %v432
  %v453 = vpack.c.b16 %v437, %v433
  %v454 = vpack.c.b16 %v442, %v438
  %v455 = vpack.c.b16 %v443, %v439
  %v456 = vpack.c.b16 %v444, %v440
  %v457 = vpack.c.b16 %v445, %v441
  %v458 = vpack.c.b16 %v446, %v446
  %v459 = vpack.c.b16 %v447, %v447
  %v460 = vpack.c.b16 %v448, %v448
  %v461 = vpack.c.b16 %v449, %v449
  %v471 = vsel %vm89, %v458, 0
  %v474 = vsel %vm89, %v459, 0
  %v477 = vsel %vm89, %v460, 0
  %v480 = vsel %vm89, %v461, 0
  %482 = vmatpush.bf16.msra.mxu0 0
  %483 = vmatpush.bf16.msra.mxu0 0
  %484 = vmatpush.bf16.msra.mxu0 0
  %485 = vmatpush.bf16.msra.mxu0 0
  %486 = vmatpush.bf16.msra.mxu0 0
  %487 = vmatpush.bf16.msra.mxu0 %v471
  %488 = vmatpush.bf16.msra.mxu0 %v454
  %489 = vmatpush.bf16.msra.mxu0 %v450
  %490 = vmatmul.bf16.gmra.mxu0 %v87
  %v491 = vpop.f32.mrf.mxu0
  %v492 = vadd.f32 0.0, %v491
  %v493 = vpop.f32.mrf.mxu0
  %494 = vdwg.mxu0
  %495 = vmatpush.bf16.msra.mxu0 0
  %496 = vmatpush.bf16.msra.mxu0 0
  %497 = vmatpush.bf16.msra.mxu0 0
  %498 = vmatpush.bf16.msra.mxu0 0
  %499 = vmatpush.bf16.msra.mxu0 0
  %500 = vmatpush.bf16.msra.mxu0 %v474
  %501 = vmatpush.bf16.msra.mxu0 %v455
  %502 = vmatpush.bf16.msra.mxu0 %v451
  %503 = vmatmul.bf16.gmra.mxu0 %v87
  %v504 = vpop.f32.mrf.mxu0
  %v505 = vadd.f32 0.0, %v504
  %v506 = vpop.f32.mrf.mxu0
  %507 = vdwg.mxu0
  %508 = vmatpush.bf16.msra.mxu0 0
  %509 = vmatpush.bf16.msra.mxu0 0
  %510 = vmatpush.bf16.msra.mxu0 0
  %511 = vmatpush.bf16.msra.mxu0 0
  %512 = vmatpush.bf16.msra.mxu0 0
  %513 = vmatpush.bf16.msra.mxu0 %v477
  %514 = vmatpush.bf16.msra.mxu0 %v456
  %515 = vmatpush.bf16.msra.mxu0 %v452
  %516 = vmatmul.bf16.gmra.mxu0 %v87
  %v517 = vpop.f32.mrf.mxu0
  %v518 = vadd.f32 0.0, %v517
  %v519 = vpop.f32.mrf.mxu0
  %520 = vdwg.mxu0
  %521 = vmatpush.bf16.msra.mxu0 0
  %522 = vmatpush.bf16.msra.mxu0 0
  %523 = vmatpush.bf16.msra.mxu0 0
  %524 = vmatpush.bf16.msra.mxu0 0
  %525 = vmatpush.bf16.msra.mxu0 0
  %526 = vmatpush.bf16.msra.mxu0 %v480
  %527 = vmatpush.bf16.msra.mxu0 %v457
  %528 = vmatpush.bf16.msra.mxu0 %v453
  %529 = vmatmul.bf16.gmra.mxu0 %v87
  %v530 = vpop.f32.mrf.mxu0
  %v531 = vadd.f32 0.0, %v530
  %v532 = vpop.f32.mrf.mxu0
  %533 = vdwg.mxu0
  %v534 = vmax.f32 %v406, %v492
  %v535 = vmax.f32 %v407, %v505
  %v536 = vmax.f32 %v408, %v518
  %v537 = vmax.f32 %v409, %v531
  %v538 = vld [vmem:[%s1] sm:$0xf]
  %540 = vset.pattern.permute.xlu0 0
  %541 = vperm.xlu0 %540, %v538
  %v542 = vpop.permute.xlu0 %541
  %v544 = vadd.f32 %v534, %v542
  %v545 = vadd.f32 %v535, %v542
  %v546 = vadd.f32 %v536, %v542
  %v547 = vadd.f32 %v537, %v542
  %v548 = vmax.f32 %v544, 0.0
  %v549 = vmax.f32 %v545, 0.0
  %v550 = vmax.f32 %v546, 0.0
  %v551 = vmax.f32 %v547, 0.0
  %v552 = vpack.c.bf16 %v549, %v548
  %v553 = vpack.c.bf16 %v551, %v550
  %v556 = vrot.slane %v552, 2
  %v557 = vrot.slane %v553, 4
  %v558 = vrot.slane %v553, 6
  %v561 = vsel %vm89, %v552, %v556
  %vm562 = vcmask 1045508
  %v565 = vsel %vm562, %v557, %v558
  %vm566 = vcmask 1043456
  %v567 = vsel %vm566, %v561, %v565
  %569 = vst [vmem:[%s6] sm:$0xff] %v567
  // Predicated region
  $region26: #{forward.15} parent=0 // pred_check
    _
  $region27: #{forward.15} parent=0 // pred_check_branch
    %571 = sbr.rel (0) target = $region29
  $region28: #{forward.15} parent=0 // pred_region
    _
  $region29: #{forward.15} parent=0 // pred_fallthru
    _
  // Predicated region
  $region30: #{forward.15} parent=0 // pred_check
    _
  $region31: #{forward.15} parent=0 // pred_check_branch
    %573 = sbr.rel (0) target = $region33
  $region32: #{forward.15} parent=0 // pred_region
    _
  $region33: #{forward.15} parent=0 // pred_fallthru
    _

// kernel: forward.16
$region0: #{forward.16}
  #allocation0 [shape = 'u32[]', space=smem, size = 0x4, offset = 0x4, fixed_abs, tag = 'smem constant byte address 0x4 - core index']
  #allocation1 [shape = 'u32[72,128]{1,0:T(1,128)}', space=vmem, size = 0x9000, scoped, tag = 'internal scratch']
  %s0 = inlined_call_operand.vmem [shape: bf16[8,36], index: 0, kind: input, shape index: {}]
  %s1 = inlined_call_operand.vmem [shape: f32[8,1], index: 1, kind: input, shape index: {}]
  %s2 = inlined_call_operand.vmem [shape: bf16[36,512], index: 2, kind: input, shape index: {}]
  %s3 = inlined_call_operand.vmem [shape: bf16[8,512], index: 3, kind: output, shape index: {}]
  %s4 = sld [smem:[#allocation0]]
  $region22: #{forward.16} parent=0
    _
  %s6 = ssub.s32 1, %s4
  %s7 = scalar_select 0, %s6, %s4
  // Predicated region
  $region2: #{forward.16} parent=0 // pred_check
    _
  $region3: #{forward.16} parent=0 // pred_check_branch
    %9 = sbr.rel (0) target = $region5
  $region4: #{forward.16} parent=0 // pred_region
    _
  $region5: #{forward.16} parent=0 // pred_fallthru
    _
  // Predicated region
  $region6: #{forward.16} parent=0 // pred_check
    _
  $region7: #{forward.16} parent=0 // pred_check_branch
    %11 = sbr.rel (0) target = $region9
  $region8: #{forward.16} parent=0 // pred_region
    _
  $region9: #{forward.16} parent=0 // pred_fallthru
    _
  // Predicated region
  $region10: #{forward.16} parent=0 // pred_check
    _
  $region11: #{forward.16} parent=0 // pred_check_branch
    %13 = sbr.rel (0) target = $region13
  $region12: #{forward.16} parent=0 // pred_region
    _
  $region13: #{forward.16} parent=0 // pred_fallthru
    _
  %v15 = vld [vmem:[%s0] sm:$0xf]
  %v16 = vld [vmem:[%s2] sm:$0xff]
  %v17 = vld [vmem:[%s2 + $0x8] sm:$0xff]
  %v18 = vld [vmem:[%s2 + $0x10] sm:$0xff]
  %v19 = vld [vmem:[%s2 + $0x18] sm:$0xff]
  %v20 = vld [vmem:[%s2 + $0x20] sm:$0xff]
  %v21 = vld [vmem:[%s2 + $0x28] sm:$0xff]
  %v22 = vld [vmem:[%s2 + $0x30] sm:$0xff]
  %v23 = vld [vmem:[%s2 + $0x38] sm:$0xff]
  %v24 = vld [vmem:[%s2 + $0x40] sm:$0x33]
  %v25 = vld [vmem:[%s2 + $0x48] sm:$0x33]
  %v26 = vld [vmem:[%s1] sm:$0xff]
  %28 = vset.pattern.permute.xlu0 0
  %29 = vperm.xlu0 %28, %v26
  %v30 = vpop.permute.xlu0 %29
  %v42 = vunpack.c.l.b16 %v16
  %v43 = vunpack.c.h.b16 %v16
  %v44 = vunpack.c.l.b16 %v17
  %v45 = vunpack.c.h.b16 %v17
  %v46 = vunpack.c.l.b16 %v18
  %v47 = vunpack.c.h.b16 %v18
  %v48 = vunpack.c.l.b16 %v19
  %v49 = vunpack.c.h.b16 %v19
  %v50 = vunpack.c.l.b16 %v20
  %v51 = vunpack.c.h.b16 %v20
  %v52 = vunpack.c.l.b16 %v21
  %v53 = vunpack.c.h.b16 %v21
  %v54 = vunpack.c.l.b16 %v22
  %v55 = vunpack.c.h.b16 %v22
  %v56 = vunpack.c.l.b16 %v23
  %v57 = vunpack.c.h.b16 %v23
  %v58 = vunpack.c.l.b16 %v24
  %v59 = vunpack.c.h.b16 %v24
  %v60 = vunpack.c.l.b16 %v25
  %v61 = vunpack.c.h.b16 %v25
  %v62 = vpack.c.b16 %v46, %v42
  %v63 = vpack.c.b16 %v47, %v43
  %v64 = vpack.c.b16 %v48, %v44
  %v65 = vpack.c.b16 %v49, %v45
  %v66 = vpack.c.b16 %v54, %v50
  %v67 = vpack.c.b16 %v55, %v51
  %v68 = vpack.c.b16 %v56, %v52
  %v69 = vpack.c.b16 %v57, %v53
  %v70 = vpack.c.b16 %v58, %v58
  %v71 = vpack.c.b16 %v59, %v59
  %v72 = vpack.c.b16 %v60, %v60
  %v73 = vpack.c.b16 %v61, %v61
  %vm82 = vcmask 293888
  %v84 = vsel %vm82, %v15, 0
  %vm86 = vcmask 1041408
  %v88 = vsel %vm86, %v70, 0
  %v91 = vsel %vm86, %v71, 0
  %v94 = vsel %vm86, %v72, 0
  %v97 = vsel %vm86, %v73, 0
  %99 = vmatpush.bf16.msra.mxu0 0
  %100 = vmatpush.bf16.msra.mxu0 0
  %101 = vmatpush.bf16.msra.mxu0 0
  %102 = vmatpush.bf16.msra.mxu0 0
  %103 = vmatpush.bf16.msra.mxu0 0
  %104 = vmatpush.bf16.msra.mxu0 %v88
  %105 = vmatpush.bf16.msra.mxu0 %v66
  %106 = vmatpush.bf16.msra.mxu0 %v62
  %107 = vmatmul.bf16.gmra.mxu0 %v84
  %v108 = vpop.f32.mrf.mxu0
  %v109 = vadd.f32 %v30, %v108
  %v110 = vpop.f32.mrf.mxu0
  %111 = vdwg.mxu0
  %112 = vmatpush.bf16.msra.mxu0 0
  %113 = vmatpush.bf16.msra.mxu0 0
  %114 = vmatpush.bf16.msra.mxu0 0
  %115 = vmatpush.bf16.msra.mxu0 0
  %116 = vmatpush.bf16.msra.mxu0 0
  %117 = vmatpush.bf16.msra.mxu0 %v91
  %118 = vmatpush.bf16.msra.mxu0 %v67
  %119 = vmatpush.bf16.msra.mxu0 %v63
  %120 = vmatmul.bf16.gmra.mxu0 %v84
  %v121 = vpop.f32.mrf.mxu0
  %v122 = vadd.f32 %v30, %v121
  %v123 = vpop.f32.mrf.mxu0
  %124 = vdwg.mxu0
  %125 = vmatpush.bf16.msra.mxu0 0
  %126 = vmatpush.bf16.msra.mxu0 0
  %127 = vmatpush.bf16.msra.mxu0 0
  %128 = vmatpush.bf16.msra.mxu0 0
  %129 = vmatpush.bf16.msra.mxu0 0
  %130 = vmatpush.bf16.msra.mxu0 %v94
  %131 = vmatpush.bf16.msra.mxu0 %v68
  %132 = vmatpush.bf16.msra.mxu0 %v64
  %133 = vmatmul.bf16.gmra.mxu0 %v84
  %v134 = vpop.f32.mrf.mxu0
  %v135 = vadd.f32 %v30, %v134
  %v136 = vpop.f32.mrf.mxu0
  %137 = vdwg.mxu0
  %138 = vmatpush.bf16.msra.mxu0 0
  %139 = vmatpush.bf16.msra.mxu0 0
  %140 = vmatpush.bf16.msra.mxu0 0
  %141 = vmatpush.bf16.msra.mxu0 0
  %142 = vmatpush.bf16.msra.mxu0 0
  %143 = vmatpush.bf16.msra.mxu0 %v97
  %144 = vmatpush.bf16.msra.mxu0 %v69
  %145 = vmatpush.bf16.msra.mxu0 %v65
  %146 = vmatmul.bf16.gmra.mxu0 %v84
  %v147 = vpop.f32.mrf.mxu0
  %v148 = vadd.f32 %v30, %v147
  %v149 = vpop.f32.mrf.mxu0
  %150 = vdwg.mxu0
  %v151 = vmax.f32 %v109, 0.0
  %v152 = vmax.f32 %v122, 0.0
  %v153 = vmax.f32 %v135, 0.0
  %v154 = vmax.f32 %v148, 0.0
  %v155 = vpack.c.bf16 %v152, %v151
  %v156 = vpack.c.bf16 %v154, %v153
  %157 = vst [vmem:[%s3] sm:$0xff] %v155
  %158 = vst [vmem:[%s3 + $0x8] sm:$0xff] %v156
  // Predicated region
  $region14: #{forward.16} parent=0 // pred_check
    _
  $region15: #{forward.16} parent=0 // pred_check_branch
    %160 = sbr.rel (0) target = $region17
  $region16: #{forward.16} parent=0 // pred_region
    _
  $region17: #{forward.16} parent=0 // pred_fallthru
    _
  // Predicated region
  $region18: #{forward.16} parent=0 // pred_check
    _
  $region19: #{forward.16} parent=0 // pred_check_branch
    %162 = sbr.rel (0) target = $region21
  $region20: #{forward.16} parent=0 // pred_region
    _
  $region21: #{forward.16} parent=0 // pred_fallthru
    _

// kernel: forward.17
$region0: #{forward.17}
  #allocation0 [shape = 'u32[]', space=smem, size = 0x4, offset = 0x4, fixed_abs, tag = 'smem constant byte address 0x4 - core index']
  #allocation1 [shape = 'u32[72,128]{1,0:T(1,128)}', space=vmem, size = 0x9000, scoped, tag = 'internal scratch']
  %s0 = inlined_call_operand.vmem [shape: bf16[8,72], index: 0, kind: input, shape index: {}]
  %s1 = inlined_call_operand.vmem [shape: f32[8,1], index: 1, kind: input, shape index: {}]
  %s2 = inlined_call_operand.vmem [shape: bf16[72,128], index: 2, kind: input, shape index: {}]
  %s3 = inlined_call_operand.vmem [shape: bf16[72,128], index: 3, kind: input, shape index: {}]
  %s4 = inlined_call_operand.vmem [shape: bf16[72,128], index: 4, kind: input, shape index: {}]
  %s5 = inlined_call_operand.vmem [shape: bf16[72,128], index: 5, kind: input, shape index: {}]
  %s6 = inlined_call_operand.vmem [shape: bf16[8,128], index: 6, kind: output, shape index: {}]
  %s7 = sld [smem:[#allocation0]]
  $region34: #{forward.17} parent=0
    _
  %s9 = ssub.s32 1, %s7
  %s10 = scalar_select 0, %s9, %s7
  // Predicated region
  $region2: #{forward.17} parent=0 // pred_check
    _
  $region3: #{forward.17} parent=0 // pred_check_branch
    %12 = sbr.rel (0) target = $region5
  $region4: #{forward.17} parent=0 // pred_region
    _
  $region5: #{forward.17} parent=0 // pred_fallthru
    _
  // Predicated region
  $region6: #{forward.17} parent=0 // pred_check
    _
  $region7: #{forward.17} parent=0 // pred_check_branch
    %14 = sbr.rel (0) target = $region9
  $region8: #{forward.17} parent=0 // pred_region
    _
  $region9: #{forward.17} parent=0 // pred_fallthru
    _
  // Predicated region
  $region10: #{forward.17} parent=0 // pred_check
    _
  $region11: #{forward.17} parent=0 // pred_check_branch
    %16 = sbr.rel (0) target = $region13
  $region12: #{forward.17} parent=0 // pred_region
    _
  $region13: #{forward.17} parent=0 // pred_fallthru
    _
  // Predicated region
  $region14: #{forward.17} parent=0 // pred_check
    _
  $region15: #{forward.17} parent=0 // pred_check_branch
    %18 = sbr.rel (0) target = $region17
  $region16: #{forward.17} parent=0 // pred_region
    _
  $region17: #{forward.17} parent=0 // pred_fallthru
    _
  // Predicated region
  $region18: #{forward.17} parent=0 // pred_check
    _
  $region19: #{forward.17} parent=0 // pred_check_branch
    %20 = sbr.rel (0) target = $region21
  $region20: #{forward.17} parent=0 // pred_region
    _
  $region21: #{forward.17} parent=0 // pred_fallthru
    _
  // Predicated region
  $region22: #{forward.17} parent=0 // pred_check
    _
  $region23: #{forward.17} parent=0 // pred_check_branch
    %22 = sbr.rel (0) target = $region25
  $region24: #{forward.17} parent=0 // pred_region
    _
  $region25: #{forward.17} parent=0 // pred_fallthru
    _
  %v24 = vld [vmem:[%s0] sm:$0xf]
  %v25 = vld [vmem:[%s2] sm:$0xf]
  %v26 = vld [vmem:[%s2 + $0x4] sm:$0xf]
  %v27 = vld [vmem:[%s2 + $0x8] sm:$0xf]
  %v28 = vld [vmem:[%s2 + $0xc] sm:$0xf]
  %v29 = vld [vmem:[%s2 + $0x10] sm:$0xf]
  %v30 = vld [vmem:[%s2 + $0x14] sm:$0xf]
  %v31 = vld [vmem:[%s2 + $0x18] sm:$0xf]
  %v32 = vld [vmem:[%s2 + $0x1c] sm:$0xf]
  %v33 = vld [vmem:[%s2 + $0x20] sm:$0xf]
  %v43 = vunpack.c.l.b16 %v25
  %v44 = vunpack.c.l.b16 %v26
  %v45 = vunpack.c.l.b16 %v27
  %v46 = vunpack.c.l.b16 %v28
  %v47 = vunpack.c.l.b16 %v29
  %v48 = vunpack.c.l.b16 %v30
  %v49 = vunpack.c.l.b16 %v31
  %v50 = vunpack.c.l.b16 %v32
  %v51 = vunpack.c.l.b16 %v33
  %v52 = vpack.c.b16 %v44, %v43
  %v53 = vpack.c.b16 %v46, %v45
  %v54 = vpack.c.b16 %v48, %v47
  %v55 = vpack.c.b16 %v50, %v49
  %v56 = vpack.c.b16 %v51, %v51
  %vm61 = vcmask 588800
  %v63 = vsel %vm61, %v24, 0
  %vm65 = vcmask 1043456
  %v67 = vsel %vm65, %v56, 0
  %69 = vmatpush.bf16.msra.mxu0 0
  %70 = vmatpush.bf16.msra.mxu0 0
  %71 = vmatpush.bf16.msra.mxu0 0
  %72 = vmatpush.bf16.msra.mxu0 %v67
  %73 = vmatpush.bf16.msra.mxu0 %v55
  %74 = vmatpush.bf16.msra.mxu0 %v54
  %75 = vmatpush.bf16.msra.mxu0 %v53
  %76 = vmatpush.bf16.msra.mxu0 %v52
  %77 = vmatmul.bf16.gmra.mxu0 %v63
  %v78 = vpop.f32.mrf.mxu0
  %v79 = vadd.f32 0.0, %v78
  %v80 = vpop.f32.mrf.mxu0
  %81 = vdwg.mxu0
  %v82 = vld [vmem:[%s3] sm:$0xf]
  %v83 = vld [vmem:[%s3 + $0x4] sm:$0xf]
  %v84 = vld [vmem:[%s3 + $0x8] sm:$0xf]
  %v85 = vld [vmem:[%s3 + $0xc] sm:$0xf]
  %v86 = vld [vmem:[%s3 + $0x10] sm:$0xf]
  %v87 = vld [vmem:[%s3 + $0x14] sm:$0xf]
  %v88 = vld [vmem:[%s3 + $0x18] sm:$0xf]
  %v89 = vld [vmem:[%s3 + $0x1c] sm:$0xf]
  %v90 = vld [vmem:[%s3 + $0x20] sm:$0xf]
  %v100 = vunpack.c.l.b16 %v82
  %v101 = vunpack.c.l.b16 %v83
  %v102 = vunpack.c.l.b16 %v84
  %v103 = vunpack.c.l.b16 %v85
  %v104 = vunpack.c.l.b16 %v86
  %v105 = vunpack.c.l.b16 %v87
  %v106 = vunpack.c.l.b16 %v88
  %v107 = vunpack.c.l.b16 %v89
  %v108 = vunpack.c.l.b16 %v90
  %v109 = vpack.c.b16 %v101, %v100
  %v110 = vpack.c.b16 %v103, %v102
  %v111 = vpack.c.b16 %v105, %v104
  %v112 = vpack.c.b16 %v107, %v106
  %v113 = vpack.c.b16 %v108, %v108
  %v119 = vsel %vm65, %v113, 0
  %121 = vmatpush.bf16.msra.mxu0 0
  %122 = vmatpush.bf16.msra.mxu0 0
  %123 = vmatpush.bf16.msra.mxu0 0
  %124 = vmatpush.bf16.msra.mxu0 %v119
  %125 = vmatpush.bf16.msra.mxu0 %v112
  %126 = vmatpush.bf16.msra.mxu0 %v111
  %127 = vmatpush.bf16.msra.mxu0 %v110
  %128 = vmatpush.bf16.msra.mxu0 %v109
  %129 = vmatmul.bf16.gmra.mxu0 %v63
  %v130 = vpop.f32.mrf.mxu0
  %v131 = vadd.f32 0.0, %v130
  %v132 = vpop.f32.mrf.mxu0
  %133 = vdwg.mxu0
  %v134 = vmax.f32 %v79, %v131
  %v135 = vld [vmem:[%s4] sm:$0xf]
  %v136 = vld [vmem:[%s4 + $0x4] sm:$0xf]
  %v137 = vld [vmem:[%s4 + $0x8] sm:$0xf]
  %v138 = vld [vmem:[%s4 + $0xc] sm:$0xf]
  %v139 = vld [vmem:[%s4 + $0x10] sm:$0xf]
  %v140 = vld [vmem:[%s4 + $0x14] sm:$0xf]
  %v141 = vld [vmem:[%s4 + $0x18] sm:$0xf]
  %v142 = vld [vmem:[%s4 + $0x1c] sm:$0xf]
  %v143 = vld [vmem:[%s4 + $0x20] sm:$0xf]
  %v153 = vunpack.c.l.b16 %v135
  %v154 = vunpack.c.l.b16 %v136
  %v155 = vunpack.c.l.b16 %v137
  %v156 = vunpack.c.l.b16 %v138
  %v157 = vunpack.c.l.b16 %v139
  %v158 = vunpack.c.l.b16 %v140
  %v159 = vunpack.c.l.b16 %v141
  %v160 = vunpack.c.l.b16 %v142
  %v161 = vunpack.c.l.b16 %v143
  %v162 = vpack.c.b16 %v154, %v153
  %v163 = vpack.c.b16 %v156, %v155
  %v164 = vpack.c.b16 %v158, %v157
  %v165 = vpack.c.b16 %v160, %v159
  %v166 = vpack.c.b16 %v161, %v161
  %v172 = vsel %vm65, %v166, 0
  %174 = vmatpush.bf16.msra.mxu0 0
  %175 = vmatpush.bf16.msra.mxu0 0
  %176 = vmatpush.bf16.msra.mxu0 0
  %177 = vmatpush.bf16.msra.mxu0 %v172
  %178 = vmatpush.bf16.msra.mxu0 %v165
  %179 = vmatpush.bf16.msra.mxu0 %v164
  %180 = vmatpush.bf16.msra.mxu0 %v163
  %181 = vmatpush.bf16.msra.mxu0 %v162
  %182 = vmatmul.bf16.gmra.mxu0 %v63
  %v183 = vpop.f32.mrf.mxu0
  %v184 = vadd.f32 0.0, %v183
  %v185 = vpop.f32.mrf.mxu0
  %186 = vdwg.mxu0
  %v187 = vmax.f32 %v134, %v184
  %v188 = vld [vmem:[%s5] sm:$0xf]
  %v189 = vld [vmem:[%s5 + $0x4] sm:$0xf]
  %v190 = vld [vmem:[%s5 + $0x8] sm:$0xf]
  %v191 = vld [vmem:[%s5 + $0xc] sm:$0xf]
  %v192 = vld [vmem:[%s5 + $0x10] sm:$0xf]
  %v193 = vld [vmem:[%s5 + $0x14] sm:$0xf]
  %v194 = vld [vmem:[%s5 + $0x18] sm:$0xf]
  %v195 = vld [vmem:[%s5 + $0x1c] sm:$0xf]
  %v196 = vld [vmem:[%s5 + $0x20] sm:$0xf]
  %v206 = vunpack.c.l.b16 %v188
  %v207 = vunpack.c.l.b16 %v189
  %v208 = vunpack.c.l.b16 %v190
  %v209 = vunpack.c.l.b16 %v191
  %v210 = vunpack.c.l.b16 %v192
  %v211 = vunpack.c.l.b16 %v193
  %v212 = vunpack.c.l.b16 %v194
  %v213 = vunpack.c.l.b16 %v195
  %v214 = vunpack.c.l.b16 %v196
  %v215 = vpack.c.b16 %v207, %v206
  %v216 = vpack.c.b16 %v209, %v208
  %v217 = vpack.c.b16 %v211, %v210
  %v218 = vpack.c.b16 %v213, %v212
  %v219 = vpack.c.b16 %v214, %v214
  %v225 = vsel %vm65, %v219, 0
  %227 = vmatpush.bf16.msra.mxu0 0
  %228 = vmatpush.bf16.msra.mxu0 0
  %229 = vmatpush.bf16.msra.mxu0 0
  %230 = vmatpush.bf16.msra.mxu0 %v225
  %231 = vmatpush.bf16.msra.mxu0 %v218
  %232 = vmatpush.bf16.msra.mxu0 %v217
  %233 = vmatpush.bf16.msra.mxu0 %v216
  %234 = vmatpush.bf16.msra.mxu0 %v215
  %235 = vmatmul.bf16.gmra.mxu0 %v63
  %v236 = vpop.f32.mrf.mxu0
  %v237 = vadd.f32 0.0, %v236
  %v238 = vpop.f32.mrf.mxu0
  %239 = vdwg.mxu0
  %v240 = vmax.f32 %v187, %v237
  %v241 = vld [vmem:[%s1] sm:$0xff]
  %243 = vset.pattern.permute.xlu0 0
  %244 = vperm.xlu0 %243, %v241
  %v245 = vpop.permute.xlu0 %244
  %v247 = vadd.f32 %v240, %v245
  %v248 = vmax.f32 %v247, 0.0
  %v249 = vpack.c.bf16 %v248, %v248
  %250 = vst [vmem:[%s6] sm:$0xf] %v249
  // Predicated region
  $region26: #{forward.17} parent=0 // pred_check
    _
  $region27: #{forward.17} parent=0 // pred_check_branch
    %252 = sbr.rel (0) target = $region29
  $region28: #{forward.17} parent=0 // pred_region
    _
  $region29: #{forward.17} parent=0 // pred_fallthru
    _
  // Predicated region
  $region30: #{forward.17} parent=0 // pred_check
    _
  $region31: #{forward.17} parent=0 // pred_check_branch
    %254 = sbr.rel (0) target = $region33
  $region32: #{forward.17} parent=0 // pred_region
    _
  $region33: #{forward.17} parent=0 // pred_fallthru
    _

// kernel: forward.18
$region0: #{forward.18}
  #allocation0 [shape = 'u32[]', space=smem, size = 0x4, offset = 0x4, fixed_abs, tag = 'smem constant byte address 0x4 - core index']
  #allocation1 [shape = 'u32[72,128]{1,0:T(1,128)}', space=vmem, size = 0x9000, scoped, tag = 'internal scratch']
  %s0 = inlined_call_operand.vmem [shape: bf16[16,72], index: 0, kind: input, shape index: {}]
  %s1 = inlined_call_operand.vmem [shape: f32[16,1], index: 1, kind: input, shape index: {}]
  %s2 = inlined_call_operand.vmem [shape: bf16[72,128], index: 2, kind: input, shape index: {}]
  %s3 = inlined_call_operand.vmem [shape: bf16[16,128], index: 3, kind: output, shape index: {}]
  %s4 = sld [smem:[#allocation0]]
  $region22: #{forward.18} parent=0
    _
  %s6 = ssub.s32 1, %s4
  %s7 = scalar_select 0, %s6, %s4
  // Predicated region
  $region2: #{forward.18} parent=0 // pred_check
    _
  $region3: #{forward.18} parent=0 // pred_check_branch
    %9 = sbr.rel (0) target = $region5
  $region4: #{forward.18} parent=0 // pred_region
    _
  $region5: #{forward.18} parent=0 // pred_fallthru
    _
  // Predicated region
  $region6: #{forward.18} parent=0 // pred_check
    _
  $region7: #{forward.18} parent=0 // pred_check_branch
    %11 = sbr.rel (0) target = $region9
  $region8: #{forward.18} parent=0 // pred_region
    _
  $region9: #{forward.18} parent=0 // pred_fallthru
    _
  // Predicated region
  $region10: #{forward.18} parent=0 // pred_check
    _
  $region11: #{forward.18} parent=0 // pred_check_branch
    %13 = sbr.rel (0) target = $region13
  $region12: #{forward.18} parent=0 // pred_region
    _
  $region13: #{forward.18} parent=0 // pred_fallthru
    _
  %v15 = vld [vmem:[%s0] sm:$0xf]
  %v16 = vld [vmem:[%s0 + $0x4] sm:$0xf]
  %v17 = vld [vmem:[%s2] sm:$0xf]
  %v18 = vld [vmem:[%s2 + $0x4] sm:$0xf]
  %v19 = vld [vmem:[%s2 + $0x8] sm:$0xf]
  %v20 = vld [vmem:[%s2 + $0xc] sm:$0xf]
  %v21 = vld [vmem:[%s2 + $0x10] sm:$0xf]
  %v22 = vld [vmem:[%s2 + $0x14] sm:$0xf]
  %v23 = vld [vmem:[%s2 + $0x18] sm:$0xf]
  %v24 = vld [vmem:[%s2 + $0x1c] sm:$0xf]
  %v25 = vld [vmem:[%s2 + $0x20] sm:$0xf]
  %v26 = vld [vmem:[%s1] sm:$0xff]
  %v27 = vld [vmem:[%s1 + $0x8] sm:$0xff]
  %29 = vset.pattern.permute.xlu0 0
  %30 = vperm.xlu0 %29, %v26
  %v31 = vpop.permute.xlu0 %30
  %34 = vset.pattern.permute.xlu0 0
  %35 = vperm.xlu0 %34, %v27
  %v36 = vpop.permute.xlu0 %35
  %v40 = vunpack.c.l.b16 %v15
  %v41 = vunpack.c.l.b16 %v16
  %v42 = vpack.c.b16 %v41, %v40
  %v52 = vunpack.c.l.b16 %v17
  %v53 = vunpack.c.l.b16 %v18
  %v54 = vunpack.c.l.b16 %v19
  %v55 = vunpack.c.l.b16 %v20
  %v56 = vunpack.c.l.b16 %v21
  %v57 = vunpack.c.l.b16 %v22
  %v58 = vunpack.c.l.b16 %v23
  %v59 = vunpack.c.l.b16 %v24
  %v60 = vunpack.c.l.b16 %v25
  %v61 = vpack.c.b16 %v53, %v52
  %v62 = vpack.c.b16 %v55, %v54
  %v63 = vpack.c.b16 %v57, %v56
  %v64 = vpack.c.b16 %v59, %v58
  %v65 = vpack.c.b16 %v60, %v60
  %vm70 = vcmask 588800
  %v72 = vsel %vm70, %v42, 0
  %vm74 = vcmask 1043456
  %v76 = vsel %vm74, %v65, 0
  %78 = vmatpush.bf16.msra.mxu0 0
  %79 = vmatpush.bf16.msra.mxu0 0
  %80 = vmatpush.bf16.msra.mxu0 0
  %81 = vmatpush.bf16.msra.mxu0 %v76
  %82 = vmatpush.bf16.msra.mxu0 %v64
  %83 = vmatpush.bf16.msra.mxu0 %v63
  %84 = vmatpush.bf16.msra.mxu0 %v62
  %85 = vmatpush.bf16.msra.mxu0 %v61
  %86 = vmatmul.bf16.gmra.mxu0 %v72
  %v87 = vpop.f32.mrf.mxu0
  %v88 = vadd.f32 %v31, %v87
  %v89 = vpop.f32.mrf.mxu0
  %v90 = vadd.f32 %v36, %v89
  %91 = vdwg.mxu0
  %v92 = vmax.f32 %v88, 0.0
  %v93 = vmax.f32 %v90, 0.0
  %v94 = vpack.c.bf16 %v92, %v92
  %v95 = vpack.c.bf16 %v93, %v93
  %96 = vst [vmem:[%s3] sm:$0xf] %v94
  %97 = vst [vmem:[%s3 + $0x4] sm:$0xf] %v95
  // Predicated region
  $region14: #{forward.18} parent=0 // pred_check
    _
  $region15: #{forward.18} parent=0 // pred_check_branch
    %99 = sbr.rel (0) target = $region17
  $region16: #{forward.18} parent=0 // pred_region
    _
  $region17: #{forward.18} parent=0 // pred_fallthru
    _
  // Predicated region
  $region18: #{forward.18} parent=0 // pred_check
    _
  $region19: #{forward.18} parent=0 // pred_check_branch
    %101 = sbr.rel (0) target = $region21
  $region20: #{forward.18} parent=0 // pred_region
    _
  $region21: #{forward.18} parent=0 // pred_fallthru
    _

// kernel: forward.19
$region0: #{forward.19}
  #allocation0 [shape = 'u32[]', space=smem, size = 0x4, offset = 0x4, fixed_abs, tag = 'smem constant byte address 0x4 - core index']
  #allocation1 [shape = 'u32[72,128]{1,0:T(1,128)}', space=vmem, size = 0x9000, scoped, tag = 'internal scratch']
  %s0 = inlined_call_operand.vmem [shape: bf16[16,144], index: 0, kind: input, shape index: {}]
  %s1 = inlined_call_operand.vmem [shape: f32[16,1], index: 1, kind: input, shape index: {}]
  %s2 = inlined_call_operand.vmem [shape: bf16[144,128], index: 2, kind: input, shape index: {}]
  %s3 = inlined_call_operand.vmem [shape: bf16[16,128], index: 3, kind: output, shape index: {}]
  %s4 = sld [smem:[#allocation0]]
  $region22: #{forward.19} parent=0
    _
  %s6 = ssub.s32 1, %s4
  %s7 = scalar_select 0, %s6, %s4
  // Predicated region
  $region2: #{forward.19} parent=0 // pred_check
    _
  $region3: #{forward.19} parent=0 // pred_check_branch
    %9 = sbr.rel (0) target = $region5
  $region4: #{forward.19} parent=0 // pred_region
    _
  $region5: #{forward.19} parent=0 // pred_fallthru
    _
  // Predicated region
  $region6: #{forward.19} parent=0 // pred_check
    _
  $region7: #{forward.19} parent=0 // pred_check_branch
    %11 = sbr.rel (0) target = $region9
  $region8: #{forward.19} parent=0 // pred_region
    _
  $region9: #{forward.19} parent=0 // pred_fallthru
    _
  // Predicated region
  $region10: #{forward.19} parent=0 // pred_check
    _
  $region11: #{forward.19} parent=0 // pred_check_branch
    %13 = sbr.rel (0) target = $region13
  $region12: #{forward.19} parent=0 // pred_region
    _
  $region13: #{forward.19} parent=0 // pred_fallthru
    _
  %v15 = vld [vmem:[%s0] sm:$0xff]
  %v16 = vld [vmem:[%s0 + $0x8] sm:$0xff]
  %v17 = vld [vmem:[%s2] sm:$0xf]
  %v18 = vld [vmem:[%s2 + $0x4] sm:$0xf]
  %v19 = vld [vmem:[%s2 + $0x8] sm:$0xf]
  %v20 = vld [vmem:[%s2 + $0xc] sm:$0xf]
  %v21 = vld [vmem:[%s2 + $0x10] sm:$0xf]
  %v22 = vld [vmem:[%s2 + $0x14] sm:$0xf]
  %v23 = vld [vmem:[%s2 + $0x18] sm:$0xf]
  %v24 = vld [vmem:[%s2 + $0x1c] sm:$0xf]
  %v25 = vld [vmem:[%s2 + $0x20] sm:$0xf]
  %v26 = vld [vmem:[%s2 + $0x24] sm:$0xf]
  %v27 = vld [vmem:[%s2 + $0x28] sm:$0xf]
  %v28 = vld [vmem:[%s2 + $0x2c] sm:$0xf]
  %v29 = vld [vmem:[%s2 + $0x30] sm:$0xf]
  %v30 = vld [vmem:[%s2 + $0x34] sm:$0xf]
  %v31 = vld [vmem:[%s2 + $0x38] sm:$0xf]
  %v32 = vld [vmem:[%s2 + $0x3c] sm:$0xf]
  %v33 = vld [vmem:[%s2 + $0x40] sm:$0xf]
  %v34 = vld [vmem:[%s2 + $0x44] sm:$0xf]
  %v35 = vld [vmem:[%s1] sm:$0xff]
  %v36 = vld [vmem:[%s1 + $0x8] sm:$0xff]
  %38 = vset.pattern.permute.xlu0 0
  %39 = vperm.xlu0 %38, %v35
  %v40 = vpop.permute.xlu0 %39
  %43 = vset.pattern.permute.xlu0 0
  %44 = vperm.xlu0 %43, %v36
  %v45 = vpop.permute.xlu0 %44
  %v49 = vunpack.c.l.b16 %v15
  %v50 = vunpack.c.h.b16 %v15
  %v51 = vunpack.c.l.b16 %v16
  %v52 = vunpack.c.h.b16 %v16
  %v53 = vpack.c.b16 %v51, %v49
  %v54 = vpack.c.b16 %v52, %v50
  %v74 = vunpack.c.l.b16 %v17
  %v75 = vunpack.c.l.b16 %v18
  %v76 = vunpack.c.l.b16 %v19
  %v77 = vunpack.c.l.b16 %v20
  %v78 = vunpack.c.l.b16 %v21
  %v79 = vunpack.c.l.b16 %v22
  %v80 = vunpack.c.l.b16 %v23
  %v81 = vunpack.c.l.b16 %v24
  %v82 = vunpack.c.l.b16 %v25
  %v83 = vunpack.c.l.b16 %v26
  %v84 = vunpack.c.l.b16 %v27
  %v85 = vunpack.c.l.b16 %v28
  %v86 = vunpack.c.l.b16 %v29
  %v87 = vunpack.c.l.b16 %v30
  %v88 = vunpack.c.l.b16 %v31
  %v89 = vunpack.c.l.b16 %v32
  %v90 = vunpack.c.l.b16 %v33
  %v91 = vunpack.c.l.b16 %v34
  %v92 = vpack.c.b16 %v75, %v74
  %v93 = vpack.c.b16 %v77, %v76
  %v94 = vpack.c.b16 %v79, %v78
  %v95 = vpack.c.b16 %v81, %v80
  %v96 = vpack.c.b16 %v83, %v82
  %v97 = vpack.c.b16 %v85, %v84
  %v98 = vpack.c.b16 %v87, %v86
  %v99 = vpack.c.b16 %v89, %v88
  %v100 = vpack.c.b16 %v91, %v90
  %vm110 = vcmask 130048
  %v112 = vsel %vm110, %v54, 0
  %114 = vmatpush.bf16.msra.mxu0 %v99
  %115 = vmatpush.bf16.msra.mxu0 %v98
  %116 = vmatpush.bf16.msra.mxu0 %v97
  %117 = vmatpush.bf16.msra.mxu0 %v96
  %118 = vmatpush.bf16.msra.mxu0 %v95
  %119 = vmatpush.bf16.msra.mxu0 %v94
  %120 = vmatpush.bf16.msra.mxu0 %v93
  %121 = vmatpush.bf16.msra.mxu0 %v92
  %122 = vmatmul.bf16.gmra.mxu0 %v53
  %v123 = vpop.f32.mrf.mxu0
  %v124 = vadd.f32 %v40, %v123
  %v125 = vpop.f32.mrf.mxu0
  %v126 = vadd.f32 %v45, %v125
  %127 = vdwg.mxu0
  %128 = vmatpush.bf16.msra.mxu0 0
  %129 = vmatpush.bf16.msra.mxu0 0
  %130 = vmatpush.bf16.msra.mxu0 0
  %131 = vmatpush.bf16.msra.mxu0 0
  %132 = vmatpush.bf16.msra.mxu0 0
  %133 = vmatpush.bf16.msra.mxu0 0
  %134 = vmatpush.bf16.msra.mxu0 0
  %135 = vmatpush.bf16.msra.mxu0 %v100
  %136 = vmatmul.bf16.gmra.mxu0 %v112
  %v137 = vpop.f32.mrf.mxu0
  %v138 = vadd.f32 %v124, %v137
  %v139 = vpop.f32.mrf.mxu0
  %v140 = vadd.f32 %v126, %v139
  %141 = vdwg.mxu0
  %v142 = vmax.f32 %v138, 0.0
  %v143 = vmax.f32 %v140, 0.0
  %v144 = vpack.c.bf16 %v142, %v142
  %v145 = vpack.c.bf16 %v143, %v143
  %146 = vst [vmem:[%s3] sm:$0xf] %v144
  %147 = vst [vmem:[%s3 + $0x4] sm:$0xf] %v145
  // Predicated region
  $region14: #{forward.19} parent=0 // pred_check
    _
  $region15: #{forward.19} parent=0 // pred_check_branch
    %149 = sbr.rel (0) target = $region17
  $region16: #{forward.19} parent=0 // pred_region
    _
  $region17: #{forward.19} parent=0 // pred_fallthru
    _
  // Predicated region
  $region18: #{forward.19} parent=0 // pred_check
    _
  $region19: #{forward.19} parent=0 // pred_check_branch
    %151 = sbr.rel (0) target = $region21
  $region20: #{forward.19} parent=0 // pred_region
    _
  $region21: #{forward.19} parent=0 // pred_fallthru
    _

// kernel: forward.20
$region0: #{forward.20}
  #allocation0 [shape = 'u32[]', space=smem, size = 0x4, offset = 0x4, fixed_abs, tag = 'smem constant byte address 0x4 - core index']
  #allocation1 [shape = 'u32[72,128]{1,0:T(1,128)}', space=vmem, size = 0x9000, scoped, tag = 'internal scratch']
  %s0 = inlined_call_operand.vmem [shape: bf16[16,144], index: 0, kind: input, shape index: {}]
  %s1 = inlined_call_operand.vmem [shape: f32[16,1], index: 1, kind: input, shape index: {}]
  %s2 = inlined_call_operand.vmem [shape: bf16[144,32], index: 2, kind: input, shape index: {}]
  %s3 = inlined_call_operand.vmem [shape: bf16[144,32], index: 3, kind: input, shape index: {}]
  %s4 = inlined_call_operand.vmem [shape: bf16[144,32], index: 4, kind: input, shape index: {}]
  %s5 = inlined_call_operand.vmem [shape: bf16[144,32], index: 5, kind: input, shape index: {}]
  %s6 = inlined_call_operand.vmem [shape: bf16[16,32], index: 6, kind: output, shape index: {}]
  %s7 = sld [smem:[#allocation0]]
  $region34: #{forward.20} parent=0
    _
  %s9 = ssub.s32 1, %s7
  %s10 = scalar_select 0, %s9, %s7
  // Predicated region
  $region2: #{forward.20} parent=0 // pred_check
    _
  $region3: #{forward.20} parent=0 // pred_check_branch
    %12 = sbr.rel (0) target = $region5
  $region4: #{forward.20} parent=0 // pred_region
    _
  $region5: #{forward.20} parent=0 // pred_fallthru
    _
  // Predicated region
  $region6: #{forward.20} parent=0 // pred_check
    _
  $region7: #{forward.20} parent=0 // pred_check_branch
    %14 = sbr.rel (0) target = $region9
  $region8: #{forward.20} parent=0 // pred_region
    _
  $region9: #{forward.20} parent=0 // pred_fallthru
    _
  // Predicated region
  $region10: #{forward.20} parent=0 // pred_check
    _
  $region11: #{forward.20} parent=0 // pred_check_branch
    %16 = sbr.rel (0) target = $region13
  $region12: #{forward.20} parent=0 // pred_region
    _
  $region13: #{forward.20} parent=0 // pred_fallthru
    _
  // Predicated region
  $region14: #{forward.20} parent=0 // pred_check
    _
  $region15: #{forward.20} parent=0 // pred_check_branch
    %18 = sbr.rel (0) target = $region17
  $region16: #{forward.20} parent=0 // pred_region
    _
  $region17: #{forward.20} parent=0 // pred_fallthru
    _
  // Predicated region
  $region18: #{forward.20} parent=0 // pred_check
    _
  $region19: #{forward.20} parent=0 // pred_check_branch
    %20 = sbr.rel (0) target = $region21
  $region20: #{forward.20} parent=0 // pred_region
    _
  $region21: #{forward.20} parent=0 // pred_fallthru
    _
  // Predicated region
  $region22: #{forward.20} parent=0 // pred_check
    _
  $region23: #{forward.20} parent=0 // pred_check_branch
    %22 = sbr.rel (0) target = $region25
  $region24: #{forward.20} parent=0 // pred_region
    _
  $region25: #{forward.20} parent=0 // pred_fallthru
    _
  %v24 = vld [vmem:[%s0] sm:$0xff]
  %v25 = vld [vmem:[%s0 + $0x8] sm:$0xff]
  %v26 = vld [vmem:[%s2] sm:$0xf]
  %v27 = vld [vmem:[%s2 + $0x4] sm:$0xf]
  %v28 = vld [vmem:[%s2 + $0x8] sm:$0xf]
  %v29 = vld [vmem:[%s2 + $0xc] sm:$0xf]
  %v30 = vld [vmem:[%s2 + $0x10] sm:$0xf]
  %v31 = vld [vmem:[%s2 + $0x14] sm:$0xf]
  %v32 = vld [vmem:[%s2 + $0x18] sm:$0xf]
  %v33 = vld [vmem:[%s2 + $0x1c] sm:$0xf]
  %v34 = vld [vmem:[%s2 + $0x20] sm:$0xf]
  %v35 = vld [vmem:[%s2 + $0x24] sm:$0xf]
  %v36 = vld [vmem:[%s2 + $0x28] sm:$0xf]
  %v37 = vld [vmem:[%s2 + $0x2c] sm:$0xf]
  %v38 = vld [vmem:[%s2 + $0x30] sm:$0xf]
  %v39 = vld [vmem:[%s2 + $0x34] sm:$0xf]
  %v40 = vld [vmem:[%s2 + $0x38] sm:$0xf]
  %v41 = vld [vmem:[%s2 + $0x3c] sm:$0xf]
  %v42 = vld [vmem:[%s2 + $0x40] sm:$0xf]
  %v43 = vld [vmem:[%s2 + $0x44] sm:$0xf]
  %v46 = vunpack.c.l.b16 %v24
  %v47 = vunpack.c.h.b16 %v24
  %v48 = vunpack.c.l.b16 %v25
  %v49 = vunpack.c.h.b16 %v25
  %v50 = vpack.c.b16 %v48, %v46
  %v51 = vpack.c.b16 %v49, %v47
  %v71 = vunpack.c.l.b16 %v26
  %v72 = vunpack.c.l.b16 %v27
  %v73 = vunpack.c.l.b16 %v28
  %v74 = vunpack.c.l.b16 %v29
  %v75 = vunpack.c.l.b16 %v30
  %v76 = vunpack.c.l.b16 %v31
  %v77 = vunpack.c.l.b16 %v32
  %v78 = vunpack.c.l.b16 %v33
  %v79 = vunpack.c.l.b16 %v34
  %v80 = vunpack.c.l.b16 %v35
  %v81 = vunpack.c.l.b16 %v36
  %v82 = vunpack.c.l.b16 %v37
  %v83 = vunpack.c.l.b16 %v38
  %v84 = vunpack.c.l.b16 %v39
  %v85 = vunpack.c.l.b16 %v40
  %v86 = vunpack.c.l.b16 %v41
  %v87 = vunpack.c.l.b16 %v42
  %v88 = vunpack.c.l.b16 %v43
  %v89 = vpack.c.b16 %v72, %v71
  %v90 = vpack.c.b16 %v74, %v73
  %v91 = vpack.c.b16 %v76, %v75
  %v92 = vpack.c.b16 %v78, %v77
  %v93 = vpack.c.b16 %v80, %v79
  %v94 = vpack.c.b16 %v82, %v81
  %v95 = vpack.c.b16 %v84, %v83
  %v96 = vpack.c.b16 %v86, %v85
  %v97 = vpack.c.b16 %v88, %v87
  %vm107 = vcmask 130048
  %v109 = vsel %vm107, %v51, 0
  %111 = vmatpush.bf16.msra.mxu0 %v96
  %112 = vmatpush.bf16.msra.mxu0 %v95
  %113 = vmatpush.bf16.msra.mxu0 %v94
  %114 = vmatpush.bf16.msra.mxu0 %v93
  %115 = vmatpush.bf16.msra.mxu0 %v92
  %116 = vmatpush.bf16.msra.mxu0 %v91
  %117 = vmatpush.bf16.msra.mxu0 %v90
  %118 = vmatpush.bf16.msra.mxu0 %v89
  %119 = vmatmul.bf16.gmra.mxu0 %v50
  %v120 = vpop.f32.mrf.mxu0
  %v121 = vadd.f32 0.0, %v120
  %v122 = vpop.f32.mrf.mxu0
  %v123 = vadd.f32 0.0, %v122
  %124 = vdwg.mxu0
  %125 = vmatpush.bf16.msra.mxu0 0
  %126 = vmatpush.bf16.msra.mxu0 0
  %127 = vmatpush.bf16.msra.mxu0 0
  %128 = vmatpush.bf16.msra.mxu0 0
  %129 = vmatpush.bf16.msra.mxu0 0
  %130 = vmatpush.bf16.msra.mxu0 0
  %131 = vmatpush.bf16.msra.mxu0 0
  %132 = vmatpush.bf16.msra.mxu0 %v97
  %133 = vmatmul.bf16.gmra.mxu0 %v109
  %v134 = vpop.f32.mrf.mxu0
  %v135 = vadd.f32 %v121, %v134
  %v136 = vpop.f32.mrf.mxu0
  %v137 = vadd.f32 %v123, %v136
  %138 = vdwg.mxu0
  %v139 = vld [vmem:[%s3] sm:$0xf]
  %v140 = vld [vmem:[%s3 + $0x4] sm:$0xf]
  %v141 = vld [vmem:[%s3 + $0x8] sm:$0xf]
  %v142 = vld [vmem:[%s3 + $0xc] sm:$0xf]
  %v143 = vld [vmem:[%s3 + $0x10] sm:$0xf]
  %v144 = vld [vmem:[%s3 + $0x14] sm:$0xf]
  %v145 = vld [vmem:[%s3 + $0x18] sm:$0xf]
  %v146 = vld [vmem:[%s3 + $0x1c] sm:$0xf]
  %v147 = vld [vmem:[%s3 + $0x20] sm:$0xf]
  %v148 = vld [vmem:[%s3 + $0x24] sm:$0xf]
  %v149 = vld [vmem:[%s3 + $0x28] sm:$0xf]
  %v150 = vld [vmem:[%s3 + $0x2c] sm:$0xf]
  %v151 = vld [vmem:[%s3 + $0x30] sm:$0xf]
  %v152 = vld [vmem:[%s3 + $0x34] sm:$0xf]
  %v153 = vld [vmem:[%s3 + $0x38] sm:$0xf]
  %v154 = vld [vmem:[%s3 + $0x3c] sm:$0xf]
  %v155 = vld [vmem:[%s3 + $0x40] sm:$0xf]
  %v156 = vld [vmem:[%s3 + $0x44] sm:$0xf]
  %v175 = vunpack.c.l.b16 %v139
  %v176 = vunpack.c.l.b16 %v140
  %v177 = vunpack.c.l.b16 %v141
  %v178 = vunpack.c.l.b16 %v142
  %v179 = vunpack.c.l.b16 %v143
  %v180 = vunpack.c.l.b16 %v144
  %v181 = vunpack.c.l.b16 %v145
  %v182 = vunpack.c.l.b16 %v146
  %v183 = vunpack.c.l.b16 %v147
  %v184 = vunpack.c.l.b16 %v148
  %v185 = vunpack.c.l.b16 %v149
  %v186 = vunpack.c.l.b16 %v150
  %v187 = vunpack.c.l.b16 %v151
  %v188 = vunpack.c.l.b16 %v152
  %v189 = vunpack.c.l.b16 %v153
  %v190 = vunpack.c.l.b16 %v154
  %v191 = vunpack.c.l.b16 %v155
  %v192 = vunpack.c.l.b16 %v156
  %v193 = vpack.c.b16 %v176, %v175
  %v194 = vpack.c.b16 %v178, %v177
  %v195 = vpack.c.b16 %v180, %v179
  %v196 = vpack.c.b16 %v182, %v181
  %v197 = vpack.c.b16 %v184, %v183
  %v198 = vpack.c.b16 %v186, %v185
  %v199 = vpack.c.b16 %v188, %v187
  %v200 = vpack.c.b16 %v190, %v189
  %v201 = vpack.c.b16 %v192, %v191
  %211 = vmatpush.bf16.msra.mxu0 %v200
  %212 = vmatpush.bf16.msra.mxu0 %v199
  %213 = vmatpush.bf16.msra.mxu0 %v198
  %214 = vmatpush.bf16.msra.mxu0 %v197
  %215 = vmatpush.bf16.msra.mxu0 %v196
  %216 = vmatpush.bf16.msra.mxu0 %v195
  %217 = vmatpush.bf16.msra.mxu0 %v194
  %218 = vmatpush.bf16.msra.mxu0 %v193
  %219 = vmatmul.bf16.gmra.mxu0 %v50
  %v220 = vpop.f32.mrf.mxu0
  %v221 = vadd.f32 0.0, %v220
  %v222 = vpop.f32.mrf.mxu0
  %v223 = vadd.f32 0.0, %v222
  %224 = vdwg.mxu0
  %225 = vmatpush.bf16.msra.mxu0 0
  %226 = vmatpush.bf16.msra.mxu0 0
  %227 = vmatpush.bf16.msra.mxu0 0
  %228 = vmatpush.bf16.msra.mxu0 0
  %229 = vmatpush.bf16.msra.mxu0 0
  %230 = vmatpush.bf16.msra.mxu0 0
  %231 = vmatpush.bf16.msra.mxu0 0
  %232 = vmatpush.bf16.msra.mxu0 %v201
  %233 = vmatmul.bf16.gmra.mxu0 %v109
  %v234 = vpop.f32.mrf.mxu0
  %v235 = vadd.f32 %v221, %v234
  %v236 = vpop.f32.mrf.mxu0
  %v237 = vadd.f32 %v223, %v236
  %238 = vdwg.mxu0
  %v239 = vmax.f32 %v135, %v235
  %v240 = vmax.f32 %v137, %v237
  %v241 = vld [vmem:[%s4] sm:$0xf]
  %v242 = vld [vmem:[%s4 + $0x4] sm:$0xf]
  %v243 = vld [vmem:[%s4 + $0x8] sm:$0xf]
  %v244 = vld [vmem:[%s4 + $0xc] sm:$0xf]
  %v245 = vld [vmem:[%s4 + $0x10] sm:$0xf]
  %v246 = vld [vmem:[%s4 + $0x14] sm:$0xf]
  %v247 = vld [vmem:[%s4 + $0x18] sm:$0xf]
  %v248 = vld [vmem:[%s4 + $0x1c] sm:$0xf]
  %v249 = vld [vmem:[%s4 + $0x20] sm:$0xf]
  %v250 = vld [vmem:[%s4 + $0x24] sm:$0xf]
  %v251 = vld [vmem:[%s4 + $0x28] sm:$0xf]
  %v252 = vld [vmem:[%s4 + $0x2c] sm:$0xf]
  %v253 = vld [vmem:[%s4 + $0x30] sm:$0xf]
  %v254 = vld [vmem:[%s4 + $0x34] sm:$0xf]
  %v255 = vld [vmem:[%s4 + $0x38] sm:$0xf]
  %v256 = vld [vmem:[%s4 + $0x3c] sm:$0xf]
  %v257 = vld [vmem:[%s4 + $0x40] sm:$0xf]
  %v258 = vld [vmem:[%s4 + $0x44] sm:$0xf]
  %v277 = vunpack.c.l.b16 %v241
  %v278 = vunpack.c.l.b16 %v242
  %v279 = vunpack.c.l.b16 %v243
  %v280 = vunpack.c.l.b16 %v244
  %v281 = vunpack.c.l.b16 %v245
  %v282 = vunpack.c.l.b16 %v246
  %v283 = vunpack.c.l.b16 %v247
  %v284 = vunpack.c.l.b16 %v248
  %v285 = vunpack.c.l.b16 %v249
  %v286 = vunpack.c.l.b16 %v250
  %v287 = vunpack.c.l.b16 %v251
  %v288 = vunpack.c.l.b16 %v252
  %v289 = vunpack.c.l.b16 %v253
  %v290 = vunpack.c.l.b16 %v254
  %v291 = vunpack.c.l.b16 %v255
  %v292 = vunpack.c.l.b16 %v256
  %v293 = vunpack.c.l.b16 %v257
  %v294 = vunpack.c.l.b16 %v258
  %v295 = vpack.c.b16 %v278, %v277
  %v296 = vpack.c.b16 %v280, %v279
  %v297 = vpack.c.b16 %v282, %v281
  %v298 = vpack.c.b16 %v284, %v283
  %v299 = vpack.c.b16 %v286, %v285
  %v300 = vpack.c.b16 %v288, %v287
  %v301 = vpack.c.b16 %v290, %v289
  %v302 = vpack.c.b16 %v292, %v291
  %v303 = vpack.c.b16 %v294, %v293
  %313 = vmatpush.bf16.msra.mxu0 %v302
  %314 = vmatpush.bf16.msra.mxu0 %v301
  %315 = vmatpush.bf16.msra.mxu0 %v300
  %316 = vmatpush.bf16.msra.mxu0 %v299
  %317 = vmatpush.bf16.msra.mxu0 %v298
  %318 = vmatpush.bf16.msra.mxu0 %v297
  %319 = vmatpush.bf16.msra.mxu0 %v296
  %320 = vmatpush.bf16.msra.mxu0 %v295
  %321 = vmatmul.bf16.gmra.mxu0 %v50
  %v322 = vpop.f32.mrf.mxu0
  %v323 = vadd.f32 0.0, %v322
  %v324 = vpop.f32.mrf.mxu0
  %v325 = vadd.f32 0.0, %v324
  %326 = vdwg.mxu0
  %327 = vmatpush.bf16.msra.mxu0 0
  %328 = vmatpush.bf16.msra.mxu0 0
  %329 = vmatpush.bf16.msra.mxu0 0
  %330 = vmatpush.bf16.msra.mxu0 0
  %331 = vmatpush.bf16.msra.mxu0 0
  %332 = vmatpush.bf16.msra.mxu0 0
  %333 = vmatpush.bf16.msra.mxu0 0
  %334 = vmatpush.bf16.msra.mxu0 %v303
  %335 = vmatmul.bf16.gmra.mxu0 %v109
  %v336 = vpop.f32.mrf.mxu0
  %v337 = vadd.f32 %v323, %v336
  %v338 = vpop.f32.mrf.mxu0
  %v339 = vadd.f32 %v325, %v338
  %340 = vdwg.mxu0
  %v341 = vmax.f32 %v239, %v337
  %v342 = vmax.f32 %v240, %v339
  %v343 = vld [vmem:[%s5] sm:$0xf]
  %v344 = vld [vmem:[%s5 + $0x4] sm:$0xf]
  %v345 = vld [vmem:[%s5 + $0x8] sm:$0xf]
  %v346 = vld [vmem:[%s5 + $0xc] sm:$0xf]
  %v347 = vld [vmem:[%s5 + $0x10] sm:$0xf]
  %v348 = vld [vmem:[%s5 + $0x14] sm:$0xf]
  %v349 = vld [vmem:[%s5 + $0x18] sm:$0xf]
  %v350 = vld [vmem:[%s5 + $0x1c] sm:$0xf]
  %v351 = vld [vmem:[%s5 + $0x20] sm:$0xf]
  %v352 = vld [vmem:[%s5 + $0x24] sm:$0xf]
  %v353 = vld [vmem:[%s5 + $0x28] sm:$0xf]
  %v354 = vld [vmem:[%s5 + $0x2c] sm:$0xf]
  %v355 = vld [vmem:[%s5 + $0x30] sm:$0xf]
  %v356 = vld [vmem:[%s5 + $0x34] sm:$0xf]
  %v357 = vld [vmem:[%s5 + $0x38] sm:$0xf]
  %v358 = vld [vmem:[%s5 + $0x3c] sm:$0xf]
  %v359 = vld [vmem:[%s5 + $0x40] sm:$0xf]
  %v360 = vld [vmem:[%s5 + $0x44] sm:$0xf]
  %v379 = vunpack.c.l.b16 %v343
  %v380 = vunpack.c.l.b16 %v344
  %v381 = vunpack.c.l.b16 %v345
  %v382 = vunpack.c.l.b16 %v346
  %v383 = vunpack.c.l.b16 %v347
  %v384 = vunpack.c.l.b16 %v348
  %v385 = vunpack.c.l.b16 %v349
  %v386 = vunpack.c.l.b16 %v350
  %v387 = vunpack.c.l.b16 %v351
  %v388 = vunpack.c.l.b16 %v352
  %v389 = vunpack.c.l.b16 %v353
  %v390 = vunpack.c.l.b16 %v354
  %v391 = vunpack.c.l.b16 %v355
  %v392 = vunpack.c.l.b16 %v356
  %v393 = vunpack.c.l.b16 %v357
  %v394 = vunpack.c.l.b16 %v358
  %v395 = vunpack.c.l.b16 %v359
  %v396 = vunpack.c.l.b16 %v360
  %v397 = vpack.c.b16 %v380, %v379
  %v398 = vpack.c.b16 %v382, %v381
  %v399 = vpack.c.b16 %v384, %v383
  %v400 = vpack.c.b16 %v386, %v385
  %v401 = vpack.c.b16 %v388, %v387
  %v402 = vpack.c.b16 %v390, %v389
  %v403 = vpack.c.b16 %v392, %v391
  %v404 = vpack.c.b16 %v394, %v393
  %v405 = vpack.c.b16 %v396, %v395
  %415 = vmatpush.bf16.msra.mxu0 %v404
  %416 = vmatpush.bf16.msra.mxu0 %v403
  %417 = vmatpush.bf16.msra.mxu0 %v402
  %418 = vmatpush.bf16.msra.mxu0 %v401
  %419 = vmatpush.bf16.msra.mxu0 %v400
  %420 = vmatpush.bf16.msra.mxu0 %v399
  %421 = vmatpush.bf16.msra.mxu0 %v398
  %422 = vmatpush.bf16.msra.mxu0 %v397
  %423 = vmatmul.bf16.gmra.mxu0 %v50
  %v424 = vpop.f32.mrf.mxu0
  %v425 = vadd.f32 0.0, %v424
  %v426 = vpop.f32.mrf.mxu0
  %v427 = vadd.f32 0.0, %v426
  %428 = vdwg.mxu0
  %429 = vmatpush.bf16.msra.mxu0 0
  %430 = vmatpush.bf16.msra.mxu0 0
  %431 = vmatpush.bf16.msra.mxu0 0
  %432 = vmatpush.bf16.msra.mxu0 0
  %433 = vmatpush.bf16.msra.mxu0 0
  %434 = vmatpush.bf16.msra.mxu0 0
  %435 = vmatpush.bf16.msra.mxu0 0
  %436 = vmatpush.bf16.msra.mxu0 %v405
  %437 = vmatmul.bf16.gmra.mxu0 %v109
  %v438 = vpop.f32.mrf.mxu0
  %v439 = vadd.f32 %v425, %v438
  %v440 = vpop.f32.mrf.mxu0
  %v441 = vadd.f32 %v427, %v440
  %442 = vdwg.mxu0
  %v443 = vmax.f32 %v341, %v439
  %v444 = vmax.f32 %v342, %v441
  %v445 = vld [vmem:[%s1] sm:$0xff]
  %v446 = vld [vmem:[%s1 + $0x8] sm:$0xff]
  %448 = vset.pattern.permute.xlu0 0
  %449 = vperm.xlu0 %448, %v445
  %v450 = vpop.permute.xlu0 %449
  %453 = vset.pattern.permute.xlu0 0
  %454 = vperm.xlu0 %453, %v446
  %v455 = vpop.permute.xlu0 %454
  %v457 = vadd.f32 %v443, %v450
  %v458 = vadd.f32 %v444, %v455
  %v459 = vmax.f32 %v457, 0.0
  %v460 = vmax.f32 %v458, 0.0
  %v461 = vpack.c.bf16 %v459, %v459
  %v462 = vpack.c.bf16 %v460, %v460
  %vm463 = vcmask 257024
  %464 = vst.msk [vmem:[%s6] sm:$0xf] %vm463, %v461
  %465 = vst.msk [vmem:[%s6 + $0x4] sm:$0xf] %vm463, %v462
  // Predicated region
  $region26: #{forward.20} parent=0 // pred_check
    _
  $region27: #{forward.20} parent=0 // pred_check_branch
    %467 = sbr.rel (0) target = $region29
  $region28: #{forward.20} parent=0 // pred_region
    _
  $region29: #{forward.20} parent=0 // pred_fallthru
    _
  // Predicated region
  $region30: #{forward.20} parent=0 // pred_check
    _
  $region31: #{forward.20} parent=0 // pred_check_branch
    %469 = sbr.rel (0) target = $region33
  $region32: #{forward.20} parent=0 // pred_region
    _
  $region33: #{forward.20} parent=0 // pred_fallthru
    _

// kernel: forward.21
$region0: #{forward.21}
  #allocation0 [shape = 'u32[]', space=smem, size = 0x4, offset = 0x4, fixed_abs, tag = 'smem constant byte address 0x4 - core index']
  #allocation1 [shape = 'u32[72,128]{1,0:T(1,128)}', space=vmem, size = 0x9000, scoped, tag = 'internal scratch']
  %s0 = inlined_call_operand.vmem [shape: bf16[32,144], index: 0, kind: input, shape index: {}]
  %s1 = inlined_call_operand.vmem [shape: f32[32,1], index: 1, kind: input, shape index: {}]
  %s2 = inlined_call_operand.vmem [shape: bf16[144,32], index: 2, kind: input, shape index: {}]
  %s3 = inlined_call_operand.vmem [shape: bf16[32,32], index: 3, kind: output, shape index: {}]
  %s4 = sld [smem:[#allocation0]]
  $region22: #{forward.21} parent=0
    _
  %s6 = ssub.s32 1, %s4
  %s7 = scalar_select 0, %s6, %s4
  // Predicated region
  $region2: #{forward.21} parent=0 // pred_check
    _
  $region3: #{forward.21} parent=0 // pred_check_branch
    %9 = sbr.rel (0) target = $region5
  $region4: #{forward.21} parent=0 // pred_region
    _
  $region5: #{forward.21} parent=0 // pred_fallthru
    _
  // Predicated region
  $region6: #{forward.21} parent=0 // pred_check
    _
  $region7: #{forward.21} parent=0 // pred_check_branch
    %11 = sbr.rel (0) target = $region9
  $region8: #{forward.21} parent=0 // pred_region
    _
  $region9: #{forward.21} parent=0 // pred_fallthru
    _
  // Predicated region
  $region10: #{forward.21} parent=0 // pred_check
    _
  $region11: #{forward.21} parent=0 // pred_check_branch
    %13 = sbr.rel (0) target = $region13
  $region12: #{forward.21} parent=0 // pred_region
    _
  $region13: #{forward.21} parent=0 // pred_fallthru
    _
  %v15 = vld [vmem:[%s0] sm:$0xff]
  %v16 = vld [vmem:[%s0 + $0x8] sm:$0xff]
  %v17 = vld [vmem:[%s0 + $0x10] sm:$0xff]
  %v18 = vld [vmem:[%s0 + $0x18] sm:$0xff]
  %v19 = vld [vmem:[%s2] sm:$0xf]
  %v20 = vld [vmem:[%s2 + $0x4] sm:$0xf]
  %v21 = vld [vmem:[%s2 + $0x8] sm:$0xf]
  %v22 = vld [vmem:[%s2 + $0xc] sm:$0xf]
  %v23 = vld [vmem:[%s2 + $0x10] sm:$0xf]
  %v24 = vld [vmem:[%s2 + $0x14] sm:$0xf]
  %v25 = vld [vmem:[%s2 + $0x18] sm:$0xf]
  %v26 = vld [vmem:[%s2 + $0x1c] sm:$0xf]
  %v27 = vld [vmem:[%s2 + $0x20] sm:$0xf]
  %v28 = vld [vmem:[%s2 + $0x24] sm:$0xf]
  %v29 = vld [vmem:[%s2 + $0x28] sm:$0xf]
  %v30 = vld [vmem:[%s2 + $0x2c] sm:$0xf]
  %v31 = vld [vmem:[%s2 + $0x30] sm:$0xf]
  %v32 = vld [vmem:[%s2 + $0x34] sm:$0xf]
  %v33 = vld [vmem:[%s2 + $0x38] sm:$0xf]
  %v34 = vld [vmem:[%s2 + $0x3c] sm:$0xf]
  %v35 = vld [vmem:[%s2 + $0x40] sm:$0xf]
  %v36 = vld [vmem:[%s2 + $0x44] sm:$0xf]
  %v37 = vld [vmem:[%s1] sm:$0xff]
  %v38 = vld [vmem:[%s1 + $0x8] sm:$0xff]
  %v39 = vld [vmem:[%s1 + $0x10] sm:$0xff]
  %v40 = vld [vmem:[%s1 + $0x18] sm:$0xff]
  %42 = vset.pattern.permute.xlu0 0
  %43 = vperm.xlu0 %42, %v37
  %v44 = vpop.permute.xlu0 %43
  %47 = vset.pattern.permute.xlu0 0
  %48 = vperm.xlu0 %47, %v38
  %v49 = vpop.permute.xlu0 %48
  %52 = vset.pattern.permute.xlu0 0
  %53 = vperm.xlu0 %52, %v39
  %v54 = vpop.permute.xlu0 %53
  %57 = vset.pattern.permute.xlu0 0
  %58 = vperm.xlu0 %57, %v40
  %v59 = vpop.permute.xlu0 %58
  %v65 = vunpack.c.l.b16 %v15
  %v66 = vunpack.c.h.b16 %v15
  %v67 = vunpack.c.l.b16 %v16
  %v68 = vunpack.c.h.b16 %v16
  %v69 = vunpack.c.l.b16 %v17
  %v70 = vunpack.c.h.b16 %v17
  %v71 = vunpack.c.l.b16 %v18
  %v72 = vunpack.c.h.b16 %v18
  %v73 = vpack.c.b16 %v67, %v65
  %v74 = vpack.c.b16 %v68, %v66
  %v75 = vpack.c.b16 %v71, %v69
  %v76 = vpack.c.b16 %v72, %v70
  %v97 = vunpack.c.l.b16 %v19
  %v98 = vunpack.c.l.b16 %v20
  %v99 = vunpack.c.l.b16 %v21
  %v100 = vunpack.c.l.b16 %v22
  %v101 = vunpack.c.l.b16 %v23
  %v102 = vunpack.c.l.b16 %v24
  %v103 = vunpack.c.l.b16 %v25
  %v104 = vunpack.c.l.b16 %v26
  %v105 = vunpack.c.l.b16 %v27
  %v106 = vunpack.c.l.b16 %v28
  %v107 = vunpack.c.l.b16 %v29
  %v108 = vunpack.c.l.b16 %v30
  %v109 = vunpack.c.l.b16 %v31
  %v110 = vunpack.c.l.b16 %v32
  %v111 = vunpack.c.l.b16 %v33
  %v112 = vunpack.c.l.b16 %v34
  %v113 = vunpack.c.l.b16 %v35
  %v114 = vunpack.c.l.b16 %v36
  %v115 = vpack.c.b16 %v98, %v97
  %v116 = vpack.c.b16 %v100, %v99
  %v117 = vpack.c.b16 %v102, %v101
  %v118 = vpack.c.b16 %v104, %v103
  %v119 = vpack.c.b16 %v106, %v105
  %v120 = vpack.c.b16 %v108, %v107
  %v121 = vpack.c.b16 %v110, %v109
  %v122 = vpack.c.b16 %v112, %v111
  %v123 = vpack.c.b16 %v114, %v113
  %vm133 = vcmask 130048
  %v135 = vsel %vm133, %v74, 0
  %v138 = vsel %vm133, %v76, 0
  %140 = vmatpush.bf16.msra.mxu0 %v122
  %141 = vmatpush.bf16.msra.mxu0 %v121
  %142 = vmatpush.bf16.msra.mxu0 %v120
  %143 = vmatpush.bf16.msra.mxu0 %v119
  %144 = vmatpush.bf16.msra.mxu0 %v118
  %145 = vmatpush.bf16.msra.mxu0 %v117
  %146 = vmatpush.bf16.msra.mxu0 %v116
  %147 = vmatpush.bf16.msra.mxu0 %v115
  %148 = vmatmul.bf16.gmra.mxu0 %v73
  %v149 = vpop.f32.mrf.mxu0
  %v150 = vadd.f32 %v44, %v149
  %v151 = vpop.f32.mrf.mxu0
  %v152 = vadd.f32 %v49, %v151
  %153 = vmatmul.bf16.gmra.mxu0 %v75
  %v154 = vpop.f32.mrf.mxu0
  %v155 = vadd.f32 %v54, %v154
  %v156 = vpop.f32.mrf.mxu0
  %v157 = vadd.f32 %v59, %v156
  %158 = vdwg.mxu0
  %159 = vmatpush.bf16.msra.mxu0 0
  %160 = vmatpush.bf16.msra.mxu0 0
  %161 = vmatpush.bf16.msra.mxu0 0
  %162 = vmatpush.bf16.msra.mxu0 0
  %163 = vmatpush.bf16.msra.mxu0 0
  %164 = vmatpush.bf16.msra.mxu0 0
  %165 = vmatpush.bf16.msra.mxu0 0
  %166 = vmatpush.bf16.msra.mxu0 %v123
  %167 = vmatmul.bf16.gmra.mxu0 %v135
  %v168 = vpop.f32.mrf.mxu0
  %v169 = vadd.f32 %v150, %v168
  %v170 = vpop.f32.mrf.mxu0
  %v171 = vadd.f32 %v152, %v170
  %172 = vmatmul.bf16.gmra.mxu0 %v138
  %v173 = vpop.f32.mrf.mxu0
  %v174 = vadd.f32 %v155, %v173
  %v175 = vpop.f32.mrf.mxu0
  %v176 = vadd.f32 %v157, %v175
  %177 = vdwg.mxu0
  %v178 = vmax.f32 %v169, 0.0
  %v179 = vmax.f32 %v171, 0.0
  %v180 = vmax.f32 %v174, 0.0
  %v181 = vmax.f32 %v176, 0.0
  %v182 = vpack.c.bf16 %v178, %v178
  %v183 = vpack.c.bf16 %v179, %v179
  %v184 = vpack.c.bf16 %v180, %v180
  %v185 = vpack.c.bf16 %v181, %v181
  %vm186 = vcmask 257024
  %187 = vst.msk [vmem:[%s3] sm:$0xf] %vm186, %v182
  %188 = vst.msk [vmem:[%s3 + $0x4] sm:$0xf] %vm186, %v183
  %189 = vst.msk [vmem:[%s3 + $0x8] sm:$0xf] %vm186, %v184
  %190 = vst.msk [vmem:[%s3 + $0xc] sm:$0xf] %vm186, %v185
  // Predicated region
  $region14: #{forward.21} parent=0 // pred_check
    _
  $region15: #{forward.21} parent=0 // pred_check_branch
    %192 = sbr.rel (0) target = $region17
  $region16: #{forward.21} parent=0 // pred_region
    _
  $region17: #{forward.21} parent=0 // pred_fallthru
    _
  // Predicated region
  $region18: #{forward.21} parent=0 // pred_check
    _
  $region19: #{forward.21} parent=0 // pred_check_branch
    %194 = sbr.rel (0) target = $region21
  $region20: #{forward.21} parent=0 // pred_region
    _
  $region21: #{forward.21} parent=0 // pred_fallthru
    _

// kernel: forward.22
$region0: #{forward.22}
  #allocation0 [shape = 'u32[]', space=smem, size = 0x4, offset = 0x4, fixed_abs, tag = 'smem constant byte address 0x4 - core index']
  #allocation1 [shape = 'u32[72,128]{1,0:T(1,128)}', space=vmem, size = 0x9000, scoped, tag = 'internal scratch']
  %s0 = inlined_call_operand.vmem [shape: bf16[32,288], index: 0, kind: input, shape index: {}]
  %s1 = inlined_call_operand.vmem [shape: f32[32,1], index: 1, kind: input, shape index: {}]
  %s2 = inlined_call_operand.vmem [shape: bf16[288,32], index: 2, kind: input, shape index: {}]
  %s3 = inlined_call_operand.vmem [shape: bf16[32,32], index: 3, kind: output, shape index: {}]
  %s4 = sld [smem:[#allocation0]]
  $region22: #{forward.22} parent=0
    _
  %s6 = ssub.s32 1, %s4
  %s7 = scalar_select 0, %s6, %s4
  // Predicated region
  $region2: #{forward.22} parent=0 // pred_check
    _
  $region3: #{forward.22} parent=0 // pred_check_branch
    %9 = sbr.rel (0) target = $region5
  $region4: #{forward.22} parent=0 // pred_region
    _
  $region5: #{forward.22} parent=0 // pred_fallthru
    _
  // Predicated region
  $region6: #{forward.22} parent=0 // pred_check
    _
  $region7: #{forward.22} parent=0 // pred_check_branch
    %11 = sbr.rel (0) target = $region9
  $region8: #{forward.22} parent=0 // pred_region
    _
  $region9: #{forward.22} parent=0 // pred_fallthru
    _
  // Predicated region
  $region10: #{forward.22} parent=0 // pred_check
    _
  $region11: #{forward.22} parent=0 // pred_check_branch
    %13 = sbr.rel (0) target = $region13
  $region12: #{forward.22} parent=0 // pred_region
    _
  $region13: #{forward.22} parent=0 // pred_fallthru
    _
  %v15 = vld [vmem:[%s0] sm:$0xff]
  %v16 = vld [vmem:[%s0 + $0x8] sm:$0xf]
  %v17 = vld [vmem:[%s0 + $0xc] sm:$0xff]
  %v18 = vld [vmem:[%s0 + $0x14] sm:$0xf]
  %v19 = vld [vmem:[%s0 + $0x18] sm:$0xff]
  %v20 = vld [vmem:[%s0 + $0x20] sm:$0xf]
  %v21 = vld [vmem:[%s0 + $0x24] sm:$0xff]
  %v22 = vld [vmem:[%s0 + $0x2c] sm:$0xf]
  %v23 = vld [vmem:[%s2] sm:$0xf]
  %v24 = vld [vmem:[%s2 + $0x4] sm:$0xf]
  %v25 = vld [vmem:[%s2 + $0x8] sm:$0xf]
  %v26 = vld [vmem:[%s2 + $0xc] sm:$0xf]
  %v27 = vld [vmem:[%s2 + $0x10] sm:$0xf]
  %v28 = vld [vmem:[%s2 + $0x14] sm:$0xf]
  %v29 = vld [vmem:[%s2 + $0x18] sm:$0xf]
  %v30 = vld [vmem:[%s2 + $0x1c] sm:$0xf]
  %v31 = vld [vmem:[%s2 + $0x20] sm:$0xf]
  %v32 = vld [vmem:[%s2 + $0x24] sm:$0xf]
  %v33 = vld [vmem:[%s2 + $0x28] sm:$0xf]
  %v34 = vld [vmem:[%s2 + $0x2c] sm:$0xf]
  %v35 = vld [vmem:[%s2 + $0x30] sm:$0xf]
  %v36 = vld [vmem:[%s2 + $0x34] sm:$0xf]
  %v37 = vld [vmem:[%s2 + $0x38] sm:$0xf]
  %v38 = vld [vmem:[%s2 + $0x3c] sm:$0xf]
  %v39 = vld [vmem:[%s2 + $0x40] sm:$0xf]
  %v40 = vld [vmem:[%s2 + $0x44] sm:$0xf]
  %v41 = vld [vmem:[%s2 + $0x48] sm:$0xf]
  %v42 = vld [vmem:[%s2 + $0x4c] sm:$0xf]
  %v43 = vld [vmem:[%s2 + $0x50] sm:$0xf]
  %v44 = vld [vmem:[%s2 + $0x54] sm:$0xf]
  %v45 = vld [vmem:[%s2 + $0x58] sm:$0xf]
  %v46 = vld [vmem:[%s2 + $0x5c] sm:$0xf]
  %v47 = vld [vmem:[%s2 + $0x60] sm:$0xf]
  %v48 = vld [vmem:[%s2 + $0x64] sm:$0xf]
  %v49 = vld [vmem:[%s2 + $0x68] sm:$0xf]
  %v50 = vld [vmem:[%s2 + $0x6c] sm:$0xf]
  %v51 = vld [vmem:[%s2 + $0x70] sm:$0xf]
  %v52 = vld [vmem:[%s2 + $0x74] sm:$0xf]
  %v53 = vld [vmem:[%s2 + $0x78] sm:$0xf]
  %v54 = vld [vmem:[%s2 + $0x7c] sm:$0xf]
  %v55 = vld [vmem:[%s2 + $0x80] sm:$0xf]
  %v56 = vld [vmem:[%s2 + $0x84] sm:$0xf]
  %v57 = vld [vmem:[%s2 + $0x88] sm:$0xf]
  %v58 = vld [vmem:[%s2 + $0x8c] sm:$0xf]
  %v59 = vld [vmem:[%s1] sm:$0xff]
  %v60 = vld [vmem:[%s1 + $0x8] sm:$0xff]
  %v61 = vld [vmem:[%s1 + $0x10] sm:$0xff]
  %v62 = vld [vmem:[%s1 + $0x18] sm:$0xff]
  %64 = vset.pattern.permute.xlu0 0
  %65 = vperm.xlu0 %64, %v59
  %v66 = vpop.permute.xlu0 %65
  %69 = vset.pattern.permute.xlu0 0
  %70 = vperm.xlu0 %69, %v60
  %v71 = vpop.permute.xlu0 %70
  %74 = vset.pattern.permute.xlu0 0
  %75 = vperm.xlu0 %74, %v61
  %v76 = vpop.permute.xlu0 %75
  %79 = vset.pattern.permute.xlu0 0
  %80 = vperm.xlu0 %79, %v62
  %v81 = vpop.permute.xlu0 %80
  %v91 = vunpack.c.l.b16 %v15
  %v92 = vunpack.c.h.b16 %v15
  %v93 = vunpack.c.l.b16 %v16
  %v94 = vunpack.c.l.b16 %v17
  %v95 = vunpack.c.h.b16 %v17
  %v96 = vunpack.c.l.b16 %v18
  %v97 = vunpack.c.l.b16 %v19
  %v98 = vunpack.c.h.b16 %v19
  %v99 = vunpack.c.l.b16 %v20
  %v100 = vunpack.c.l.b16 %v21
  %v101 = vunpack.c.h.b16 %v21
  %v102 = vunpack.c.l.b16 %v22
  %v103 = vpack.c.b16 %v94, %v91
  %v104 = vpack.c.b16 %v95, %v92
  %v105 = vpack.c.b16 %v96, %v93
  %v106 = vpack.c.b16 %v100, %v97
  %v107 = vpack.c.b16 %v101, %v98
  %v108 = vpack.c.b16 %v102, %v99
  %v149 = vunpack.c.l.b16 %v23
  %v150 = vunpack.c.l.b16 %v24
  %v151 = vunpack.c.l.b16 %v25
  %v152 = vunpack.c.l.b16 %v26
  %v153 = vunpack.c.l.b16 %v27
  %v154 = vunpack.c.l.b16 %v28
  %v155 = vunpack.c.l.b16 %v29
  %v156 = vunpack.c.l.b16 %v30
  %v157 = vunpack.c.l.b16 %v31
  %v158 = vunpack.c.l.b16 %v32
  %v159 = vunpack.c.l.b16 %v33
  %v160 = vunpack.c.l.b16 %v34
  %v161 = vunpack.c.l.b16 %v35
  %v162 = vunpack.c.l.b16 %v36
  %v163 = vunpack.c.l.b16 %v37
  %v164 = vunpack.c.l.b16 %v38
  %v165 = vunpack.c.l.b16 %v39
  %v166 = vunpack.c.l.b16 %v40
  %v167 = vunpack.c.l.b16 %v41
  %v168 = vunpack.c.l.b16 %v42
  %v169 = vunpack.c.l.b16 %v43
  %v170 = vunpack.c.l.b16 %v44
  %v171 = vunpack.c.l.b16 %v45
  %v172 = vunpack.c.l.b16 %v46
  %v173 = vunpack.c.l.b16 %v47
  %v174 = vunpack.c.l.b16 %v48
  %v175 = vunpack.c.l.b16 %v49
  %v176 = vunpack.c.l.b16 %v50
  %v177 = vunpack.c.l.b16 %v51
  %v178 = vunpack.c.l.b16 %v52
  %v179 = vunpack.c.l.b16 %v53
  %v180 = vunpack.c.l.b16 %v54
  %v181 = vunpack.c.l.b16 %v55
  %v182 = vunpack.c.l.b16 %v56
  %v183 = vunpack.c.l.b16 %v57
  %v184 = vunpack.c.l.b16 %v58
  %v185 = vpack.c.b16 %v150, %v149
  %v186 = vpack.c.b16 %v152, %v151
  %v187 = vpack.c.b16 %v154, %v153
  %v188 = vpack.c.b16 %v156, %v155
  %v189 = vpack.c.b16 %v158, %v157
  %v190 = vpack.c.b16 %v160, %v159
  %v191 = vpack.c.b16 %v162, %v161
  %v192 = vpack.c.b16 %v164, %v163
  %v193 = vpack.c.b16 %v166, %v165
  %v194 = vpack.c.b16 %v168, %v167
  %v195 = vpack.c.b16 %v170, %v169
  %v196 = vpack.c.b16 %v172, %v171
  %v197 = vpack.c.b16 %v174, %v173
  %v198 = vpack.c.b16 %v176, %v175
  %v199 = vpack.c.b16 %v178, %v177
  %v200 = vpack.c.b16 %v180, %v179
  %v201 = vpack.c.b16 %v182, %v181
  %v202 = vpack.c.b16 %v184, %v183
  %vm221 = vcmask 261120
  %v223 = vsel %vm221, %v105, 0
  %v226 = vsel %vm221, %v108, 0
  %228 = vmatpush.bf16.msra.mxu0 %v192
  %229 = vmatpush.bf16.msra.mxu0 %v191
  %230 = vmatpush.bf16.msra.mxu0 %v190
  %231 = vmatpush.bf16.msra.mxu0 %v189
  %232 = vmatpush.bf16.msra.mxu0 %v188
  %233 = vmatpush.bf16.msra.mxu0 %v187
  %234 = vmatpush.bf16.msra.mxu0 %v186
  %235 = vmatpush.bf16.msra.mxu0 %v185
  %236 = vmatmul.bf16.gmra.mxu0 %v103
  %v237 = vpop.f32.mrf.mxu0
  %v238 = vadd.f32 %v66, %v237
  %v239 = vpop.f32.mrf.mxu0
  %v240 = vadd.f32 %v71, %v239
  %241 = vmatmul.bf16.gmra.mxu0 %v106
  %v242 = vpop.f32.mrf.mxu0
  %v243 = vadd.f32 %v76, %v242
  %v244 = vpop.f32.mrf.mxu0
  %v245 = vadd.f32 %v81, %v244
  %246 = vdwg.mxu0
  %247 = vmatpush.bf16.msra.mxu0 %v200
  %248 = vmatpush.bf16.msra.mxu0 %v199
  %249 = vmatpush.bf16.msra.mxu0 %v198
  %250 = vmatpush.bf16.msra.mxu0 %v197
  %251 = vmatpush.bf16.msra.mxu0 %v196
  %252 = vmatpush.bf16.msra.mxu0 %v195
  %253 = vmatpush.bf16.msra.mxu0 %v194
  %254 = vmatpush.bf16.msra.mxu0 %v193
  %255 = vmatmul.bf16.gmra.mxu0 %v104
  %v256 = vpop.f32.mrf.mxu0
  %v257 = vadd.f32 %v238, %v256
  %v258 = vpop.f32.mrf.mxu0
  %v259 = vadd.f32 %v240, %v258
  %260 = vmatmul.bf16.gmra.mxu0 %v107
  %v261 = vpop.f32.mrf.mxu0
  %v262 = vadd.f32 %v243, %v261
  %v263 = vpop.f32.mrf.mxu0
  %v264 = vadd.f32 %v245, %v263
  %265 = vdwg.mxu0
  %266 = vmatpush.bf16.msra.mxu0 0
  %267 = vmatpush.bf16.msra.mxu0 0
  %268 = vmatpush.bf16.msra.mxu0 0
  %269 = vmatpush.bf16.msra.mxu0 0
  %270 = vmatpush.bf16.msra.mxu0 0
  %271 = vmatpush.bf16.msra.mxu0 0
  %272 = vmatpush.bf16.msra.mxu0 %v202
  %273 = vmatpush.bf16.msra.mxu0 %v201
  %274 = vmatmul.bf16.gmra.mxu0 %v223
  %v275 = vpop.f32.mrf.mxu0
  %v276 = vadd.f32 %v257, %v275
  %v277 = vpop.f32.mrf.mxu0
  %v278 = vadd.f32 %v259, %v277
  %279 = vmatmul.bf16.gmra.mxu0 %v226
  %v280 = vpop.f32.mrf.mxu0
  %v281 = vadd.f32 %v262, %v280
  %v282 = vpop.f32.mrf.mxu0
  %v283 = vadd.f32 %v264, %v282
  %284 = vdwg.mxu0
  %v285 = vmax.f32 %v276, 0.0
  %v286 = vmax.f32 %v278, 0.0
  %v287 = vmax.f32 %v281, 0.0
  %v288 = vmax.f32 %v283, 0.0
  %v289 = vpack.c.bf16 %v285, %v285
  %v290 = vpack.c.bf16 %v286, %v286
  %v291 = vpack.c.bf16 %v287, %v287
  %v292 = vpack.c.bf16 %v288, %v288
  %vm293 = vcmask 257024
  %294 = vst.msk [vmem:[%s3] sm:$0xf] %vm293, %v289
  %295 = vst.msk [vmem:[%s3 + $0x4] sm:$0xf] %vm293, %v290
  %296 = vst.msk [vmem:[%s3 + $0x8] sm:$0xf] %vm293, %v291
  %297 = vst.msk [vmem:[%s3 + $0xc] sm:$0xf] %vm293, %v292
  // Predicated region
  $region14: #{forward.22} parent=0 // pred_check
    _
  $region15: #{forward.22} parent=0 // pred_check_branch
    %299 = sbr.rel (0) target = $region17
  $region16: #{forward.22} parent=0 // pred_region
    _
  $region17: #{forward.22} parent=0 // pred_fallthru
    _
  // Predicated region
  $region18: #{forward.22} parent=0 // pred_check
    _
  $region19: #{forward.22} parent=0 // pred_check_branch
    %301 = sbr.rel (0) target = $region21
  $region20: #{forward.22} parent=0 // pred_region
    _
  $region21: #{forward.22} parent=0 // pred_fallthru
    _

// kernel: forward.24
$region0: #{forward.24}
  #allocation0 [shape = 'u32[]', space=smem, size = 0x4, offset = 0x4, fixed_abs, tag = 'smem constant byte address 0x4 - core index']
  #allocation1 [shape = 'u32[72,128]{1,0:T(1,128)}', space=vmem, size = 0x9000, scoped, tag = 'internal scratch']
  %s0 = inlined_call_operand.vmem [shape: bf16[32,288], index: 0, kind: input, shape index: {}]
  %s1 = inlined_call_operand.vmem [shape: f32[32,1], index: 1, kind: input, shape index: {}]
  %s2 = inlined_call_operand.vmem [shape: bf16[288,8], index: 2, kind: input, shape index: {}]
  %s3 = inlined_call_operand.vmem [shape: bf16[32,8], index: 3, kind: output, shape index: {}]
  %s4 = sld [smem:[#allocation0]]
  $region22: #{forward.24} parent=0
    _
  %s6 = ssub.s32 1, %s4
  %s7 = scalar_select 0, %s6, %s4
  // Predicated region
  $region2: #{forward.24} parent=0 // pred_check
    _
  $region3: #{forward.24} parent=0 // pred_check_branch
    %9 = sbr.rel (0) target = $region5
  $region4: #{forward.24} parent=0 // pred_region
    _
  $region5: #{forward.24} parent=0 // pred_fallthru
    _
  // Predicated region
  $region6: #{forward.24} parent=0 // pred_check
    _
  $region7: #{forward.24} parent=0 // pred_check_branch
    %11 = sbr.rel (0) target = $region9
  $region8: #{forward.24} parent=0 // pred_region
    _
  $region9: #{forward.24} parent=0 // pred_fallthru
    _
  // Predicated region
  $region10: #{forward.24} parent=0 // pred_check
    _
  $region11: #{forward.24} parent=0 // pred_check_branch
    %13 = sbr.rel (0) target = $region13
  $region12: #{forward.24} parent=0 // pred_region
    _
  $region13: #{forward.24} parent=0 // pred_fallthru
    _
  %v15 = vld [vmem:[%s0] sm:$0xff]
  %v16 = vld [vmem:[%s0 + $0x8] sm:$0xf]
  %v17 = vld [vmem:[%s0 + $0xc] sm:$0xff]
  %v18 = vld [vmem:[%s0 + $0x14] sm:$0xf]
  %v19 = vld [vmem:[%s0 + $0x18] sm:$0xff]
  %v20 = vld [vmem:[%s0 + $0x20] sm:$0xf]
  %v21 = vld [vmem:[%s0 + $0x24] sm:$0xff]
  %v22 = vld [vmem:[%s0 + $0x2c] sm:$0xf]
  %v23 = vld [vmem:[%s2] sm:$0xf]
  %v24 = vld [vmem:[%s2 + $0x4] sm:$0xf]
  %v25 = vld [vmem:[%s2 + $0x8] sm:$0xf]
  %v26 = vld [vmem:[%s2 + $0xc] sm:$0xf]
  %v27 = vld [vmem:[%s2 + $0x10] sm:$0xf]
  %v28 = vld [vmem:[%s2 + $0x14] sm:$0xf]
  %v29 = vld [vmem:[%s2 + $0x18] sm:$0xf]
  %v30 = vld [vmem:[%s2 + $0x1c] sm:$0xf]
  %v31 = vld [vmem:[%s2 + $0x20] sm:$0xf]
  %v32 = vld [vmem:[%s2 + $0x24] sm:$0xf]
  %v33 = vld [vmem:[%s2 + $0x28] sm:$0xf]
  %v34 = vld [vmem:[%s2 + $0x2c] sm:$0xf]
  %v35 = vld [vmem:[%s2 + $0x30] sm:$0xf]
  %v36 = vld [vmem:[%s2 + $0x34] sm:$0xf]
  %v37 = vld [vmem:[%s2 + $0x38] sm:$0xf]
  %v38 = vld [vmem:[%s2 + $0x3c] sm:$0xf]
  %v39 = vld [vmem:[%s2 + $0x40] sm:$0xf]
  %v40 = vld [vmem:[%s2 + $0x44] sm:$0xf]
  %v41 = vld [vmem:[%s2 + $0x48] sm:$0xf]
  %v42 = vld [vmem:[%s2 + $0x4c] sm:$0xf]
  %v43 = vld [vmem:[%s2 + $0x50] sm:$0xf]
  %v44 = vld [vmem:[%s2 + $0x54] sm:$0xf]
  %v45 = vld [vmem:[%s2 + $0x58] sm:$0xf]
  %v46 = vld [vmem:[%s2 + $0x5c] sm:$0xf]
  %v47 = vld [vmem:[%s2 + $0x60] sm:$0xf]
  %v48 = vld [vmem:[%s2 + $0x64] sm:$0xf]
  %v49 = vld [vmem:[%s2 + $0x68] sm:$0xf]
  %v50 = vld [vmem:[%s2 + $0x6c] sm:$0xf]
  %v51 = vld [vmem:[%s2 + $0x70] sm:$0xf]
  %v52 = vld [vmem:[%s2 + $0x74] sm:$0xf]
  %v53 = vld [vmem:[%s2 + $0x78] sm:$0xf]
  %v54 = vld [vmem:[%s2 + $0x7c] sm:$0xf]
  %v55 = vld [vmem:[%s2 + $0x80] sm:$0xf]
  %v56 = vld [vmem:[%s2 + $0x84] sm:$0xf]
  %v57 = vld [vmem:[%s2 + $0x88] sm:$0xf]
  %v58 = vld [vmem:[%s2 + $0x8c] sm:$0xf]
  %v59 = vld [vmem:[%s1] sm:$0xff]
  %v60 = vld [vmem:[%s1 + $0x8] sm:$0xff]
  %v61 = vld [vmem:[%s1 + $0x10] sm:$0xff]
  %v62 = vld [vmem:[%s1 + $0x18] sm:$0xff]
  %64 = vset.pattern.permute.xlu0 0
  %65 = vperm.xlu0 %64, %v59
  %v66 = vpop.permute.xlu0 %65
  %69 = vset.pattern.permute.xlu0 0
  %70 = vperm.xlu0 %69, %v60
  %v71 = vpop.permute.xlu0 %70
  %74 = vset.pattern.permute.xlu0 0
  %75 = vperm.xlu0 %74, %v61
  %v76 = vpop.permute.xlu0 %75
  %79 = vset.pattern.permute.xlu0 0
  %80 = vperm.xlu0 %79, %v62
  %v81 = vpop.permute.xlu0 %80
  %v91 = vunpack.c.l.b16 %v15
  %v92 = vunpack.c.h.b16 %v15
  %v93 = vunpack.c.l.b16 %v16
  %v94 = vunpack.c.l.b16 %v17
  %v95 = vunpack.c.h.b16 %v17
  %v96 = vunpack.c.l.b16 %v18
  %v97 = vunpack.c.l.b16 %v19
  %v98 = vunpack.c.h.b16 %v19
  %v99 = vunpack.c.l.b16 %v20
  %v100 = vunpack.c.l.b16 %v21
  %v101 = vunpack.c.h.b16 %v21
  %v102 = vunpack.c.l.b16 %v22
  %v103 = vpack.c.b16 %v94, %v91
  %v104 = vpack.c.b16 %v95, %v92
  %v105 = vpack.c.b16 %v96, %v93
  %v106 = vpack.c.b16 %v100, %v97
  %v107 = vpack.c.b16 %v101, %v98
  %v108 = vpack.c.b16 %v102, %v99
  %v149 = vunpack.c.l.b16 %v23
  %v150 = vunpack.c.l.b16 %v24
  %v151 = vunpack.c.l.b16 %v25
  %v152 = vunpack.c.l.b16 %v26
  %v153 = vunpack.c.l.b16 %v27
  %v154 = vunpack.c.l.b16 %v28
  %v155 = vunpack.c.l.b16 %v29
  %v156 = vunpack.c.l.b16 %v30
  %v157 = vunpack.c.l.b16 %v31
  %v158 = vunpack.c.l.b16 %v32
  %v159 = vunpack.c.l.b16 %v33
  %v160 = vunpack.c.l.b16 %v34
  %v161 = vunpack.c.l.b16 %v35
  %v162 = vunpack.c.l.b16 %v36
  %v163 = vunpack.c.l.b16 %v37
  %v164 = vunpack.c.l.b16 %v38
  %v165 = vunpack.c.l.b16 %v39
  %v166 = vunpack.c.l.b16 %v40
  %v167 = vunpack.c.l.b16 %v41
  %v168 = vunpack.c.l.b16 %v42
  %v169 = vunpack.c.l.b16 %v43
  %v170 = vunpack.c.l.b16 %v44
  %v171 = vunpack.c.l.b16 %v45
  %v172 = vunpack.c.l.b16 %v46
  %v173 = vunpack.c.l.b16 %v47
  %v174 = vunpack.c.l.b16 %v48
  %v175 = vunpack.c.l.b16 %v49
  %v176 = vunpack.c.l.b16 %v50
  %v177 = vunpack.c.l.b16 %v51
  %v178 = vunpack.c.l.b16 %v52
  %v179 = vunpack.c.l.b16 %v53
  %v180 = vunpack.c.l.b16 %v54
  %v181 = vunpack.c.l.b16 %v55
  %v182 = vunpack.c.l.b16 %v56
  %v183 = vunpack.c.l.b16 %v57
  %v184 = vunpack.c.l.b16 %v58
  %v185 = vpack.c.b16 %v150, %v149
  %v186 = vpack.c.b16 %v152, %v151
  %v187 = vpack.c.b16 %v154, %v153
  %v188 = vpack.c.b16 %v156, %v155
  %v189 = vpack.c.b16 %v158, %v157
  %v190 = vpack.c.b16 %v160, %v159
  %v191 = vpack.c.b16 %v162, %v161
  %v192 = vpack.c.b16 %v164, %v163
  %v193 = vpack.c.b16 %v166, %v165
  %v194 = vpack.c.b16 %v168, %v167
  %v195 = vpack.c.b16 %v170, %v169
  %v196 = vpack.c.b16 %v172, %v171
  %v197 = vpack.c.b16 %v174, %v173
  %v198 = vpack.c.b16 %v176, %v175
  %v199 = vpack.c.b16 %v178, %v177
  %v200 = vpack.c.b16 %v180, %v179
  %v201 = vpack.c.b16 %v182, %v181
  %v202 = vpack.c.b16 %v184, %v183
  %vm221 = vcmask 261120
  %v223 = vsel %vm221, %v105, 0
  %v226 = vsel %vm221, %v108, 0
  %228 = vmatpush.bf16.msra.mxu0 %v192
  %229 = vmatpush.bf16.msra.mxu0 %v191
  %230 = vmatpush.bf16.msra.mxu0 %v190
  %231 = vmatpush.bf16.msra.mxu0 %v189
  %232 = vmatpush.bf16.msra.mxu0 %v188
  %233 = vmatpush.bf16.msra.mxu0 %v187
  %234 = vmatpush.bf16.msra.mxu0 %v186
  %235 = vmatpush.bf16.msra.mxu0 %v185
  %236 = vmatmul.bf16.gmra.mxu0 %v103
  %v237 = vpop.f32.mrf.mxu0
  %v238 = vadd.f32 %v66, %v237
  %v239 = vpop.f32.mrf.mxu0
  %v240 = vadd.f32 %v71, %v239
  %241 = vmatmul.bf16.gmra.mxu0 %v106
  %v242 = vpop.f32.mrf.mxu0
  %v243 = vadd.f32 %v76, %v242
  %v244 = vpop.f32.mrf.mxu0
  %v245 = vadd.f32 %v81, %v244
  %246 = vdwg.mxu0
  %247 = vmatpush.bf16.msra.mxu0 %v200
  %248 = vmatpush.bf16.msra.mxu0 %v199
  %249 = vmatpush.bf16.msra.mxu0 %v198
  %250 = vmatpush.bf16.msra.mxu0 %v197
  %251 = vmatpush.bf16.msra.mxu0 %v196
  %252 = vmatpush.bf16.msra.mxu0 %v195
  %253 = vmatpush.bf16.msra.mxu0 %v194
  %254 = vmatpush.bf16.msra.mxu0 %v193
  %255 = vmatmul.bf16.gmra.mxu0 %v104
  %v256 = vpop.f32.mrf.mxu0
  %v257 = vadd.f32 %v238, %v256
  %v258 = vpop.f32.mrf.mxu0
  %v259 = vadd.f32 %v240, %v258
  %260 = vmatmul.bf16.gmra.mxu0 %v107
  %v261 = vpop.f32.mrf.mxu0
  %v262 = vadd.f32 %v243, %v261
  %v263 = vpop.f32.mrf.mxu0
  %v264 = vadd.f32 %v245, %v263
  %265 = vdwg.mxu0
  %266 = vmatpush.bf16.msra.mxu0 0
  %267 = vmatpush.bf16.msra.mxu0 0
  %268 = vmatpush.bf16.msra.mxu0 0
  %269 = vmatpush.bf16.msra.mxu0 0
  %270 = vmatpush.bf16.msra.mxu0 0
  %271 = vmatpush.bf16.msra.mxu0 0
  %272 = vmatpush.bf16.msra.mxu0 %v202
  %273 = vmatpush.bf16.msra.mxu0 %v201
  %274 = vmatmul.bf16.gmra.mxu0 %v223
  %v275 = vpop.f32.mrf.mxu0
  %v276 = vadd.f32 %v257, %v275
  %v277 = vpop.f32.mrf.mxu0
  %v278 = vadd.f32 %v259, %v277
  %279 = vmatmul.bf16.gmra.mxu0 %v226
  %v280 = vpop.f32.mrf.mxu0
  %v281 = vadd.f32 %v262, %v280
  %v282 = vpop.f32.mrf.mxu0
  %v283 = vadd.f32 %v264, %v282
  %284 = vdwg.mxu0
  %v285 = vmax.f32 %v276, 0.0
  %v286 = vmax.f32 %v278, 0.0
  %v287 = vmax.f32 %v281, 0.0
  %v288 = vmax.f32 %v283, 0.0
  %v289 = vpack.c.bf16 %v285, %v285
  %v290 = vpack.c.bf16 %v286, %v286
  %v291 = vpack.c.bf16 %v287, %v287
  %v292 = vpack.c.bf16 %v288, %v288
  %vm293 = vcmask 60416
  %294 = vst.msk [vmem:[%s3] sm:$0xf] %vm293, %v289
  %295 = vst.msk [vmem:[%s3 + $0x4] sm:$0xf] %vm293, %v290
  %296 = vst.msk [vmem:[%s3 + $0x8] sm:$0xf] %vm293, %v291
  %297 = vst.msk [vmem:[%s3 + $0xc] sm:$0xf] %vm293, %v292
  // Predicated region
  $region14: #{forward.24} parent=0 // pred_check
    _
  $region15: #{forward.24} parent=0 // pred_check_branch
    %299 = sbr.rel (0) target = $region17
  $region16: #{forward.24} parent=0 // pred_region
    _
  $region17: #{forward.24} parent=0 // pred_fallthru
    _
  // Predicated region
  $region18: #{forward.24} parent=0 // pred_check
    _
  $region19: #{forward.24} parent=0 // pred_check_branch
    %301 = sbr.rel (0) target = $region21
  $region20: #{forward.24} parent=0 // pred_region
    _
  $region21: #{forward.24} parent=0 // pred_fallthru
    _

// kernel: forward.23
$region0: #{forward.23}
  #allocation0 [shape = 'u32[]', space=smem, size = 0x4, offset = 0x4, fixed_abs, tag = 'smem constant byte address 0x4 - core index']
  #allocation1 [shape = 'u32[72,128]{1,0:T(1,128)}', space=vmem, size = 0x9000, scoped, tag = 'internal scratch']
  %s0 = inlined_call_operand.vmem [shape: bf16[32,288], index: 0, kind: input, shape index: {}]
  %s1 = inlined_call_operand.vmem [shape: f32[32,1], index: 1, kind: input, shape index: {}]
  %s2 = inlined_call_operand.vmem [shape: bf16[288,8], index: 2, kind: input, shape index: {}]
  %s3 = inlined_call_operand.vmem [shape: bf16[288,8], index: 3, kind: input, shape index: {}]
  %s4 = inlined_call_operand.vmem [shape: bf16[288,8], index: 4, kind: input, shape index: {}]
  %s5 = inlined_call_operand.vmem [shape: bf16[288,8], index: 5, kind: input, shape index: {}]
  %s6 = inlined_call_operand.vmem [shape: bf16[32,8], index: 6, kind: output, shape index: {}]
  %s7 = sld [smem:[#allocation0]]
  $region34: #{forward.23} parent=0
    _
  %s9 = ssub.s32 1, %s7
  %s10 = scalar_select 0, %s9, %s7
  // Predicated region
  $region2: #{forward.23} parent=0 // pred_check
    _
  $region3: #{forward.23} parent=0 // pred_check_branch
    %12 = sbr.rel (0) target = $region5
  $region4: #{forward.23} parent=0 // pred_region
    _
  $region5: #{forward.23} parent=0 // pred_fallthru
    _
  // Predicated region
  $region6: #{forward.23} parent=0 // pred_check
    _
  $region7: #{forward.23} parent=0 // pred_check_branch
    %14 = sbr.rel (0) target = $region9
  $region8: #{forward.23} parent=0 // pred_region
    _
  $region9: #{forward.23} parent=0 // pred_fallthru
    _
  // Predicated region
  $region10: #{forward.23} parent=0 // pred_check
    _
  $region11: #{forward.23} parent=0 // pred_check_branch
    %16 = sbr.rel (0) target = $region13
  $region12: #{forward.23} parent=0 // pred_region
    _
  $region13: #{forward.23} parent=0 // pred_fallthru
    _
  // Predicated region
  $region14: #{forward.23} parent=0 // pred_check
    _
  $region15: #{forward.23} parent=0 // pred_check_branch
    %18 = sbr.rel (0) target = $region17
  $region16: #{forward.23} parent=0 // pred_region
    _
  $region17: #{forward.23} parent=0 // pred_fallthru
    _
  // Predicated region
  $region18: #{forward.23} parent=0 // pred_check
    _
  $region19: #{forward.23} parent=0 // pred_check_branch
    %20 = sbr.rel (0) target = $region21
  $region20: #{forward.23} parent=0 // pred_region
    _
  $region21: #{forward.23} parent=0 // pred_fallthru
    _
  // Predicated region
  $region22: #{forward.23} parent=0 // pred_check
    _
  $region23: #{forward.23} parent=0 // pred_check_branch
    %22 = sbr.rel (0) target = $region25
  $region24: #{forward.23} parent=0 // pred_region
    _
  $region25: #{forward.23} parent=0 // pred_fallthru
    _
  %v24 = vld [vmem:[%s0] sm:$0xff]
  %v25 = vld [vmem:[%s0 + $0x8] sm:$0xf]
  %v26 = vld [vmem:[%s0 + $0xc] sm:$0xff]
  %v27 = vld [vmem:[%s0 + $0x14] sm:$0xf]
  %v28 = vld [vmem:[%s0 + $0x18] sm:$0xff]
  %v29 = vld [vmem:[%s0 + $0x20] sm:$0xf]
  %v30 = vld [vmem:[%s0 + $0x24] sm:$0xff]
  %v31 = vld [vmem:[%s0 + $0x2c] sm:$0xf]
  %v32 = vld [vmem:[%s2] sm:$0xf]
  %v33 = vld [vmem:[%s2 + $0x4] sm:$0xf]
  %v34 = vld [vmem:[%s2 + $0x8] sm:$0xf]
  %v35 = vld [vmem:[%s2 + $0xc] sm:$0xf]
  %v36 = vld [vmem:[%s2 + $0x10] sm:$0xf]
  %v37 = vld [vmem:[%s2 + $0x14] sm:$0xf]
  %v38 = vld [vmem:[%s2 + $0x18] sm:$0xf]
  %v39 = vld [vmem:[%s2 + $0x1c] sm:$0xf]
  %v40 = vld [vmem:[%s2 + $0x20] sm:$0xf]
  %v41 = vld [vmem:[%s2 + $0x24] sm:$0xf]
  %v42 = vld [vmem:[%s2 + $0x28] sm:$0xf]
  %v43 = vld [vmem:[%s2 + $0x2c] sm:$0xf]
  %v44 = vld [vmem:[%s2 + $0x30] sm:$0xf]
  %v45 = vld [vmem:[%s2 + $0x34] sm:$0xf]
  %v46 = vld [vmem:[%s2 + $0x38] sm:$0xf]
  %v47 = vld [vmem:[%s2 + $0x3c] sm:$0xf]
  %v48 = vld [vmem:[%s2 + $0x40] sm:$0xf]
  %v49 = vld [vmem:[%s2 + $0x44] sm:$0xf]
  %v50 = vld [vmem:[%s2 + $0x48] sm:$0xf]
  %v51 = vld [vmem:[%s2 + $0x4c] sm:$0xf]
  %v52 = vld [vmem:[%s2 + $0x50] sm:$0xf]
  %v53 = vld [vmem:[%s2 + $0x54] sm:$0xf]
  %v54 = vld [vmem:[%s2 + $0x58] sm:$0xf]
  %v55 = vld [vmem:[%s2 + $0x5c] sm:$0xf]
  %v56 = vld [vmem:[%s2 + $0x60] sm:$0xf]
  %v57 = vld [vmem:[%s2 + $0x64] sm:$0xf]
  %v58 = vld [vmem:[%s2 + $0x68] sm:$0xf]
  %v59 = vld [vmem:[%s2 + $0x6c] sm:$0xf]
  %v60 = vld [vmem:[%s2 + $0x70] sm:$0xf]
  %v61 = vld [vmem:[%s2 + $0x74] sm:$0xf]
  %v62 = vld [vmem:[%s2 + $0x78] sm:$0xf]
  %v63 = vld [vmem:[%s2 + $0x7c] sm:$0xf]
  %v64 = vld [vmem:[%s2 + $0x80] sm:$0xf]
  %v65 = vld [vmem:[%s2 + $0x84] sm:$0xf]
  %v66 = vld [vmem:[%s2 + $0x88] sm:$0xf]
  %v67 = vld [vmem:[%s2 + $0x8c] sm:$0xf]
  %v76 = vunpack.c.l.b16 %v24
  %v77 = vunpack.c.h.b16 %v24
  %v78 = vunpack.c.l.b16 %v25
  %v79 = vunpack.c.l.b16 %v26
  %v80 = vunpack.c.h.b16 %v26
  %v81 = vunpack.c.l.b16 %v27
  %v82 = vunpack.c.l.b16 %v28
  %v83 = vunpack.c.h.b16 %v28
  %v84 = vunpack.c.l.b16 %v29
  %v85 = vunpack.c.l.b16 %v30
  %v86 = vunpack.c.h.b16 %v30
  %v87 = vunpack.c.l.b16 %v31
  %v88 = vpack.c.b16 %v79, %v76
  %v89 = vpack.c.b16 %v80, %v77
  %v90 = vpack.c.b16 %v81, %v78
  %v91 = vpack.c.b16 %v85, %v82
  %v92 = vpack.c.b16 %v86, %v83
  %v93 = vpack.c.b16 %v87, %v84
  %v134 = vunpack.c.l.b16 %v32
  %v135 = vunpack.c.l.b16 %v33
  %v136 = vunpack.c.l.b16 %v34
  %v137 = vunpack.c.l.b16 %v35
  %v138 = vunpack.c.l.b16 %v36
  %v139 = vunpack.c.l.b16 %v37
  %v140 = vunpack.c.l.b16 %v38
  %v141 = vunpack.c.l.b16 %v39
  %v142 = vunpack.c.l.b16 %v40
  %v143 = vunpack.c.l.b16 %v41
  %v144 = vunpack.c.l.b16 %v42
  %v145 = vunpack.c.l.b16 %v43
  %v146 = vunpack.c.l.b16 %v44
  %v147 = vunpack.c.l.b16 %v45
  %v148 = vunpack.c.l.b16 %v46
  %v149 = vunpack.c.l.b16 %v47
  %v150 = vunpack.c.l.b16 %v48
  %v151 = vunpack.c.l.b16 %v49
  %v152 = vunpack.c.l.b16 %v50
  %v153 = vunpack.c.l.b16 %v51
  %v154 = vunpack.c.l.b16 %v52
  %v155 = vunpack.c.l.b16 %v53
  %v156 = vunpack.c.l.b16 %v54
  %v157 = vunpack.c.l.b16 %v55
  %v158 = vunpack.c.l.b16 %v56
  %v159 = vunpack.c.l.b16 %v57
  %v160 = vunpack.c.l.b16 %v58
  %v161 = vunpack.c.l.b16 %v59
  %v162 = vunpack.c.l.b16 %v60
  %v163 = vunpack.c.l.b16 %v61
  %v164 = vunpack.c.l.b16 %v62
  %v165 = vunpack.c.l.b16 %v63
  %v166 = vunpack.c.l.b16 %v64
  %v167 = vunpack.c.l.b16 %v65
  %v168 = vunpack.c.l.b16 %v66
  %v169 = vunpack.c.l.b16 %v67
  %v170 = vpack.c.b16 %v135, %v134
  %v171 = vpack.c.b16 %v137, %v136
  %v172 = vpack.c.b16 %v139, %v138
  %v173 = vpack.c.b16 %v141, %v140
  %v174 = vpack.c.b16 %v143, %v142
  %v175 = vpack.c.b16 %v145, %v144
  %v176 = vpack.c.b16 %v147, %v146
  %v177 = vpack.c.b16 %v149, %v148
  %v178 = vpack.c.b16 %v151, %v150
  %v179 = vpack.c.b16 %v153, %v152
  %v180 = vpack.c.b16 %v155, %v154
  %v181 = vpack.c.b16 %v157, %v156
  %v182 = vpack.c.b16 %v159, %v158
  %v183 = vpack.c.b16 %v161, %v160
  %v184 = vpack.c.b16 %v163, %v162
  %v185 = vpack.c.b16 %v165, %v164
  %v186 = vpack.c.b16 %v167, %v166
  %v187 = vpack.c.b16 %v169, %v168
  %vm206 = vcmask 261120
  %v208 = vsel %vm206, %v90, 0
  %v211 = vsel %vm206, %v93, 0
  %213 = vmatpush.bf16.msra.mxu0 %v177
  %214 = vmatpush.bf16.msra.mxu0 %v176
  %215 = vmatpush.bf16.msra.mxu0 %v175
  %216 = vmatpush.bf16.msra.mxu0 %v174
  %217 = vmatpush.bf16.msra.mxu0 %v173
  %218 = vmatpush.bf16.msra.mxu0 %v172
  %219 = vmatpush.bf16.msra.mxu0 %v171
  %220 = vmatpush.bf16.msra.mxu0 %v170
  %221 = vmatmul.bf16.gmra.mxu0 %v88
  %v222 = vpop.f32.mrf.mxu0
  %v223 = vadd.f32 0.0, %v222
  %v224 = vpop.f32.mrf.mxu0
  %v225 = vadd.f32 0.0, %v224
  %226 = vmatmul.bf16.gmra.mxu0 %v91
  %v227 = vpop.f32.mrf.mxu0
  %v228 = vadd.f32 0.0, %v227
  %v229 = vpop.f32.mrf.mxu0
  %v230 = vadd.f32 0.0, %v229
  %231 = vdwg.mxu0
  %232 = vmatpush.bf16.msra.mxu0 %v185
  %233 = vmatpush.bf16.msra.mxu0 %v184
  %234 = vmatpush.bf16.msra.mxu0 %v183
  %235 = vmatpush.bf16.msra.mxu0 %v182
  %236 = vmatpush.bf16.msra.mxu0 %v181
  %237 = vmatpush.bf16.msra.mxu0 %v180
  %238 = vmatpush.bf16.msra.mxu0 %v179
  %239 = vmatpush.bf16.msra.mxu0 %v178
  %240 = vmatmul.bf16.gmra.mxu0 %v89
  %v241 = vpop.f32.mrf.mxu0
  %v242 = vadd.f32 %v223, %v241
  %v243 = vpop.f32.mrf.mxu0
  %v244 = vadd.f32 %v225, %v243
  %245 = vmatmul.bf16.gmra.mxu0 %v92
  %v246 = vpop.f32.mrf.mxu0
  %v247 = vadd.f32 %v228, %v246
  %v248 = vpop.f32.mrf.mxu0
  %v249 = vadd.f32 %v230, %v248
  %250 = vdwg.mxu0
  %251 = vmatpush.bf16.msra.mxu0 0
  %252 = vmatpush.bf16.msra.mxu0 0
  %253 = vmatpush.bf16.msra.mxu0 0
  %254 = vmatpush.bf16.msra.mxu0 0
  %255 = vmatpush.bf16.msra.mxu0 0
  %256 = vmatpush.bf16.msra.mxu0 0
  %257 = vmatpush.bf16.msra.mxu0 %v187
  %258 = vmatpush.bf16.msra.mxu0 %v186
  %259 = vmatmul.bf16.gmra.mxu0 %v208
  %v260 = vpop.f32.mrf.mxu0
  %v261 = vadd.f32 %v242, %v260
  %v262 = vpop.f32.mrf.mxu0
  %v263 = vadd.f32 %v244, %v262
  %264 = vmatmul.bf16.gmra.mxu0 %v211
  %v265 = vpop.f32.mrf.mxu0
  %v266 = vadd.f32 %v247, %v265
  %v267 = vpop.f32.mrf.mxu0
  %v268 = vadd.f32 %v249, %v267
  %269 = vdwg.mxu0
  %v270 = vld [vmem:[%s3] sm:$0xf]
  %v271 = vld [vmem:[%s3 + $0x4] sm:$0xf]
  %v272 = vld [vmem:[%s3 + $0x8] sm:$0xf]
  %v273 = vld [vmem:[%s3 + $0xc] sm:$0xf]
  %v274 = vld [vmem:[%s3 + $0x10] sm:$0xf]
  %v275 = vld [vmem:[%s3 + $0x14] sm:$0xf]
  %v276 = vld [vmem:[%s3 + $0x18] sm:$0xf]
  %v277 = vld [vmem:[%s3 + $0x1c] sm:$0xf]
  %v278 = vld [vmem:[%s3 + $0x20] sm:$0xf]
  %v279 = vld [vmem:[%s3 + $0x24] sm:$0xf]
  %v280 = vld [vmem:[%s3 + $0x28] sm:$0xf]
  %v281 = vld [vmem:[%s3 + $0x2c] sm:$0xf]
  %v282 = vld [vmem:[%s3 + $0x30] sm:$0xf]
  %v283 = vld [vmem:[%s3 + $0x34] sm:$0xf]
  %v284 = vld [vmem:[%s3 + $0x38] sm:$0xf]
  %v285 = vld [vmem:[%s3 + $0x3c] sm:$0xf]
  %v286 = vld [vmem:[%s3 + $0x40] sm:$0xf]
  %v287 = vld [vmem:[%s3 + $0x44] sm:$0xf]
  %v288 = vld [vmem:[%s3 + $0x48] sm:$0xf]
  %v289 = vld [vmem:[%s3 + $0x4c] sm:$0xf]
  %v290 = vld [vmem:[%s3 + $0x50] sm:$0xf]
  %v291 = vld [vmem:[%s3 + $0x54] sm:$0xf]
  %v292 = vld [vmem:[%s3 + $0x58] sm:$0xf]
  %v293 = vld [vmem:[%s3 + $0x5c] sm:$0xf]
  %v294 = vld [vmem:[%s3 + $0x60] sm:$0xf]
  %v295 = vld [vmem:[%s3 + $0x64] sm:$0xf]
  %v296 = vld [vmem:[%s3 + $0x68] sm:$0xf]
  %v297 = vld [vmem:[%s3 + $0x6c] sm:$0xf]
  %v298 = vld [vmem:[%s3 + $0x70] sm:$0xf]
  %v299 = vld [vmem:[%s3 + $0x74] sm:$0xf]
  %v300 = vld [vmem:[%s3 + $0x78] sm:$0xf]
  %v301 = vld [vmem:[%s3 + $0x7c] sm:$0xf]
  %v302 = vld [vmem:[%s3 + $0x80] sm:$0xf]
  %v303 = vld [vmem:[%s3 + $0x84] sm:$0xf]
  %v304 = vld [vmem:[%s3 + $0x88] sm:$0xf]
  %v305 = vld [vmem:[%s3 + $0x8c] sm:$0xf]
  %v342 = vunpack.c.l.b16 %v270
  %v343 = vunpack.c.l.b16 %v271
  %v344 = vunpack.c.l.b16 %v272
  %v345 = vunpack.c.l.b16 %v273
  %v346 = vunpack.c.l.b16 %v274
  %v347 = vunpack.c.l.b16 %v275
  %v348 = vunpack.c.l.b16 %v276
  %v349 = vunpack.c.l.b16 %v277
  %v350 = vunpack.c.l.b16 %v278
  %v351 = vunpack.c.l.b16 %v279
  %v352 = vunpack.c.l.b16 %v280
  %v353 = vunpack.c.l.b16 %v281
  %v354 = vunpack.c.l.b16 %v282
  %v355 = vunpack.c.l.b16 %v283
  %v356 = vunpack.c.l.b16 %v284
  %v357 = vunpack.c.l.b16 %v285
  %v358 = vunpack.c.l.b16 %v286
  %v359 = vunpack.c.l.b16 %v287
  %v360 = vunpack.c.l.b16 %v288
  %v361 = vunpack.c.l.b16 %v289
  %v362 = vunpack.c.l.b16 %v290
  %v363 = vunpack.c.l.b16 %v291
  %v364 = vunpack.c.l.b16 %v292
  %v365 = vunpack.c.l.b16 %v293
  %v366 = vunpack.c.l.b16 %v294
  %v367 = vunpack.c.l.b16 %v295
  %v368 = vunpack.c.l.b16 %v296
  %v369 = vunpack.c.l.b16 %v297
  %v370 = vunpack.c.l.b16 %v298
  %v371 = vunpack.c.l.b16 %v299
  %v372 = vunpack.c.l.b16 %v300
  %v373 = vunpack.c.l.b16 %v301
  %v374 = vunpack.c.l.b16 %v302
  %v375 = vunpack.c.l.b16 %v303
  %v376 = vunpack.c.l.b16 %v304
  %v377 = vunpack.c.l.b16 %v305
  %v378 = vpack.c.b16 %v343, %v342
  %v379 = vpack.c.b16 %v345, %v344
  %v380 = vpack.c.b16 %v347, %v346
  %v381 = vpack.c.b16 %v349, %v348
  %v382 = vpack.c.b16 %v351, %v350
  %v383 = vpack.c.b16 %v353, %v352
  %v384 = vpack.c.b16 %v355, %v354
  %v385 = vpack.c.b16 %v357, %v356
  %v386 = vpack.c.b16 %v359, %v358
  %v387 = vpack.c.b16 %v361, %v360
  %v388 = vpack.c.b16 %v363, %v362
  %v389 = vpack.c.b16 %v365, %v364
  %v390 = vpack.c.b16 %v367, %v366
  %v391 = vpack.c.b16 %v369, %v368
  %v392 = vpack.c.b16 %v371, %v370
  %v393 = vpack.c.b16 %v373, %v372
  %v394 = vpack.c.b16 %v375, %v374
  %v395 = vpack.c.b16 %v377, %v376
  %414 = vmatpush.bf16.msra.mxu0 %v385
  %415 = vmatpush.bf16.msra.mxu0 %v384
  %416 = vmatpush.bf16.msra.mxu0 %v383
  %417 = vmatpush.bf16.msra.mxu0 %v382
  %418 = vmatpush.bf16.msra.mxu0 %v381
  %419 = vmatpush.bf16.msra.mxu0 %v380
  %420 = vmatpush.bf16.msra.mxu0 %v379
  %421 = vmatpush.bf16.msra.mxu0 %v378
  %422 = vmatmul.bf16.gmra.mxu0 %v88
  %v423 = vpop.f32.mrf.mxu0
  %v424 = vadd.f32 0.0, %v423
  %v425 = vpop.f32.mrf.mxu0
  %v426 = vadd.f32 0.0, %v425
  %427 = vmatmul.bf16.gmra.mxu0 %v91
  %v428 = vpop.f32.mrf.mxu0
  %v429 = vadd.f32 0.0, %v428
  %v430 = vpop.f32.mrf.mxu0
  %v431 = vadd.f32 0.0, %v430
  %432 = vdwg.mxu0
  %433 = vmatpush.bf16.msra.mxu0 %v393
  %434 = vmatpush.bf16.msra.mxu0 %v392
  %435 = vmatpush.bf16.msra.mxu0 %v391
  %436 = vmatpush.bf16.msra.mxu0 %v390
  %437 = vmatpush.bf16.msra.mxu0 %v389
  %438 = vmatpush.bf16.msra.mxu0 %v388
  %439 = vmatpush.bf16.msra.mxu0 %v387
  %440 = vmatpush.bf16.msra.mxu0 %v386
  %441 = vmatmul.bf16.gmra.mxu0 %v89
  %v442 = vpop.f32.mrf.mxu0
  %v443 = vadd.f32 %v424, %v442
  %v444 = vpop.f32.mrf.mxu0
  %v445 = vadd.f32 %v426, %v444
  %446 = vmatmul.bf16.gmra.mxu0 %v92
  %v447 = vpop.f32.mrf.mxu0
  %v448 = vadd.f32 %v429, %v447
  %v449 = vpop.f32.mrf.mxu0
  %v450 = vadd.f32 %v431, %v449
  %451 = vdwg.mxu0
  %452 = vmatpush.bf16.msra.mxu0 0
  %453 = vmatpush.bf16.msra.mxu0 0
  %454 = vmatpush.bf16.msra.mxu0 0
  %455 = vmatpush.bf16.msra.mxu0 0
  %456 = vmatpush.bf16.msra.mxu0 0
  %457 = vmatpush.bf16.msra.mxu0 0
  %458 = vmatpush.bf16.msra.mxu0 %v395
  %459 = vmatpush.bf16.msra.mxu0 %v394
  %460 = vmatmul.bf16.gmra.mxu0 %v208
  %v461 = vpop.f32.mrf.mxu0
  %v462 = vadd.f32 %v443, %v461
  %v463 = vpop.f32.mrf.mxu0
  %v464 = vadd.f32 %v445, %v463
  %465 = vmatmul.bf16.gmra.mxu0 %v211
  %v466 = vpop.f32.mrf.mxu0
  %v467 = vadd.f32 %v448, %v466
  %v468 = vpop.f32.mrf.mxu0
  %v469 = vadd.f32 %v450, %v468
  %470 = vdwg.mxu0
  %v471 = vmax.f32 %v261, %v462
  %v472 = vmax.f32 %v263, %v464
  %v473 = vmax.f32 %v266, %v467
  %v474 = vmax.f32 %v268, %v469
  %v475 = vld [vmem:[%s4] sm:$0xf]
  %v476 = vld [vmem:[%s4 + $0x4] sm:$0xf]
  %v477 = vld [vmem:[%s4 + $0x8] sm:$0xf]
  %v478 = vld [vmem:[%s4 + $0xc] sm:$0xf]
  %v479 = vld [vmem:[%s4 + $0x10] sm:$0xf]
  %v480 = vld [vmem:[%s4 + $0x14] sm:$0xf]
  %v481 = vld [vmem:[%s4 + $0x18] sm:$0xf]
  %v482 = vld [vmem:[%s4 + $0x1c] sm:$0xf]
  %v483 = vld [vmem:[%s4 + $0x20] sm:$0xf]
  %v484 = vld [vmem:[%s4 + $0x24] sm:$0xf]
  %v485 = vld [vmem:[%s4 + $0x28] sm:$0xf]
  %v486 = vld [vmem:[%s4 + $0x2c] sm:$0xf]
  %v487 = vld [vmem:[%s4 + $0x30] sm:$0xf]
  %v488 = vld [vmem:[%s4 + $0x34] sm:$0xf]
  %v489 = vld [vmem:[%s4 + $0x38] sm:$0xf]
  %v490 = vld [vmem:[%s4 + $0x3c] sm:$0xf]
  %v491 = vld [vmem:[%s4 + $0x40] sm:$0xf]
  %v492 = vld [vmem:[%s4 + $0x44] sm:$0xf]
  %v493 = vld [vmem:[%s4 + $0x48] sm:$0xf]
  %v494 = vld [vmem:[%s4 + $0x4c] sm:$0xf]
  %v495 = vld [vmem:[%s4 + $0x50] sm:$0xf]
  %v496 = vld [vmem:[%s4 + $0x54] sm:$0xf]
  %v497 = vld [vmem:[%s4 + $0x58] sm:$0xf]
  %v498 = vld [vmem:[%s4 + $0x5c] sm:$0xf]
  %v499 = vld [vmem:[%s4 + $0x60] sm:$0xf]
  %v500 = vld [vmem:[%s4 + $0x64] sm:$0xf]
  %v501 = vld [vmem:[%s4 + $0x68] sm:$0xf]
  %v502 = vld [vmem:[%s4 + $0x6c] sm:$0xf]
  %v503 = vld [vmem:[%s4 + $0x70] sm:$0xf]
  %v504 = vld [vmem:[%s4 + $0x74] sm:$0xf]
  %v505 = vld [vmem:[%s4 + $0x78] sm:$0xf]
  %v506 = vld [vmem:[%s4 + $0x7c] sm:$0xf]
  %v507 = vld [vmem:[%s4 + $0x80] sm:$0xf]
  %v508 = vld [vmem:[%s4 + $0x84] sm:$0xf]
  %v509 = vld [vmem:[%s4 + $0x88] sm:$0xf]
  %v510 = vld [vmem:[%s4 + $0x8c] sm:$0xf]
  %v547 = vunpack.c.l.b16 %v475
  %v548 = vunpack.c.l.b16 %v476
  %v549 = vunpack.c.l.b16 %v477
  %v550 = vunpack.c.l.b16 %v478
  %v551 = vunpack.c.l.b16 %v479
  %v552 = vunpack.c.l.b16 %v480
  %v553 = vunpack.c.l.b16 %v481
  %v554 = vunpack.c.l.b16 %v482
  %v555 = vunpack.c.l.b16 %v483
  %v556 = vunpack.c.l.b16 %v484
  %v557 = vunpack.c.l.b16 %v485
  %v558 = vunpack.c.l.b16 %v486
  %v559 = vunpack.c.l.b16 %v487
  %v560 = vunpack.c.l.b16 %v488
  %v561 = vunpack.c.l.b16 %v489
  %v562 = vunpack.c.l.b16 %v490
  %v563 = vunpack.c.l.b16 %v491
  %v564 = vunpack.c.l.b16 %v492
  %v565 = vunpack.c.l.b16 %v493
  %v566 = vunpack.c.l.b16 %v494
  %v567 = vunpack.c.l.b16 %v495
  %v568 = vunpack.c.l.b16 %v496
  %v569 = vunpack.c.l.b16 %v497
  %v570 = vunpack.c.l.b16 %v498
  %v571 = vunpack.c.l.b16 %v499
  %v572 = vunpack.c.l.b16 %v500
  %v573 = vunpack.c.l.b16 %v501
  %v574 = vunpack.c.l.b16 %v502
  %v575 = vunpack.c.l.b16 %v503
  %v576 = vunpack.c.l.b16 %v504
  %v577 = vunpack.c.l.b16 %v505
  %v578 = vunpack.c.l.b16 %v506
  %v579 = vunpack.c.l.b16 %v507
  %v580 = vunpack.c.l.b16 %v508
  %v581 = vunpack.c.l.b16 %v509
  %v582 = vunpack.c.l.b16 %v510
  %v583 = vpack.c.b16 %v548, %v547
  %v584 = vpack.c.b16 %v550, %v549
  %v585 = vpack.c.b16 %v552, %v551
  %v586 = vpack.c.b16 %v554, %v553
  %v587 = vpack.c.b16 %v556, %v555
  %v588 = vpack.c.b16 %v558, %v557
  %v589 = vpack.c.b16 %v560, %v559
  %v590 = vpack.c.b16 %v562, %v561
  %v591 = vpack.c.b16 %v564, %v563
  %v592 = vpack.c.b16 %v566, %v565
  %v593 = vpack.c.b16 %v568, %v567
  %v594 = vpack.c.b16 %v570, %v569
  %v595 = vpack.c.b16 %v572, %v571
  %v596 = vpack.c.b16 %v574, %v573
  %v597 = vpack.c.b16 %v576, %v575
  %v598 = vpack.c.b16 %v578, %v577
  %v599 = vpack.c.b16 %v580, %v579
  %v600 = vpack.c.b16 %v582, %v581
  %619 = vmatpush.bf16.msra.mxu0 %v590
  %620 = vmatpush.bf16.msra.mxu0 %v589
  %621 = vmatpush.bf16.msra.mxu0 %v588
  %622 = vmatpush.bf16.msra.mxu0 %v587
  %623 = vmatpush.bf16.msra.mxu0 %v586
  %624 = vmatpush.bf16.msra.mxu0 %v585
  %625 = vmatpush.bf16.msra.mxu0 %v584
  %626 = vmatpush.bf16.msra.mxu0 %v583
  %627 = vmatmul.bf16.gmra.mxu0 %v88
  %v628 = vpop.f32.mrf.mxu0
  %v629 = vadd.f32 0.0, %v628
  %v630 = vpop.f32.mrf.mxu0
  %v631 = vadd.f32 0.0, %v630
  %632 = vmatmul.bf16.gmra.mxu0 %v91
  %v633 = vpop.f32.mrf.mxu0
  %v634 = vadd.f32 0.0, %v633
  %v635 = vpop.f32.mrf.mxu0
  %v636 = vadd.f32 0.0, %v635
  %637 = vdwg.mxu0
  %638 = vmatpush.bf16.msra.mxu0 %v598
  %639 = vmatpush.bf16.msra.mxu0 %v597
  %640 = vmatpush.bf16.msra.mxu0 %v596
  %641 = vmatpush.bf16.msra.mxu0 %v595
  %642 = vmatpush.bf16.msra.mxu0 %v594
  %643 = vmatpush.bf16.msra.mxu0 %v593
  %644 = vmatpush.bf16.msra.mxu0 %v592
  %645 = vmatpush.bf16.msra.mxu0 %v591
  %646 = vmatmul.bf16.gmra.mxu0 %v89
  %v647 = vpop.f32.mrf.mxu0
  %v648 = vadd.f32 %v629, %v647
  %v649 = vpop.f32.mrf.mxu0
  %v650 = vadd.f32 %v631, %v649
  %651 = vmatmul.bf16.gmra.mxu0 %v92
  %v652 = vpop.f32.mrf.mxu0
  %v653 = vadd.f32 %v634, %v652
  %v654 = vpop.f32.mrf.mxu0
  %v655 = vadd.f32 %v636, %v654
  %656 = vdwg.mxu0
  %657 = vmatpush.bf16.msra.mxu0 0
  %658 = vmatpush.bf16.msra.mxu0 0
  %659 = vmatpush.bf16.msra.mxu0 0
  %660 = vmatpush.bf16.msra.mxu0 0
  %661 = vmatpush.bf16.msra.mxu0 0
  %662 = vmatpush.bf16.msra.mxu0 0
  %663 = vmatpush.bf16.msra.mxu0 %v600
  %664 = vmatpush.bf16.msra.mxu0 %v599
  %665 = vmatmul.bf16.gmra.mxu0 %v208
  %v666 = vpop.f32.mrf.mxu0
  %v667 = vadd.f32 %v648, %v666
  %v668 = vpop.f32.mrf.mxu0
  %v669 = vadd.f32 %v650, %v668
  %670 = vmatmul.bf16.gmra.mxu0 %v211
  %v671 = vpop.f32.mrf.mxu0
  %v672 = vadd.f32 %v653, %v671
  %v673 = vpop.f32.mrf.mxu0
  %v674 = vadd.f32 %v655, %v673
  %675 = vdwg.mxu0
  %v676 = vmax.f32 %v471, %v667
  %v677 = vmax.f32 %v472, %v669
  %v678 = vmax.f32 %v473, %v672
  %v679 = vmax.f32 %v474, %v674
  %v680 = vld [vmem:[%s5] sm:$0xf]
  %v681 = vld [vmem:[%s5 + $0x4] sm:$0xf]
  %v682 = vld [vmem:[%s5 + $0x8] sm:$0xf]
  %v683 = vld [vmem:[%s5 + $0xc] sm:$0xf]
  %v684 = vld [vmem:[%s5 + $0x10] sm:$0xf]
  %v685 = vld [vmem:[%s5 + $0x14] sm:$0xf]
  %v686 = vld [vmem:[%s5 + $0x18] sm:$0xf]
  %v687 = vld [vmem:[%s5 + $0x1c] sm:$0xf]
  %v688 = vld [vmem:[%s5 + $0x20] sm:$0xf]
  %v689 = vld [vmem:[%s5 + $0x24] sm:$0xf]
  %v690 = vld [vmem:[%s5 + $0x28] sm:$0xf]
  %v691 = vld [vmem:[%s5 + $0x2c] sm:$0xf]
  %v692 = vld [vmem:[%s5 + $0x30] sm:$0xf]
  %v693 = vld [vmem:[%s5 + $0x34] sm:$0xf]
  %v694 = vld [vmem:[%s5 + $0x38] sm:$0xf]
  %v695 = vld [vmem:[%s5 + $0x3c] sm:$0xf]
  %v696 = vld [vmem:[%s5 + $0x40] sm:$0xf]
  %v697 = vld [vmem:[%s5 + $0x44] sm:$0xf]
  %v698 = vld [vmem:[%s5 + $0x48] sm:$0xf]
  %v699 = vld [vmem:[%s5 + $0x4c] sm:$0xf]
  %v700 = vld [vmem:[%s5 + $0x50] sm:$0xf]
  %v701 = vld [vmem:[%s5 + $0x54] sm:$0xf]
  %v702 = vld [vmem:[%s5 + $0x58] sm:$0xf]
  %v703 = vld [vmem:[%s5 + $0x5c] sm:$0xf]
  %v704 = vld [vmem:[%s5 + $0x60] sm:$0xf]
  %v705 = vld [vmem:[%s5 + $0x64] sm:$0xf]
  %v706 = vld [vmem:[%s5 + $0x68] sm:$0xf]
  %v707 = vld [vmem:[%s5 + $0x6c] sm:$0xf]
  %v708 = vld [vmem:[%s5 + $0x70] sm:$0xf]
  %v709 = vld [vmem:[%s5 + $0x74] sm:$0xf]
  %v710 = vld [vmem:[%s5 + $0x78] sm:$0xf]
  %v711 = vld [vmem:[%s5 + $0x7c] sm:$0xf]
  %v712 = vld [vmem:[%s5 + $0x80] sm:$0xf]
  %v713 = vld [vmem:[%s5 + $0x84] sm:$0xf]
  %v714 = vld [vmem:[%s5 + $0x88] sm:$0xf]
  %v715 = vld [vmem:[%s5 + $0x8c] sm:$0xf]
  %v752 = vunpack.c.l.b16 %v680
  %v753 = vunpack.c.l.b16 %v681
  %v754 = vunpack.c.l.b16 %v682
  %v755 = vunpack.c.l.b16 %v683
  %v756 = vunpack.c.l.b16 %v684
  %v757 = vunpack.c.l.b16 %v685
  %v758 = vunpack.c.l.b16 %v686
  %v759 = vunpack.c.l.b16 %v687
  %v760 = vunpack.c.l.b16 %v688
  %v761 = vunpack.c.l.b16 %v689
  %v762 = vunpack.c.l.b16 %v690
  %v763 = vunpack.c.l.b16 %v691
  %v764 = vunpack.c.l.b16 %v692
  %v765 = vunpack.c.l.b16 %v693
  %v766 = vunpack.c.l.b16 %v694
  %v767 = vunpack.c.l.b16 %v695
  %v768 = vunpack.c.l.b16 %v696
  %v769 = vunpack.c.l.b16 %v697
  %v770 = vunpack.c.l.b16 %v698
  %v771 = vunpack.c.l.b16 %v699
  %v772 = vunpack.c.l.b16 %v700
  %v773 = vunpack.c.l.b16 %v701
  %v774 = vunpack.c.l.b16 %v702
  %v775 = vunpack.c.l.b16 %v703
  %v776 = vunpack.c.l.b16 %v704
  %v777 = vunpack.c.l.b16 %v705
  %v778 = vunpack.c.l.b16 %v706
  %v779 = vunpack.c.l.b16 %v707
  %v780 = vunpack.c.l.b16 %v708
  %v781 = vunpack.c.l.b16 %v709
  %v782 = vunpack.c.l.b16 %v710
  %v783 = vunpack.c.l.b16 %v711
  %v784 = vunpack.c.l.b16 %v712
  %v785 = vunpack.c.l.b16 %v713
  %v786 = vunpack.c.l.b16 %v714
  %v787 = vunpack.c.l.b16 %v715
  %v788 = vpack.c.b16 %v753, %v752
  %v789 = vpack.c.b16 %v755, %v754
  %v790 = vpack.c.b16 %v757, %v756
  %v791 = vpack.c.b16 %v759, %v758
  %v792 = vpack.c.b16 %v761, %v760
  %v793 = vpack.c.b16 %v763, %v762
  %v794 = vpack.c.b16 %v765, %v764
  %v795 = vpack.c.b16 %v767, %v766
  %v796 = vpack.c.b16 %v769, %v768
  %v797 = vpack.c.b16 %v771, %v770
  %v798 = vpack.c.b16 %v773, %v772
  %v799 = vpack.c.b16 %v775, %v774
  %v800 = vpack.c.b16 %v777, %v776
  %v801 = vpack.c.b16 %v779, %v778
  %v802 = vpack.c.b16 %v781, %v780
  %v803 = vpack.c.b16 %v783, %v782
  %v804 = vpack.c.b16 %v785, %v784
  %v805 = vpack.c.b16 %v787, %v786
  %824 = vmatpush.bf16.msra.mxu0 %v795
  %825 = vmatpush.bf16.msra.mxu0 %v794
  %826 = vmatpush.bf16.msra.mxu0 %v793
  %827 = vmatpush.bf16.msra.mxu0 %v792
  %828 = vmatpush.bf16.msra.mxu0 %v791
  %829 = vmatpush.bf16.msra.mxu0 %v790
  %830 = vmatpush.bf16.msra.mxu0 %v789
  %831 = vmatpush.bf16.msra.mxu0 %v788
  %832 = vmatmul.bf16.gmra.mxu0 %v88
  %v833 = vpop.f32.mrf.mxu0
  %v834 = vadd.f32 0.0, %v833
  %v835 = vpop.f32.mrf.mxu0
  %v836 = vadd.f32 0.0, %v835
  %837 = vmatmul.bf16.gmra.mxu0 %v91
  %v838 = vpop.f32.mrf.mxu0
  %v839 = vadd.f32 0.0, %v838
  %v840 = vpop.f32.mrf.mxu0
  %v841 = vadd.f32 0.0, %v840
  %842 = vdwg.mxu0
  %843 = vmatpush.bf16.msra.mxu0 %v803
  %844 = vmatpush.bf16.msra.mxu0 %v802
  %845 = vmatpush.bf16.msra.mxu0 %v801
  %846 = vmatpush.bf16.msra.mxu0 %v800
  %847 = vmatpush.bf16.msra.mxu0 %v799
  %848 = vmatpush.bf16.msra.mxu0 %v798
  %849 = vmatpush.bf16.msra.mxu0 %v797
  %850 = vmatpush.bf16.msra.mxu0 %v796
  %851 = vmatmul.bf16.gmra.mxu0 %v89
  %v852 = vpop.f32.mrf.mxu0
  %v853 = vadd.f32 %v834, %v852
  %v854 = vpop.f32.mrf.mxu0
  %v855 = vadd.f32 %v836, %v854
  %856 = vmatmul.bf16.gmra.mxu0 %v92
  %v857 = vpop.f32.mrf.mxu0
  %v858 = vadd.f32 %v839, %v857
  %v859 = vpop.f32.mrf.mxu0
  %v860 = vadd.f32 %v841, %v859
  %861 = vdwg.mxu0
  %862 = vmatpush.bf16.msra.mxu0 0
  %863 = vmatpush.bf16.msra.mxu0 0
  %864 = vmatpush.bf16.msra.mxu0 0
  %865 = vmatpush.bf16.msra.mxu0 0
  %866 = vmatpush.bf16.msra.mxu0 0
  %867 = vmatpush.bf16.msra.mxu0 0
  %868 = vmatpush.bf16.msra.mxu0 %v805
  %869 = vmatpush.bf16.msra.mxu0 %v804
  %870 = vmatmul.bf16.gmra.mxu0 %v208
  %v871 = vpop.f32.mrf.mxu0
  %v872 = vadd.f32 %v853, %v871
  %v873 = vpop.f32.mrf.mxu0
  %v874 = vadd.f32 %v855, %v873
  %875 = vmatmul.bf16.gmra.mxu0 %v211
  %v876 = vpop.f32.mrf.mxu0
  %v877 = vadd.f32 %v858, %v876
  %v878 = vpop.f32.mrf.mxu0
  %v879 = vadd.f32 %v860, %v878
  %880 = vdwg.mxu0
  %v881 = vmax.f32 %v676, %v872
  %v882 = vmax.f32 %v677, %v874
  %v883 = vmax.f32 %v678, %v877
  %v884 = vmax.f32 %v679, %v879
  %v885 = vld [vmem:[%s1] sm:$0xff]
  %v886 = vld [vmem:[%s1 + $0x8] sm:$0xff]
  %v887 = vld [vmem:[%s1 + $0x10] sm:$0xff]
  %v888 = vld [vmem:[%s1 + $0x18] sm:$0xff]
  %890 = vset.pattern.permute.xlu0 0
  %891 = vperm.xlu0 %890, %v885
  %v892 = vpop.permute.xlu0 %891
  %895 = vset.pattern.permute.xlu0 0
  %896 = vperm.xlu0 %895, %v886
  %v897 = vpop.permute.xlu0 %896
  %900 = vset.pattern.permute.xlu0 0
  %901 = vperm.xlu0 %900, %v887
  %v902 = vpop.permute.xlu0 %901
  %905 = vset.pattern.permute.xlu0 0
  %906 = vperm.xlu0 %905, %v888
  %v907 = vpop.permute.xlu0 %906
  %v909 = vadd.f32 %v881, %v892
  %v910 = vadd.f32 %v882, %v897
  %v911 = vadd.f32 %v883, %v902
  %v912 = vadd.f32 %v884, %v907
  %v913 = vmax.f32 %v909, 0.0
  %v914 = vmax.f32 %v910, 0.0
  %v915 = vmax.f32 %v911, 0.0
  %v916 = vmax.f32 %v912, 0.0
  %v917 = vpack.c.bf16 %v913, %v913
  %v918 = vpack.c.bf16 %v914, %v914
  %v919 = vpack.c.bf16 %v915, %v915
  %v920 = vpack.c.bf16 %v916, %v916
  %vm921 = vcmask 60416
  %922 = vst.msk [vmem:[%s6] sm:$0xf] %vm921, %v917
  %923 = vst.msk [vmem:[%s6 + $0x4] sm:$0xf] %vm921, %v918
  %924 = vst.msk [vmem:[%s6 + $0x8] sm:$0xf] %vm921, %v919
  %925 = vst.msk [vmem:[%s6 + $0xc] sm:$0xf] %vm921, %v920
  // Predicated region
  $region26: #{forward.23} parent=0 // pred_check
    _
  $region27: #{forward.23} parent=0 // pred_check_branch
    %927 = sbr.rel (0) target = $region29
  $region28: #{forward.23} parent=0 // pred_region
    _
  $region29: #{forward.23} parent=0 // pred_fallthru
    _
  // Predicated region
  $region30: #{forward.23} parent=0 // pred_check
    _
  $region31: #{forward.23} parent=0 // pred_check_branch
    %929 = sbr.rel (0) target = $region33
  $region32: #{forward.23} parent=0 // pred_region
    _
  $region33: #{forward.23} parent=0 // pred_fallthru
    _

// kernel: forward.26
$region0: #{forward.26}
  #allocation0 [shape = 'u32[]', space=smem, size = 0x4, offset = 0x4, fixed_abs, tag = 'smem constant byte address 0x4 - core index']
  #allocation1 [shape = 'u32[72,128]{1,0:T(1,128)}', space=vmem, size = 0x9000, scoped, tag = 'internal scratch']
  %s0 = inlined_call_operand.vmem [shape: bf16[32,288], index: 0, kind: input, shape index: {}]
  %s1 = inlined_call_operand.vmem [shape: f32[32,1], index: 1, kind: input, shape index: {}]
  %s2 = inlined_call_operand.vmem [shape: bf16[288,2], index: 2, kind: input, shape index: {}]
  %s3 = inlined_call_operand.vmem [shape: bf16[288,2], index: 3, kind: input, shape index: {}]
  %s4 = inlined_call_operand.vmem [shape: bf16[288,2], index: 4, kind: input, shape index: {}]
  %s5 = inlined_call_operand.vmem [shape: bf16[288,2], index: 5, kind: input, shape index: {}]
  %s6 = inlined_call_operand.vmem [shape: bf16[32,2], index: 6, kind: output, shape index: {}]
  %s7 = sld [smem:[#allocation0]]
  $region34: #{forward.26} parent=0
    _
  %s9 = ssub.s32 1, %s7
  %s10 = scalar_select 0, %s9, %s7
  // Predicated region
  $region2: #{forward.26} parent=0 // pred_check
    _
  $region3: #{forward.26} parent=0 // pred_check_branch
    %12 = sbr.rel (0) target = $region5
  $region4: #{forward.26} parent=0 // pred_region
    _
  $region5: #{forward.26} parent=0 // pred_fallthru
    _
  // Predicated region
  $region6: #{forward.26} parent=0 // pred_check
    _
  $region7: #{forward.26} parent=0 // pred_check_branch
    %14 = sbr.rel (0) target = $region9
  $region8: #{forward.26} parent=0 // pred_region
    _
  $region9: #{forward.26} parent=0 // pred_fallthru
    _
  // Predicated region
  $region10: #{forward.26} parent=0 // pred_check
    _
  $region11: #{forward.26} parent=0 // pred_check_branch
    %16 = sbr.rel (0) target = $region13
  $region12: #{forward.26} parent=0 // pred_region
    _
  $region13: #{forward.26} parent=0 // pred_fallthru
    _
  // Predicated region
  $region14: #{forward.26} parent=0 // pred_check
    _
  $region15: #{forward.26} parent=0 // pred_check_branch
    %18 = sbr.rel (0) target = $region17
  $region16: #{forward.26} parent=0 // pred_region
    _
  $region17: #{forward.26} parent=0 // pred_fallthru
    _
  // Predicated region
  $region18: #{forward.26} parent=0 // pred_check
    _
  $region19: #{forward.26} parent=0 // pred_check_branch
    %20 = sbr.rel (0) target = $region21
  $region20: #{forward.26} parent=0 // pred_region
    _
  $region21: #{forward.26} parent=0 // pred_fallthru
    _
  // Predicated region
  $region22: #{forward.26} parent=0 // pred_check
    _
  $region23: #{forward.26} parent=0 // pred_check_branch
    %22 = sbr.rel (0) target = $region25
  $region24: #{forward.26} parent=0 // pred_region
    _
  $region25: #{forward.26} parent=0 // pred_fallthru
    _
  %v24 = vld [vmem:[%s0] sm:$0xff]
  %v25 = vld [vmem:[%s0 + $0x8] sm:$0xf]
  %v26 = vld [vmem:[%s0 + $0xc] sm:$0xff]
  %v27 = vld [vmem:[%s0 + $0x14] sm:$0xf]
  %v28 = vld [vmem:[%s0 + $0x18] sm:$0xff]
  %v29 = vld [vmem:[%s0 + $0x20] sm:$0xf]
  %v30 = vld [vmem:[%s0 + $0x24] sm:$0xff]
  %v31 = vld [vmem:[%s0 + $0x2c] sm:$0xf]
  %v32 = vld [vmem:[%s2] sm:$0xf]
  %v33 = vld [vmem:[%s2 + $0x4] sm:$0xf]
  %v34 = vld [vmem:[%s2 + $0x8] sm:$0xf]
  %v35 = vld [vmem:[%s2 + $0xc] sm:$0xf]
  %v36 = vld [vmem:[%s2 + $0x10] sm:$0xf]
  %v37 = vld [vmem:[%s2 + $0x14] sm:$0xf]
  %v38 = vld [vmem:[%s2 + $0x18] sm:$0xf]
  %v39 = vld [vmem:[%s2 + $0x1c] sm:$0xf]
  %v40 = vld [vmem:[%s2 + $0x20] sm:$0xf]
  %v41 = vld [vmem:[%s2 + $0x24] sm:$0xf]
  %v42 = vld [vmem:[%s2 + $0x28] sm:$0xf]
  %v43 = vld [vmem:[%s2 + $0x2c] sm:$0xf]
  %v44 = vld [vmem:[%s2 + $0x30] sm:$0xf]
  %v45 = vld [vmem:[%s2 + $0x34] sm:$0xf]
  %v46 = vld [vmem:[%s2 + $0x38] sm:$0xf]
  %v47 = vld [vmem:[%s2 + $0x3c] sm:$0xf]
  %v48 = vld [vmem:[%s2 + $0x40] sm:$0xf]
  %v49 = vld [vmem:[%s2 + $0x44] sm:$0xf]
  %v50 = vld [vmem:[%s2 + $0x48] sm:$0xf]
  %v51 = vld [vmem:[%s2 + $0x4c] sm:$0xf]
  %v52 = vld [vmem:[%s2 + $0x50] sm:$0xf]
  %v53 = vld [vmem:[%s2 + $0x54] sm:$0xf]
  %v54 = vld [vmem:[%s2 + $0x58] sm:$0xf]
  %v55 = vld [vmem:[%s2 + $0x5c] sm:$0xf]
  %v56 = vld [vmem:[%s2 + $0x60] sm:$0xf]
  %v57 = vld [vmem:[%s2 + $0x64] sm:$0xf]
  %v58 = vld [vmem:[%s2 + $0x68] sm:$0xf]
  %v59 = vld [vmem:[%s2 + $0x6c] sm:$0xf]
  %v60 = vld [vmem:[%s2 + $0x70] sm:$0xf]
  %v61 = vld [vmem:[%s2 + $0x74] sm:$0xf]
  %v62 = vld [vmem:[%s2 + $0x78] sm:$0xf]
  %v63 = vld [vmem:[%s2 + $0x7c] sm:$0xf]
  %v64 = vld [vmem:[%s2 + $0x80] sm:$0xf]
  %v65 = vld [vmem:[%s2 + $0x84] sm:$0xf]
  %v66 = vld [vmem:[%s2 + $0x88] sm:$0xf]
  %v67 = vld [vmem:[%s2 + $0x8c] sm:$0xf]
  %v76 = vunpack.c.l.b16 %v24
  %v77 = vunpack.c.h.b16 %v24
  %v78 = vunpack.c.l.b16 %v25
  %v79 = vunpack.c.l.b16 %v26
  %v80 = vunpack.c.h.b16 %v26
  %v81 = vunpack.c.l.b16 %v27
  %v82 = vunpack.c.l.b16 %v28
  %v83 = vunpack.c.h.b16 %v28
  %v84 = vunpack.c.l.b16 %v29
  %v85 = vunpack.c.l.b16 %v30
  %v86 = vunpack.c.h.b16 %v30
  %v87 = vunpack.c.l.b16 %v31
  %v88 = vpack.c.b16 %v79, %v76
  %v89 = vpack.c.b16 %v80, %v77
  %v90 = vpack.c.b16 %v81, %v78
  %v91 = vpack.c.b16 %v85, %v82
  %v92 = vpack.c.b16 %v86, %v83
  %v93 = vpack.c.b16 %v87, %v84
  %v134 = vunpack.c.l.b16 %v32
  %v135 = vunpack.c.l.b16 %v33
  %v136 = vunpack.c.l.b16 %v34
  %v137 = vunpack.c.l.b16 %v35
  %v138 = vunpack.c.l.b16 %v36
  %v139 = vunpack.c.l.b16 %v37
  %v140 = vunpack.c.l.b16 %v38
  %v141 = vunpack.c.l.b16 %v39
  %v142 = vunpack.c.l.b16 %v40
  %v143 = vunpack.c.l.b16 %v41
  %v144 = vunpack.c.l.b16 %v42
  %v145 = vunpack.c.l.b16 %v43
  %v146 = vunpack.c.l.b16 %v44
  %v147 = vunpack.c.l.b16 %v45
  %v148 = vunpack.c.l.b16 %v46
  %v149 = vunpack.c.l.b16 %v47
  %v150 = vunpack.c.l.b16 %v48
  %v151 = vunpack.c.l.b16 %v49
  %v152 = vunpack.c.l.b16 %v50
  %v153 = vunpack.c.l.b16 %v51
  %v154 = vunpack.c.l.b16 %v52
  %v155 = vunpack.c.l.b16 %v53
  %v156 = vunpack.c.l.b16 %v54
  %v157 = vunpack.c.l.b16 %v55
  %v158 = vunpack.c.l.b16 %v56
  %v159 = vunpack.c.l.b16 %v57
  %v160 = vunpack.c.l.b16 %v58
  %v161 = vunpack.c.l.b16 %v59
  %v162 = vunpack.c.l.b16 %v60
  %v163 = vunpack.c.l.b16 %v61
  %v164 = vunpack.c.l.b16 %v62
  %v165 = vunpack.c.l.b16 %v63
  %v166 = vunpack.c.l.b16 %v64
  %v167 = vunpack.c.l.b16 %v65
  %v168 = vunpack.c.l.b16 %v66
  %v169 = vunpack.c.l.b16 %v67
  %v170 = vpack.c.b16 %v135, %v134
  %v171 = vpack.c.b16 %v137, %v136
  %v172 = vpack.c.b16 %v139, %v138
  %v173 = vpack.c.b16 %v141, %v140
  %v174 = vpack.c.b16 %v143, %v142
  %v175 = vpack.c.b16 %v145, %v144
  %v176 = vpack.c.b16 %v147, %v146
  %v177 = vpack.c.b16 %v149, %v148
  %v178 = vpack.c.b16 %v151, %v150
  %v179 = vpack.c.b16 %v153, %v152
  %v180 = vpack.c.b16 %v155, %v154
  %v181 = vpack.c.b16 %v157, %v156
  %v182 = vpack.c.b16 %v159, %v158
  %v183 = vpack.c.b16 %v161, %v160
  %v184 = vpack.c.b16 %v163, %v162
  %v185 = vpack.c.b16 %v165, %v164
  %v186 = vpack.c.b16 %v167, %v166
  %v187 = vpack.c.b16 %v169, %v168
  %vm206 = vcmask 261120
  %v208 = vsel %vm206, %v90, 0
  %v211 = vsel %vm206, %v93, 0
  %213 = vmatpush.bf16.msra.mxu0 %v177
  %214 = vmatpush.bf16.msra.mxu0 %v176
  %215 = vmatpush.bf16.msra.mxu0 %v175
  %216 = vmatpush.bf16.msra.mxu0 %v174
  %217 = vmatpush.bf16.msra.mxu0 %v173
  %218 = vmatpush.bf16.msra.mxu0 %v172
  %219 = vmatpush.bf16.msra.mxu0 %v171
  %220 = vmatpush.bf16.msra.mxu0 %v170
  %221 = vmatmul.bf16.gmra.mxu0 %v88
  %v222 = vpop.f32.mrf.mxu0
  %v223 = vadd.f32 0.0, %v222
  %v224 = vpop.f32.mrf.mxu0
  %v225 = vadd.f32 0.0, %v224
  %226 = vmatmul.bf16.gmra.mxu0 %v91
  %v227 = vpop.f32.mrf.mxu0
  %v228 = vadd.f32 0.0, %v227
  %v229 = vpop.f32.mrf.mxu0
  %v230 = vadd.f32 0.0, %v229
  %231 = vdwg.mxu0
  %232 = vmatpush.bf16.msra.mxu0 %v185
  %233 = vmatpush.bf16.msra.mxu0 %v184
  %234 = vmatpush.bf16.msra.mxu0 %v183
  %235 = vmatpush.bf16.msra.mxu0 %v182
  %236 = vmatpush.bf16.msra.mxu0 %v181
  %237 = vmatpush.bf16.msra.mxu0 %v180
  %238 = vmatpush.bf16.msra.mxu0 %v179
  %239 = vmatpush.bf16.msra.mxu0 %v178
  %240 = vmatmul.bf16.gmra.mxu0 %v89
  %v241 = vpop.f32.mrf.mxu0
  %v242 = vadd.f32 %v223, %v241
  %v243 = vpop.f32.mrf.mxu0
  %v244 = vadd.f32 %v225, %v243
  %245 = vmatmul.bf16.gmra.mxu0 %v92
  %v246 = vpop.f32.mrf.mxu0
  %v247 = vadd.f32 %v228, %v246
  %v248 = vpop.f32.mrf.mxu0
  %v249 = vadd.f32 %v230, %v248
  %250 = vdwg.mxu0
  %251 = vmatpush.bf16.msra.mxu0 0
  %252 = vmatpush.bf16.msra.mxu0 0
  %253 = vmatpush.bf16.msra.mxu0 0
  %254 = vmatpush.bf16.msra.mxu0 0
  %255 = vmatpush.bf16.msra.mxu0 0
  %256 = vmatpush.bf16.msra.mxu0 0
  %257 = vmatpush.bf16.msra.mxu0 %v187
  %258 = vmatpush.bf16.msra.mxu0 %v186
  %259 = vmatmul.bf16.gmra.mxu0 %v208
  %v260 = vpop.f32.mrf.mxu0
  %v261 = vadd.f32 %v242, %v260
  %v262 = vpop.f32.mrf.mxu0
  %v263 = vadd.f32 %v244, %v262
  %264 = vmatmul.bf16.gmra.mxu0 %v211
  %v265 = vpop.f32.mrf.mxu0
  %v266 = vadd.f32 %v247, %v265
  %v267 = vpop.f32.mrf.mxu0
  %v268 = vadd.f32 %v249, %v267
  %269 = vdwg.mxu0
  %v270 = vld [vmem:[%s3] sm:$0xf]
  %v271 = vld [vmem:[%s3 + $0x4] sm:$0xf]
  %v272 = vld [vmem:[%s3 + $0x8] sm:$0xf]
  %v273 = vld [vmem:[%s3 + $0xc] sm:$0xf]
  %v274 = vld [vmem:[%s3 + $0x10] sm:$0xf]
  %v275 = vld [vmem:[%s3 + $0x14] sm:$0xf]
  %v276 = vld [vmem:[%s3 + $0x18] sm:$0xf]
  %v277 = vld [vmem:[%s3 + $0x1c] sm:$0xf]
  %v278 = vld [vmem:[%s3 + $0x20] sm:$0xf]
  %v279 = vld [vmem:[%s3 + $0x24] sm:$0xf]
  %v280 = vld [vmem:[%s3 + $0x28] sm:$0xf]
  %v281 = vld [vmem:[%s3 + $0x2c] sm:$0xf]
  %v282 = vld [vmem:[%s3 + $0x30] sm:$0xf]
  %v283 = vld [vmem:[%s3 + $0x34] sm:$0xf]
  %v284 = vld [vmem:[%s3 + $0x38] sm:$0xf]
  %v285 = vld [vmem:[%s3 + $0x3c] sm:$0xf]
  %v286 = vld [vmem:[%s3 + $0x40] sm:$0xf]
  %v287 = vld [vmem:[%s3 + $0x44] sm:$0xf]
  %v288 = vld [vmem:[%s3 + $0x48] sm:$0xf]
  %v289 = vld [vmem:[%s3 + $0x4c] sm:$0xf]
  %v290 = vld [vmem:[%s3 + $0x50] sm:$0xf]
  %v291 = vld [vmem:[%s3 + $0x54] sm:$0xf]
  %v292 = vld [vmem:[%s3 + $0x58] sm:$0xf]
  %v293 = vld [vmem:[%s3 + $0x5c] sm:$0xf]
  %v294 = vld [vmem:[%s3 + $0x60] sm:$0xf]
  %v295 = vld [vmem:[%s3 + $0x64] sm:$0xf]
  %v296 = vld [vmem:[%s3 + $0x68] sm:$0xf]
  %v297 = vld [vmem:[%s3 + $0x6c] sm:$0xf]
  %v298 = vld [vmem:[%s3 + $0x70] sm:$0xf]
  %v299 = vld [vmem:[%s3 + $0x74] sm:$0xf]
  %v300 = vld [vmem:[%s3 + $0x78] sm:$0xf]
  %v301 = vld [vmem:[%s3 + $0x7c] sm:$0xf]
  %v302 = vld [vmem:[%s3 + $0x80] sm:$0xf]
  %v303 = vld [vmem:[%s3 + $0x84] sm:$0xf]
  %v304 = vld [vmem:[%s3 + $0x88] sm:$0xf]
  %v305 = vld [vmem:[%s3 + $0x8c] sm:$0xf]
  %v342 = vunpack.c.l.b16 %v270
  %v343 = vunpack.c.l.b16 %v271
  %v344 = vunpack.c.l.b16 %v272
  %v345 = vunpack.c.l.b16 %v273
  %v346 = vunpack.c.l.b16 %v274
  %v347 = vunpack.c.l.b16 %v275
  %v348 = vunpack.c.l.b16 %v276
  %v349 = vunpack.c.l.b16 %v277
  %v350 = vunpack.c.l.b16 %v278
  %v351 = vunpack.c.l.b16 %v279
  %v352 = vunpack.c.l.b16 %v280
  %v353 = vunpack.c.l.b16 %v281
  %v354 = vunpack.c.l.b16 %v282
  %v355 = vunpack.c.l.b16 %v283
  %v356 = vunpack.c.l.b16 %v284
  %v357 = vunpack.c.l.b16 %v285
  %v358 = vunpack.c.l.b16 %v286
  %v359 = vunpack.c.l.b16 %v287
  %v360 = vunpack.c.l.b16 %v288
  %v361 = vunpack.c.l.b16 %v289
  %v362 = vunpack.c.l.b16 %v290
  %v363 = vunpack.c.l.b16 %v291
  %v364 = vunpack.c.l.b16 %v292
  %v365 = vunpack.c.l.b16 %v293
  %v366 = vunpack.c.l.b16 %v294
  %v367 = vunpack.c.l.b16 %v295
  %v368 = vunpack.c.l.b16 %v296
  %v369 = vunpack.c.l.b16 %v297
  %v370 = vunpack.c.l.b16 %v298
  %v371 = vunpack.c.l.b16 %v299
  %v372 = vunpack.c.l.b16 %v300
  %v373 = vunpack.c.l.b16 %v301
  %v374 = vunpack.c.l.b16 %v302
  %v375 = vunpack.c.l.b16 %v303
  %v376 = vunpack.c.l.b16 %v304
  %v377 = vunpack.c.l.b16 %v305
  %v378 = vpack.c.b16 %v343, %v342
  %v379 = vpack.c.b16 %v345, %v344
  %v380 = vpack.c.b16 %v347, %v346
  %v381 = vpack.c.b16 %v349, %v348
  %v382 = vpack.c.b16 %v351, %v350
  %v383 = vpack.c.b16 %v353, %v352
  %v384 = vpack.c.b16 %v355, %v354
  %v385 = vpack.c.b16 %v357, %v356
  %v386 = vpack.c.b16 %v359, %v358
  %v387 = vpack.c.b16 %v361, %v360
  %v388 = vpack.c.b16 %v363, %v362
  %v389 = vpack.c.b16 %v365, %v364
  %v390 = vpack.c.b16 %v367, %v366
  %v391 = vpack.c.b16 %v369, %v368
  %v392 = vpack.c.b16 %v371, %v370
  %v393 = vpack.c.b16 %v373, %v372
  %v394 = vpack.c.b16 %v375, %v374
  %v395 = vpack.c.b16 %v377, %v376
  %414 = vmatpush.bf16.msra.mxu0 %v385
  %415 = vmatpush.bf16.msra.mxu0 %v384
  %416 = vmatpush.bf16.msra.mxu0 %v383
  %417 = vmatpush.bf16.msra.mxu0 %v382
  %418 = vmatpush.bf16.msra.mxu0 %v381
  %419 = vmatpush.bf16.msra.mxu0 %v380
  %420 = vmatpush.bf16.msra.mxu0 %v379
  %421 = vmatpush.bf16.msra.mxu0 %v378
  %422 = vmatmul.bf16.gmra.mxu0 %v88
  %v423 = vpop.f32.mrf.mxu0
  %v424 = vadd.f32 0.0, %v423
  %v425 = vpop.f32.mrf.mxu0
  %v426 = vadd.f32 0.0, %v425
  %427 = vmatmul.bf16.gmra.mxu0 %v91
  %v428 = vpop.f32.mrf.mxu0
  %v429 = vadd.f32 0.0, %v428
  %v430 = vpop.f32.mrf.mxu0
  %v431 = vadd.f32 0.0, %v430
  %432 = vdwg.mxu0
  %433 = vmatpush.bf16.msra.mxu0 %v393
  %434 = vmatpush.bf16.msra.mxu0 %v392
  %435 = vmatpush.bf16.msra.mxu0 %v391
  %436 = vmatpush.bf16.msra.mxu0 %v390
  %437 = vmatpush.bf16.msra.mxu0 %v389
  %438 = vmatpush.bf16.msra.mxu0 %v388
  %439 = vmatpush.bf16.msra.mxu0 %v387
  %440 = vmatpush.bf16.msra.mxu0 %v386
  %441 = vmatmul.bf16.gmra.mxu0 %v89
  %v442 = vpop.f32.mrf.mxu0
  %v443 = vadd.f32 %v424, %v442
  %v444 = vpop.f32.mrf.mxu0
  %v445 = vadd.f32 %v426, %v444
  %446 = vmatmul.bf16.gmra.mxu0 %v92
  %v447 = vpop.f32.mrf.mxu0
  %v448 = vadd.f32 %v429, %v447
  %v449 = vpop.f32.mrf.mxu0
  %v450 = vadd.f32 %v431, %v449
  %451 = vdwg.mxu0
  %452 = vmatpush.bf16.msra.mxu0 0
  %453 = vmatpush.bf16.msra.mxu0 0
  %454 = vmatpush.bf16.msra.mxu0 0
  %455 = vmatpush.bf16.msra.mxu0 0
  %456 = vmatpush.bf16.msra.mxu0 0
  %457 = vmatpush.bf16.msra.mxu0 0
  %458 = vmatpush.bf16.msra.mxu0 %v395
  %459 = vmatpush.bf16.msra.mxu0 %v394
  %460 = vmatmul.bf16.gmra.mxu0 %v208
  %v461 = vpop.f32.mrf.mxu0
  %v462 = vadd.f32 %v443, %v461
  %v463 = vpop.f32.mrf.mxu0
  %v464 = vadd.f32 %v445, %v463
  %465 = vmatmul.bf16.gmra.mxu0 %v211
  %v466 = vpop.f32.mrf.mxu0
  %v467 = vadd.f32 %v448, %v466
  %v468 = vpop.f32.mrf.mxu0
  %v469 = vadd.f32 %v450, %v468
  %470 = vdwg.mxu0
  %v471 = vmax.f32 %v261, %v462
  %v472 = vmax.f32 %v263, %v464
  %v473 = vmax.f32 %v266, %v467
  %v474 = vmax.f32 %v268, %v469
  %v475 = vld [vmem:[%s4] sm:$0xf]
  %v476 = vld [vmem:[%s4 + $0x4] sm:$0xf]
  %v477 = vld [vmem:[%s4 + $0x8] sm:$0xf]
  %v478 = vld [vmem:[%s4 + $0xc] sm:$0xf]
  %v479 = vld [vmem:[%s4 + $0x10] sm:$0xf]
  %v480 = vld [vmem:[%s4 + $0x14] sm:$0xf]
  %v481 = vld [vmem:[%s4 + $0x18] sm:$0xf]
  %v482 = vld [vmem:[%s4 + $0x1c] sm:$0xf]
  %v483 = vld [vmem:[%s4 + $0x20] sm:$0xf]
  %v484 = vld [vmem:[%s4 + $0x24] sm:$0xf]
  %v485 = vld [vmem:[%s4 + $0x28] sm:$0xf]
  %v486 = vld [vmem:[%s4 + $0x2c] sm:$0xf]
  %v487 = vld [vmem:[%s4 + $0x30] sm:$0xf]
  %v488 = vld [vmem:[%s4 + $0x34] sm:$0xf]
  %v489 = vld [vmem:[%s4 + $0x38] sm:$0xf]
  %v490 = vld [vmem:[%s4 + $0x3c] sm:$0xf]
  %v491 = vld [vmem:[%s4 + $0x40] sm:$0xf]
  %v492 = vld [vmem:[%s4 + $0x44] sm:$0xf]
  %v493 = vld [vmem:[%s4 + $0x48] sm:$0xf]
  %v494 = vld [vmem:[%s4 + $0x4c] sm:$0xf]
  %v495 = vld [vmem:[%s4 + $0x50] sm:$0xf]
  %v496 = vld [vmem:[%s4 + $0x54] sm:$0xf]
  %v497 = vld [vmem:[%s4 + $0x58] sm:$0xf]
  %v498 = vld [vmem:[%s4 + $0x5c] sm:$0xf]
  %v499 = vld [vmem:[%s4 + $0x60] sm:$0xf]
  %v500 = vld [vmem:[%s4 + $0x64] sm:$0xf]
  %v501 = vld [vmem:[%s4 + $0x68] sm:$0xf]
  %v502 = vld [vmem:[%s4 + $0x6c] sm:$0xf]
  %v503 = vld [vmem:[%s4 + $0x70] sm:$0xf]
  %v504 = vld [vmem:[%s4 + $0x74] sm:$0xf]
  %v505 = vld [vmem:[%s4 + $0x78] sm:$0xf]
  %v506 = vld [vmem:[%s4 + $0x7c] sm:$0xf]
  %v507 = vld [vmem:[%s4 + $0x80] sm:$0xf]
  %v508 = vld [vmem:[%s4 + $0x84] sm:$0xf]
  %v509 = vld [vmem:[%s4 + $0x88] sm:$0xf]
  %v510 = vld [vmem:[%s4 + $0x8c] sm:$0xf]
  %v547 = vunpack.c.l.b16 %v475
  %v548 = vunpack.c.l.b16 %v476
  %v549 = vunpack.c.l.b16 %v477
  %v550 = vunpack.c.l.b16 %v478
  %v551 = vunpack.c.l.b16 %v479
  %v552 = vunpack.c.l.b16 %v480
  %v553 = vunpack.c.l.b16 %v481
  %v554 = vunpack.c.l.b16 %v482
  %v555 = vunpack.c.l.b16 %v483
  %v556 = vunpack.c.l.b16 %v484
  %v557 = vunpack.c.l.b16 %v485
  %v558 = vunpack.c.l.b16 %v486
  %v559 = vunpack.c.l.b16 %v487
  %v560 = vunpack.c.l.b16 %v488
  %v561 = vunpack.c.l.b16 %v489
  %v562 = vunpack.c.l.b16 %v490
  %v563 = vunpack.c.l.b16 %v491
  %v564 = vunpack.c.l.b16 %v492
  %v565 = vunpack.c.l.b16 %v493
  %v566 = vunpack.c.l.b16 %v494
  %v567 = vunpack.c.l.b16 %v495
  %v568 = vunpack.c.l.b16 %v496
  %v569 = vunpack.c.l.b16 %v497
  %v570 = vunpack.c.l.b16 %v498
  %v571 = vunpack.c.l.b16 %v499
  %v572 = vunpack.c.l.b16 %v500
  %v573 = vunpack.c.l.b16 %v501
  %v574 = vunpack.c.l.b16 %v502
  %v575 = vunpack.c.l.b16 %v503
  %v576 = vunpack.c.l.b16 %v504
  %v577 = vunpack.c.l.b16 %v505
  %v578 = vunpack.c.l.b16 %v506
  %v579 = vunpack.c.l.b16 %v507
  %v580 = vunpack.c.l.b16 %v508
  %v581 = vunpack.c.l.b16 %v509
  %v582 = vunpack.c.l.b16 %v510
  %v583 = vpack.c.b16 %v548, %v547
  %v584 = vpack.c.b16 %v550, %v549
  %v585 = vpack.c.b16 %v552, %v551
  %v586 = vpack.c.b16 %v554, %v553
  %v587 = vpack.c.b16 %v556, %v555
  %v588 = vpack.c.b16 %v558, %v557
  %v589 = vpack.c.b16 %v560, %v559
  %v590 = vpack.c.b16 %v562, %v561
  %v591 = vpack.c.b16 %v564, %v563
  %v592 = vpack.c.b16 %v566, %v565
  %v593 = vpack.c.b16 %v568, %v567
  %v594 = vpack.c.b16 %v570, %v569
  %v595 = vpack.c.b16 %v572, %v571
  %v596 = vpack.c.b16 %v574, %v573
  %v597 = vpack.c.b16 %v576, %v575
  %v598 = vpack.c.b16 %v578, %v577
  %v599 = vpack.c.b16 %v580, %v579
  %v600 = vpack.c.b16 %v582, %v581
  %619 = vmatpush.bf16.msra.mxu0 %v590
  %620 = vmatpush.bf16.msra.mxu0 %v589
  %621 = vmatpush.bf16.msra.mxu0 %v588
  %622 = vmatpush.bf16.msra.mxu0 %v587
  %623 = vmatpush.bf16.msra.mxu0 %v586
  %624 = vmatpush.bf16.msra.mxu0 %v585
  %625 = vmatpush.bf16.msra.mxu0 %v584
  %626 = vmatpush.bf16.msra.mxu0 %v583
  %627 = vmatmul.bf16.gmra.mxu0 %v88
  %v628 = vpop.f32.mrf.mxu0
  %v629 = vadd.f32 0.0, %v628
  %v630 = vpop.f32.mrf.mxu0
  %v631 = vadd.f32 0.0, %v630
  %632 = vmatmul.bf16.gmra.mxu0 %v91
  %v633 = vpop.f32.mrf.mxu0
  %v634 = vadd.f32 0.0, %v633
  %v635 = vpop.f32.mrf.mxu0
  %v636 = vadd.f32 0.0, %v635
  %637 = vdwg.mxu0
  %638 = vmatpush.bf16.msra.mxu0 %v598
  %639 = vmatpush.bf16.msra.mxu0 %v597
  %640 = vmatpush.bf16.msra.mxu0 %v596
  %641 = vmatpush.bf16.msra.mxu0 %v595
  %642 = vmatpush.bf16.msra.mxu0 %v594
  %643 = vmatpush.bf16.msra.mxu0 %v593
  %644 = vmatpush.bf16.msra.mxu0 %v592
  %645 = vmatpush.bf16.msra.mxu0 %v591
  %646 = vmatmul.bf16.gmra.mxu0 %v89
  %v647 = vpop.f32.mrf.mxu0
  %v648 = vadd.f32 %v629, %v647
  %v649 = vpop.f32.mrf.mxu0
  %v650 = vadd.f32 %v631, %v649
  %651 = vmatmul.bf16.gmra.mxu0 %v92
  %v652 = vpop.f32.mrf.mxu0
  %v653 = vadd.f32 %v634, %v652
  %v654 = vpop.f32.mrf.mxu0
  %v655 = vadd.f32 %v636, %v654
  %656 = vdwg.mxu0
  %657 = vmatpush.bf16.msra.mxu0 0
  %658 = vmatpush.bf16.msra.mxu0 0
  %659 = vmatpush.bf16.msra.mxu0 0
  %660 = vmatpush.bf16.msra.mxu0 0
  %661 = vmatpush.bf16.msra.mxu0 0
  %662 = vmatpush.bf16.msra.mxu0 0
  %663 = vmatpush.bf16.msra.mxu0 %v600
  %664 = vmatpush.bf16.msra.mxu0 %v599
  %665 = vmatmul.bf16.gmra.mxu0 %v208
  %v666 = vpop.f32.mrf.mxu0
  %v667 = vadd.f32 %v648, %v666
  %v668 = vpop.f32.mrf.mxu0
  %v669 = vadd.f32 %v650, %v668
  %670 = vmatmul.bf16.gmra.mxu0 %v211
  %v671 = vpop.f32.mrf.mxu0
  %v672 = vadd.f32 %v653, %v671
  %v673 = vpop.f32.mrf.mxu0
  %v674 = vadd.f32 %v655, %v673
  %675 = vdwg.mxu0
  %v676 = vmax.f32 %v471, %v667
  %v677 = vmax.f32 %v472, %v669
  %v678 = vmax.f32 %v473, %v672
  %v679 = vmax.f32 %v474, %v674
  %v680 = vld [vmem:[%s5] sm:$0xf]
  %v681 = vld [vmem:[%s5 + $0x4] sm:$0xf]
  %v682 = vld [vmem:[%s5 + $0x8] sm:$0xf]
  %v683 = vld [vmem:[%s5 + $0xc] sm:$0xf]
  %v684 = vld [vmem:[%s5 + $0x10] sm:$0xf]
  %v685 = vld [vmem:[%s5 + $0x14] sm:$0xf]
  %v686 = vld [vmem:[%s5 + $0x18] sm:$0xf]
  %v687 = vld [vmem:[%s5 + $0x1c] sm:$0xf]
  %v688 = vld [vmem:[%s5 + $0x20] sm:$0xf]
  %v689 = vld [vmem:[%s5 + $0x24] sm:$0xf]
  %v690 = vld [vmem:[%s5 + $0x28] sm:$0xf]
  %v691 = vld [vmem:[%s5 + $0x2c] sm:$0xf]
  %v692 = vld [vmem:[%s5 + $0x30] sm:$0xf]
  %v693 = vld [vmem:[%s5 + $0x34] sm:$0xf]
  %v694 = vld [vmem:[%s5 + $0x38] sm:$0xf]
  %v695 = vld [vmem:[%s5 + $0x3c] sm:$0xf]
  %v696 = vld [vmem:[%s5 + $0x40] sm:$0xf]
  %v697 = vld [vmem:[%s5 + $0x44] sm:$0xf]
  %v698 = vld [vmem:[%s5 + $0x48] sm:$0xf]
  %v699 = vld [vmem:[%s5 + $0x4c] sm:$0xf]
  %v700 = vld [vmem:[%s5 + $0x50] sm:$0xf]
  %v701 = vld [vmem:[%s5 + $0x54] sm:$0xf]
  %v702 = vld [vmem:[%s5 + $0x58] sm:$0xf]
  %v703 = vld [vmem:[%s5 + $0x5c] sm:$0xf]
  %v704 = vld [vmem:[%s5 + $0x60] sm:$0xf]
  %v705 = vld [vmem:[%s5 + $0x64] sm:$0xf]
  %v706 = vld [vmem:[%s5 + $0x68] sm:$0xf]
  %v707 = vld [vmem:[%s5 + $0x6c] sm:$0xf]
  %v708 = vld [vmem:[%s5 + $0x70] sm:$0xf]
  %v709 = vld [vmem:[%s5 + $0x74] sm:$0xf]
  %v710 = vld [vmem:[%s5 + $0x78] sm:$0xf]
  %v711 = vld [vmem:[%s5 + $0x7c] sm:$0xf]
  %v712 = vld [vmem:[%s5 + $0x80] sm:$0xf]
  %v713 = vld [vmem:[%s5 + $0x84] sm:$0xf]
  %v714 = vld [vmem:[%s5 + $0x88] sm:$0xf]
  %v715 = vld [vmem:[%s5 + $0x8c] sm:$0xf]
  %v752 = vunpack.c.l.b16 %v680
  %v753 = vunpack.c.l.b16 %v681
  %v754 = vunpack.c.l.b16 %v682
  %v755 = vunpack.c.l.b16 %v683
  %v756 = vunpack.c.l.b16 %v684
  %v757 = vunpack.c.l.b16 %v685
  %v758 = vunpack.c.l.b16 %v686
  %v759 = vunpack.c.l.b16 %v687
  %v760 = vunpack.c.l.b16 %v688
  %v761 = vunpack.c.l.b16 %v689
  %v762 = vunpack.c.l.b16 %v690
  %v763 = vunpack.c.l.b16 %v691
  %v764 = vunpack.c.l.b16 %v692
  %v765 = vunpack.c.l.b16 %v693
  %v766 = vunpack.c.l.b16 %v694
  %v767 = vunpack.c.l.b16 %v695
  %v768 = vunpack.c.l.b16 %v696
  %v769 = vunpack.c.l.b16 %v697
  %v770 = vunpack.c.l.b16 %v698
  %v771 = vunpack.c.l.b16 %v699
  %v772 = vunpack.c.l.b16 %v700
  %v773 = vunpack.c.l.b16 %v701
  %v774 = vunpack.c.l.b16 %v702
  %v775 = vunpack.c.l.b16 %v703
  %v776 = vunpack.c.l.b16 %v704
  %v777 = vunpack.c.l.b16 %v705
  %v778 = vunpack.c.l.b16 %v706
  %v779 = vunpack.c.l.b16 %v707
  %v780 = vunpack.c.l.b16 %v708
  %v781 = vunpack.c.l.b16 %v709
  %v782 = vunpack.c.l.b16 %v710
  %v783 = vunpack.c.l.b16 %v711
  %v784 = vunpack.c.l.b16 %v712
  %v785 = vunpack.c.l.b16 %v713
  %v786 = vunpack.c.l.b16 %v714
  %v787 = vunpack.c.l.b16 %v715
  %v788 = vpack.c.b16 %v753, %v752
  %v789 = vpack.c.b16 %v755, %v754
  %v790 = vpack.c.b16 %v757, %v756
  %v791 = vpack.c.b16 %v759, %v758
  %v792 = vpack.c.b16 %v761, %v760
  %v793 = vpack.c.b16 %v763, %v762
  %v794 = vpack.c.b16 %v765, %v764
  %v795 = vpack.c.b16 %v767, %v766
  %v796 = vpack.c.b16 %v769, %v768
  %v797 = vpack.c.b16 %v771, %v770
  %v798 = vpack.c.b16 %v773, %v772
  %v799 = vpack.c.b16 %v775, %v774
  %v800 = vpack.c.b16 %v777, %v776
  %v801 = vpack.c.b16 %v779, %v778
  %v802 = vpack.c.b16 %v781, %v780
  %v803 = vpack.c.b16 %v783, %v782
  %v804 = vpack.c.b16 %v785, %v784
  %v805 = vpack.c.b16 %v787, %v786
  %824 = vmatpush.bf16.msra.mxu0 %v795
  %825 = vmatpush.bf16.msra.mxu0 %v794
  %826 = vmatpush.bf16.msra.mxu0 %v793
  %827 = vmatpush.bf16.msra.mxu0 %v792
  %828 = vmatpush.bf16.msra.mxu0 %v791
  %829 = vmatpush.bf16.msra.mxu0 %v790
  %830 = vmatpush.bf16.msra.mxu0 %v789
  %831 = vmatpush.bf16.msra.mxu0 %v788
  %832 = vmatmul.bf16.gmra.mxu0 %v88
  %v833 = vpop.f32.mrf.mxu0
  %v834 = vadd.f32 0.0, %v833
  %v835 = vpop.f32.mrf.mxu0
  %v836 = vadd.f32 0.0, %v835
  %837 = vmatmul.bf16.gmra.mxu0 %v91
  %v838 = vpop.f32.mrf.mxu0
  %v839 = vadd.f32 0.0, %v838
  %v840 = vpop.f32.mrf.mxu0
  %v841 = vadd.f32 0.0, %v840
  %842 = vdwg.mxu0
  %843 = vmatpush.bf16.msra.mxu0 %v803
  %844 = vmatpush.bf16.msra.mxu0 %v802
  %845 = vmatpush.bf16.msra.mxu0 %v801
  %846 = vmatpush.bf16.msra.mxu0 %v800
  %847 = vmatpush.bf16.msra.mxu0 %v799
  %848 = vmatpush.bf16.msra.mxu0 %v798
  %849 = vmatpush.bf16.msra.mxu0 %v797
  %850 = vmatpush.bf16.msra.mxu0 %v796
  %851 = vmatmul.bf16.gmra.mxu0 %v89
  %v852 = vpop.f32.mrf.mxu0
  %v853 = vadd.f32 %v834, %v852
  %v854 = vpop.f32.mrf.mxu0
  %v855 = vadd.f32 %v836, %v854
  %856 = vmatmul.bf16.gmra.mxu0 %v92
  %v857 = vpop.f32.mrf.mxu0
  %v858 = vadd.f32 %v839, %v857
  %v859 = vpop.f32.mrf.mxu0
  %v860 = vadd.f32 %v841, %v859
  %861 = vdwg.mxu0
  %862 = vmatpush.bf16.msra.mxu0 0
  %863 = vmatpush.bf16.msra.mxu0 0
  %864 = vmatpush.bf16.msra.mxu0 0
  %865 = vmatpush.bf16.msra.mxu0 0
  %866 = vmatpush.bf16.msra.mxu0 0
  %867 = vmatpush.bf16.msra.mxu0 0
  %868 = vmatpush.bf16.msra.mxu0 %v805
  %869 = vmatpush.bf16.msra.mxu0 %v804
  %870 = vmatmul.bf16.gmra.mxu0 %v208
  %v871 = vpop.f32.mrf.mxu0
  %v872 = vadd.f32 %v853, %v871
  %v873 = vpop.f32.mrf.mxu0
  %v874 = vadd.f32 %v855, %v873
  %875 = vmatmul.bf16.gmra.mxu0 %v211
  %v876 = vpop.f32.mrf.mxu0
  %v877 = vadd.f32 %v858, %v876
  %v878 = vpop.f32.mrf.mxu0
  %v879 = vadd.f32 %v860, %v878
  %880 = vdwg.mxu0
  %v881 = vmax.f32 %v676, %v872
  %v882 = vmax.f32 %v677, %v874
  %v883 = vmax.f32 %v678, %v877
  %v884 = vmax.f32 %v679, %v879
  %v885 = vld [vmem:[%s1] sm:$0xff]
  %v886 = vld [vmem:[%s1 + $0x8] sm:$0xff]
  %v887 = vld [vmem:[%s1 + $0x10] sm:$0xff]
  %v888 = vld [vmem:[%s1 + $0x18] sm:$0xff]
  %890 = vset.pattern.permute.xlu0 0
  %891 = vperm.xlu0 %890, %v885
  %v892 = vpop.permute.xlu0 %891
  %895 = vset.pattern.permute.xlu0 0
  %896 = vperm.xlu0 %895, %v886
  %v897 = vpop.permute.xlu0 %896
  %900 = vset.pattern.permute.xlu0 0
  %901 = vperm.xlu0 %900, %v887
  %v902 = vpop.permute.xlu0 %901
  %905 = vset.pattern.permute.xlu0 0
  %906 = vperm.xlu0 %905, %v888
  %v907 = vpop.permute.xlu0 %906
  %v909 = vadd.f32 %v881, %v892
  %v910 = vadd.f32 %v882, %v897
  %v911 = vadd.f32 %v883, %v902
  %v912 = vadd.f32 %v884, %v907
  %v913 = vmax.f32 %v909, 0.0
  %v914 = vmax.f32 %v910, 0.0
  %v915 = vmax.f32 %v911, 0.0
  %v916 = vmax.f32 %v912, 0.0
  %v917 = vpack.c.bf16 %v913, %v913
  %v918 = vpack.c.bf16 %v914, %v914
  %v919 = vpack.c.bf16 %v915, %v915
  %v920 = vpack.c.bf16 %v916, %v916
  %vm921 = vcmask 11264
  %922 = vst.msk [vmem:[%s6] sm:$0xf] %vm921, %v917
  %923 = vst.msk [vmem:[%s6 + $0x4] sm:$0xf] %vm921, %v918
  %924 = vst.msk [vmem:[%s6 + $0x8] sm:$0xf] %vm921, %v919
  %925 = vst.msk [vmem:[%s6 + $0xc] sm:$0xf] %vm921, %v920
  // Predicated region
  $region26: #{forward.26} parent=0 // pred_check
    _
  $region27: #{forward.26} parent=0 // pred_check_branch
    %927 = sbr.rel (0) target = $region29
  $region28: #{forward.26} parent=0 // pred_region
    _
  $region29: #{forward.26} parent=0 // pred_fallthru
    _
  // Predicated region
  $region30: #{forward.26} parent=0 // pred_check
    _
  $region31: #{forward.26} parent=0 // pred_check_branch
    %929 = sbr.rel (0) target = $region33
  $region32: #{forward.26} parent=0 // pred_region
    _
  $region33: #{forward.26} parent=0 // pred_fallthru
    _

// kernel: forward.27
$region0: #{forward.27}
  #allocation0 [shape = 'u32[]', space=smem, size = 0x4, offset = 0x4, fixed_abs, tag = 'smem constant byte address 0x4 - core index']
  #allocation1 [shape = 'u32[72,128]{1,0:T(1,128)}', space=vmem, size = 0x9000, scoped, tag = 'internal scratch']
  %s0 = inlined_call_operand.vmem [shape: bf16[2,1568], index: 0, kind: input, shape index: {}]
  %s1 = inlined_call_operand.vmem [shape: bf16[1568,256], index: 1, kind: input, shape index: {}]
  %s2 = inlined_call_operand.vmem [shape: f32[1,256], index: 2, kind: input, shape index: {}]
  %s3 = inlined_call_operand.vmem [shape: bf16[256,256], index: 3, kind: input, shape index: {}]
  %s4 = inlined_call_operand.vmem [shape: f32[1,256], index: 4, kind: input, shape index: {}]
  %s5 = inlined_call_operand.vmem [shape: bf16[256,8], index: 5, kind: input, shape index: {}]
  %s6 = inlined_call_operand.vmem [shape: f32[1,8], index: 6, kind: input, shape index: {}]
  %s7 = inlined_call_operand.hbm [shape: f32[2,8], index: 7, kind: output, shape index: {}]
  %s8 = sld [smem:[#allocation0]]
  $region38: #{forward.27} parent=0
    _
  %s10 = ssub.s32 1, %s8
  %s11 = scalar_select 0, %s10, %s8
  $region1: #{forward.27} parent=0
    #allocation2 [shape = 'u8[1024]{0}', space=vmem, size = 0x400, scoped, tag = 'output window, operand 0, single buffered']
    #allocation3 [shape = 's32[1]{0}', space=sflag, size = 0x4, scoped, tag = 'scoped memory for forward.27']
    %12 = vsyncpa [#allocation3], 0
    // Predicated region
    $region2: #{forward.27} parent=1 // pred_check
      _
    $region3: #{forward.27} parent=1 // pred_check_branch
      %14 = sbr.rel (0) target = $region5
    $region4: #{forward.27} parent=1 // pred_region
      _
    $region5: #{forward.27} parent=1 // pred_fallthru
      _
    // Predicated region
    $region6: #{forward.27} parent=1 // pred_check
      _
    $region7: #{forward.27} parent=1 // pred_check_branch
      %16 = sbr.rel (0) target = $region9
    $region8: #{forward.27} parent=1 // pred_region
      _
    $region9: #{forward.27} parent=1 // pred_fallthru
      _
    // Predicated region
    $region10: #{forward.27} parent=1 // pred_check
      _
    $region11: #{forward.27} parent=1 // pred_check_branch
      %18 = sbr.rel (0) target = $region13
    $region12: #{forward.27} parent=1 // pred_region
      _
    $region13: #{forward.27} parent=1 // pred_fallthru
      _
    // Predicated region
    $region14: #{forward.27} parent=1 // pred_check
      _
    $region15: #{forward.27} parent=1 // pred_check_branch
      %20 = sbr.rel (0) target = $region17
    $region16: #{forward.27} parent=1 // pred_region
      _
    $region17: #{forward.27} parent=1 // pred_fallthru
      _
    // Predicated region
    $region18: #{forward.27} parent=1 // pred_check
      _
    $region19: #{forward.27} parent=1 // pred_check_branch
      %22 = sbr.rel (0) target = $region21
    $region20: #{forward.27} parent=1 // pred_region
      _
    $region21: #{forward.27} parent=1 // pred_fallthru
      _
    // Predicated region
    $region22: #{forward.27} parent=1 // pred_check
      _
    $region23: #{forward.27} parent=1 // pred_check_branch
      %24 = sbr.rel (0) target = $region25
    $region24: #{forward.27} parent=1 // pred_region
      _
    $region25: #{forward.27} parent=1 // pred_fallthru
      _
    // Predicated region
    $region26: #{forward.27} parent=1 // pred_check
      _
    $region27: #{forward.27} parent=1 // pred_check_branch
      %26 = sbr.rel (0) target = $region29
    $region28: #{forward.27} parent=1 // pred_region
      _
    $region29: #{forward.27} parent=1 // pred_fallthru
      _
    %v28 = vld [vmem:[%s0] sm:$0xff]
    %v29 = vld [vmem:[%s0 + $0x8] sm:$0x1f]
    %v30 = vld [vmem:[%s1] sm:$0xff]
    %v31 = vld [vmem:[%s1 + $0x8] sm:$0xff]
    %v32 = vld [vmem:[%s1 + $0x10] sm:$0xff]
    %v33 = vld [vmem:[%s1 + $0x18] sm:$0xff]
    %v34 = vld [vmem:[%s1 + $0x20] sm:$0xff]
    %v35 = vld [vmem:[%s1 + $0x28] sm:$0xff]
    %v36 = vld [vmem:[%s1 + $0x30] sm:$0xff]
    %v37 = vld [vmem:[%s1 + $0x38] sm:$0xff]
    %v38 = vld [vmem:[%s1 + $0x40] sm:$0xff]
    %v39 = vld [vmem:[%s1 + $0x48] sm:$0xff]
    %v40 = vld [vmem:[%s1 + $0x50] sm:$0xff]
    %v41 = vld [vmem:[%s1 + $0x58] sm:$0xff]
    %v42 = vld [vmem:[%s1 + $0x60] sm:$0xff]
    %v43 = vld [vmem:[%s1 + $0x68] sm:$0xff]
    %v44 = vld [vmem:[%s1 + $0x70] sm:$0xff]
    %v45 = vld [vmem:[%s1 + $0x78] sm:$0xff]
    %v46 = vld [vmem:[%s1 + $0x80] sm:$0xff]
    %v47 = vld [vmem:[%s1 + $0x88] sm:$0xff]
    %v48 = vld [vmem:[%s1 + $0x90] sm:$0xff]
    %v49 = vld [vmem:[%s1 + $0x98] sm:$0xff]
    %v50 = vld [vmem:[%s1 + $0xa0] sm:$0xff]
    %v51 = vld [vmem:[%s1 + $0xa8] sm:$0xff]
    %v52 = vld [vmem:[%s1 + $0xb0] sm:$0xff]
    %v53 = vld [vmem:[%s1 + $0xb8] sm:$0xff]
    %v54 = vld [vmem:[%s1 + $0xc0] sm:$0xff]
    %v55 = vld [vmem:[%s1 + $0xc8] sm:$0xff]
    %v56 = vld [vmem:[%s1 + $0xd0] sm:$0xff]
    %v57 = vld [vmem:[%s1 + $0xd8] sm:$0xff]
    %v58 = vld [vmem:[%s1 + $0xe0] sm:$0xff]
    %v59 = vld [vmem:[%s1 + $0xe8] sm:$0xff]
    %v60 = vld [vmem:[%s1 + $0xf0] sm:$0xff]
    %v61 = vld [vmem:[%s1 + $0xf8] sm:$0xff]
    %v62 = vld [vmem:[%s1 + $0x100] sm:$0xff]
    %v63 = vld [vmem:[%s1 + $0x108] sm:$0xff]
    %v64 = vld [vmem:[%s1 + $0x110] sm:$0xff]
    %v65 = vld [vmem:[%s1 + $0x118] sm:$0xff]
    %v66 = vld [vmem:[%s1 + $0x120] sm:$0xff]
    %v67 = vld [vmem:[%s1 + $0x128] sm:$0xff]
    %v68 = vld [vmem:[%s1 + $0x130] sm:$0xff]
    %v69 = vld [vmem:[%s1 + $0x138] sm:$0xff]
    %v70 = vld [vmem:[%s1 + $0x140] sm:$0xff]
    %v71 = vld [vmem:[%s1 + $0x148] sm:$0xff]
    %v72 = vld [vmem:[%s1 + $0x150] sm:$0xff]
    %v73 = vld [vmem:[%s1 + $0x158] sm:$0xff]
    %v74 = vld [vmem:[%s1 + $0x160] sm:$0xff]
    %v75 = vld [vmem:[%s1 + $0x168] sm:$0xff]
    %v76 = vld [vmem:[%s1 + $0x170] sm:$0xff]
    %v77 = vld [vmem:[%s1 + $0x178] sm:$0xff]
    %v78 = vld [vmem:[%s1 + $0x180] sm:$0xff]
    %v79 = vld [vmem:[%s1 + $0x188] sm:$0xff]
    %v80 = vld [vmem:[%s1 + $0x190] sm:$0xff]
    %v81 = vld [vmem:[%s1 + $0x198] sm:$0xff]
    %v82 = vld [vmem:[%s1 + $0x1a0] sm:$0xff]
    %v83 = vld [vmem:[%s1 + $0x1a8] sm:$0xff]
    %v84 = vld [vmem:[%s1 + $0x1b0] sm:$0xff]
    %v85 = vld [vmem:[%s1 + $0x1b8] sm:$0xff]
    %v86 = vld [vmem:[%s1 + $0x1c0] sm:$0xff]
    %v87 = vld [vmem:[%s1 + $0x1c8] sm:$0xff]
    %v88 = vld [vmem:[%s1 + $0x1d0] sm:$0xff]
    %v89 = vld [vmem:[%s1 + $0x1d8] sm:$0xff]
    %v90 = vld [vmem:[%s1 + $0x1e0] sm:$0xff]
    %v91 = vld [vmem:[%s1 + $0x1e8] sm:$0xff]
    %v92 = vld [vmem:[%s1 + $0x1f0] sm:$0xff]
    %v93 = vld [vmem:[%s1 + $0x1f8] sm:$0xff]
    %v94 = vld [vmem:[%s1 + $0x200] sm:$0xff]
    %v95 = vld [vmem:[%s1 + $0x208] sm:$0xff]
    %v96 = vld [vmem:[%s1 + $0x210] sm:$0xff]
    %v97 = vld [vmem:[%s1 + $0x218] sm:$0xff]
    %v98 = vld [vmem:[%s1 + $0x220] sm:$0xff]
    %v99 = vld [vmem:[%s1 + $0x228] sm:$0xff]
    %v100 = vld [vmem:[%s1 + $0x230] sm:$0xff]
    %v101 = vld [vmem:[%s1 + $0x238] sm:$0xff]
    %v102 = vld [vmem:[%s1 + $0x240] sm:$0xff]
    %v103 = vld [vmem:[%s1 + $0x248] sm:$0xff]
    %v104 = vld [vmem:[%s1 + $0x250] sm:$0xff]
    %v105 = vld [vmem:[%s1 + $0x258] sm:$0xff]
    %v106 = vld [vmem:[%s1 + $0x260] sm:$0xff]
    %v107 = vld [vmem:[%s1 + $0x268] sm:$0xff]
    %v108 = vld [vmem:[%s1 + $0x270] sm:$0xff]
    %v109 = vld [vmem:[%s1 + $0x278] sm:$0xff]
    %v110 = vld [vmem:[%s1 + $0x280] sm:$0xff]
    %v111 = vld [vmem:[%s1 + $0x288] sm:$0xff]
    %v112 = vld [vmem:[%s1 + $0x290] sm:$0xff]
    %v113 = vld [vmem:[%s1 + $0x298] sm:$0xff]
    %v114 = vld [vmem:[%s1 + $0x2a0] sm:$0xff]
    %v115 = vld [vmem:[%s1 + $0x2a8] sm:$0xff]
    %v116 = vld [vmem:[%s1 + $0x2b0] sm:$0xff]
    %v117 = vld [vmem:[%s1 + $0x2b8] sm:$0xff]
    %v118 = vld [vmem:[%s1 + $0x2c0] sm:$0xff]
    %v119 = vld [vmem:[%s1 + $0x2c8] sm:$0xff]
    %v120 = vld [vmem:[%s1 + $0x2d0] sm:$0xff]
    %v121 = vld [vmem:[%s1 + $0x2d8] sm:$0xff]
    %v122 = vld [vmem:[%s1 + $0x2e0] sm:$0xff]
    %v123 = vld [vmem:[%s1 + $0x2e8] sm:$0xff]
    %v124 = vld [vmem:[%s1 + $0x2f0] sm:$0xff]
    %v125 = vld [vmem:[%s1 + $0x2f8] sm:$0xff]
    %v126 = vld [vmem:[%s1 + $0x300] sm:$0xff]
    %v127 = vld [vmem:[%s1 + $0x308] sm:$0xff]
    %v128 = vld [vmem:[%s1 + $0x310] sm:$0xff]
    %v129 = vld [vmem:[%s1 + $0x318] sm:$0xff]
    %v130 = vld [vmem:[%s1 + $0x320] sm:$0xff]
    %v131 = vld [vmem:[%s1 + $0x328] sm:$0xff]
    %v132 = vld [vmem:[%s1 + $0x330] sm:$0xff]
    %v133 = vld [vmem:[%s1 + $0x338] sm:$0xff]
    %v134 = vld [vmem:[%s1 + $0x340] sm:$0xff]
    %v135 = vld [vmem:[%s1 + $0x348] sm:$0xff]
    %v136 = vld [vmem:[%s1 + $0x350] sm:$0xff]
    %v137 = vld [vmem:[%s1 + $0x358] sm:$0xff]
    %v138 = vld [vmem:[%s1 + $0x360] sm:$0xff]
    %v139 = vld [vmem:[%s1 + $0x368] sm:$0xff]
    %v140 = vld [vmem:[%s1 + $0x370] sm:$0xff]
    %v141 = vld [vmem:[%s1 + $0x378] sm:$0xff]
    %v142 = vld [vmem:[%s1 + $0x380] sm:$0xff]
    %v143 = vld [vmem:[%s1 + $0x388] sm:$0xff]
    %v144 = vld [vmem:[%s1 + $0x390] sm:$0xff]
    %v145 = vld [vmem:[%s1 + $0x398] sm:$0xff]
    %v146 = vld [vmem:[%s1 + $0x3a0] sm:$0xff]
    %v147 = vld [vmem:[%s1 + $0x3a8] sm:$0xff]
    %v148 = vld [vmem:[%s1 + $0x3b0] sm:$0xff]
    %v149 = vld [vmem:[%s1 + $0x3b8] sm:$0xff]
    %v150 = vld [vmem:[%s1 + $0x3c0] sm:$0xff]
    %v151 = vld [vmem:[%s1 + $0x3c8] sm:$0xff]
    %v152 = vld [vmem:[%s1 + $0x3d0] sm:$0xff]
    %v153 = vld [vmem:[%s1 + $0x3d8] sm:$0xff]
    %v154 = vld [vmem:[%s1 + $0x3e0] sm:$0xff]
    %v155 = vld [vmem:[%s1 + $0x3e8] sm:$0xff]
    %v156 = vld [vmem:[%s1 + $0x3f0] sm:$0xff]
    %v157 = vld [vmem:[%s1 + $0x3f8] sm:$0xff]
    %v158 = vld [vmem:[%s1 + $0x400] sm:$0xff]
    %v159 = vld [vmem:[%s1 + $0x408] sm:$0xff]
    %v160 = vld [vmem:[%s1 + $0x410] sm:$0xff]
    %v161 = vld [vmem:[%s1 + $0x418] sm:$0xff]
    %v162 = vld [vmem:[%s1 + $0x420] sm:$0xff]
    %v163 = vld [vmem:[%s1 + $0x428] sm:$0xff]
    %v164 = vld [vmem:[%s1 + $0x430] sm:$0xff]
    %v165 = vld [vmem:[%s1 + $0x438] sm:$0xff]
    %v166 = vld [vmem:[%s1 + $0x440] sm:$0xff]
    %v167 = vld [vmem:[%s1 + $0x448] sm:$0xff]
    %v168 = vld [vmem:[%s1 + $0x450] sm:$0xff]
    %v169 = vld [vmem:[%s1 + $0x458] sm:$0xff]
    %v170 = vld [vmem:[%s1 + $0x460] sm:$0xff]
    %v171 = vld [vmem:[%s1 + $0x468] sm:$0xff]
    %v172 = vld [vmem:[%s1 + $0x470] sm:$0xff]
    %v173 = vld [vmem:[%s1 + $0x478] sm:$0xff]
    %v174 = vld [vmem:[%s1 + $0x480] sm:$0xff]
    %v175 = vld [vmem:[%s1 + $0x488] sm:$0xff]
    %v176 = vld [vmem:[%s1 + $0x490] sm:$0xff]
    %v177 = vld [vmem:[%s1 + $0x498] sm:$0xff]
    %v178 = vld [vmem:[%s1 + $0x4a0] sm:$0xff]
    %v179 = vld [vmem:[%s1 + $0x4a8] sm:$0xff]
    %v180 = vld [vmem:[%s1 + $0x4b0] sm:$0xff]
    %v181 = vld [vmem:[%s1 + $0x4b8] sm:$0xff]
    %v182 = vld [vmem:[%s1 + $0x4c0] sm:$0xff]
    %v183 = vld [vmem:[%s1 + $0x4c8] sm:$0xff]
    %v184 = vld [vmem:[%s1 + $0x4d0] sm:$0xff]
    %v185 = vld [vmem:[%s1 + $0x4d8] sm:$0xff]
    %v186 = vld [vmem:[%s1 + $0x4e0] sm:$0xff]
    %v187 = vld [vmem:[%s1 + $0x4e8] sm:$0xff]
    %v188 = vld [vmem:[%s1 + $0x4f0] sm:$0xff]
    %v189 = vld [vmem:[%s1 + $0x4f8] sm:$0xff]
    %v190 = vld [vmem:[%s1 + $0x500] sm:$0xff]
    %v191 = vld [vmem:[%s1 + $0x508] sm:$0xff]
    %v192 = vld [vmem:[%s1 + $0x510] sm:$0xff]
    %v193 = vld [vmem:[%s1 + $0x518] sm:$0xff]
    %v194 = vld [vmem:[%s1 + $0x520] sm:$0xff]
    %v195 = vld [vmem:[%s1 + $0x528] sm:$0xff]
    %v196 = vld [vmem:[%s1 + $0x530] sm:$0xff]
    %v197 = vld [vmem:[%s1 + $0x538] sm:$0xff]
    %v198 = vld [vmem:[%s1 + $0x540] sm:$0xff]
    %v199 = vld [vmem:[%s1 + $0x548] sm:$0xff]
    %v200 = vld [vmem:[%s1 + $0x550] sm:$0xff]
    %v201 = vld [vmem:[%s1 + $0x558] sm:$0xff]
    %v202 = vld [vmem:[%s1 + $0x560] sm:$0xff]
    %v203 = vld [vmem:[%s1 + $0x568] sm:$0xff]
    %v204 = vld [vmem:[%s1 + $0x570] sm:$0xff]
    %v205 = vld [vmem:[%s1 + $0x578] sm:$0xff]
    %v206 = vld [vmem:[%s1 + $0x580] sm:$0xff]
    %v207 = vld [vmem:[%s1 + $0x588] sm:$0xff]
    %v208 = vld [vmem:[%s1 + $0x590] sm:$0xff]
    %v209 = vld [vmem:[%s1 + $0x598] sm:$0xff]
    %v210 = vld [vmem:[%s1 + $0x5a0] sm:$0xff]
    %v211 = vld [vmem:[%s1 + $0x5a8] sm:$0xff]
    %v212 = vld [vmem:[%s1 + $0x5b0] sm:$0xff]
    %v213 = vld [vmem:[%s1 + $0x5b8] sm:$0xff]
    %v214 = vld [vmem:[%s1 + $0x5c0] sm:$0xff]
    %v215 = vld [vmem:[%s1 + $0x5c8] sm:$0xff]
    %v216 = vld [vmem:[%s1 + $0x5d0] sm:$0xff]
    %v217 = vld [vmem:[%s1 + $0x5d8] sm:$0xff]
    %v218 = vld [vmem:[%s1 + $0x5e0] sm:$0xff]
    %v219 = vld [vmem:[%s1 + $0x5e8] sm:$0xff]
    %v220 = vld [vmem:[%s1 + $0x5f0] sm:$0xff]
    %v221 = vld [vmem:[%s1 + $0x5f8] sm:$0xff]
    %v222 = vld [vmem:[%s1 + $0x600] sm:$0xff]
    %v223 = vld [vmem:[%s1 + $0x608] sm:$0xff]
    %v224 = vld [vmem:[%s1 + $0x610] sm:$0xff]
    %v225 = vld [vmem:[%s1 + $0x618] sm:$0xff]
    %v226 = vld [vmem:[%s2] sm:$0x3]
    %v228 = vperm.slane %v226, 0
    %v229 = vperm.slane %v226, 1
    %233 = vst [vmem:[#allocation1] ss:$9 sm:$0xff] %v28
    %v234 = vld [vmem:[#allocation1] sm:$0xff]
    %v235 = vld [vmem:[#allocation1 + $0x9] sm:$0xff]
    %v236 = vld [vmem:[#allocation1 + $0x12] sm:$0xff]
    %v237 = vld [vmem:[#allocation1 + $0x1b] sm:$0xff]
    %v238 = vld [vmem:[#allocation1 + $0x24] sm:$0xff]
    %v239 = vld [vmem:[#allocation1 + $0x2d] sm:$0xff]
    %v240 = vld [vmem:[#allocation1 + $0x36] sm:$0xff]
    %v241 = vld [vmem:[#allocation1 + $0x3f] sm:$0xff]
    %243 = vst [vmem:[#allocation1] ss:$9 sm:$0xff] %v29
    %v244 = vld [vmem:[#allocation1] sm:$0xff]
    %v245 = vld [vmem:[#allocation1 + $0x9] sm:$0xff]
    %v246 = vld [vmem:[#allocation1 + $0x12] sm:$0xff]
    %v247 = vld [vmem:[#allocation1 + $0x1b] sm:$0xff]
    %v248 = vld [vmem:[#allocation1 + $0x24] sm:$0xff]
    %v457 = vunpack.c.l.b16 %v30
    %v458 = vunpack.c.h.b16 %v30
    %v459 = vunpack.c.l.b16 %v31
    %v460 = vunpack.c.h.b16 %v31
    %v461 = vunpack.c.l.b16 %v32
    %v462 = vunpack.c.h.b16 %v32
    %v463 = vunpack.c.l.b16 %v33
    %v464 = vunpack.c.h.b16 %v33
    %v465 = vunpack.c.l.b16 %v34
    %v466 = vunpack.c.h.b16 %v34
    %v467 = vunpack.c.l.b16 %v35
    %v468 = vunpack.c.h.b16 %v35
    %v469 = vunpack.c.l.b16 %v36
    %v470 = vunpack.c.h.b16 %v36
    %v471 = vunpack.c.l.b16 %v37
    %v472 = vunpack.c.h.b16 %v37
    %v473 = vunpack.c.l.b16 %v38
    %v474 = vunpack.c.h.b16 %v38
    %v475 = vunpack.c.l.b16 %v39
    %v476 = vunpack.c.h.b16 %v39
    %v477 = vunpack.c.l.b16 %v40
    %v478 = vunpack.c.h.b16 %v40
    %v479 = vunpack.c.l.b16 %v41
    %v480 = vunpack.c.h.b16 %v41
    %v481 = vunpack.c.l.b16 %v42
    %v482 = vunpack.c.h.b16 %v42
    %v483 = vunpack.c.l.b16 %v43
    %v484 = vunpack.c.h.b16 %v43
    %v485 = vunpack.c.l.b16 %v44
    %v486 = vunpack.c.h.b16 %v44
    %v487 = vunpack.c.l.b16 %v45
    %v488 = vunpack.c.h.b16 %v45
    %v489 = vunpack.c.l.b16 %v46
    %v490 = vunpack.c.h.b16 %v46
    %v491 = vunpack.c.l.b16 %v47
    %v492 = vunpack.c.h.b16 %v47
    %v493 = vunpack.c.l.b16 %v48
    %v494 = vunpack.c.h.b16 %v48
    %v495 = vunpack.c.l.b16 %v49
    %v496 = vunpack.c.h.b16 %v49
    %v497 = vunpack.c.l.b16 %v50
    %v498 = vunpack.c.h.b16 %v50
    %v499 = vunpack.c.l.b16 %v51
    %v500 = vunpack.c.h.b16 %v51
    %v501 = vunpack.c.l.b16 %v52
    %v502 = vunpack.c.h.b16 %v52
    %v503 = vunpack.c.l.b16 %v53
    %v504 = vunpack.c.h.b16 %v53
    %v505 = vunpack.c.l.b16 %v54
    %v506 = vunpack.c.h.b16 %v54
    %v507 = vunpack.c.l.b16 %v55
    %v508 = vunpack.c.h.b16 %v55
    %v509 = vunpack.c.l.b16 %v56
    %v510 = vunpack.c.h.b16 %v56
    %v511 = vunpack.c.l.b16 %v57
    %v512 = vunpack.c.h.b16 %v57
    %v513 = vunpack.c.l.b16 %v58
    %v514 = vunpack.c.h.b16 %v58
    %v515 = vunpack.c.l.b16 %v59
    %v516 = vunpack.c.h.b16 %v59
    %v517 = vunpack.c.l.b16 %v60
    %v518 = vunpack.c.h.b16 %v60
    %v519 = vunpack.c.l.b16 %v61
    %v520 = vunpack.c.h.b16 %v61
    %v521 = vunpack.c.l.b16 %v62
    %v522 = vunpack.c.h.b16 %v62
    %v523 = vunpack.c.l.b16 %v63
    %v524 = vunpack.c.h.b16 %v63
    %v525 = vunpack.c.l.b16 %v64
    %v526 = vunpack.c.h.b16 %v64
    %v527 = vunpack.c.l.b16 %v65
    %v528 = vunpack.c.h.b16 %v65
    %v529 = vunpack.c.l.b16 %v66
    %v530 = vunpack.c.h.b16 %v66
    %v531 = vunpack.c.l.b16 %v67
    %v532 = vunpack.c.h.b16 %v67
    %v533 = vunpack.c.l.b16 %v68
    %v534 = vunpack.c.h.b16 %v68
    %v535 = vunpack.c.l.b16 %v69
    %v536 = vunpack.c.h.b16 %v69
    %v537 = vunpack.c.l.b16 %v70
    %v538 = vunpack.c.h.b16 %v70
    %v539 = vunpack.c.l.b16 %v71
    %v540 = vunpack.c.h.b16 %v71
    %v541 = vunpack.c.l.b16 %v72
    %v542 = vunpack.c.h.b16 %v72
    %v543 = vunpack.c.l.b16 %v73
    %v544 = vunpack.c.h.b16 %v73
    %v545 = vunpack.c.l.b16 %v74
    %v546 = vunpack.c.h.b16 %v74
    %v547 = vunpack.c.l.b16 %v75
    %v548 = vunpack.c.h.b16 %v75
    %v549 = vunpack.c.l.b16 %v76
    %v550 = vunpack.c.h.b16 %v76
    %v551 = vunpack.c.l.b16 %v77
    %v552 = vunpack.c.h.b16 %v77
    %v553 = vunpack.c.l.b16 %v78
    %v554 = vunpack.c.h.b16 %v78
    %v555 = vunpack.c.l.b16 %v79
    %v556 = vunpack.c.h.b16 %v79
    %v557 = vunpack.c.l.b16 %v80
    %v558 = vunpack.c.h.b16 %v80
    %v559 = vunpack.c.l.b16 %v81
    %v560 = vunpack.c.h.b16 %v81
    %v561 = vunpack.c.l.b16 %v82
    %v562 = vunpack.c.h.b16 %v82
    %v563 = vunpack.c.l.b16 %v83
    %v564 = vunpack.c.h.b16 %v83
    %v565 = vunpack.c.l.b16 %v84
    %v566 = vunpack.c.h.b16 %v84
    %v567 = vunpack.c.l.b16 %v85
    %v568 = vunpack.c.h.b16 %v85
    %v569 = vunpack.c.l.b16 %v86
    %v570 = vunpack.c.h.b16 %v86
    %v571 = vunpack.c.l.b16 %v87
    %v572 = vunpack.c.h.b16 %v87
    %v573 = vunpack.c.l.b16 %v88
    %v574 = vunpack.c.h.b16 %v88
    %v575 = vunpack.c.l.b16 %v89
    %v576 = vunpack.c.h.b16 %v89
    %v577 = vunpack.c.l.b16 %v90
    %v578 = vunpack.c.h.b16 %v90
    %v579 = vunpack.c.l.b16 %v91
    %v580 = vunpack.c.h.b16 %v91
    %v581 = vunpack.c.l.b16 %v92
    %v582 = vunpack.c.h.b16 %v92
    %v583 = vunpack.c.l.b16 %v93
    %v584 = vunpack.c.h.b16 %v93
    %v585 = vunpack.c.l.b16 %v94
    %v586 = vunpack.c.h.b16 %v94
    %v587 = vunpack.c.l.b16 %v95
    %v588 = vunpack.c.h.b16 %v95
    %v589 = vunpack.c.l.b16 %v96
    %v590 = vunpack.c.h.b16 %v96
    %v591 = vunpack.c.l.b16 %v97
    %v592 = vunpack.c.h.b16 %v97
    %v593 = vunpack.c.l.b16 %v98
    %v594 = vunpack.c.h.b16 %v98
    %v595 = vunpack.c.l.b16 %v99
    %v596 = vunpack.c.h.b16 %v99
    %v597 = vunpack.c.l.b16 %v100
    %v598 = vunpack.c.h.b16 %v100
    %v599 = vunpack.c.l.b16 %v101
    %v600 = vunpack.c.h.b16 %v101
    %v601 = vunpack.c.l.b16 %v102
    %v602 = vunpack.c.h.b16 %v102
    %v603 = vunpack.c.l.b16 %v103
    %v604 = vunpack.c.h.b16 %v103
    %v605 = vunpack.c.l.b16 %v104
    %v606 = vunpack.c.h.b16 %v104
    %v607 = vunpack.c.l.b16 %v105
    %v608 = vunpack.c.h.b16 %v105
    %v609 = vunpack.c.l.b16 %v106
    %v610 = vunpack.c.h.b16 %v106
    %v611 = vunpack.c.l.b16 %v107
    %v612 = vunpack.c.h.b16 %v107
    %v613 = vunpack.c.l.b16 %v108
    %v614 = vunpack.c.h.b16 %v108
    %v615 = vunpack.c.l.b16 %v109
    %v616 = vunpack.c.h.b16 %v109
    %v617 = vunpack.c.l.b16 %v110
    %v618 = vunpack.c.h.b16 %v110
    %v619 = vunpack.c.l.b16 %v111
    %v620 = vunpack.c.h.b16 %v111
    %v621 = vunpack.c.l.b16 %v112
    %v622 = vunpack.c.h.b16 %v112
    %v623 = vunpack.c.l.b16 %v113
    %v624 = vunpack.c.h.b16 %v113
    %v625 = vunpack.c.l.b16 %v114
    %v626 = vunpack.c.h.b16 %v114
    %v627 = vunpack.c.l.b16 %v115
    %v628 = vunpack.c.h.b16 %v115
    %v629 = vunpack.c.l.b16 %v116
    %v630 = vunpack.c.h.b16 %v116
    %v631 = vunpack.c.l.b16 %v117
    %v632 = vunpack.c.h.b16 %v117
    %v633 = vunpack.c.l.b16 %v118
    %v634 = vunpack.c.h.b16 %v118
    %v635 = vunpack.c.l.b16 %v119
    %v636 = vunpack.c.h.b16 %v119
    %v637 = vunpack.c.l.b16 %v120
    %v638 = vunpack.c.h.b16 %v120
    %v639 = vunpack.c.l.b16 %v121
    %v640 = vunpack.c.h.b16 %v121
    %v641 = vunpack.c.l.b16 %v122
    %v642 = vunpack.c.h.b16 %v122
    %v643 = vunpack.c.l.b16 %v123
    %v644 = vunpack.c.h.b16 %v123
    %v645 = vunpack.c.l.b16 %v124
    %v646 = vunpack.c.h.b16 %v124
    %v647 = vunpack.c.l.b16 %v125
    %v648 = vunpack.c.h.b16 %v125
    %v649 = vunpack.c.l.b16 %v126
    %v650 = vunpack.c.h.b16 %v126
    %v651 = vunpack.c.l.b16 %v127
    %v652 = vunpack.c.h.b16 %v127
    %v653 = vunpack.c.l.b16 %v128
    %v654 = vunpack.c.h.b16 %v128
    %v655 = vunpack.c.l.b16 %v129
    %v656 = vunpack.c.h.b16 %v129
    %v657 = vunpack.c.l.b16 %v130
    %v658 = vunpack.c.h.b16 %v130
    %v659 = vunpack.c.l.b16 %v131
    %v660 = vunpack.c.h.b16 %v131
    %v661 = vunpack.c.l.b16 %v132
    %v662 = vunpack.c.h.b16 %v132
    %v663 = vunpack.c.l.b16 %v133
    %v664 = vunpack.c.h.b16 %v133
    %v665 = vunpack.c.l.b16 %v134
    %v666 = vunpack.c.h.b16 %v134
    %v667 = vunpack.c.l.b16 %v135
    %v668 = vunpack.c.h.b16 %v135
    %v669 = vunpack.c.l.b16 %v136
    %v670 = vunpack.c.h.b16 %v136
    %v671 = vunpack.c.l.b16 %v137
    %v672 = vunpack.c.h.b16 %v137
    %v673 = vunpack.c.l.b16 %v138
    %v674 = vunpack.c.h.b16 %v138
    %v675 = vunpack.c.l.b16 %v139
    %v676 = vunpack.c.h.b16 %v139
    %v677 = vunpack.c.l.b16 %v140
    %v678 = vunpack.c.h.b16 %v140
    %v679 = vunpack.c.l.b16 %v141
    %v680 = vunpack.c.h.b16 %v141
    %v681 = vunpack.c.l.b16 %v142
    %v682 = vunpack.c.h.b16 %v142
    %v683 = vunpack.c.l.b16 %v143
    %v684 = vunpack.c.h.b16 %v143
    %v685 = vunpack.c.l.b16 %v144
    %v686 = vunpack.c.h.b16 %v144
    %v687 = vunpack.c.l.b16 %v145
    %v688 = vunpack.c.h.b16 %v145
    %v689 = vunpack.c.l.b16 %v146
    %v690 = vunpack.c.h.b16 %v146
    %v691 = vunpack.c.l.b16 %v147
    %v692 = vunpack.c.h.b16 %v147
    %v693 = vunpack.c.l.b16 %v148
    %v694 = vunpack.c.h.b16 %v148
    %v695 = vunpack.c.l.b16 %v149
    %v696 = vunpack.c.h.b16 %v149
    %v697 = vunpack.c.l.b16 %v150
    %v698 = vunpack.c.h.b16 %v150
    %v699 = vunpack.c.l.b16 %v151
    %v700 = vunpack.c.h.b16 %v151
    %v701 = vunpack.c.l.b16 %v152
    %v702 = vunpack.c.h.b16 %v152
    %v703 = vunpack.c.l.b16 %v153
    %v704 = vunpack.c.h.b16 %v153
    %v705 = vunpack.c.l.b16 %v154
    %v706 = vunpack.c.h.b16 %v154
    %v707 = vunpack.c.l.b16 %v155
    %v708 = vunpack.c.h.b16 %v155
    %v709 = vunpack.c.l.b16 %v156
    %v710 = vunpack.c.h.b16 %v156
    %v711 = vunpack.c.l.b16 %v157
    %v712 = vunpack.c.h.b16 %v157
    %v713 = vunpack.c.l.b16 %v158
    %v714 = vunpack.c.h.b16 %v158
    %v715 = vunpack.c.l.b16 %v159
    %v716 = vunpack.c.h.b16 %v159
    %v717 = vunpack.c.l.b16 %v160
    %v718 = vunpack.c.h.b16 %v160
    %v719 = vunpack.c.l.b16 %v161
    %v720 = vunpack.c.h.b16 %v161
    %v721 = vunpack.c.l.b16 %v162
    %v722 = vunpack.c.h.b16 %v162
    %v723 = vunpack.c.l.b16 %v163
    %v724 = vunpack.c.h.b16 %v163
    %v725 = vunpack.c.l.b16 %v164
    %v726 = vunpack.c.h.b16 %v164
    %v727 = vunpack.c.l.b16 %v165
    %v728 = vunpack.c.h.b16 %v165
    %v729 = vunpack.c.l.b16 %v166
    %v730 = vunpack.c.h.b16 %v166
    %v731 = vunpack.c.l.b16 %v167
    %v732 = vunpack.c.h.b16 %v167
    %v733 = vunpack.c.l.b16 %v168
    %v734 = vunpack.c.h.b16 %v168
    %v735 = vunpack.c.l.b16 %v169
    %v736 = vunpack.c.h.b16 %v169
    %v737 = vunpack.c.l.b16 %v170
    %v738 = vunpack.c.h.b16 %v170
    %v739 = vunpack.c.l.b16 %v171
    %v740 = vunpack.c.h.b16 %v171
    %v741 = vunpack.c.l.b16 %v172
    %v742 = vunpack.c.h.b16 %v172
    %v743 = vunpack.c.l.b16 %v173
    %v744 = vunpack.c.h.b16 %v173
    %v745 = vunpack.c.l.b16 %v174
    %v746 = vunpack.c.h.b16 %v174
    %v747 = vunpack.c.l.b16 %v175
    %v748 = vunpack.c.h.b16 %v175
    %v749 = vunpack.c.l.b16 %v176
    %v750 = vunpack.c.h.b16 %v176
    %v751 = vunpack.c.l.b16 %v177
    %v752 = vunpack.c.h.b16 %v177
    %v753 = vunpack.c.l.b16 %v178
    %v754 = vunpack.c.h.b16 %v178
    %v755 = vunpack.c.l.b16 %v179
    %v756 = vunpack.c.h.b16 %v179
    %v757 = vunpack.c.l.b16 %v180
    %v758 = vunpack.c.h.b16 %v180
    %v759 = vunpack.c.l.b16 %v181
    %v760 = vunpack.c.h.b16 %v181
    %v761 = vunpack.c.l.b16 %v182
    %v762 = vunpack.c.h.b16 %v182
    %v763 = vunpack.c.l.b16 %v183
    %v764 = vunpack.c.h.b16 %v183
    %v765 = vunpack.c.l.b16 %v184
    %v766 = vunpack.c.h.b16 %v184
    %v767 = vunpack.c.l.b16 %v185
    %v768 = vunpack.c.h.b16 %v185
    %v769 = vunpack.c.l.b16 %v186
    %v770 = vunpack.c.h.b16 %v186
    %v771 = vunpack.c.l.b16 %v187
    %v772 = vunpack.c.h.b16 %v187
    %v773 = vunpack.c.l.b16 %v188
    %v774 = vunpack.c.h.b16 %v188
    %v775 = vunpack.c.l.b16 %v189
    %v776 = vunpack.c.h.b16 %v189
    %v777 = vunpack.c.l.b16 %v190
    %v778 = vunpack.c.h.b16 %v190
    %v779 = vunpack.c.l.b16 %v191
    %v780 = vunpack.c.h.b16 %v191
    %v781 = vunpack.c.l.b16 %v192
    %v782 = vunpack.c.h.b16 %v192
    %v783 = vunpack.c.l.b16 %v193
    %v784 = vunpack.c.h.b16 %v193
    %v785 = vunpack.c.l.b16 %v194
    %v786 = vunpack.c.h.b16 %v194
    %v787 = vunpack.c.l.b16 %v195
    %v788 = vunpack.c.h.b16 %v195
    %v789 = vunpack.c.l.b16 %v196
    %v790 = vunpack.c.h.b16 %v196
    %v791 = vunpack.c.l.b16 %v197
    %v792 = vunpack.c.h.b16 %v197
    %v793 = vunpack.c.l.b16 %v198
    %v794 = vunpack.c.h.b16 %v198
    %v795 = vunpack.c.l.b16 %v199
    %v796 = vunpack.c.h.b16 %v199
    %v797 = vunpack.c.l.b16 %v200
    %v798 = vunpack.c.h.b16 %v200
    %v799 = vunpack.c.l.b16 %v201
    %v800 = vunpack.c.h.b16 %v201
    %v801 = vunpack.c.l.b16 %v202
    %v802 = vunpack.c.h.b16 %v202
    %v803 = vunpack.c.l.b16 %v203
    %v804 = vunpack.c.h.b16 %v203
    %v805 = vunpack.c.l.b16 %v204
    %v806 = vunpack.c.h.b16 %v204
    %v807 = vunpack.c.l.b16 %v205
    %v808 = vunpack.c.h.b16 %v205
    %v809 = vunpack.c.l.b16 %v206
    %v810 = vunpack.c.h.b16 %v206
    %v811 = vunpack.c.l.b16 %v207
    %v812 = vunpack.c.h.b16 %v207
    %v813 = vunpack.c.l.b16 %v208
    %v814 = vunpack.c.h.b16 %v208
    %v815 = vunpack.c.l.b16 %v209
    %v816 = vunpack.c.h.b16 %v209
    %v817 = vunpack.c.l.b16 %v210
    %v818 = vunpack.c.h.b16 %v210
    %v819 = vunpack.c.l.b16 %v211
    %v820 = vunpack.c.h.b16 %v211
    %v821 = vunpack.c.l.b16 %v212
    %v822 = vunpack.c.h.b16 %v212
    %v823 = vunpack.c.l.b16 %v213
    %v824 = vunpack.c.h.b16 %v213
    %v825 = vunpack.c.l.b16 %v214
    %v826 = vunpack.c.h.b16 %v214
    %v827 = vunpack.c.l.b16 %v215
    %v828 = vunpack.c.h.b16 %v215
    %v829 = vunpack.c.l.b16 %v216
    %v830 = vunpack.c.h.b16 %v216
    %v831 = vunpack.c.l.b16 %v217
    %v832 = vunpack.c.h.b16 %v217
    %v833 = vunpack.c.l.b16 %v218
    %v834 = vunpack.c.h.b16 %v218
    %v835 = vunpack.c.l.b16 %v219
    %v836 = vunpack.c.h.b16 %v219
    %v837 = vunpack.c.l.b16 %v220
    %v838 = vunpack.c.h.b16 %v220
    %v839 = vunpack.c.l.b16 %v221
    %v840 = vunpack.c.h.b16 %v221
    %v841 = vunpack.c.l.b16 %v222
    %v842 = vunpack.c.h.b16 %v222
    %v843 = vunpack.c.l.b16 %v223
    %v844 = vunpack.c.h.b16 %v223
    %v845 = vunpack.c.l.b16 %v224
    %v846 = vunpack.c.h.b16 %v224
    %v847 = vunpack.c.l.b16 %v225
    %v848 = vunpack.c.h.b16 %v225
    %v849 = vpack.c.b16 %v459, %v457
    %v850 = vpack.c.b16 %v460, %v458
    %v851 = vpack.c.b16 %v463, %v461
    %v852 = vpack.c.b16 %v464, %v462
    %v853 = vpack.c.b16 %v467, %v465
    %v854 = vpack.c.b16 %v468, %v466
    %v855 = vpack.c.b16 %v471, %v469
    %v856 = vpack.c.b16 %v472, %v470
    %v857 = vpack.c.b16 %v475, %v473
    %v858 = vpack.c.b16 %v476, %v474
    %v859 = vpack.c.b16 %v479, %v477
    %v860 = vpack.c.b16 %v480, %v478
    %v861 = vpack.c.b16 %v483, %v481
    %v862 = vpack.c.b16 %v484, %v482
    %v863 = vpack.c.b16 %v487, %v485
    %v864 = vpack.c.b16 %v488, %v486
    %v865 = vpack.c.b16 %v491, %v489
    %v866 = vpack.c.b16 %v492, %v490
    %v867 = vpack.c.b16 %v495, %v493
    %v868 = vpack.c.b16 %v496, %v494
    %v869 = vpack.c.b16 %v499, %v497
    %v870 = vpack.c.b16 %v500, %v498
    %v871 = vpack.c.b16 %v503, %v501
    %v872 = vpack.c.b16 %v504, %v502
    %v873 = vpack.c.b16 %v507, %v505
    %v874 = vpack.c.b16 %v508, %v506
    %v875 = vpack.c.b16 %v511, %v509
    %v876 = vpack.c.b16 %v512, %v510
    %v877 = vpack.c.b16 %v515, %v513
    %v878 = vpack.c.b16 %v516, %v514
    %v879 = vpack.c.b16 %v519, %v517
    %v880 = vpack.c.b16 %v520, %v518
    %v881 = vpack.c.b16 %v523, %v521
    %v882 = vpack.c.b16 %v524, %v522
    %v883 = vpack.c.b16 %v527, %v525
    %v884 = vpack.c.b16 %v528, %v526
    %v885 = vpack.c.b16 %v531, %v529
    %v886 = vpack.c.b16 %v532, %v530
    %v887 = vpack.c.b16 %v535, %v533
    %v888 = vpack.c.b16 %v536, %v534
    %v889 = vpack.c.b16 %v539, %v537
    %v890 = vpack.c.b16 %v540, %v538
    %v891 = vpack.c.b16 %v543, %v541
    %v892 = vpack.c.b16 %v544, %v542
    %v893 = vpack.c.b16 %v547, %v545
    %v894 = vpack.c.b16 %v548, %v546
    %v895 = vpack.c.b16 %v551, %v549
    %v896 = vpack.c.b16 %v552, %v550
    %v897 = vpack.c.b16 %v555, %v553
    %v898 = vpack.c.b16 %v556, %v554
    %v899 = vpack.c.b16 %v559, %v557
    %v900 = vpack.c.b16 %v560, %v558
    %v901 = vpack.c.b16 %v563, %v561
    %v902 = vpack.c.b16 %v564, %v562
    %v903 = vpack.c.b16 %v567, %v565
    %v904 = vpack.c.b16 %v568, %v566
    %v905 = vpack.c.b16 %v571, %v569
    %v906 = vpack.c.b16 %v572, %v570
    %v907 = vpack.c.b16 %v575, %v573
    %v908 = vpack.c.b16 %v576, %v574
    %v909 = vpack.c.b16 %v579, %v577
    %v910 = vpack.c.b16 %v580, %v578
    %v911 = vpack.c.b16 %v583, %v581
    %v912 = vpack.c.b16 %v584, %v582
    %v913 = vpack.c.b16 %v587, %v585
    %v914 = vpack.c.b16 %v588, %v586
    %v915 = vpack.c.b16 %v591, %v589
    %v916 = vpack.c.b16 %v592, %v590
    %v917 = vpack.c.b16 %v595, %v593
    %v918 = vpack.c.b16 %v596, %v594
    %v919 = vpack.c.b16 %v599, %v597
    %v920 = vpack.c.b16 %v600, %v598
    %v921 = vpack.c.b16 %v603, %v601
    %v922 = vpack.c.b16 %v604, %v602
    %v923 = vpack.c.b16 %v607, %v605
    %v924 = vpack.c.b16 %v608, %v606
    %v925 = vpack.c.b16 %v611, %v609
    %v926 = vpack.c.b16 %v612, %v610
    %v927 = vpack.c.b16 %v615, %v613
    %v928 = vpack.c.b16 %v616, %v614
    %v929 = vpack.c.b16 %v619, %v617
    %v930 = vpack.c.b16 %v620, %v618
    %v931 = vpack.c.b16 %v623, %v621
    %v932 = vpack.c.b16 %v624, %v622
    %v933 = vpack.c.b16 %v627, %v625
    %v934 = vpack.c.b16 %v628, %v626
    %v935 = vpack.c.b16 %v631, %v629
    %v936 = vpack.c.b16 %v632, %v630
    %v937 = vpack.c.b16 %v635, %v633
    %v938 = vpack.c.b16 %v636, %v634
    %v939 = vpack.c.b16 %v639, %v637
    %v940 = vpack.c.b16 %v640, %v638
    %v941 = vpack.c.b16 %v643, %v641
    %v942 = vpack.c.b16 %v644, %v642
    %v943 = vpack.c.b16 %v647, %v645
    %v944 = vpack.c.b16 %v648, %v646
    %v945 = vpack.c.b16 %v651, %v649
    %v946 = vpack.c.b16 %v652, %v650
    %v947 = vpack.c.b16 %v655, %v653
    %v948 = vpack.c.b16 %v656, %v654
    %v949 = vpack.c.b16 %v659, %v657
    %v950 = vpack.c.b16 %v660, %v658
    %v951 = vpack.c.b16 %v663, %v661
    %v952 = vpack.c.b16 %v664, %v662
    %v953 = vpack.c.b16 %v667, %v665
    %v954 = vpack.c.b16 %v668, %v666
    %v955 = vpack.c.b16 %v671, %v669
    %v956 = vpack.c.b16 %v672, %v670
    %v957 = vpack.c.b16 %v675, %v673
    %v958 = vpack.c.b16 %v676, %v674
    %v959 = vpack.c.b16 %v679, %v677
    %v960 = vpack.c.b16 %v680, %v678
    %v961 = vpack.c.b16 %v683, %v681
    %v962 = vpack.c.b16 %v684, %v682
    %v963 = vpack.c.b16 %v687, %v685
    %v964 = vpack.c.b16 %v688, %v686
    %v965 = vpack.c.b16 %v691, %v689
    %v966 = vpack.c.b16 %v692, %v690
    %v967 = vpack.c.b16 %v695, %v693
    %v968 = vpack.c.b16 %v696, %v694
    %v969 = vpack.c.b16 %v699, %v697
    %v970 = vpack.c.b16 %v700, %v698
    %v971 = vpack.c.b16 %v703, %v701
    %v972 = vpack.c.b16 %v704, %v702
    %v973 = vpack.c.b16 %v707, %v705
    %v974 = vpack.c.b16 %v708, %v706
    %v975 = vpack.c.b16 %v711, %v709
    %v976 = vpack.c.b16 %v712, %v710
    %v977 = vpack.c.b16 %v715, %v713
    %v978 = vpack.c.b16 %v716, %v714
    %v979 = vpack.c.b16 %v719, %v717
    %v980 = vpack.c.b16 %v720, %v718
    %v981 = vpack.c.b16 %v723, %v721
    %v982 = vpack.c.b16 %v724, %v722
    %v983 = vpack.c.b16 %v727, %v725
    %v984 = vpack.c.b16 %v728, %v726
    %v985 = vpack.c.b16 %v731, %v729
    %v986 = vpack.c.b16 %v732, %v730
    %v987 = vpack.c.b16 %v735, %v733
    %v988 = vpack.c.b16 %v736, %v734
    %v989 = vpack.c.b16 %v739, %v737
    %v990 = vpack.c.b16 %v740, %v738
    %v991 = vpack.c.b16 %v743, %v741
    %v992 = vpack.c.b16 %v744, %v742
    %v993 = vpack.c.b16 %v747, %v745
    %v994 = vpack.c.b16 %v748, %v746
    %v995 = vpack.c.b16 %v751, %v749
    %v996 = vpack.c.b16 %v752, %v750
    %v997 = vpack.c.b16 %v755, %v753
    %v998 = vpack.c.b16 %v756, %v754
    %v999 = vpack.c.b16 %v759, %v757
    %v1000 = vpack.c.b16 %v760, %v758
    %v1001 = vpack.c.b16 %v763, %v761
    %v1002 = vpack.c.b16 %v764, %v762
    %v1003 = vpack.c.b16 %v767, %v765
    %v1004 = vpack.c.b16 %v768, %v766
    %v1005 = vpack.c.b16 %v771, %v769
    %v1006 = vpack.c.b16 %v772, %v770
    %v1007 = vpack.c.b16 %v775, %v773
    %v1008 = vpack.c.b16 %v776, %v774
    %v1009 = vpack.c.b16 %v779, %v777
    %v1010 = vpack.c.b16 %v780, %v778
    %v1011 = vpack.c.b16 %v783, %v781
    %v1012 = vpack.c.b16 %v784, %v782
    %v1013 = vpack.c.b16 %v787, %v785
    %v1014 = vpack.c.b16 %v788, %v786
    %v1015 = vpack.c.b16 %v791, %v789
    %v1016 = vpack.c.b16 %v792, %v790
    %v1017 = vpack.c.b16 %v795, %v793
    %v1018 = vpack.c.b16 %v796, %v794
    %v1019 = vpack.c.b16 %v799, %v797
    %v1020 = vpack.c.b16 %v800, %v798
    %v1021 = vpack.c.b16 %v803, %v801
    %v1022 = vpack.c.b16 %v804, %v802
    %v1023 = vpack.c.b16 %v807, %v805
    %v1024 = vpack.c.b16 %v808, %v806
    %v1025 = vpack.c.b16 %v811, %v809
    %v1026 = vpack.c.b16 %v812, %v810
    %v1027 = vpack.c.b16 %v815, %v813
    %v1028 = vpack.c.b16 %v816, %v814
    %v1029 = vpack.c.b16 %v819, %v817
    %v1030 = vpack.c.b16 %v820, %v818
    %v1031 = vpack.c.b16 %v823, %v821
    %v1032 = vpack.c.b16 %v824, %v822
    %v1033 = vpack.c.b16 %v827, %v825
    %v1034 = vpack.c.b16 %v828, %v826
    %v1035 = vpack.c.b16 %v831, %v829
    %v1036 = vpack.c.b16 %v832, %v830
    %v1037 = vpack.c.b16 %v835, %v833
    %v1038 = vpack.c.b16 %v836, %v834
    %v1039 = vpack.c.b16 %v839, %v837
    %v1040 = vpack.c.b16 %v840, %v838
    %v1041 = vpack.c.b16 %v843, %v841
    %v1042 = vpack.c.b16 %v844, %v842
    %v1043 = vpack.c.b16 %v847, %v845
    %v1044 = vpack.c.b16 %v848, %v846
    %vm1241 = vcmask 261120
    %v1242 = vsel %vm1241, %v248, 0
    %1244 = vmatpush.bf16.msra.mxu0 %v863
    %1245 = vmatpush.bf16.msra.mxu0 %v861
    %1246 = vmatpush.bf16.msra.mxu0 %v859
    %1247 = vmatpush.bf16.msra.mxu0 %v857
    %1248 = vmatpush.bf16.msra.mxu0 %v855
    %1249 = vmatpush.bf16.msra.mxu0 %v853
    %1250 = vmatpush.bf16.msra.mxu0 %v851
    %1251 = vmatpush.bf16.msra.mxu0 %v849
    %1252 = vmatmul.bf16.gmra.mxu0 %v234
    %v1253 = vpop.f32.mrf.mxu0
    %v1254 = vadd.f32 %v228, %v1253
    %v1255 = vpop.f32.mrf.mxu0
    %1256 = vdwg.mxu0
    %1257 = vmatpush.bf16.msra.mxu0 %v879
    %1258 = vmatpush.bf16.msra.mxu0 %v877
    %1259 = vmatpush.bf16.msra.mxu0 %v875
    %1260 = vmatpush.bf16.msra.mxu0 %v873
    %1261 = vmatpush.bf16.msra.mxu0 %v871
    %1262 = vmatpush.bf16.msra.mxu0 %v869
    %1263 = vmatpush.bf16.msra.mxu0 %v867
    %1264 = vmatpush.bf16.msra.mxu0 %v865
    %1265 = vmatmul.bf16.gmra.mxu0 %v235
    %v1266 = vpop.f32.mrf.mxu0
    %v1267 = vadd.f32 %v1254, %v1266
    %v1268 = vpop.f32.mrf.mxu0
    %1269 = vdwg.mxu0
    %1270 = vmatpush.bf16.msra.mxu0 %v895
    %1271 = vmatpush.bf16.msra.mxu0 %v893
    %1272 = vmatpush.bf16.msra.mxu0 %v891
    %1273 = vmatpush.bf16.msra.mxu0 %v889
    %1274 = vmatpush.bf16.msra.mxu0 %v887
    %1275 = vmatpush.bf16.msra.mxu0 %v885
    %1276 = vmatpush.bf16.msra.mxu0 %v883
    %1277 = vmatpush.bf16.msra.mxu0 %v881
    %1278 = vmatmul.bf16.gmra.mxu0 %v236
    %v1279 = vpop.f32.mrf.mxu0
    %v1280 = vadd.f32 %v1267, %v1279
    %v1281 = vpop.f32.mrf.mxu0
    %1282 = vdwg.mxu0
    %1283 = vmatpush.bf16.msra.mxu0 %v911
    %1284 = vmatpush.bf16.msra.mxu0 %v909
    %1285 = vmatpush.bf16.msra.mxu0 %v907
    %1286 = vmatpush.bf16.msra.mxu0 %v905
    %1287 = vmatpush.bf16.msra.mxu0 %v903
    %1288 = vmatpush.bf16.msra.mxu0 %v901
    %1289 = vmatpush.bf16.msra.mxu0 %v899
    %1290 = vmatpush.bf16.msra.mxu0 %v897
    %1291 = vmatmul.bf16.gmra.mxu0 %v237
    %v1292 = vpop.f32.mrf.mxu0
    %v1293 = vadd.f32 %v1280, %v1292
    %v1294 = vpop.f32.mrf.mxu0
    %1295 = vdwg.mxu0
    %1296 = vmatpush.bf16.msra.mxu0 %v927
    %1297 = vmatpush.bf16.msra.mxu0 %v925
    %1298 = vmatpush.bf16.msra.mxu0 %v923
    %1299 = vmatpush.bf16.msra.mxu0 %v921
    %1300 = vmatpush.bf16.msra.mxu0 %v919
    %1301 = vmatpush.bf16.msra.mxu0 %v917
    %1302 = vmatpush.bf16.msra.mxu0 %v915
    %1303 = vmatpush.bf16.msra.mxu0 %v913
    %1304 = vmatmul.bf16.gmra.mxu0 %v238
    %v1305 = vpop.f32.mrf.mxu0
    %v1306 = vadd.f32 %v1293, %v1305
    %v1307 = vpop.f32.mrf.mxu0
    %1308 = vdwg.mxu0
    %1309 = vmatpush.bf16.msra.mxu0 %v943
    %1310 = vmatpush.bf16.msra.mxu0 %v941
    %1311 = vmatpush.bf16.msra.mxu0 %v939
    %1312 = vmatpush.bf16.msra.mxu0 %v937
    %1313 = vmatpush.bf16.msra.mxu0 %v935
    %1314 = vmatpush.bf16.msra.mxu0 %v933
    %1315 = vmatpush.bf16.msra.mxu0 %v931
    %1316 = vmatpush.bf16.msra.mxu0 %v929
    %1317 = vmatmul.bf16.gmra.mxu0 %v239
    %v1318 = vpop.f32.mrf.mxu0
    %v1319 = vadd.f32 %v1306, %v1318
    %v1320 = vpop.f32.mrf.mxu0
    %1321 = vdwg.mxu0
    %1322 = vmatpush.bf16.msra.mxu0 %v959
    %1323 = vmatpush.bf16.msra.mxu0 %v957
    %1324 = vmatpush.bf16.msra.mxu0 %v955
    %1325 = vmatpush.bf16.msra.mxu0 %v953
    %1326 = vmatpush.bf16.msra.mxu0 %v951
    %1327 = vmatpush.bf16.msra.mxu0 %v949
    %1328 = vmatpush.bf16.msra.mxu0 %v947
    %1329 = vmatpush.bf16.msra.mxu0 %v945
    %1330 = vmatmul.bf16.gmra.mxu0 %v240
    %v1331 = vpop.f32.mrf.mxu0
    %v1332 = vadd.f32 %v1319, %v1331
    %v1333 = vpop.f32.mrf.mxu0
    %1334 = vdwg.mxu0
    %1335 = vmatpush.bf16.msra.mxu0 %v975
    %1336 = vmatpush.bf16.msra.mxu0 %v973
    %1337 = vmatpush.bf16.msra.mxu0 %v971
    %1338 = vmatpush.bf16.msra.mxu0 %v969
    %1339 = vmatpush.bf16.msra.mxu0 %v967
    %1340 = vmatpush.bf16.msra.mxu0 %v965
    %1341 = vmatpush.bf16.msra.mxu0 %v963
    %1342 = vmatpush.bf16.msra.mxu0 %v961
    %1343 = vmatmul.bf16.gmra.mxu0 %v241
    %v1344 = vpop.f32.mrf.mxu0
    %v1345 = vadd.f32 %v1332, %v1344
    %v1346 = vpop.f32.mrf.mxu0
    %1347 = vdwg.mxu0
    %1348 = vmatpush.bf16.msra.mxu0 %v991
    %1349 = vmatpush.bf16.msra.mxu0 %v989
    %1350 = vmatpush.bf16.msra.mxu0 %v987
    %1351 = vmatpush.bf16.msra.mxu0 %v985
    %1352 = vmatpush.bf16.msra.mxu0 %v983
    %1353 = vmatpush.bf16.msra.mxu0 %v981
    %1354 = vmatpush.bf16.msra.mxu0 %v979
    %1355 = vmatpush.bf16.msra.mxu0 %v977
    %1356 = vmatmul.bf16.gmra.mxu0 %v244
    %v1357 = vpop.f32.mrf.mxu0
    %v1358 = vadd.f32 %v1345, %v1357
    %v1359 = vpop.f32.mrf.mxu0
    %1360 = vdwg.mxu0
    %1361 = vmatpush.bf16.msra.mxu0 %v1007
    %1362 = vmatpush.bf16.msra.mxu0 %v1005
    %1363 = vmatpush.bf16.msra.mxu0 %v1003
    %1364 = vmatpush.bf16.msra.mxu0 %v1001
    %1365 = vmatpush.bf16.msra.mxu0 %v999
    %1366 = vmatpush.bf16.msra.mxu0 %v997
    %1367 = vmatpush.bf16.msra.mxu0 %v995
    %1368 = vmatpush.bf16.msra.mxu0 %v993
    %1369 = vmatmul.bf16.gmra.mxu0 %v245
    %v1370 = vpop.f32.mrf.mxu0
    %v1371 = vadd.f32 %v1358, %v1370
    %v1372 = vpop.f32.mrf.mxu0
    %1373 = vdwg.mxu0
    %1374 = vmatpush.bf16.msra.mxu0 %v1023
    %1375 = vmatpush.bf16.msra.mxu0 %v1021
    %1376 = vmatpush.bf16.msra.mxu0 %v1019
    %1377 = vmatpush.bf16.msra.mxu0 %v1017
    %1378 = vmatpush.bf16.msra.mxu0 %v1015
    %1379 = vmatpush.bf16.msra.mxu0 %v1013
    %1380 = vmatpush.bf16.msra.mxu0 %v1011
    %1381 = vmatpush.bf16.msra.mxu0 %v1009
    %1382 = vmatmul.bf16.gmra.mxu0 %v246
    %v1383 = vpop.f32.mrf.mxu0
    %v1384 = vadd.f32 %v1371, %v1383
    %v1385 = vpop.f32.mrf.mxu0
    %1386 = vdwg.mxu0
    %1387 = vmatpush.bf16.msra.mxu0 %v1039
    %1388 = vmatpush.bf16.msra.mxu0 %v1037
    %1389 = vmatpush.bf16.msra.mxu0 %v1035
    %1390 = vmatpush.bf16.msra.mxu0 %v1033
    %1391 = vmatpush.bf16.msra.mxu0 %v1031
    %1392 = vmatpush.bf16.msra.mxu0 %v1029
    %1393 = vmatpush.bf16.msra.mxu0 %v1027
    %1394 = vmatpush.bf16.msra.mxu0 %v1025
    %1395 = vmatmul.bf16.gmra.mxu0 %v247
    %v1396 = vpop.f32.mrf.mxu0
    %v1397 = vadd.f32 %v1384, %v1396
    %v1398 = vpop.f32.mrf.mxu0
    %1399 = vdwg.mxu0
    %1400 = vmatpush.bf16.msra.mxu0 0
    %1401 = vmatpush.bf16.msra.mxu0 0
    %1402 = vmatpush.bf16.msra.mxu0 0
    %1403 = vmatpush.bf16.msra.mxu0 0
    %1404 = vmatpush.bf16.msra.mxu0 0
    %1405 = vmatpush.bf16.msra.mxu0 0
    %1406 = vmatpush.bf16.msra.mxu0 %v1043
    %1407 = vmatpush.bf16.msra.mxu0 %v1041
    %1408 = vmatmul.bf16.gmra.mxu0 %v1242
    %v1409 = vpop.f32.mrf.mxu0
    %v1410 = vadd.f32 %v1397, %v1409
    %v1411 = vpop.f32.mrf.mxu0
    %1412 = vdwg.mxu0
    %1413 = vmatpush.bf16.msra.mxu0 %v864
    %1414 = vmatpush.bf16.msra.mxu0 %v862
    %1415 = vmatpush.bf16.msra.mxu0 %v860
    %1416 = vmatpush.bf16.msra.mxu0 %v858
    %1417 = vmatpush.bf16.msra.mxu0 %v856
    %1418 = vmatpush.bf16.msra.mxu0 %v854
    %1419 = vmatpush.bf16.msra.mxu0 %v852
    %1420 = vmatpush.bf16.msra.mxu0 %v850
    %1421 = vmatmul.bf16.gmra.mxu0 %v234
    %v1422 = vpop.f32.mrf.mxu0
    %v1423 = vadd.f32 %v229, %v1422
    %v1424 = vpop.f32.mrf.mxu0
    %1425 = vdwg.mxu0
    %1426 = vmatpush.bf16.msra.mxu0 %v880
    %1427 = vmatpush.bf16.msra.mxu0 %v878
    %1428 = vmatpush.bf16.msra.mxu0 %v876
    %1429 = vmatpush.bf16.msra.mxu0 %v874
    %1430 = vmatpush.bf16.msra.mxu0 %v872
    %1431 = vmatpush.bf16.msra.mxu0 %v870
    %1432 = vmatpush.bf16.msra.mxu0 %v868
    %1433 = vmatpush.bf16.msra.mxu0 %v866
    %1434 = vmatmul.bf16.gmra.mxu0 %v235
    %v1435 = vpop.f32.mrf.mxu0
    %v1436 = vadd.f32 %v1423, %v1435
    %v1437 = vpop.f32.mrf.mxu0
    %1438 = vdwg.mxu0
    %1439 = vmatpush.bf16.msra.mxu0 %v896
    %1440 = vmatpush.bf16.msra.mxu0 %v894
    %1441 = vmatpush.bf16.msra.mxu0 %v892
    %1442 = vmatpush.bf16.msra.mxu0 %v890
    %1443 = vmatpush.bf16.msra.mxu0 %v888
    %1444 = vmatpush.bf16.msra.mxu0 %v886
    %1445 = vmatpush.bf16.msra.mxu0 %v884
    %1446 = vmatpush.bf16.msra.mxu0 %v882
    %1447 = vmatmul.bf16.gmra.mxu0 %v236
    %v1448 = vpop.f32.mrf.mxu0
    %v1449 = vadd.f32 %v1436, %v1448
    %v1450 = vpop.f32.mrf.mxu0
    %1451 = vdwg.mxu0
    %1452 = vmatpush.bf16.msra.mxu0 %v912
    %1453 = vmatpush.bf16.msra.mxu0 %v910
    %1454 = vmatpush.bf16.msra.mxu0 %v908
    %1455 = vmatpush.bf16.msra.mxu0 %v906
    %1456 = vmatpush.bf16.msra.mxu0 %v904
    %1457 = vmatpush.bf16.msra.mxu0 %v902
    %1458 = vmatpush.bf16.msra.mxu0 %v900
    %1459 = vmatpush.bf16.msra.mxu0 %v898
    %1460 = vmatmul.bf16.gmra.mxu0 %v237
    %v1461 = vpop.f32.mrf.mxu0
    %v1462 = vadd.f32 %v1449, %v1461
    %v1463 = vpop.f32.mrf.mxu0
    %1464 = vdwg.mxu0
    %1465 = vmatpush.bf16.msra.mxu0 %v928
    %1466 = vmatpush.bf16.msra.mxu0 %v926
    %1467 = vmatpush.bf16.msra.mxu0 %v924
    %1468 = vmatpush.bf16.msra.mxu0 %v922
    %1469 = vmatpush.bf16.msra.mxu0 %v920
    %1470 = vmatpush.bf16.msra.mxu0 %v918
    %1471 = vmatpush.bf16.msra.mxu0 %v916
    %1472 = vmatpush.bf16.msra.mxu0 %v914
    %1473 = vmatmul.bf16.gmra.mxu0 %v238
    %v1474 = vpop.f32.mrf.mxu0
    %v1475 = vadd.f32 %v1462, %v1474
    %v1476 = vpop.f32.mrf.mxu0
    %1477 = vdwg.mxu0
    %1478 = vmatpush.bf16.msra.mxu0 %v944
    %1479 = vmatpush.bf16.msra.mxu0 %v942
    %1480 = vmatpush.bf16.msra.mxu0 %v940
    %1481 = vmatpush.bf16.msra.mxu0 %v938
    %1482 = vmatpush.bf16.msra.mxu0 %v936
    %1483 = vmatpush.bf16.msra.mxu0 %v934
    %1484 = vmatpush.bf16.msra.mxu0 %v932
    %1485 = vmatpush.bf16.msra.mxu0 %v930
    %1486 = vmatmul.bf16.gmra.mxu0 %v239
    %v1487 = vpop.f32.mrf.mxu0
    %v1488 = vadd.f32 %v1475, %v1487
    %v1489 = vpop.f32.mrf.mxu0
    %1490 = vdwg.mxu0
    %1491 = vmatpush.bf16.msra.mxu0 %v960
    %1492 = vmatpush.bf16.msra.mxu0 %v958
    %1493 = vmatpush.bf16.msra.mxu0 %v956
    %1494 = vmatpush.bf16.msra.mxu0 %v954
    %1495 = vmatpush.bf16.msra.mxu0 %v952
    %1496 = vmatpush.bf16.msra.mxu0 %v950
    %1497 = vmatpush.bf16.msra.mxu0 %v948
    %1498 = vmatpush.bf16.msra.mxu0 %v946
    %1499 = vmatmul.bf16.gmra.mxu0 %v240
    %v1500 = vpop.f32.mrf.mxu0
    %v1501 = vadd.f32 %v1488, %v1500
    %v1502 = vpop.f32.mrf.mxu0
    %1503 = vdwg.mxu0
    %1504 = vmatpush.bf16.msra.mxu0 %v976
    %1505 = vmatpush.bf16.msra.mxu0 %v974
    %1506 = vmatpush.bf16.msra.mxu0 %v972
    %1507 = vmatpush.bf16.msra.mxu0 %v970
    %1508 = vmatpush.bf16.msra.mxu0 %v968
    %1509 = vmatpush.bf16.msra.mxu0 %v966
    %1510 = vmatpush.bf16.msra.mxu0 %v964
    %1511 = vmatpush.bf16.msra.mxu0 %v962
    %1512 = vmatmul.bf16.gmra.mxu0 %v241
    %v1513 = vpop.f32.mrf.mxu0
    %v1514 = vadd.f32 %v1501, %v1513
    %v1515 = vpop.f32.mrf.mxu0
    %1516 = vdwg.mxu0
    %1517 = vmatpush.bf16.msra.mxu0 %v992
    %1518 = vmatpush.bf16.msra.mxu0 %v990
    %1519 = vmatpush.bf16.msra.mxu0 %v988
    %1520 = vmatpush.bf16.msra.mxu0 %v986
    %1521 = vmatpush.bf16.msra.mxu0 %v984
    %1522 = vmatpush.bf16.msra.mxu0 %v982
    %1523 = vmatpush.bf16.msra.mxu0 %v980
    %1524 = vmatpush.bf16.msra.mxu0 %v978
    %1525 = vmatmul.bf16.gmra.mxu0 %v244
    %v1526 = vpop.f32.mrf.mxu0
    %v1527 = vadd.f32 %v1514, %v1526
    %v1528 = vpop.f32.mrf.mxu0
    %1529 = vdwg.mxu0
    %1530 = vmatpush.bf16.msra.mxu0 %v1008
    %1531 = vmatpush.bf16.msra.mxu0 %v1006
    %1532 = vmatpush.bf16.msra.mxu0 %v1004
    %1533 = vmatpush.bf16.msra.mxu0 %v1002
    %1534 = vmatpush.bf16.msra.mxu0 %v1000
    %1535 = vmatpush.bf16.msra.mxu0 %v998
    %1536 = vmatpush.bf16.msra.mxu0 %v996
    %1537 = vmatpush.bf16.msra.mxu0 %v994
    %1538 = vmatmul.bf16.gmra.mxu0 %v245
    %v1539 = vpop.f32.mrf.mxu0
    %v1540 = vadd.f32 %v1527, %v1539
    %v1541 = vpop.f32.mrf.mxu0
    %1542 = vdwg.mxu0
    %1543 = vmatpush.bf16.msra.mxu0 %v1024
    %1544 = vmatpush.bf16.msra.mxu0 %v1022
    %1545 = vmatpush.bf16.msra.mxu0 %v1020
    %1546 = vmatpush.bf16.msra.mxu0 %v1018
    %1547 = vmatpush.bf16.msra.mxu0 %v1016
    %1548 = vmatpush.bf16.msra.mxu0 %v1014
    %1549 = vmatpush.bf16.msra.mxu0 %v1012
    %1550 = vmatpush.bf16.msra.mxu0 %v1010
    %1551 = vmatmul.bf16.gmra.mxu0 %v246
    %v1552 = vpop.f32.mrf.mxu0
    %v1553 = vadd.f32 %v1540, %v1552
    %v1554 = vpop.f32.mrf.mxu0
    %1555 = vdwg.mxu0
    %1556 = vmatpush.bf16.msra.mxu0 %v1040
    %1557 = vmatpush.bf16.msra.mxu0 %v1038
    %1558 = vmatpush.bf16.msra.mxu0 %v1036
    %1559 = vmatpush.bf16.msra.mxu0 %v1034
    %1560 = vmatpush.bf16.msra.mxu0 %v1032
    %1561 = vmatpush.bf16.msra.mxu0 %v1030
    %1562 = vmatpush.bf16.msra.mxu0 %v1028
    %1563 = vmatpush.bf16.msra.mxu0 %v1026
    %1564 = vmatmul.bf16.gmra.mxu0 %v247
    %v1565 = vpop.f32.mrf.mxu0
    %v1566 = vadd.f32 %v1553, %v1565
    %v1567 = vpop.f32.mrf.mxu0
    %1568 = vdwg.mxu0
    %1569 = vmatpush.bf16.msra.mxu0 0
    %1570 = vmatpush.bf16.msra.mxu0 0
    %1571 = vmatpush.bf16.msra.mxu0 0
    %1572 = vmatpush.bf16.msra.mxu0 0
    %1573 = vmatpush.bf16.msra.mxu0 0
    %1574 = vmatpush.bf16.msra.mxu0 0
    %1575 = vmatpush.bf16.msra.mxu0 %v1044
    %1576 = vmatpush.bf16.msra.mxu0 %v1042
    %1577 = vmatmul.bf16.gmra.mxu0 %v1242
    %v1578 = vpop.f32.mrf.mxu0
    %v1579 = vadd.f32 %v1566, %v1578
    %v1580 = vpop.f32.mrf.mxu0
    %1581 = vdwg.mxu0
    %v1582 = vmax.f32 %v1410, 0.0
    %v1583 = vmax.f32 %v1579, 0.0
    %v1584 = vpack.c.bf16 %v1582, %v1582
    %v1585 = vpack.c.bf16 %v1583, %v1583
    %v1586 = vld [vmem:[%s3] sm:$0xff]
    %v1587 = vld [vmem:[%s3 + $0x8] sm:$0xff]
    %v1588 = vld [vmem:[%s3 + $0x10] sm:$0xff]
    %v1589 = vld [vmem:[%s3 + $0x18] sm:$0xff]
    %v1590 = vld [vmem:[%s3 + $0x20] sm:$0xff]
    %v1591 = vld [vmem:[%s3 + $0x28] sm:$0xff]
    %v1592 = vld [vmem:[%s3 + $0x30] sm:$0xff]
    %v1593 = vld [vmem:[%s3 + $0x38] sm:$0xff]
    %v1594 = vld [vmem:[%s3 + $0x40] sm:$0xff]
    %v1595 = vld [vmem:[%s3 + $0x48] sm:$0xff]
    %v1596 = vld [vmem:[%s3 + $0x50] sm:$0xff]
    %v1597 = vld [vmem:[%s3 + $0x58] sm:$0xff]
    %v1598 = vld [vmem:[%s3 + $0x60] sm:$0xff]
    %v1599 = vld [vmem:[%s3 + $0x68] sm:$0xff]
    %v1600 = vld [vmem:[%s3 + $0x70] sm:$0xff]
    %v1601 = vld [vmem:[%s3 + $0x78] sm:$0xff]
    %v1602 = vld [vmem:[%s3 + $0x80] sm:$0xff]
    %v1603 = vld [vmem:[%s3 + $0x88] sm:$0xff]
    %v1604 = vld [vmem:[%s3 + $0x90] sm:$0xff]
    %v1605 = vld [vmem:[%s3 + $0x98] sm:$0xff]
    %v1606 = vld [vmem:[%s3 + $0xa0] sm:$0xff]
    %v1607 = vld [vmem:[%s3 + $0xa8] sm:$0xff]
    %v1608 = vld [vmem:[%s3 + $0xb0] sm:$0xff]
    %v1609 = vld [vmem:[%s3 + $0xb8] sm:$0xff]
    %v1610 = vld [vmem:[%s3 + $0xc0] sm:$0xff]
    %v1611 = vld [vmem:[%s3 + $0xc8] sm:$0xff]
    %v1612 = vld [vmem:[%s3 + $0xd0] sm:$0xff]
    %v1613 = vld [vmem:[%s3 + $0xd8] sm:$0xff]
    %v1614 = vld [vmem:[%s3 + $0xe0] sm:$0xff]
    %v1615 = vld [vmem:[%s3 + $0xe8] sm:$0xff]
    %v1616 = vld [vmem:[%s3 + $0xf0] sm:$0xff]
    %v1617 = vld [vmem:[%s3 + $0xf8] sm:$0xff]
    %v1618 = vld [vmem:[%s4] sm:$0x3]
    %v1620 = vperm.slane %v1618, 0
    %v1621 = vperm.slane %v1618, 1
    %v1656 = vunpack.c.l.b16 %v1586
    %v1657 = vunpack.c.h.b16 %v1586
    %v1658 = vunpack.c.l.b16 %v1587
    %v1659 = vunpack.c.h.b16 %v1587
    %v1660 = vunpack.c.l.b16 %v1588
    %v1661 = vunpack.c.h.b16 %v1588
    %v1662 = vunpack.c.l.b16 %v1589
    %v1663 = vunpack.c.h.b16 %v1589
    %v1664 = vunpack.c.l.b16 %v1590
    %v1665 = vunpack.c.h.b16 %v1590
    %v1666 = vunpack.c.l.b16 %v1591
    %v1667 = vunpack.c.h.b16 %v1591
    %v1668 = vunpack.c.l.b16 %v1592
    %v1669 = vunpack.c.h.b16 %v1592
    %v1670 = vunpack.c.l.b16 %v1593
    %v1671 = vunpack.c.h.b16 %v1593
    %v1672 = vunpack.c.l.b16 %v1594
    %v1673 = vunpack.c.h.b16 %v1594
    %v1674 = vunpack.c.l.b16 %v1595
    %v1675 = vunpack.c.h.b16 %v1595
    %v1676 = vunpack.c.l.b16 %v1596
    %v1677 = vunpack.c.h.b16 %v1596
    %v1678 = vunpack.c.l.b16 %v1597
    %v1679 = vunpack.c.h.b16 %v1597
    %v1680 = vunpack.c.l.b16 %v1598
    %v1681 = vunpack.c.h.b16 %v1598
    %v1682 = vunpack.c.l.b16 %v1599
    %v1683 = vunpack.c.h.b16 %v1599
    %v1684 = vunpack.c.l.b16 %v1600
    %v1685 = vunpack.c.h.b16 %v1600
    %v1686 = vunpack.c.l.b16 %v1601
    %v1687 = vunpack.c.h.b16 %v1601
    %v1688 = vunpack.c.l.b16 %v1602
    %v1689 = vunpack.c.h.b16 %v1602
    %v1690 = vunpack.c.l.b16 %v1603
    %v1691 = vunpack.c.h.b16 %v1603
    %v1692 = vunpack.c.l.b16 %v1604
    %v1693 = vunpack.c.h.b16 %v1604
    %v1694 = vunpack.c.l.b16 %v1605
    %v1695 = vunpack.c.h.b16 %v1605
    %v1696 = vunpack.c.l.b16 %v1606
    %v1697 = vunpack.c.h.b16 %v1606
    %v1698 = vunpack.c.l.b16 %v1607
    %v1699 = vunpack.c.h.b16 %v1607
    %v1700 = vunpack.c.l.b16 %v1608
    %v1701 = vunpack.c.h.b16 %v1608
    %v1702 = vunpack.c.l.b16 %v1609
    %v1703 = vunpack.c.h.b16 %v1609
    %v1704 = vunpack.c.l.b16 %v1610
    %v1705 = vunpack.c.h.b16 %v1610
    %v1706 = vunpack.c.l.b16 %v1611
    %v1707 = vunpack.c.h.b16 %v1611
    %v1708 = vunpack.c.l.b16 %v1612
    %v1709 = vunpack.c.h.b16 %v1612
    %v1710 = vunpack.c.l.b16 %v1613
    %v1711 = vunpack.c.h.b16 %v1613
    %v1712 = vunpack.c.l.b16 %v1614
    %v1713 = vunpack.c.h.b16 %v1614
    %v1714 = vunpack.c.l.b16 %v1615
    %v1715 = vunpack.c.h.b16 %v1615
    %v1716 = vunpack.c.l.b16 %v1616
    %v1717 = vunpack.c.h.b16 %v1616
    %v1718 = vunpack.c.l.b16 %v1617
    %v1719 = vunpack.c.h.b16 %v1617
    %v1720 = vpack.c.b16 %v1658, %v1656
    %v1721 = vpack.c.b16 %v1659, %v1657
    %v1722 = vpack.c.b16 %v1662, %v1660
    %v1723 = vpack.c.b16 %v1663, %v1661
    %v1724 = vpack.c.b16 %v1666, %v1664
    %v1725 = vpack.c.b16 %v1667, %v1665
    %v1726 = vpack.c.b16 %v1670, %v1668
    %v1727 = vpack.c.b16 %v1671, %v1669
    %v1728 = vpack.c.b16 %v1674, %v1672
    %v1729 = vpack.c.b16 %v1675, %v1673
    %v1730 = vpack.c.b16 %v1678, %v1676
    %v1731 = vpack.c.b16 %v1679, %v1677
    %v1732 = vpack.c.b16 %v1682, %v1680
    %v1733 = vpack.c.b16 %v1683, %v1681
    %v1734 = vpack.c.b16 %v1686, %v1684
    %v1735 = vpack.c.b16 %v1687, %v1685
    %v1736 = vpack.c.b16 %v1690, %v1688
    %v1737 = vpack.c.b16 %v1691, %v1689
    %v1738 = vpack.c.b16 %v1694, %v1692
    %v1739 = vpack.c.b16 %v1695, %v1693
    %v1740 = vpack.c.b16 %v1698, %v1696
    %v1741 = vpack.c.b16 %v1699, %v1697
    %v1742 = vpack.c.b16 %v1702, %v1700
    %v1743 = vpack.c.b16 %v1703, %v1701
    %v1744 = vpack.c.b16 %v1706, %v1704
    %v1745 = vpack.c.b16 %v1707, %v1705
    %v1746 = vpack.c.b16 %v1710, %v1708
    %v1747 = vpack.c.b16 %v1711, %v1709
    %v1748 = vpack.c.b16 %v1714, %v1712
    %v1749 = vpack.c.b16 %v1715, %v1713
    %v1750 = vpack.c.b16 %v1718, %v1716
    %v1751 = vpack.c.b16 %v1719, %v1717
    %1784 = vmatpush.bf16.msra.mxu0 %v1734
    %1785 = vmatpush.bf16.msra.mxu0 %v1732
    %1786 = vmatpush.bf16.msra.mxu0 %v1730
    %1787 = vmatpush.bf16.msra.mxu0 %v1728
    %1788 = vmatpush.bf16.msra.mxu0 %v1726
    %1789 = vmatpush.bf16.msra.mxu0 %v1724
    %1790 = vmatpush.bf16.msra.mxu0 %v1722
    %1791 = vmatpush.bf16.msra.mxu0 %v1720
    %1792 = vmatmul.bf16.gmra.mxu0 %v1584
    %v1793 = vpop.f32.mrf.mxu0
    %v1794 = vadd.f32 %v1620, %v1793
    %v1795 = vpop.f32.mrf.mxu0
    %1796 = vdwg.mxu0
    %1797 = vmatpush.bf16.msra.mxu0 %v1750
    %1798 = vmatpush.bf16.msra.mxu0 %v1748
    %1799 = vmatpush.bf16.msra.mxu0 %v1746
    %1800 = vmatpush.bf16.msra.mxu0 %v1744
    %1801 = vmatpush.bf16.msra.mxu0 %v1742
    %1802 = vmatpush.bf16.msra.mxu0 %v1740
    %1803 = vmatpush.bf16.msra.mxu0 %v1738
    %1804 = vmatpush.bf16.msra.mxu0 %v1736
    %1805 = vmatmul.bf16.gmra.mxu0 %v1585
    %v1806 = vpop.f32.mrf.mxu0
    %v1807 = vadd.f32 %v1794, %v1806
    %v1808 = vpop.f32.mrf.mxu0
    %1809 = vdwg.mxu0
    %1810 = vmatpush.bf16.msra.mxu0 %v1735
    %1811 = vmatpush.bf16.msra.mxu0 %v1733
    %1812 = vmatpush.bf16.msra.mxu0 %v1731
    %1813 = vmatpush.bf16.msra.mxu0 %v1729
    %1814 = vmatpush.bf16.msra.mxu0 %v1727
    %1815 = vmatpush.bf16.msra.mxu0 %v1725
    %1816 = vmatpush.bf16.msra.mxu0 %v1723
    %1817 = vmatpush.bf16.msra.mxu0 %v1721
    %1818 = vmatmul.bf16.gmra.mxu0 %v1584
    %v1819 = vpop.f32.mrf.mxu0
    %v1820 = vadd.f32 %v1621, %v1819
    %v1821 = vpop.f32.mrf.mxu0
    %1822 = vdwg.mxu0
    %1823 = vmatpush.bf16.msra.mxu0 %v1751
    %1824 = vmatpush.bf16.msra.mxu0 %v1749
    %1825 = vmatpush.bf16.msra.mxu0 %v1747
    %1826 = vmatpush.bf16.msra.mxu0 %v1745
    %1827 = vmatpush.bf16.msra.mxu0 %v1743
    %1828 = vmatpush.bf16.msra.mxu0 %v1741
    %1829 = vmatpush.bf16.msra.mxu0 %v1739
    %1830 = vmatpush.bf16.msra.mxu0 %v1737
    %1831 = vmatmul.bf16.gmra.mxu0 %v1585
    %v1832 = vpop.f32.mrf.mxu0
    %v1833 = vadd.f32 %v1820, %v1832
    %v1834 = vpop.f32.mrf.mxu0
    %1835 = vdwg.mxu0
    %v1836 = vmax.f32 %v1807, 0.0
    %v1837 = vmax.f32 %v1833, 0.0
    %v1838 = vpack.c.bf16 %v1836, %v1836
    %v1839 = vpack.c.bf16 %v1837, %v1837
    %v1840 = vld [vmem:[%s5] sm:$0xf]
    %v1841 = vld [vmem:[%s5 + $0x4] sm:$0xf]
    %v1842 = vld [vmem:[%s5 + $0x8] sm:$0xf]
    %v1843 = vld [vmem:[%s5 + $0xc] sm:$0xf]
    %v1844 = vld [vmem:[%s5 + $0x10] sm:$0xf]
    %v1845 = vld [vmem:[%s5 + $0x14] sm:$0xf]
    %v1846 = vld [vmem:[%s5 + $0x18] sm:$0xf]
    %v1847 = vld [vmem:[%s5 + $0x1c] sm:$0xf]
    %v1848 = vld [vmem:[%s5 + $0x20] sm:$0xf]
    %v1849 = vld [vmem:[%s5 + $0x24] sm:$0xf]
    %v1850 = vld [vmem:[%s5 + $0x28] sm:$0xf]
    %v1851 = vld [vmem:[%s5 + $0x2c] sm:$0xf]
    %v1852 = vld [vmem:[%s5 + $0x30] sm:$0xf]
    %v1853 = vld [vmem:[%s5 + $0x34] sm:$0xf]
    %v1854 = vld [vmem:[%s5 + $0x38] sm:$0xf]
    %v1855 = vld [vmem:[%s5 + $0x3c] sm:$0xf]
    %v1856 = vld [vmem:[%s5 + $0x40] sm:$0xf]
    %v1857 = vld [vmem:[%s5 + $0x44] sm:$0xf]
    %v1858 = vld [vmem:[%s5 + $0x48] sm:$0xf]
    %v1859 = vld [vmem:[%s5 + $0x4c] sm:$0xf]
    %v1860 = vld [vmem:[%s5 + $0x50] sm:$0xf]
    %v1861 = vld [vmem:[%s5 + $0x54] sm:$0xf]
    %v1862 = vld [vmem:[%s5 + $0x58] sm:$0xf]
    %v1863 = vld [vmem:[%s5 + $0x5c] sm:$0xf]
    %v1864 = vld [vmem:[%s5 + $0x60] sm:$0xf]
    %v1865 = vld [vmem:[%s5 + $0x64] sm:$0xf]
    %v1866 = vld [vmem:[%s5 + $0x68] sm:$0xf]
    %v1867 = vld [vmem:[%s5 + $0x6c] sm:$0xf]
    %v1868 = vld [vmem:[%s5 + $0x70] sm:$0xf]
    %v1869 = vld [vmem:[%s5 + $0x74] sm:$0xf]
    %v1870 = vld [vmem:[%s5 + $0x78] sm:$0xf]
    %v1871 = vld [vmem:[%s5 + $0x7c] sm:$0xf]
    %v1872 = vld [vmem:[%s6] sm:$0x1]
    %v1874 = vperm.slane %v1872, 0
    %v1908 = vunpack.c.l.b16 %v1840
    %v1909 = vunpack.c.l.b16 %v1841
    %v1910 = vunpack.c.l.b16 %v1842
    %v1911 = vunpack.c.l.b16 %v1843
    %v1912 = vunpack.c.l.b16 %v1844
    %v1913 = vunpack.c.l.b16 %v1845
    %v1914 = vunpack.c.l.b16 %v1846
    %v1915 = vunpack.c.l.b16 %v1847
    %v1916 = vunpack.c.l.b16 %v1848
    %v1917 = vunpack.c.l.b16 %v1849
    %v1918 = vunpack.c.l.b16 %v1850
    %v1919 = vunpack.c.l.b16 %v1851
    %v1920 = vunpack.c.l.b16 %v1852
    %v1921 = vunpack.c.l.b16 %v1853
    %v1922 = vunpack.c.l.b16 %v1854
    %v1923 = vunpack.c.l.b16 %v1855
    %v1924 = vunpack.c.l.b16 %v1856
    %v1925 = vunpack.c.l.b16 %v1857
    %v1926 = vunpack.c.l.b16 %v1858
    %v1927 = vunpack.c.l.b16 %v1859
    %v1928 = vunpack.c.l.b16 %v1860
    %v1929 = vunpack.c.l.b16 %v1861
    %v1930 = vunpack.c.l.b16 %v1862
    %v1931 = vunpack.c.l.b16 %v1863
    %v1932 = vunpack.c.l.b16 %v1864
    %v1933 = vunpack.c.l.b16 %v1865
    %v1934 = vunpack.c.l.b16 %v1866
    %v1935 = vunpack.c.l.b16 %v1867
    %v1936 = vunpack.c.l.b16 %v1868
    %v1937 = vunpack.c.l.b16 %v1869
    %v1938 = vunpack.c.l.b16 %v1870
    %v1939 = vunpack.c.l.b16 %v1871
    %v1940 = vpack.c.b16 %v1909, %v1908
    %v1941 = vpack.c.b16 %v1911, %v1910
    %v1942 = vpack.c.b16 %v1913, %v1912
    %v1943 = vpack.c.b16 %v1915, %v1914
    %v1944 = vpack.c.b16 %v1917, %v1916
    %v1945 = vpack.c.b16 %v1919, %v1918
    %v1946 = vpack.c.b16 %v1921, %v1920
    %v1947 = vpack.c.b16 %v1923, %v1922
    %v1948 = vpack.c.b16 %v1925, %v1924
    %v1949 = vpack.c.b16 %v1927, %v1926
    %v1950 = vpack.c.b16 %v1929, %v1928
    %v1951 = vpack.c.b16 %v1931, %v1930
    %v1952 = vpack.c.b16 %v1933, %v1932
    %v1953 = vpack.c.b16 %v1935, %v1934
    %v1954 = vpack.c.b16 %v1937, %v1936
    %v1955 = vpack.c.b16 %v1939, %v1938
    %1972 = vmatpush.bf16.msra.mxu0 %v1947
    %1973 = vmatpush.bf16.msra.mxu0 %v1946
    %1974 = vmatpush.bf16.msra.mxu0 %v1945
    %1975 = vmatpush.bf16.msra.mxu0 %v1944
    %1976 = vmatpush.bf16.msra.mxu0 %v1943
    %1977 = vmatpush.bf16.msra.mxu0 %v1942
    %1978 = vmatpush.bf16.msra.mxu0 %v1941
    %1979 = vmatpush.bf16.msra.mxu0 %v1940
    %1980 = vmatmul.bf16.gmra.mxu0 %v1838
    %v1981 = vpop.f32.mrf.mxu0
    %v1982 = vadd.f32 %v1874, %v1981
    %v1983 = vpop.f32.mrf.mxu0
    %1984 = vdwg.mxu0
    %1985 = vmatpush.bf16.msra.mxu0 %v1955
    %1986 = vmatpush.bf16.msra.mxu0 %v1954
    %1987 = vmatpush.bf16.msra.mxu0 %v1953
    %1988 = vmatpush.bf16.msra.mxu0 %v1952
    %1989 = vmatpush.bf16.msra.mxu0 %v1951
    %1990 = vmatpush.bf16.msra.mxu0 %v1950
    %1991 = vmatpush.bf16.msra.mxu0 %v1949
    %1992 = vmatpush.bf16.msra.mxu0 %v1948
    %1993 = vmatmul.bf16.gmra.mxu0 %v1839
    %v1994 = vpop.f32.mrf.mxu0
    %v1995 = vadd.f32 %v1982, %v1994
    %v1996 = vpop.f32.mrf.mxu0
    %1997 = vdwg.mxu0
    %v1998 = vsub.f32 0.0, %v1995
    %v1999 = vmul.f32 %v1998, 1.442695
    %v2000 = vpow.pop %v1999
    %v2001 = vadd.f32 %v2000, 1.0
    %v2002 = vrcp.pop %v2001
    %v2003 = vmax.f32 %v2002, 0.0
    %v2004 = vmin.f32 %v2003, 1.0
    %vm2005 = vcmask 58368
    %2006 = vst.msk [vmem:[#allocation2] sm:$0x3] %vm2005, %v2004
    // Predicated region
    $region30: #{forward.27} parent=1 // pred_check
      _
    $region31: #{forward.27} parent=1 // pred_check_branch
      %2008 = sbr.rel (0) target = $region33
    $region32: #{forward.27} parent=1 // pred_region
      %2010 = vsyncadd [#allocation3], 0
      %s2012 = sshll.u32 [#allocation2], 4
      %s2013 = int_to_ptr.vmem [resolvable:$true] %s2012
      %s2014 = sshll.u32 %s7, 4
      %s2015 = int_to_ptr.hbm [resolvable:$true] %s2014
      %2017 = dma.vmem_to_hbm [thread:$0]  %s2013, 32, %s2015, [#allocation3]
    $region33: #{forward.27} parent=1 // pred_fallthru
      _
    // Predicated region
    $region34: #{forward.27} parent=1 // pred_check
      _
    $region35: #{forward.27} parent=1 // pred_check_branch
      %2019 = sbr.rel (0) target = $region37
    $region36: #{forward.27} parent=1 // pred_region
      %2021 = dma.done [#allocation3], 32
    $region37: #{forward.27} parent=1 // pred_fallthru
      _
    %2022 = vsyncpa [#allocation3], 1

</llo_original>
